<compile_context>
chip_gen: v5e
topology: v5e:2x2
jax: 0.10.0
libtpu: 0.0.40
codegen_flags: <defaults>
</compile_context>

<pallas_src>
import functools

import jax
import jax.numpy as jnp
import numpy as np
from jax.experimental import pallas as pl
from jax.experimental.pallas import tpu as pltpu

_EPS = 1e-5
_LANE = 128
_VMEM_LIMIT = 32 * 1024 * 1024  # safe on v5e/v6e/v7x


def _round_up(x, m):
    return (x + m - 1) // m * m


def _pick_row_tile(h, max_rows=8):
    """Largest divisor of h that is <= max_rows (row-tile height)."""
    for t in range(min(h, max_rows), 0, -1):
        if h % t == 0:
            return t
    return h


# ---------------------------------------------------------------------------
# Pass 1 / 2 kernel: (optional affine+ReLU) -> 3x3 conv (pad=1) on one row tile.
# ---------------------------------------------------------------------------
def _conv3x3_kernel(x_ref, scale_ref, bias_ref, w_ref, y_ref, stats_ref,
                    pad_ref, patches_ref, *, preact, tr):
    """Grid = (batch, row_tiles).

    x_ref      : (1, H, W, Cp)      full image, resident across the row axis
    scale_ref  : (1, Cp)            per-channel affine scale (unused if not preact)
    bias_ref   : (1, Cp)            per-channel affine bias  (unused if not preact)
    w_ref      : (9*Cp, Cp) bf16    conv weight in im2col layout
    y_ref      : (1, tr, W, Cp) bf16 raw conv output for this row tile
    stats_ref  : (1, 2, Cp) f32     per-image [sum, sumsq] accumulator (row-resident)
    pad_ref    : (tr+2, W+2, Cp) bf16  scratch: row tile + 1-px halo
    patches_ref: (tr, W, 9*Cp) bf16    scratch: im2col patches
    """
    r = pl.program_id(1)
    nr = pl.num_programs(1)
    _, H, W, Cp = x_ref.shape
    row0 = r * tr

    def act(v):
        v = v.astype(jnp.float32)
        if preact:
            scale = scale_ref[...].reshape(1, 1, Cp)
            bias = bias_ref[...].reshape(1, 1, Cp)
            v = jnp.maximum(v * scale + bias, 0.0)
        return v.astype(pad_ref.dtype)

    # Zero only the halo strips (every step: megacore-safe), not the whole buffer.
    zcol = jnp.zeros((tr + 2, 1, Cp), pad_ref.dtype)
    pad_ref[:, 0:1, :] = zcol
    pad_ref[:, W + 1:W + 2, :] = zcol

    # Body rows of this tile (always valid).
    body = x_ref[:, pl.ds(row0, tr), :, :].reshape(tr, W, Cp)
    pad_ref[1:1 + tr, 1:1 + W, :] = act(body)

    zrow = jnp.zeros((1, W, Cp), pad_ref.dtype)

    @pl.when(r == 0)
    def _():
        pad_ref[0:1, 1:1 + W, :] = zrow

    @pl.when(r > 0)
    def _():
        top = x_ref[:, pl.ds(row0 - 1, 1), :, :].reshape(1, W, Cp)
        pad_ref[0:1, 1:1 + W, :] = act(top)

    @pl.when(r == nr - 1)
    def _():
        pad_ref[tr + 1:tr + 2, 1:1 + W, :] = zrow

    @pl.when(r < nr - 1)
    def _():
        bot = x_ref[:, pl.ds(row0 + tr, 1), :, :].reshape(1, W, Cp)
        pad_ref[tr + 1:tr + 2, 1:1 + W, :] = act(bot)

    # im2col: write each tap directly into its 128-aligned lane range (no transient
    # tap list, no concatenate).
    for t in range(9):
        dy, dx = divmod(t, 3)
        patches_ref[:, :, t * Cp:(t + 1) * Cp] = pad_ref[dy:dy + tr, dx:dx + W, :]

    # One bf16 MXU matmul with f32 accumulation.
    acc = jnp.dot(patches_ref[...].reshape(tr * W, 9 * Cp), w_ref[...],
                  preferred_element_type=jnp.float32)            # (tr*W, Cp) f32

    y_ref[...] = acc.reshape(1, tr, W, Cp).astype(y_ref.dtype)

    # One-pass BN partials, accumulated across row tiles in the resident output.
    @pl.when(r == 0)
    def _():
        stats_ref[...] = jnp.zeros_like(stats_ref)

    s = jnp.sum(acc, axis=0, keepdims=True)                      # (1, Cp)
    ss = jnp.sum(acc * acc, axis=0, keepdims=True)               # (1, Cp)
    stats_ref[...] += jnp.concatenate([s, ss], axis=0).reshape(1, 2, Cp)


def _conv3x3_pass(x, scale, bias, w_flat, *, preact, tr):
    N, H, W, Cp = x.shape
    nr = H // tr
    kernel = functools.partial(_conv3x3_kernel, preact=preact, tr=tr)

    img_spec = pl.BlockSpec((1, H, W, Cp), lambda i, r: (i, 0, 0, 0))
    vec_spec = pl.BlockSpec((1, Cp), lambda i, r: (0, 0))
    w_spec = pl.BlockSpec((9 * Cp, Cp), lambda i, r: (0, 0))
    y_spec = pl.BlockSpec((1, tr, W, Cp), lambda i, r: (i, r, 0, 0))
    st_spec = pl.BlockSpec((1, 2, Cp), lambda i, r: (i, 0, 0))

    flops = int(2 * N * H * W * (9 * Cp) * Cp)
    bytes_accessed = int(x.size * x.dtype.itemsize + w_flat.size * 2
                         + N * H * W * Cp * 2 + N * 2 * Cp * 4)

    return pl.pallas_call(
        kernel,
        out_shape=(jax.ShapeDtypeStruct((N, H, W, Cp), jnp.bfloat16),
                   jax.ShapeDtypeStruct((N, 2, Cp), jnp.float32)),
        grid=(N, nr),
        in_specs=[img_spec, vec_spec, vec_spec, w_spec],
        out_specs=(y_spec, st_spec),
        scratch_shapes=[
            pltpu.VMEM((tr + 2, W + 2, Cp), jnp.bfloat16),   # halo-padded rows
            pltpu.VMEM((tr, W, 9 * Cp), jnp.bfloat16),       # im2col patches
        ],
        compiler_params=pltpu.CompilerParams(
            dimension_semantics=("parallel", "arbitrary"),
            vmem_limit_bytes=_VMEM_LIMIT),
        cost_estimate=pl.CostEstimate(flops=flops, transcendentals=0,
                                      bytes_accessed=bytes_accessed),
    )(x, scale, bias, w_flat)


# ---------------------------------------------------------------------------
# Pass 3 kernel: out = relu(y * scale + bias + residual), flat lane-dense tiles.
# ---------------------------------------------------------------------------
def _bn_add_relu_kernel(y_ref, scale_ref, bias_ref, res_ref, o_ref):
    scale = scale_ref[...]   # (1, Cp) broadcasts over rows
    bias = bias_ref[...]
    o_ref[...] = jnp.maximum(
        y_ref[...].astype(jnp.float32) * scale + bias + res_ref[...].astype(jnp.float32),
        0.0).astype(o_ref.dtype)


def _bn_add_relu_pass(y, scale, bias, res):
    M, Cp = y.shape
    mb = 1024 if M >= 1024 else M
    grid = (pl.cdiv(M, mb),)
    row_spec = pl.BlockSpec((mb, Cp), lambda i: (i, 0))
    vec_spec = pl.BlockSpec((1, Cp), lambda i: (0, 0))
    bytes_accessed = int(y.size * 2 + res.size * 4 + M * Cp * 4)
    return pl.pallas_call(
        _bn_add_relu_kernel,
        out_shape=jax.ShapeDtypeStruct((M, Cp), jnp.float32),
        grid=grid,
        in_specs=[row_spec, vec_spec, vec_spec, row_spec],
        out_specs=row_spec,
        compiler_params=pltpu.CompilerParams(
            dimension_semantics=("parallel",),
            vmem_limit_bytes=_VMEM_LIMIT),
        cost_estimate=pl.CostEstimate(flops=int(3 * M * Cp), transcendentals=0,
                                      bytes_accessed=bytes_accessed),
    )(y, scale, bias, res)


# ---------------------------------------------------------------------------
# BN folding glue (tiny, outside the kernels).
# ---------------------------------------------------------------------------
def _fold_bn(stats, gamma_p, beta_p, m_count):
    """stats: (N, 2, Cp) per-image [sum, sumsq] -> folded (scale, bias), each (1, Cp)."""
    s = jnp.sum(stats, axis=0)                    # (2, Cp)
    inv_m = 1.0 / float(m_count)
    mean = s[0] * inv_m
    var = jnp.maximum(s[1] * inv_m - mean * mean, 0.0)
    scale = gamma_p * jax.lax.rsqrt(var + _EPS)
    bias = beta_p - mean * scale
    return scale.reshape(1, -1), bias.reshape(1, -1)


def basic_block(x_nchw, w1, g1, b1, w2, g2, b2):
    """BasicBlock forward (stride=1, downsample=None, training-mode BatchNorm).

    x_nchw : (N, C, H, W) float32
    w1, w2 : (3, 3, C, C) conv weights in HWIO
    g*, b* : (C,) BatchNorm gamma / beta
    """
    N, C, H, W = x_nchw.shape
    P = w1.shape[-1]
    assert C == P, "identity residual requires in_planes == planes"
    Cp = _round_up(max(C, _LANE), _LANE)
    tr = _pick_row_tile(H)

    # NCHW -> NHWC, channels zero-padded to Cp lanes (f32: exact residual / conv1 input).
    x = jnp.transpose(x_nchw, (0, 2, 3, 1))
    x = jnp.pad(x, ((0, 0), (0, 0), (0, 0), (0, Cp - C))).astype(jnp.float32)

    def pad_weight(w):                            # (3,3,C,P) -> (9*Cp, Cp) bf16
        wp = jnp.pad(w, ((0, 0), (0, 0), (0, Cp - C), (0, Cp - P)))
        return wp.reshape(9 * Cp, Cp).astype(jnp.bfloat16)

    def pad_vec(v):
        return jnp.pad(v.astype(jnp.float32), (0, Cp - P))

    w1f, w2f = pad_weight(w1), pad_weight(w2)
    ones = jnp.ones((1, Cp), jnp.float32)
    zeros = jnp.zeros((1, Cp), jnp.float32)
    m_count = N * H * W

    # pass 1: conv1 + BN1 partial stats
    y1, st1 = _conv3x3_pass(x, ones, zeros, w1f, preact=False, tr=tr)
    scale1, bias1 = _fold_bn(st1, pad_vec(g1), pad_vec(b1), m_count)

    # pass 2: bn1 + relu + conv2 + BN2 partial stats
    y2, st2 = _conv3x3_pass(y1, scale1, bias1, w2f, preact=True, tr=tr)
    scale2, bias2 = _fold_bn(st2, pad_vec(g2), pad_vec(b2), m_count)

    # pass 3: bn2 + identity residual + relu (flat lane-dense elementwise pass)
    out_flat = _bn_add_relu_pass(y2.reshape(N * H * W, Cp), scale2, bias2,
                                 x.reshape(N * H * W, Cp))

    out = out_flat.reshape(N, H, W, Cp)[..., :P]
    return jnp.transpose(out, (0, 3, 1, 2))       # NHWC -> NCHW


def _reference(x_nchw, w1, g1, b1, w2, g2, b2):
    """Pure-JAX f32 reference (NHWC, HWIO), training-mode batch norm."""
    x = jnp.transpose(x_nchw, (0, 2, 3, 1))

    def conv(a, w):
        return jax.lax.conv_general_dilated(
            a, w, window_strides=(1, 1), padding=((1, 1), (1, 1)),
            dimension_numbers=("NHWC", "HWIO", "NHWC"))

    def bn(a, g, b):
        m = jnp.mean(a, axis=(0, 1, 2), keepdims=True)
        v = jnp.mean((a - m) ** 2, axis=(0, 1, 2), keepdims=True)
        return (a - m) * jax.lax.rsqrt(v + _EPS) * g + b

    y = jnp.maximum(bn(conv(x, w1), g1, b1), 0.0)
    z = bn(conv(y, w2), g2, b2)
    out = jnp.maximum(z + x, 0.0)
    return jnp.transpose(out, (0, 3, 1, 2))


if __name__ == "__main__":
    key = jax.random.PRNGKey(0)
    k1, k2, k3, k4, k5 = jax.random.split(key, 5)

    N, C, H, W = 2, 4, 16, 16          # in_planes = planes = 4, stride = 1
    x = jax.random.normal(k1, (N, C, H, W), jnp.float32)

    # Deterministic synthetic parameters (shapes from BasicBlock.__init__).
    w1 = jax.random.normal(k2, (3, 3, C, C), jnp.float32) * 0.2   # conv1 (HWIO)
    w2 = jax.random.normal(k3, (3, 3, C, C), jnp.float32) * 0.2   # conv2 (HWIO)
    g1 = 1.0 + 0.1 * jax.random.normal(k4, (C,), jnp.float32)     # bn1 gamma
    b1 = 0.1 * jax.random.normal(k5, (C,), jnp.float32)           # bn1 beta
    g2 = jnp.ones((C,), jnp.float32)                              # bn2 gamma
    b2 = jnp.zeros((C,), jnp.float32)                             # bn2 beta

    fwd = jax.jit(basic_block)
    out = jax.block_until_ready(fwd(x, w1, g1, b1, w2, g2, b2))
    ref = jax.block_until_ready(_reference(x, w1, g1, b1, w2, g2, b2))

    # Tolerance reflects bf16 MXU operands + bf16 inter-pass storage vs. f32 reference.
    np.testing.assert_allclose(np.asarray(out), np.asarray(ref),
                               rtol=5e-2, atol=5e-2)

    print("KERNEL_OK")
</pallas_src>

<mosaic_0001>
module attributes {stable_mosaic.version = 11 : i64} {
  func.func @_conv3x3_kernel(%arg0: i32, %arg1: i32, %arg2: memref<1x16x16x128xf32, #tpu.memory_space<vmem>>, %arg3: memref<1x128xf32, #tpu.memory_space<vmem>>, %arg4: memref<1x128xf32, #tpu.memory_space<vmem>>, %arg5: memref<1152x128xbf16, #tpu.memory_space<vmem>>, %arg6: memref<1x8x16x128xbf16, #tpu.memory_space<vmem>>, %arg7: memref<1x2x128xf32, #tpu.memory_space<vmem>>, %arg8: memref<10x18x128xbf16, #tpu.memory_space<vmem>>, %arg9: memref<8x16x1152xbf16, #tpu.memory_space<vmem>>) attributes {dimension_semantics = [#tpu.dimension_semantics<parallel>, #tpu.dimension_semantics<arbitrary>], iteration_bounds = array<i64: 2, 2>, scalar_prefetch = 0 : i64, scratch_operands = 2 : i64, tpu.core_type = #tpu.core_type<tc>, window_params = [{transform_indices = @transform_0, window_bounds = array<i64: 1, 16, 16, 128>}, {pipeline_mode = #tpu.pipeline_mode<synchronous>, transform_indices = @transform_1, window_bounds = array<i64: 1, 128>}, {pipeline_mode = #tpu.pipeline_mode<synchronous>, transform_indices = @transform_2, window_bounds = array<i64: 1, 128>}, {pipeline_mode = #tpu.pipeline_mode<synchronous>, transform_indices = @transform_3, window_bounds = array<i64: 1152, 128>}, {transform_indices = @transform_4, window_bounds = array<i64: 1, 8, 16, 128>}, {transform_indices = @transform_5, window_bounds = array<i64: 1, 2, 128>}]} {
    %c8_i32 = arith.constant 8 : i32
    %0 = arith.muli %arg1, %c8_i32 : i32
    %cst = arith.constant 0.000000e+00 : bf16
    %1 = vector.broadcast %cst : bf16 to vector<10x1x128xbf16>
    %c0 = arith.constant 0 : index
    %c0_0 = arith.constant 0 : index
    %c0_1 = arith.constant 0 : index
    %2 = vector.load %arg8[%c0, %c0_0, %c0_1] : memref<10x18x128xbf16, #tpu.memory_space<vmem>>, vector<10x1x128xbf16>
    tpu.vector_store %arg8[%c0, %c0_0, %c0_1], %1 {strides = array<i32>} : memref<10x18x128xbf16, #tpu.memory_space<vmem>>, vector<10x1x128xbf16>,
    %c0_2 = arith.constant 0 : index
    %c17 = arith.constant 17 : index
    %c0_3 = arith.constant 0 : index
    %3 = vector.load %arg8[%c0_2, %c17, %c0_3] : memref<10x18x128xbf16, #tpu.memory_space<vmem>>, vector<10x1x128xbf16>
    tpu.vector_store %arg8[%c0_2, %c17, %c0_3], %1 {strides = array<i32>} : memref<10x18x128xbf16, #tpu.memory_space<vmem>>, vector<10x1x128xbf16>,
    %c0_4 = arith.constant 0 : index
    %4 = arith.index_cast %0 : i32 to index
    %c0_5 = arith.constant 0 : index
    %c0_6 = arith.constant 0 : index
    %5 = vector.load %arg2[%c0_4, %4, %c0_5, %c0_6] : memref<1x16x16x128xf32, #tpu.memory_space<vmem>>, vector<1x8x16x128xf32>
    %6 = vector.shape_cast %5 : vector<1x8x16x128xf32> to vector<8x16x128xf32>
    %7 = arith.truncf %6 : vector<8x16x128xf32> to vector<8x16x128xbf16>
    %c1 = arith.constant 1 : index
    %c1_7 = arith.constant 1 : index
    %c0_8 = arith.constant 0 : index
    %8 = vector.load %arg8[%c1, %c1_7, %c0_8] : memref<10x18x128xbf16, #tpu.memory_space<vmem>>, vector<8x16x128xbf16>
    tpu.vector_store %arg8[%c1, %c1_7, %c0_8], %7 {strides = array<i32>} : memref<10x18x128xbf16, #tpu.memory_space<vmem>>, vector<8x16x128xbf16>,
    %cst_9 = arith.constant 0.000000e+00 : bf16
    %9 = vector.broadcast %cst_9 : bf16 to vector<1x16x128xbf16>
    %c0_i32 = arith.constant 0 : i32
    %10 = arith.cmpi eq, %arg1, %c0_i32 : i32
    %11 = arith.extui %10 : i1 to i32
    %c0_i32_10 = arith.constant 0 : i32
    %12 = arith.cmpi ne, %11, %c0_i32_10 : i32
    scf.if %12 {
      %c0_81 = arith.constant 0 : index
      %c1_82 = arith.constant 1 : index
      %c0_83 = arith.constant 0 : index
      %60 = vector.load %arg8[%c0_81, %c1_82, %c0_83] : memref<10x18x128xbf16, #tpu.memory_space<vmem>>, vector<1x16x128xbf16>
      tpu.vector_store %arg8[%c0_81, %c1_82, %c0_83], %9 {strides = array<i32>} : memref<10x18x128xbf16, #tpu.memory_space<vmem>>, vector<1x16x128xbf16>,
    } else {
    }
    %c0_i32_11 = arith.constant 0 : i32
    %13 = arith.cmpi sgt, %arg1, %c0_i32_11 : i32
    %14 = arith.extui %13 : i1 to i32
    %c0_i32_12 = arith.constant 0 : i32
    %15 = arith.cmpi ne, %14, %c0_i32_12 : i32
    scf.if %15 {
      %c1_i32_81 = arith.constant 1 : i32
      %60 = arith.subi %0, %c1_i32_81 : i32
      %c0_82 = arith.constant 0 : index
      %61 = arith.index_cast %60 : i32 to index
      %c0_83 = arith.constant 0 : index
      %c0_84 = arith.constant 0 : index
      %62 = vector.load %arg2[%c0_82, %61, %c0_83, %c0_84] : memref<1x16x16x128xf32, #tpu.memory_space<vmem>>, vector<1x1x16x128xf32>
      %63 = vector.shape_cast %62 : vector<1x1x16x128xf32> to vector<1x16x128xf32>
      %64 = arith.truncf %63 : vector<1x16x128xf32> to vector<1x16x128xbf16>
      %c0_85 = arith.constant 0 : index
      %c1_86 = arith.constant 1 : index
      %c0_87 = arith.constant 0 : index
      %65 = vector.load %arg8[%c0_85, %c1_86, %c0_87] : memref<10x18x128xbf16, #tpu.memory_space<vmem>>, vector<1x16x128xbf16>
      tpu.vector_store %arg8[%c0_85, %c1_86, %c0_87], %64 {strides = array<i32>} : memref<10x18x128xbf16, #tpu.memory_space<vmem>>, vector<1x16x128xbf16>,
    } else {
    }
    %c1_i32 = arith.constant 1 : i32
    %16 = arith.cmpi eq, %arg1, %c1_i32 : i32
    %17 = arith.extui %16 : i1 to i32
    %c0_i32_13 = arith.constant 0 : i32
    %18 = arith.cmpi ne, %17, %c0_i32_13 : i32
    scf.if %18 {
      %c9 = arith.constant 9 : index
      %c1_81 = arith.constant 1 : index
      %c0_82 = arith.constant 0 : index
      %60 = vector.load %arg8[%c9, %c1_81, %c0_82] : memref<10x18x128xbf16, #tpu.memory_space<vmem>>, vector<1x16x128xbf16>
      tpu.vector_store %arg8[%c9, %c1_81, %c0_82], %9 {strides = array<i32>} : memref<10x18x128xbf16, #tpu.memory_space<vmem>>, vector<1x16x128xbf16>,
    } else {
    }
    %c1_i32_14 = arith.constant 1 : i32
    %19 = arith.cmpi slt, %arg1, %c1_i32_14 : i32
    %20 = arith.extui %19 : i1 to i32
    %c0_i32_15 = arith.constant 0 : i32
    %21 = arith.cmpi ne, %20, %c0_i32_15 : i32
    scf.if %21 {
      %c8_i32_81 = arith.constant 8 : i32
      %60 = arith.addi %0, %c8_i32_81 : i32
      %c0_82 = arith.constant 0 : index
      %61 = arith.index_cast %60 : i32 to index
      %c0_83 = arith.constant 0 : index
      %c0_84 = arith.constant 0 : index
      %62 = vector.load %arg2[%c0_82, %61, %c0_83, %c0_84] : memref<1x16x16x128xf32, #tpu.memory_space<vmem>>, vector<1x1x16x128xf32>
      %63 = vector.shape_cast %62 : vector<1x1x16x128xf32> to vector<1x16x128xf32>
      %64 = arith.truncf %63 : vector<1x16x128xf32> to vector<1x16x128xbf16>
      %c9 = arith.constant 9 : index
      %c1_85 = arith.constant 1 : index
      %c0_86 = arith.constant 0 : index
      %65 = vector.load %arg8[%c9, %c1_85, %c0_86] : memref<10x18x128xbf16, #tpu.memory_space<vmem>>, vector<1x16x128xbf16>
      tpu.vector_store %arg8[%c9, %c1_85, %c0_86], %64 {strides = array<i32>} : memref<10x18x128xbf16, #tpu.memory_space<vmem>>, vector<1x16x128xbf16>,
    } else {
    }
    %c0_16 = arith.constant 0 : index
    %c0_17 = arith.constant 0 : index
    %c0_18 = arith.constant 0 : index
    %22 = vector.load %arg8[%c0_16, %c0_17, %c0_18] : memref<10x18x128xbf16, #tpu.memory_space<vmem>>, vector<8x16x128xbf16>
    %c0_19 = arith.constant 0 : index
    %c0_20 = arith.constant 0 : index
    %c0_21 = arith.constant 0 : index
    %23 = vector.load %arg9[%c0_19, %c0_20, %c0_21] : memref<8x16x1152xbf16, #tpu.memory_space<vmem>>, vector<8x16x128xbf16>
    tpu.vector_store %arg9[%c0_19, %c0_20, %c0_21], %22 {strides = array<i32>} : memref<8x16x1152xbf16, #tpu.memory_space<vmem>>, vector<8x16x128xbf16>,
    %c0_22 = arith.constant 0 : index
    %c1_23 = arith.constant 1 : index
    %c0_24 = arith.constant 0 : index
    %24 = vector.load %arg8[%c0_22, %c1_23, %c0_24] : memref<10x18x128xbf16, #tpu.memory_space<vmem>>, vector<8x16x128xbf16>
    %c0_25 = arith.constant 0 : index
    %c0_26 = arith.constant 0 : index
    %c128 = arith.constant 128 : index
    %25 = vector.load %arg9[%c0_25, %c0_26, %c128] : memref<8x16x1152xbf16, #tpu.memory_space<vmem>>, vector<8x16x128xbf16>
    tpu.vector_store %arg9[%c0_25, %c0_26, %c128], %24 {strides = array<i32>} : memref<8x16x1152xbf16, #tpu.memory_space<vmem>>, vector<8x16x128xbf16>,
    %c0_27 = arith.constant 0 : index
    %c2 = arith.constant 2 : index
    %c0_28 = arith.constant 0 : index
    %26 = vector.load %arg8[%c0_27, %c2, %c0_28] : memref<10x18x128xbf16, #tpu.memory_space<vmem>>, vector<8x16x128xbf16>
    %c0_29 = arith.constant 0 : index
    %c0_30 = arith.constant 0 : index
    %c256 = arith.constant 256 : index
    %27 = vector.load %arg9[%c0_29, %c0_30, %c256] : memref<8x16x1152xbf16, #tpu.memory_space<vmem>>, vector<8x16x128xbf16>
    tpu.vector_store %arg9[%c0_29, %c0_30, %c256], %26 {strides = array<i32>} : memref<8x16x1152xbf16, #tpu.memory_space<vmem>>, vector<8x16x128xbf16>,
    %c1_31 = arith.constant 1 : index
    %c0_32 = arith.constant 0 : index
    %c0_33 = arith.constant 0 : index
    %28 = vector.load %arg8[%c1_31, %c0_32, %c0_33] : memref<10x18x128xbf16, #tpu.memory_space<vmem>>, vector<8x16x128xbf16>
    %c0_34 = arith.constant 0 : index
    %c0_35 = arith.constant 0 : index
    %c384 = arith.constant 384 : index
    %29 = vector.load %arg9[%c0_34, %c0_35, %c384] : memref<8x16x1152xbf16, #tpu.memory_space<vmem>>, vector<8x16x128xbf16>
    tpu.vector_store %arg9[%c0_34, %c0_35, %c384], %28 {strides = array<i32>} : memref<8x16x1152xbf16, #tpu.memory_space<vmem>>, vector<8x16x128xbf16>,
    %c1_36 = arith.constant 1 : index
    %c1_37 = arith.constant 1 : index
    %c0_38 = arith.constant 0 : index
    %30 = vector.load %arg8[%c1_36, %c1_37, %c0_38] : memref<10x18x128xbf16, #tpu.memory_space<vmem>>, vector<8x16x128xbf16>
    %c0_39 = arith.constant 0 : index
    %c0_40 = arith.constant 0 : index
    %c512 = arith.constant 512 : index
    %31 = vector.load %arg9[%c0_39, %c0_40, %c512] : memref<8x16x1152xbf16, #tpu.memory_space<vmem>>, vector<8x16x128xbf16>
    tpu.vector_store %arg9[%c0_39, %c0_40, %c512], %30 {strides = array<i32>} : memref<8x16x1152xbf16, #tpu.memory_space<vmem>>, vector<8x16x128xbf16>,
    %c1_41 = arith.constant 1 : index
    %c2_42 = arith.constant 2 : index
    %c0_43 = arith.constant 0 : index
    %32 = vector.load %arg8[%c1_41, %c2_42, %c0_43] : memref<10x18x128xbf16, #tpu.memory_space<vmem>>, vector<8x16x128xbf16>
    %c0_44 = arith.constant 0 : index
    %c0_45 = arith.constant 0 : index
    %c640 = arith.constant 640 : index
    %33 = vector.load %arg9[%c0_44, %c0_45, %c640] : memref<8x16x1152xbf16, #tpu.memory_space<vmem>>, vector<8x16x128xbf16>
    tpu.vector_store %arg9[%c0_44, %c0_45, %c640], %32 {strides = array<i32>} : memref<8x16x1152xbf16, #tpu.memory_space<vmem>>, vector<8x16x128xbf16>,
    %c2_46 = arith.constant 2 : index
    %c0_47 = arith.constant 0 : index
    %c0_48 = arith.constant 0 : index
    %34 = vector.load %arg8[%c2_46, %c0_47, %c0_48] : memref<10x18x128xbf16, #tpu.memory_space<vmem>>, vector<8x16x128xbf16>
    %c0_49 = arith.constant 0 : index
    %c0_50 = arith.constant 0 : index
    %c768 = arith.constant 768 : index
    %35 = vector.load %arg9[%c0_49, %c0_50, %c768] : memref<8x16x1152xbf16, #tpu.memory_space<vmem>>, vector<8x16x128xbf16>
    tpu.vector_store %arg9[%c0_49, %c0_50, %c768], %34 {strides = array<i32>} : memref<8x16x1152xbf16, #tpu.memory_space<vmem>>, vector<8x16x128xbf16>,
    %c2_51 = arith.constant 2 : index
    %c1_52 = arith.constant 1 : index
    %c0_53 = arith.constant 0 : index
    %36 = vector.load %arg8[%c2_51, %c1_52, %c0_53] : memref<10x18x128xbf16, #tpu.memory_space<vmem>>, vector<8x16x128xbf16>
    %c0_54 = arith.constant 0 : index
    %c0_55 = arith.constant 0 : index
    %c896 = arith.constant 896 : index
    %37 = vector.load %arg9[%c0_54, %c0_55, %c896] : memref<8x16x1152xbf16, #tpu.memory_space<vmem>>, vector<8x16x128xbf16>
    tpu.vector_store %arg9[%c0_54, %c0_55, %c896], %36 {strides = array<i32>} : memref<8x16x1152xbf16, #tpu.memory_space<vmem>>, vector<8x16x128xbf16>,
    %c2_56 = arith.constant 2 : index
    %c2_57 = arith.constant 2 : index
    %c0_58 = arith.constant 0 : index
    %38 = vector.load %arg8[%c2_56, %c2_57, %c0_58] : memref<10x18x128xbf16, #tpu.memory_space<vmem>>, vector<8x16x128xbf16>
    %c0_59 = arith.constant 0 : index
    %c0_60 = arith.constant 0 : index
    %c1024 = arith.constant 1024 : index
    %39 = vector.load %arg9[%c0_59, %c0_60, %c1024] : memref<8x16x1152xbf16, #tpu.memory_space<vmem>>, vector<8x16x128xbf16>
    tpu.vector_store %arg9[%c0_59, %c0_60, %c1024], %38 {strides = array<i32>} : memref<8x16x1152xbf16, #tpu.memory_space<vmem>>, vector<8x16x128xbf16>,
    %c0_61 = arith.constant 0 : index
    %c0_62 = arith.constant 0 : index
    %c0_63 = arith.constant 0 : index
    %40 = vector.load %arg9[%c0_61, %c0_62, %c0_63] : memref<8x16x1152xbf16, #tpu.memory_space<vmem>>, vector<8x16x1152xbf16>
    %41 = vector.shape_cast %40 : vector<8x16x1152xbf16> to vector<128x1152xbf16>
    %c0_64 = arith.constant 0 : index
    %c0_65 = arith.constant 0 : index
    %42 = vector.load %arg5[%c0_64, %c0_65] : memref<1152x128xbf16, #tpu.memory_space<vmem>>, vector<1152x128xbf16>
    %cst_66 = arith.constant dense<0.000000e+00> : vector<128x128xf32>
    %43 = tpu.matmul %41, %42, %cst_66 {dimension_numbers = #tpu.dot_dimension_numbers<[1], [0], [0], [1], [0, 0, 1, 1], [], []>} : vector<128x1152xbf16>, vector<1152x128xbf16>, vector<128x128xf32> -> vector<128x128xf32>
    %44 = vector.shape_cast %43 : vector<128x128xf32> to vector<1x8x16x128xf32>
    %45 = arith.truncf %44 : vector<1x8x16x128xf32> to vector<1x8x16x128xbf16>
    %c0_67 = arith.constant 0 : index
    %c0_68 = arith.constant 0 : index
    %c0_69 = arith.constant 0 : index
    %c0_70 = arith.constant 0 : index
    %46 = vector.load %arg6[%c0_67, %c0_68, %c0_69, %c0_70] : memref<1x8x16x128xbf16, #tpu.memory_space<vmem>>, vector<1x8x16x128xbf16>
    tpu.vector_store %arg6[%c0_67, %c0_68, %c0_69, %c0_70], %45 {strides = array<i32>} : memref<1x8x16x128xbf16, #tpu.memory_space<vmem>>, vector<1x8x16x128xbf16>,
    %c0_i32_71 = arith.constant 0 : i32
    %47 = arith.cmpi eq, %arg1, %c0_i32_71 : i32
    %48 = arith.extui %47 : i1 to i32
    %c0_i32_72 = arith.constant 0 : i32
    %49 = arith.cmpi ne, %48, %c0_i32_72 : i32
    scf.if %49 {
      %cst_81 = arith.constant 0.000000e+00 : f32
      %60 = vector.broadcast %cst_81 : f32 to vector<1x2x128xf32>
      %c0_82 = arith.constant 0 : index
      %c0_83 = arith.constant 0 : index
      %c0_84 = arith.constant 0 : index
      %61 = vector.load %arg7[%c0_82, %c0_83, %c0_84] : memref<1x2x128xf32, #tpu.memory_space<vmem>>, vector<1x2x128xf32>
      tpu.vector_store %arg7[%c0_82, %c0_83, %c0_84], %60 {strides = array<i32>} : memref<1x2x128xf32, #tpu.memory_space<vmem>>, vector<1x2x128xf32>,
    } else {
    }
    %cst_73 = arith.constant dense<0.000000e+00> : vector<128xf32>
    %50 = vector.multi_reduction <add>, %43, %cst_73 [0] : vector<128x128xf32> to vector<128xf32>
    %51 = vector.shape_cast %50 : vector<128xf32> to vector<1x128xf32>
    %52 = arith.mulf %43, %43 : vector<128x128xf32>
    %cst_74 = arith.constant dense<0.000000e+00> : vector<128xf32>
    %53 = vector.multi_reduction <add>, %52, %cst_74 [0] : vector<128x128xf32> to vector<128xf32>
    %54 = vector.shape_cast %53 : vector<128xf32> to vector<1x128xf32>
    %c0_75 = arith.constant 0 : index
    %c0_76 = arith.constant 0 : index
    %c0_77 = arith.constant 0 : index
    %55 = vector.load %arg7[%c0_75, %c0_76, %c0_77] : memref<1x2x128xf32, #tpu.memory_space<vmem>>, vector<1x2x128xf32>
    %56 = tpu.concatenate %51, %54 in 0 : vector<1x128xf32>, vector<1x128xf32> -> vector<2x128xf32>
    %57 = vector.shape_cast %56 : vector<2x128xf32> to vector<1x2x128xf32>
    %58 = arith.addf %55, %57 : vector<1x2x128xf32>
    %c0_78 = arith.constant 0 : index
    %c0_79 = arith.constant 0 : index
    %c0_80 = arith.constant 0 : index
    %59 = vector.load %arg7[%c0_78, %c0_79, %c0_80] : memref<1x2x128xf32, #tpu.memory_space<vmem>>, vector<1x2x128xf32>
    tpu.vector_store %arg7[%c0_78, %c0_79, %c0_80], %58 {strides = array<i32>} : memref<1x2x128xf32, #tpu.memory_space<vmem>>, vector<1x2x128xf32>,
    return
  }
  func.func @transform_0(%arg0: i32, %arg1: i32) -> (i32, i32, i32, i32) {
    %c0_i32 = arith.constant 0 : i32
    %c0_i32_0 = arith.constant 0 : i32
    %c0_i32_1 = arith.constant 0 : i32
    %c0_i32_2 = arith.constant 0 : i32
    return %arg0, %c0_i32, %c0_i32_0, %c0_i32_1 : i32, i32, i32, i32
  }
  func.func @transform_1(%arg0: i32, %arg1: i32) -> (i32, i32) {
    %c0_i32 = arith.constant 0 : i32
    %c0_i32_0 = arith.constant 0 : i32
    %c0_i32_1 = arith.constant 0 : i32
    return %c0_i32, %c0_i32_0 : i32, i32
  }
  func.func @transform_2(%arg0: i32, %arg1: i32) -> (i32, i32) {
    %c0_i32 = arith.constant 0 : i32
    %c0_i32_0 = arith.constant 0 : i32
    %c0_i32_1 = arith.constant 0 : i32
    return %c0_i32, %c0_i32_0 : i32, i32
  }
  func.func @transform_3(%arg0: i32, %arg1: i32) -> (i32, i32) {
    %c0_i32 = arith.constant 0 : i32
    %c0_i32_0 = arith.constant 0 : i32
    %c0_i32_1 = arith.constant 0 : i32
    return %c0_i32, %c0_i32_0 : i32, i32
  }
  func.func @transform_4(%arg0: i32, %arg1: i32) -> (i32, i32, i32, i32) {
    %c0_i32 = arith.constant 0 : i32
    %c0_i32_0 = arith.constant 0 : i32
    %c0_i32_1 = arith.constant 0 : i32
    return %arg0, %arg1, %c0_i32, %c0_i32_0 : i32, i32, i32, i32
  }
  func.func @transform_5(%arg0: i32, %arg1: i32) -> (i32, i32, i32) {
    %c0_i32 = arith.constant 0 : i32
    %c0_i32_0 = arith.constant 0 : i32
    %c0_i32_1 = arith.constant 0 : i32
    return %arg0, %c0_i32, %c0_i32_0 : i32, i32, i32
  }
}

module attributes {stable_mosaic.version = 11 : i64} {
  func.func @_bn_add_relu_kernel(%arg0: i32, %arg1: memref<512x128xbf16, #tpu.memory_space<vmem>>, %arg2: memref<1x128xf32, #tpu.memory_space<vmem>>, %arg3: memref<1x128xf32, #tpu.memory_space<vmem>>, %arg4: memref<512x128xf32, #tpu.memory_space<vmem>>, %arg5: memref<512x128xf32, #tpu.memory_space<vmem>>) attributes {dimension_semantics = [#tpu.dimension_semantics<parallel>], iteration_bounds = array<i64: 1>, scalar_prefetch = 0 : i64, scratch_operands = 0 : i64, tpu.core_type = #tpu.core_type<tc>, window_params = [{transform_indices = @transform_0, window_bounds = array<i64: 512, 128>}, {pipeline_mode = #tpu.pipeline_mode<synchronous>, transform_indices = @transform_1, window_bounds = array<i64: 1, 128>}, {pipeline_mode = #tpu.pipeline_mode<synchronous>, transform_indices = @transform_2, window_bounds = array<i64: 1, 128>}, {transform_indices = @transform_3, window_bounds = array<i64: 512, 128>}, {transform_indices = @transform_4, window_bounds = array<i64: 512, 128>}]} {
    %c0 = arith.constant 0 : index
    %c0_0 = arith.constant 0 : index
    %0 = vector.load %arg2[%c0, %c0_0] : memref<1x128xf32, #tpu.memory_space<vmem>>, vector<1x128xf32>
    %c0_1 = arith.constant 0 : index
    %c0_2 = arith.constant 0 : index
    %1 = vector.load %arg3[%c0_1, %c0_2] : memref<1x128xf32, #tpu.memory_space<vmem>>, vector<1x128xf32>
    %c0_3 = arith.constant 0 : index
    %c0_4 = arith.constant 0 : index
    %2 = vector.load %arg1[%c0_3, %c0_4] : memref<512x128xbf16, #tpu.memory_space<vmem>>, vector<512x128xbf16>
    %3 = arith.extf %2 : vector<512x128xbf16> to vector<512x128xf32>
    %4 = vector.broadcast %0 : vector<1x128xf32> to vector<512x128xf32>
    %5 = arith.mulf %3, %4 : vector<512x128xf32>
    %6 = vector.broadcast %1 : vector<1x128xf32> to vector<512x128xf32>
    %7 = arith.addf %5, %6 : vector<512x128xf32>
    %c0_5 = arith.constant 0 : index
    %c0_6 = arith.constant 0 : index
    %8 = vector.load %arg4[%c0_5, %c0_6] : memref<512x128xf32, #tpu.memory_space<vmem>>, vector<512x128xf32>
    %9 = arith.addf %7, %8 : vector<512x128xf32>
    %cst = arith.constant 0.000000e+00 : f32
    %10 = vector.broadcast %cst : f32 to vector<512x128xf32>
    %11 = arith.maximumf %9, %10 : vector<512x128xf32>
    %c0_7 = arith.constant 0 : index
    %c0_8 = arith.constant 0 : index
    %12 = vector.load %arg5[%c0_7, %c0_8] : memref<512x128xf32, #tpu.memory_space<vmem>>, vector<512x128xf32>
    tpu.vector_store %arg5[%c0_7, %c0_8], %11 {strides = array<i32>} : memref<512x128xf32, #tpu.memory_space<vmem>>, vector<512x128xf32>,
    return
  }
  func.func @transform_0(%arg0: i32) -> (i32, i32) {
    %c0_i32 = arith.constant 0 : i32
    %c0_i32_0 = arith.constant 0 : i32
    return %arg0, %c0_i32 : i32, i32
  }
  func.func @transform_1(%arg0: i32) -> (i32, i32) {
    %c0_i32 = arith.constant 0 : i32
    %c0_i32_0 = arith.constant 0 : i32
    %c0_i32_1 = arith.constant 0 : i32
    return %c0_i32, %c0_i32_0 : i32, i32
  }
  func.func @transform_2(%arg0: i32) -> (i32, i32) {
    %c0_i32 = arith.constant 0 : i32
    %c0_i32_0 = arith.constant 0 : i32
    %c0_i32_1 = arith.constant 0 : i32
    return %c0_i32, %c0_i32_0 : i32, i32
  }
  func.func @transform_3(%arg0: i32) -> (i32, i32) {
    %c0_i32 = arith.constant 0 : i32
    %c0_i32_0 = arith.constant 0 : i32
    return %arg0, %c0_i32 : i32, i32
  }
  func.func @transform_4(%arg0: i32) -> (i32, i32) {
    %c0_i32 = arith.constant 0 : i32
    %c0_i32_0 = arith.constant 0 : i32
    return %arg0, %c0_i32 : i32, i32
  }
}

module attributes {stable_mosaic.version = 11 : i64} {
  func.func @_conv3x3_kernel(%arg0: i32, %arg1: i32, %arg2: memref<1x16x16x128xbf16, #tpu.memory_space<vmem>>, %arg3: memref<1x128xf32, #tpu.memory_space<vmem>>, %arg4: memref<1x128xf32, #tpu.memory_space<vmem>>, %arg5: memref<1152x128xbf16, #tpu.memory_space<vmem>>, %arg6: memref<1x8x16x128xbf16, #tpu.memory_space<vmem>>, %arg7: memref<1x2x128xf32, #tpu.memory_space<vmem>>, %arg8: memref<10x18x128xbf16, #tpu.memory_space<vmem>>, %arg9: memref<8x16x1152xbf16, #tpu.memory_space<vmem>>) attributes {dimension_semantics = [#tpu.dimension_semantics<parallel>, #tpu.dimension_semantics<arbitrary>], iteration_bounds = array<i64: 2, 2>, scalar_prefetch = 0 : i64, scratch_operands = 2 : i64, tpu.core_type = #tpu.core_type<tc>, window_params = [{transform_indices = @transform_0, window_bounds = array<i64: 1, 16, 16, 128>}, {pipeline_mode = #tpu.pipeline_mode<synchronous>, transform_indices = @transform_1, window_bounds = array<i64: 1, 128>}, {pipeline_mode = #tpu.pipeline_mode<synchronous>, transform_indices = @transform_2, window_bounds = array<i64: 1, 128>}, {pipeline_mode = #tpu.pipeline_mode<synchronous>, transform_indices = @transform_3, window_bounds = array<i64: 1152, 128>}, {transform_indices = @transform_4, window_bounds = array<i64: 1, 8, 16, 128>}, {transform_indices = @transform_5, window_bounds = array<i64: 1, 2, 128>}]} {
    %c8_i32 = arith.constant 8 : i32
    %0 = arith.muli %arg1, %c8_i32 : i32
    %cst = arith.constant 0.000000e+00 : bf16
    %1 = vector.broadcast %cst : bf16 to vector<10x1x128xbf16>
    %c0 = arith.constant 0 : index
    %c0_0 = arith.constant 0 : index
    %c0_1 = arith.constant 0 : index
    %2 = vector.load %arg8[%c0, %c0_0, %c0_1] : memref<10x18x128xbf16, #tpu.memory_space<vmem>>, vector<10x1x128xbf16>
    tpu.vector_store %arg8[%c0, %c0_0, %c0_1], %1 {strides = array<i32>} : memref<10x18x128xbf16, #tpu.memory_space<vmem>>, vector<10x1x128xbf16>,
    %c0_2 = arith.constant 0 : index
    %c17 = arith.constant 17 : index
    %c0_3 = arith.constant 0 : index
    %3 = vector.load %arg8[%c0_2, %c17, %c0_3] : memref<10x18x128xbf16, #tpu.memory_space<vmem>>, vector<10x1x128xbf16>
    tpu.vector_store %arg8[%c0_2, %c17, %c0_3], %1 {strides = array<i32>} : memref<10x18x128xbf16, #tpu.memory_space<vmem>>, vector<10x1x128xbf16>,
    %c0_4 = arith.constant 0 : index
    %4 = arith.index_cast %0 : i32 to index
    %c0_5 = arith.constant 0 : index
    %c0_6 = arith.constant 0 : index
    %5 = vector.load %arg2[%c0_4, %4, %c0_5, %c0_6] : memref<1x16x16x128xbf16, #tpu.memory_space<vmem>>, vector<1x8x16x128xbf16>
    %6 = vector.shape_cast %5 : vector<1x8x16x128xbf16> to vector<8x16x128xbf16>
    %7 = arith.extf %6 : vector<8x16x128xbf16> to vector<8x16x128xf32>
    %c0_7 = arith.constant 0 : index
    %c0_8 = arith.constant 0 : index
    %8 = vector.load %arg3[%c0_7, %c0_8] : memref<1x128xf32, #tpu.memory_space<vmem>>, vector<1x128xf32>
    %9 = vector.shape_cast %8 : vector<1x128xf32> to vector<1x1x128xf32>
    %c0_9 = arith.constant 0 : index
    %c0_10 = arith.constant 0 : index
    %10 = vector.load %arg4[%c0_9, %c0_10] : memref<1x128xf32, #tpu.memory_space<vmem>>, vector<1x128xf32>
    %11 = vector.shape_cast %10 : vector<1x128xf32> to vector<1x1x128xf32>
    %12 = vector.broadcast %9 : vector<1x1x128xf32> to vector<8x16x128xf32>
    %13 = arith.mulf %7, %12 : vector<8x16x128xf32>
    %14 = vector.broadcast %11 : vector<1x1x128xf32> to vector<8x16x128xf32>
    %15 = arith.addf %13, %14 : vector<8x16x128xf32>
    %cst_11 = arith.constant 0.000000e+00 : f32
    %16 = vector.broadcast %cst_11 : f32 to vector<8x16x128xf32>
    %17 = arith.maximumf %15, %16 : vector<8x16x128xf32>
    %18 = arith.truncf %17 : vector<8x16x128xf32> to vector<8x16x128xbf16>
    %c1 = arith.constant 1 : index
    %c1_12 = arith.constant 1 : index
    %c0_13 = arith.constant 0 : index
    %19 = vector.load %arg8[%c1, %c1_12, %c0_13] : memref<10x18x128xbf16, #tpu.memory_space<vmem>>, vector<8x16x128xbf16>
    tpu.vector_store %arg8[%c1, %c1_12, %c0_13], %18 {strides = array<i32>} : memref<10x18x128xbf16, #tpu.memory_space<vmem>>, vector<8x16x128xbf16>,
    %cst_14 = arith.constant 0.000000e+00 : bf16
    %20 = vector.broadcast %cst_14 : bf16 to vector<1x16x128xbf16>
    %c0_i32 = arith.constant 0 : i32
    %21 = arith.cmpi eq, %arg1, %c0_i32 : i32
    %22 = arith.extui %21 : i1 to i32
    %c0_i32_15 = arith.constant 0 : i32
    %23 = arith.cmpi ne, %22, %c0_i32_15 : i32
    scf.if %23 {
      %c0_86 = arith.constant 0 : index
      %c1_87 = arith.constant 1 : index
      %c0_88 = arith.constant 0 : index
      %71 = vector.load %arg8[%c0_86, %c1_87, %c0_88] : memref<10x18x128xbf16, #tpu.memory_space<vmem>>, vector<1x16x128xbf16>
      tpu.vector_store %arg8[%c0_86, %c1_87, %c0_88], %20 {strides = array<i32>} : memref<10x18x128xbf16, #tpu.memory_space<vmem>>, vector<1x16x128xbf16>,
    } else {
    }
    %c0_i32_16 = arith.constant 0 : i32
    %24 = arith.cmpi sgt, %arg1, %c0_i32_16 : i32
    %25 = arith.extui %24 : i1 to i32
    %c0_i32_17 = arith.constant 0 : i32
    %26 = arith.cmpi ne, %25, %c0_i32_17 : i32
    scf.if %26 {
      %c1_i32_86 = arith.constant 1 : i32
      %71 = arith.subi %0, %c1_i32_86 : i32
      %c0_87 = arith.constant 0 : index
      %72 = arith.index_cast %71 : i32 to index
      %c0_88 = arith.constant 0 : index
      %c0_89 = arith.constant 0 : index
      %73 = vector.load %arg2[%c0_87, %72, %c0_88, %c0_89] : memref<1x16x16x128xbf16, #tpu.memory_space<vmem>>, vector<1x1x16x128xbf16>
      %74 = vector.shape_cast %73 : vector<1x1x16x128xbf16> to vector<1x16x128xbf16>
      %75 = arith.extf %74 : vector<1x16x128xbf16> to vector<1x16x128xf32>
      %c0_90 = arith.constant 0 : index
      %c0_91 = arith.constant 0 : index
      %76 = vector.load %arg3[%c0_90, %c0_91] : memref<1x128xf32, #tpu.memory_space<vmem>>, vector<1x128xf32>
      %77 = vector.shape_cast %76 : vector<1x128xf32> to vector<1x1x128xf32>
      %c0_92 = arith.constant 0 : index
      %c0_93 = arith.constant 0 : index
      %78 = vector.load %arg4[%c0_92, %c0_93] : memref<1x128xf32, #tpu.memory_space<vmem>>, vector<1x128xf32>
      %79 = vector.shape_cast %78 : vector<1x128xf32> to vector<1x1x128xf32>
      %80 = vector.broadcast %77 : vector<1x1x128xf32> to vector<1x16x128xf32>
      %81 = arith.mulf %75, %80 : vector<1x16x128xf32>
      %82 = vector.broadcast %79 : vector<1x1x128xf32> to vector<1x16x128xf32>
      %83 = arith.addf %81, %82 : vector<1x16x128xf32>
      %cst_94 = arith.constant 0.000000e+00 : f32
      %84 = vector.broadcast %cst_94 : f32 to vector<1x16x128xf32>
      %85 = arith.maximumf %83, %84 : vector<1x16x128xf32>
      %86 = arith.truncf %85 : vector<1x16x128xf32> to vector<1x16x128xbf16>
      %c0_95 = arith.constant 0 : index
      %c1_96 = arith.constant 1 : index
      %c0_97 = arith.constant 0 : index
      %87 = vector.load %arg8[%c0_95, %c1_96, %c0_97] : memref<10x18x128xbf16, #tpu.memory_space<vmem>>, vector<1x16x128xbf16>
      tpu.vector_store %arg8[%c0_95, %c1_96, %c0_97], %86 {strides = array<i32>} : memref<10x18x128xbf16, #tpu.memory_space<vmem>>, vector<1x16x128xbf16>,
    } else {
    }
    %c1_i32 = arith.constant 1 : i32
    %27 = arith.cmpi eq, %arg1, %c1_i32 : i32
    %28 = arith.extui %27 : i1 to i32
    %c0_i32_18 = arith.constant 0 : i32
    %29 = arith.cmpi ne, %28, %c0_i32_18 : i32
    scf.if %29 {
      %c9 = arith.constant 9 : index
      %c1_86 = arith.constant 1 : index
      %c0_87 = arith.constant 0 : index
      %71 = vector.load %arg8[%c9, %c1_86, %c0_87] : memref<10x18x128xbf16, #tpu.memory_space<vmem>>, vector<1x16x128xbf16>
      tpu.vector_store %arg8[%c9, %c1_86, %c0_87], %20 {strides = array<i32>} : memref<10x18x128xbf16, #tpu.memory_space<vmem>>, vector<1x16x128xbf16>,
    } else {
    }
    %c1_i32_19 = arith.constant 1 : i32
    %30 = arith.cmpi slt, %arg1, %c1_i32_19 : i32
    %31 = arith.extui %30 : i1 to i32
    %c0_i32_20 = arith.constant 0 : i32
    %32 = arith.cmpi ne, %31, %c0_i32_20 : i32
    scf.if %32 {
      %c8_i32_86 = arith.constant 8 : i32
      %71 = arith.addi %0, %c8_i32_86 : i32
      %c0_87 = arith.constant 0 : index
      %72 = arith.index_cast %71 : i32 to index
      %c0_88 = arith.constant 0 : index
      %c0_89 = arith.constant 0 : index
      %73 = vector.load %arg2[%c0_87, %72, %c0_88, %c0_89] : memref<1x16x16x128xbf16, #tpu.memory_space<vmem>>, vector<1x1x16x128xbf16>
      %74 = vector.shape_cast %73 : vector<1x1x16x128xbf16> to vector<1x16x128xbf16>
      %75 = arith.extf %74 : vector<1x16x128xbf16> to vector<1x16x128xf32>
      %c0_90 = arith.constant 0 : index
      %c0_91 = arith.constant 0 : index
      %76 = vector.load %arg3[%c0_90, %c0_91] : memref<1x128xf32, #tpu.memory_space<vmem>>, vector<1x128xf32>
      %77 = vector.shape_cast %76 : vector<1x128xf32> to vector<1x1x128xf32>
      %c0_92 = arith.constant 0 : index
      %c0_93 = arith.constant 0 : index
      %78 = vector.load %arg4[%c0_92, %c0_93] : memref<1x128xf32, #tpu.memory_space<vmem>>, vector<1x128xf32>
      %79 = vector.shape_cast %78 : vector<1x128xf32> to vector<1x1x128xf32>
      %80 = vector.broadcast %77 : vector<1x1x128xf32> to vector<1x16x128xf32>
      %81 = arith.mulf %75, %80 : vector<1x16x128xf32>
      %82 = vector.broadcast %79 : vector<1x1x128xf32> to vector<1x16x128xf32>
      %83 = arith.addf %81, %82 : vector<1x16x128xf32>
      %cst_94 = arith.constant 0.000000e+00 : f32
      %84 = vector.broadcast %cst_94 : f32 to vector<1x16x128xf32>
      %85 = arith.maximumf %83, %84 : vector<1x16x128xf32>
      %86 = arith.truncf %85 : vector<1x16x128xf32> to vector<1x16x128xbf16>
      %c9 = arith.constant 9 : index
      %c1_95 = arith.constant 1 : index
      %c0_96 = arith.constant 0 : index
      %87 = vector.load %arg8[%c9, %c1_95, %c0_96] : memref<10x18x128xbf16, #tpu.memory_space<vmem>>, vector<1x16x128xbf16>
      tpu.vector_store %arg8[%c9, %c1_95, %c0_96], %86 {strides = array<i32>} : memref<10x18x128xbf16, #tpu.memory_space<vmem>>, vector<1x16x128xbf16>,
    } else {
    }
    %c0_21 = arith.constant 0 : index
    %c0_22 = arith.constant 0 : index
    %c0_23 = arith.constant 0 : index
    %33 = vector.load %arg8[%c0_21, %c0_22, %c0_23] : memref<10x18x128xbf16, #tpu.memory_space<vmem>>, vector<8x16x128xbf16>
    %c0_24 = arith.constant 0 : index
    %c0_25 = arith.constant 0 : index
    %c0_26 = arith.constant 0 : index
    %34 = vector.load %arg9[%c0_24, %c0_25, %c0_26] : memref<8x16x1152xbf16, #tpu.memory_space<vmem>>, vector<8x16x128xbf16>
    tpu.vector_store %arg9[%c0_24, %c0_25, %c0_26], %33 {strides = array<i32>} : memref<8x16x1152xbf16, #tpu.memory_space<vmem>>, vector<8x16x128xbf16>,
    %c0_27 = arith.constant 0 : index
    %c1_28 = arith.constant 1 : index
    %c0_29 = arith.constant 0 : index
    %35 = vector.load %arg8[%c0_27, %c1_28, %c0_29] : memref<10x18x128xbf16, #tpu.memory_space<vmem>>, vector<8x16x128xbf16>
    %c0_30 = arith.constant 0 : index
    %c0_31 = arith.constant 0 : index
    %c128 = arith.constant 128 : index
    %36 = vector.load %arg9[%c0_30, %c0_31, %c128] : memref<8x16x1152xbf16, #tpu.memory_space<vmem>>, vector<8x16x128xbf16>
    tpu.vector_store %arg9[%c0_30, %c0_31, %c128], %35 {strides = array<i32>} : memref<8x16x1152xbf16, #tpu.memory_space<vmem>>, vector<8x16x128xbf16>,
    %c0_32 = arith.constant 0 : index
    %c2 = arith.constant 2 : index
    %c0_33 = arith.constant 0 : index
    %37 = vector.load %arg8[%c0_32, %c2, %c0_33] : memref<10x18x128xbf16, #tpu.memory_space<vmem>>, vector<8x16x128xbf16>
    %c0_34 = arith.constant 0 : index
    %c0_35 = arith.constant 0 : index
    %c256 = arith.constant 256 : index
    %38 = vector.load %arg9[%c0_34, %c0_35, %c256] : memref<8x16x1152xbf16, #tpu.memory_space<vmem>>, vector<8x16x128xbf16>
    tpu.vector_store %arg9[%c0_34, %c0_35, %c256], %37 {strides = array<i32>} : memref<8x16x1152xbf16, #tpu.memory_space<vmem>>, vector<8x16x128xbf16>,
    %c1_36 = arith.constant 1 : index
    %c0_37 = arith.constant 0 : index
    %c0_38 = arith.constant 0 : index
    %39 = vector.load %arg8[%c1_36, %c0_37, %c0_38] : memref<10x18x128xbf16, #tpu.memory_space<vmem>>, vector<8x16x128xbf16>
    %c0_39 = arith.constant 0 : index
    %c0_40 = arith.constant 0 : index
    %c384 = arith.constant 384 : index
    %40 = vector.load %arg9[%c0_39, %c0_40, %c384] : memref<8x16x1152xbf16, #tpu.memory_space<vmem>>, vector<8x16x128xbf16>
    tpu.vector_store %arg9[%c0_39, %c0_40, %c384], %39 {strides = array<i32>} : memref<8x16x1152xbf16, #tpu.memory_space<vmem>>, vector<8x16x128xbf16>,
    %c1_41 = arith.constant 1 : index
    %c1_42 = arith.constant 1 : index
    %c0_43 = arith.constant 0 : index
    %41 = vector.load %arg8[%c1_41, %c1_42, %c0_43] : memref<10x18x128xbf16, #tpu.memory_space<vmem>>, vector<8x16x128xbf16>
    %c0_44 = arith.constant 0 : index
    %c0_45 = arith.constant 0 : index
    %c512 = arith.constant 512 : index
    %42 = vector.load %arg9[%c0_44, %c0_45, %c512] : memref<8x16x1152xbf16, #tpu.memory_space<vmem>>, vector<8x16x128xbf16>
    tpu.vector_store %arg9[%c0_44, %c0_45, %c512], %41 {strides = array<i32>} : memref<8x16x1152xbf16, #tpu.memory_space<vmem>>, vector<8x16x128xbf16>,
    %c1_46 = arith.constant 1 : index
    %c2_47 = arith.constant 2 : index
    %c0_48 = arith.constant 0 : index
    %43 = vector.load %arg8[%c1_46, %c2_47, %c0_48] : memref<10x18x128xbf16, #tpu.memory_space<vmem>>, vector<8x16x128xbf16>
    %c0_49 = arith.constant 0 : index
    %c0_50 = arith.constant 0 : index
    %c640 = arith.constant 640 : index
    %44 = vector.load %arg9[%c0_49, %c0_50, %c640] : memref<8x16x1152xbf16, #tpu.memory_space<vmem>>, vector<8x16x128xbf16>
    tpu.vector_store %arg9[%c0_49, %c0_50, %c640], %43 {strides = array<i32>} : memref<8x16x1152xbf16, #tpu.memory_space<vmem>>, vector<8x16x128xbf16>,
    %c2_51 = arith.constant 2 : index
    %c0_52 = arith.constant 0 : index
    %c0_53 = arith.constant 0 : index
    %45 = vector.load %arg8[%c2_51, %c0_52, %c0_53] : memref<10x18x128xbf16, #tpu.memory_space<vmem>>, vector<8x16x128xbf16>
    %c0_54 = arith.constant 0 : index
    %c0_55 = arith.constant 0 : index
    %c768 = arith.constant 768 : index
    %46 = vector.load %arg9[%c0_54, %c0_55, %c768] : memref<8x16x1152xbf16, #tpu.memory_space<vmem>>, vector<8x16x128xbf16>
    tpu.vector_store %arg9[%c0_54, %c0_55, %c768], %45 {strides = array<i32>} : memref<8x16x1152xbf16, #tpu.memory_space<vmem>>, vector<8x16x128xbf16>,
    %c2_56 = arith.constant 2 : index
    %c1_57 = arith.constant 1 : index
    %c0_58 = arith.constant 0 : index
    %47 = vector.load %arg8[%c2_56, %c1_57, %c0_58] : memref<10x18x128xbf16, #tpu.memory_space<vmem>>, vector<8x16x128xbf16>
    %c0_59 = arith.constant 0 : index
    %c0_60 = arith.constant 0 : index
    %c896 = arith.constant 896 : index
    %48 = vector.load %arg9[%c0_59, %c0_60, %c896] : memref<8x16x1152xbf16, #tpu.memory_space<vmem>>, vector<8x16x128xbf16>
    tpu.vector_store %arg9[%c0_59, %c0_60, %c896], %47 {strides = array<i32>} : memref<8x16x1152xbf16, #tpu.memory_space<vmem>>, vector<8x16x128xbf16>,
    %c2_61 = arith.constant 2 : index
    %c2_62 = arith.constant 2 : index
    %c0_63 = arith.constant 0 : index
    %49 = vector.load %arg8[%c2_61, %c2_62, %c0_63] : memref<10x18x128xbf16, #tpu.memory_space<vmem>>, vector<8x16x128xbf16>
    %c0_64 = arith.constant 0 : index
    %c0_65 = arith.constant 0 : index
    %c1024 = arith.constant 1024 : index
    %50 = vector.load %arg9[%c0_64, %c0_65, %c1024] : memref<8x16x1152xbf16, #tpu.memory_space<vmem>>, vector<8x16x128xbf16>
    tpu.vector_store %arg9[%c0_64, %c0_65, %c1024], %49 {strides = array<i32>} : memref<8x16x1152xbf16, #tpu.memory_space<vmem>>, vector<8x16x128xbf16>,
    %c0_66 = arith.constant 0 : index
    %c0_67 = arith.constant 0 : index
    %c0_68 = arith.constant 0 : index
    %51 = vector.load %arg9[%c0_66, %c0_67, %c0_68] : memref<8x16x1152xbf16, #tpu.memory_space<vmem>>, vector<8x16x1152xbf16>
    %52 = vector.shape_cast %51 : vector<8x16x1152xbf16> to vector<128x1152xbf16>
    %c0_69 = arith.constant 0 : index
    %c0_70 = arith.constant 0 : index
    %53 = vector.load %arg5[%c0_69, %c0_70] : memref<1152x128xbf16, #tpu.memory_space<vmem>>, vector<1152x128xbf16>
    %cst_71 = arith.constant dense<0.000000e+00> : vector<128x128xf32>
    %54 = tpu.matmul %52, %53, %cst_71 {dimension_numbers = #tpu.dot_dimension_numbers<[1], [0], [0], [1], [0, 0, 1, 1], [], []>} : vector<128x1152xbf16>, vector<1152x128xbf16>, vector<128x128xf32> -> vector<128x128xf32>
    %55 = vector.shape_cast %54 : vector<128x128xf32> to vector<1x8x16x128xf32>
    %56 = arith.truncf %55 : vector<1x8x16x128xf32> to vector<1x8x16x128xbf16>
    %c0_72 = arith.constant 0 : index
    %c0_73 = arith.constant 0 : index
    %c0_74 = arith.constant 0 : index
    %c0_75 = arith.constant 0 : index
    %57 = vector.load %arg6[%c0_72, %c0_73, %c0_74, %c0_75] : memref<1x8x16x128xbf16, #tpu.memory_space<vmem>>, vector<1x8x16x128xbf16>
    tpu.vector_store %arg6[%c0_72, %c0_73, %c0_74, %c0_75], %56 {strides = array<i32>} : memref<1x8x16x128xbf16, #tpu.memory_space<vmem>>, vector<1x8x16x128xbf16>,
    %c0_i32_76 = arith.constant 0 : i32
    %58 = arith.cmpi eq, %arg1, %c0_i32_76 : i32
    %59 = arith.extui %58 : i1 to i32
    %c0_i32_77 = arith.constant 0 : i32
    %60 = arith.cmpi ne, %59, %c0_i32_77 : i32
    scf.if %60 {
      %cst_86 = arith.constant 0.000000e+00 : f32
      %71 = vector.broadcast %cst_86 : f32 to vector<1x2x128xf32>
      %c0_87 = arith.constant 0 : index
      %c0_88 = arith.constant 0 : index
      %c0_89 = arith.constant 0 : index
      %72 = vector.load %arg7[%c0_87, %c0_88, %c0_89] : memref<1x2x128xf32, #tpu.memory_space<vmem>>, vector<1x2x128xf32>
      tpu.vector_store %arg7[%c0_87, %c0_88, %c0_89], %71 {strides = array<i32>} : memref<1x2x128xf32, #tpu.memory_space<vmem>>, vector<1x2x128xf32>,
    } else {
    }
    %cst_78 = arith.constant dense<0.000000e+00> : vector<128xf32>
    %61 = vector.multi_reduction <add>, %54, %cst_78 [0] : vector<128x128xf32> to vector<128xf32>
    %62 = vector.shape_cast %61 : vector<128xf32> to vector<1x128xf32>
    %63 = arith.mulf %54, %54 : vector<128x128xf32>
    %cst_79 = arith.constant dense<0.000000e+00> : vector<128xf32>
    %64 = vector.multi_reduction <add>, %63, %cst_79 [0] : vector<128x128xf32> to vector<128xf32>
    %65 = vector.shape_cast %64 : vector<128xf32> to vector<1x128xf32>
    %c0_80 = arith.constant 0 : index
    %c0_81 = arith.constant 0 : index
    %c0_82 = arith.constant 0 : index
    %66 = vector.load %arg7[%c0_80, %c0_81, %c0_82] : memref<1x2x128xf32, #tpu.memory_space<vmem>>, vector<1x2x128xf32>
    %67 = tpu.concatenate %62, %65 in 0 : vector<1x128xf32>, vector<1x128xf32> -> vector<2x128xf32>
    %68 = vector.shape_cast %67 : vector<2x128xf32> to vector<1x2x128xf32>
    %69 = arith.addf %66, %68 : vector<1x2x128xf32>
    %c0_83 = arith.constant 0 : index
    %c0_84 = arith.constant 0 : index
    %c0_85 = arith.constant 0 : index
    %70 = vector.load %arg7[%c0_83, %c0_84, %c0_85] : memref<1x2x128xf32, #tpu.memory_space<vmem>>, vector<1x2x128xf32>
    tpu.vector_store %arg7[%c0_83, %c0_84, %c0_85], %69 {strides = array<i32>} : memref<1x2x128xf32, #tpu.memory_space<vmem>>, vector<1x2x128xf32>,
    return
  }
  func.func @transform_0(%arg0: i32, %arg1: i32) -> (i32, i32, i32, i32) {
    %c0_i32 = arith.constant 0 : i32
    %c0_i32_0 = arith.constant 0 : i32
    %c0_i32_1 = arith.constant 0 : i32
    %c0_i32_2 = arith.constant 0 : i32
    return %arg0, %c0_i32, %c0_i32_0, %c0_i32_1 : i32, i32, i32, i32
  }
  func.func @transform_1(%arg0: i32, %arg1: i32) -> (i32, i32) {
    %c0_i32 = arith.constant 0 : i32
    %c0_i32_0 = arith.constant 0 : i32
    %c0_i32_1 = arith.constant 0 : i32
    return %c0_i32, %c0_i32_0 : i32, i32
  }
  func.func @transform_2(%arg0: i32, %arg1: i32) -> (i32, i32) {
    %c0_i32 = arith.constant 0 : i32
    %c0_i32_0 = arith.constant 0 : i32
    %c0_i32_1 = arith.constant 0 : i32
    return %c0_i32, %c0_i32_0 : i32, i32
  }
  func.func @transform_3(%arg0: i32, %arg1: i32) -> (i32, i32) {
    %c0_i32 = arith.constant 0 : i32
    %c0_i32_0 = arith.constant 0 : i32
    %c0_i32_1 = arith.constant 0 : i32
    return %c0_i32, %c0_i32_0 : i32, i32
  }
  func.func @transform_4(%arg0: i32, %arg1: i32) -> (i32, i32, i32, i32) {
    %c0_i32 = arith.constant 0 : i32
    %c0_i32_0 = arith.constant 0 : i32
    %c0_i32_1 = arith.constant 0 : i32
    return %arg0, %arg1, %c0_i32, %c0_i32_0 : i32, i32, i32, i32
  }
  func.func @transform_5(%arg0: i32, %arg1: i32) -> (i32, i32, i32) {
    %c0_i32 = arith.constant 0 : i32
    %c0_i32_0 = arith.constant 0 : i32
    %c0_i32_1 = arith.constant 0 : i32
    return %arg0, %c0_i32, %c0_i32_0 : i32, i32, i32
  }
}

</mosaic_0001>

<llo_original>
// kernel: basic_block.5
$region0: #{basic_block.5}
  #allocation0 [shape = 'u32[]', space=smem, size = 0x4, offset = 0x4, fixed_abs, tag = 'smem constant byte address 0x4 - core index']
  #allocation1 [shape = 'u32[72,128]{1,0:T(1,128)}', space=vmem, size = 0x9000, scoped, tag = 'internal scratch']
  %s0 = inlined_call_operand.vmem [shape: bf16[512,128], index: 0, kind: input, shape index: {}]
  %s1 = inlined_call_operand.vmem [shape: f32[1,128], index: 1, kind: input, shape index: {}]
  %s2 = inlined_call_operand.vmem [shape: f32[1,128], index: 2, kind: input, shape index: {}]
  %s3 = inlined_call_operand.vmem [shape: f32[512,128], index: 3, kind: input, shape index: {}]
  %s4 = inlined_call_operand.vmem [shape: f32[512,128], index: 4, kind: output, shape index: {}]
  %s5 = sld [smem:[#allocation0]]
  $region26: #{basic_block.5} parent=0
    _
  %s7 = ssub.s32 1, %s5
  %s8 = scalar_select 0, %s7, %s5
  // Predicated region
  $region2: #{basic_block.5} parent=0 // pred_check
    _
  $region3: #{basic_block.5} parent=0 // pred_check_branch
    %10 = sbr.rel (0) target = $region5
  $region4: #{basic_block.5} parent=0 // pred_region
    _
  $region5: #{basic_block.5} parent=0 // pred_fallthru
    _
  // Predicated region
  $region6: #{basic_block.5} parent=0 // pred_check
    _
  $region7: #{basic_block.5} parent=0 // pred_check_branch
    %12 = sbr.rel (0) target = $region9
  $region8: #{basic_block.5} parent=0 // pred_region
    _
  $region9: #{basic_block.5} parent=0 // pred_fallthru
    _
  // Predicated region
  $region10: #{basic_block.5} parent=0 // pred_check
    _
  $region11: #{basic_block.5} parent=0 // pred_check_branch
    %14 = sbr.rel (0) target = $region13
  $region12: #{basic_block.5} parent=0 // pred_region
    _
  $region13: #{basic_block.5} parent=0 // pred_fallthru
    _
  // Predicated region
  $region14: #{basic_block.5} parent=0 // pred_check
    _
  $region15: #{basic_block.5} parent=0 // pred_check_branch
    %16 = sbr.rel (0) target = $region17
  $region16: #{basic_block.5} parent=0 // pred_region
    _
  $region17: #{basic_block.5} parent=0 // pred_fallthru
    _
  %v17 = vld [vmem:[%s1] sm:$0x1]
  %v18 = vld [vmem:[%s2] sm:$0x1]
  %v19 = vld [vmem:[%s0] sm:$0xf]
  %v20 = vld [vmem:[%s0 + $0x4] sm:$0xf]
  %v21 = vld [vmem:[%s0 + $0x8] sm:$0xf]
  %v22 = vld [vmem:[%s0 + $0xc] sm:$0xf]
  %v23 = vld [vmem:[%s0 + $0x10] sm:$0xf]
  %v24 = vld [vmem:[%s0 + $0x14] sm:$0xf]
  %v25 = vld [vmem:[%s0 + $0x18] sm:$0xf]
  %v26 = vld [vmem:[%s0 + $0x1c] sm:$0xf]
  %v27 = vld [vmem:[%s0 + $0x20] sm:$0xf]
  %v28 = vld [vmem:[%s0 + $0x24] sm:$0xf]
  %v29 = vld [vmem:[%s0 + $0x28] sm:$0xf]
  %v30 = vld [vmem:[%s0 + $0x2c] sm:$0xf]
  %v31 = vld [vmem:[%s0 + $0x30] sm:$0xf]
  %v32 = vld [vmem:[%s0 + $0x34] sm:$0xf]
  %v33 = vld [vmem:[%s0 + $0x38] sm:$0xf]
  %v34 = vld [vmem:[%s0 + $0x3c] sm:$0xf]
  %v35 = vld [vmem:[%s0 + $0x40] sm:$0xf]
  %v36 = vld [vmem:[%s0 + $0x44] sm:$0xf]
  %v37 = vld [vmem:[%s0 + $0x48] sm:$0xf]
  %v38 = vld [vmem:[%s0 + $0x4c] sm:$0xf]
  %v39 = vld [vmem:[%s0 + $0x50] sm:$0xf]
  %v40 = vld [vmem:[%s0 + $0x54] sm:$0xf]
  %v41 = vld [vmem:[%s0 + $0x58] sm:$0xf]
  %v42 = vld [vmem:[%s0 + $0x5c] sm:$0xf]
  %v43 = vld [vmem:[%s0 + $0x60] sm:$0xf]
  %v44 = vld [vmem:[%s0 + $0x64] sm:$0xf]
  %v45 = vld [vmem:[%s0 + $0x68] sm:$0xf]
  %v46 = vld [vmem:[%s0 + $0x6c] sm:$0xf]
  %v47 = vld [vmem:[%s0 + $0x70] sm:$0xf]
  %v48 = vld [vmem:[%s0 + $0x74] sm:$0xf]
  %v49 = vld [vmem:[%s0 + $0x78] sm:$0xf]
  %v50 = vld [vmem:[%s0 + $0x7c] sm:$0xf]
  %v51 = vld [vmem:[%s0 + $0x80] sm:$0xf]
  %v52 = vld [vmem:[%s0 + $0x84] sm:$0xf]
  %v53 = vld [vmem:[%s0 + $0x88] sm:$0xf]
  %v54 = vld [vmem:[%s0 + $0x8c] sm:$0xf]
  %v55 = vld [vmem:[%s0 + $0x90] sm:$0xf]
  %v56 = vld [vmem:[%s0 + $0x94] sm:$0xf]
  %v57 = vld [vmem:[%s0 + $0x98] sm:$0xf]
  %v58 = vld [vmem:[%s0 + $0x9c] sm:$0xf]
  %v59 = vld [vmem:[%s0 + $0xa0] sm:$0xf]
  %v60 = vld [vmem:[%s0 + $0xa4] sm:$0xf]
  %v61 = vld [vmem:[%s0 + $0xa8] sm:$0xf]
  %v62 = vld [vmem:[%s0 + $0xac] sm:$0xf]
  %v63 = vld [vmem:[%s0 + $0xb0] sm:$0xf]
  %v64 = vld [vmem:[%s0 + $0xb4] sm:$0xf]
  %v65 = vld [vmem:[%s0 + $0xb8] sm:$0xf]
  %v66 = vld [vmem:[%s0 + $0xbc] sm:$0xf]
  %v67 = vld [vmem:[%s0 + $0xc0] sm:$0xf]
  %v68 = vld [vmem:[%s0 + $0xc4] sm:$0xf]
  %v69 = vld [vmem:[%s0 + $0xc8] sm:$0xf]
  %v70 = vld [vmem:[%s0 + $0xcc] sm:$0xf]
  %v71 = vld [vmem:[%s0 + $0xd0] sm:$0xf]
  %v72 = vld [vmem:[%s0 + $0xd4] sm:$0xf]
  %v73 = vld [vmem:[%s0 + $0xd8] sm:$0xf]
  %v74 = vld [vmem:[%s0 + $0xdc] sm:$0xf]
  %v75 = vld [vmem:[%s0 + $0xe0] sm:$0xf]
  %v76 = vld [vmem:[%s0 + $0xe4] sm:$0xf]
  %v77 = vld [vmem:[%s0 + $0xe8] sm:$0xf]
  %v78 = vld [vmem:[%s0 + $0xec] sm:$0xf]
  %v79 = vld [vmem:[%s0 + $0xf0] sm:$0xf]
  %v80 = vld [vmem:[%s0 + $0xf4] sm:$0xf]
  %v81 = vld [vmem:[%s0 + $0xf8] sm:$0xf]
  %v82 = vld [vmem:[%s0 + $0xfc] sm:$0xf]
  %v83 = vunpack.c.l.bf16 %v19
  %v84 = vunpack.c.l.bf16 %v20
  %v85 = vunpack.c.l.bf16 %v21
  %v86 = vunpack.c.l.bf16 %v22
  %v87 = vunpack.c.l.bf16 %v23
  %v88 = vunpack.c.l.bf16 %v24
  %v89 = vunpack.c.l.bf16 %v25
  %v90 = vunpack.c.l.bf16 %v26
  %v91 = vunpack.c.l.bf16 %v27
  %v92 = vunpack.c.l.bf16 %v28
  %v93 = vunpack.c.l.bf16 %v29
  %v94 = vunpack.c.l.bf16 %v30
  %v95 = vunpack.c.l.bf16 %v31
  %v96 = vunpack.c.l.bf16 %v32
  %v97 = vunpack.c.l.bf16 %v33
  %v98 = vunpack.c.l.bf16 %v34
  %v99 = vunpack.c.l.bf16 %v35
  %v100 = vunpack.c.l.bf16 %v36
  %v101 = vunpack.c.l.bf16 %v37
  %v102 = vunpack.c.l.bf16 %v38
  %v103 = vunpack.c.l.bf16 %v39
  %v104 = vunpack.c.l.bf16 %v40
  %v105 = vunpack.c.l.bf16 %v41
  %v106 = vunpack.c.l.bf16 %v42
  %v107 = vunpack.c.l.bf16 %v43
  %v108 = vunpack.c.l.bf16 %v44
  %v109 = vunpack.c.l.bf16 %v45
  %v110 = vunpack.c.l.bf16 %v46
  %v111 = vunpack.c.l.bf16 %v47
  %v112 = vunpack.c.l.bf16 %v48
  %v113 = vunpack.c.l.bf16 %v49
  %v114 = vunpack.c.l.bf16 %v50
  %v115 = vunpack.c.l.bf16 %v51
  %v116 = vunpack.c.l.bf16 %v52
  %v117 = vunpack.c.l.bf16 %v53
  %v118 = vunpack.c.l.bf16 %v54
  %v119 = vunpack.c.l.bf16 %v55
  %v120 = vunpack.c.l.bf16 %v56
  %v121 = vunpack.c.l.bf16 %v57
  %v122 = vunpack.c.l.bf16 %v58
  %v123 = vunpack.c.l.bf16 %v59
  %v124 = vunpack.c.l.bf16 %v60
  %v125 = vunpack.c.l.bf16 %v61
  %v126 = vunpack.c.l.bf16 %v62
  %v127 = vunpack.c.l.bf16 %v63
  %v128 = vunpack.c.l.bf16 %v64
  %v129 = vunpack.c.l.bf16 %v65
  %v130 = vunpack.c.l.bf16 %v66
  %v131 = vunpack.c.l.bf16 %v67
  %v132 = vunpack.c.l.bf16 %v68
  %v133 = vunpack.c.l.bf16 %v69
  %v134 = vunpack.c.l.bf16 %v70
  %v135 = vunpack.c.l.bf16 %v71
  %v136 = vunpack.c.l.bf16 %v72
  %v137 = vunpack.c.l.bf16 %v73
  %v138 = vunpack.c.l.bf16 %v74
  %v139 = vunpack.c.l.bf16 %v75
  %v140 = vunpack.c.l.bf16 %v76
  %v141 = vunpack.c.l.bf16 %v77
  %v142 = vunpack.c.l.bf16 %v78
  %v143 = vunpack.c.l.bf16 %v79
  %v144 = vunpack.c.l.bf16 %v80
  %v145 = vunpack.c.l.bf16 %v81
  %v146 = vunpack.c.l.bf16 %v82
  %v148 = vperm.slane %v17, 0
  %v150 = vmul.f32 %v83, %v148
  %v151 = vmul.f32 %v84, %v148
  %v152 = vmul.f32 %v85, %v148
  %v153 = vmul.f32 %v86, %v148
  %v154 = vmul.f32 %v87, %v148
  %v155 = vmul.f32 %v88, %v148
  %v156 = vmul.f32 %v89, %v148
  %v157 = vmul.f32 %v90, %v148
  %v158 = vmul.f32 %v91, %v148
  %v159 = vmul.f32 %v92, %v148
  %v160 = vmul.f32 %v93, %v148
  %v161 = vmul.f32 %v94, %v148
  %v162 = vmul.f32 %v95, %v148
  %v163 = vmul.f32 %v96, %v148
  %v164 = vmul.f32 %v97, %v148
  %v165 = vmul.f32 %v98, %v148
  %v166 = vmul.f32 %v99, %v148
  %v167 = vmul.f32 %v100, %v148
  %v168 = vmul.f32 %v101, %v148
  %v169 = vmul.f32 %v102, %v148
  %v170 = vmul.f32 %v103, %v148
  %v171 = vmul.f32 %v104, %v148
  %v172 = vmul.f32 %v105, %v148
  %v173 = vmul.f32 %v106, %v148
  %v174 = vmul.f32 %v107, %v148
  %v175 = vmul.f32 %v108, %v148
  %v176 = vmul.f32 %v109, %v148
  %v177 = vmul.f32 %v110, %v148
  %v178 = vmul.f32 %v111, %v148
  %v179 = vmul.f32 %v112, %v148
  %v180 = vmul.f32 %v113, %v148
  %v181 = vmul.f32 %v114, %v148
  %v182 = vmul.f32 %v115, %v148
  %v183 = vmul.f32 %v116, %v148
  %v184 = vmul.f32 %v117, %v148
  %v185 = vmul.f32 %v118, %v148
  %v186 = vmul.f32 %v119, %v148
  %v187 = vmul.f32 %v120, %v148
  %v188 = vmul.f32 %v121, %v148
  %v189 = vmul.f32 %v122, %v148
  %v190 = vmul.f32 %v123, %v148
  %v191 = vmul.f32 %v124, %v148
  %v192 = vmul.f32 %v125, %v148
  %v193 = vmul.f32 %v126, %v148
  %v194 = vmul.f32 %v127, %v148
  %v195 = vmul.f32 %v128, %v148
  %v196 = vmul.f32 %v129, %v148
  %v197 = vmul.f32 %v130, %v148
  %v198 = vmul.f32 %v131, %v148
  %v199 = vmul.f32 %v132, %v148
  %v200 = vmul.f32 %v133, %v148
  %v201 = vmul.f32 %v134, %v148
  %v202 = vmul.f32 %v135, %v148
  %v203 = vmul.f32 %v136, %v148
  %v204 = vmul.f32 %v137, %v148
  %v205 = vmul.f32 %v138, %v148
  %v206 = vmul.f32 %v139, %v148
  %v207 = vmul.f32 %v140, %v148
  %v208 = vmul.f32 %v141, %v148
  %v209 = vmul.f32 %v142, %v148
  %v210 = vmul.f32 %v143, %v148
  %v211 = vmul.f32 %v144, %v148
  %v212 = vmul.f32 %v145, %v148
  %v213 = vmul.f32 %v146, %v148
  %v215 = vperm.slane %v18, 0
  %v217 = vadd.f32 %v150, %v215
  %v218 = vadd.f32 %v151, %v215
  %v219 = vadd.f32 %v152, %v215
  %v220 = vadd.f32 %v153, %v215
  %v221 = vadd.f32 %v154, %v215
  %v222 = vadd.f32 %v155, %v215
  %v223 = vadd.f32 %v156, %v215
  %v224 = vadd.f32 %v157, %v215
  %v225 = vadd.f32 %v158, %v215
  %v226 = vadd.f32 %v159, %v215
  %v227 = vadd.f32 %v160, %v215
  %v228 = vadd.f32 %v161, %v215
  %v229 = vadd.f32 %v162, %v215
  %v230 = vadd.f32 %v163, %v215
  %v231 = vadd.f32 %v164, %v215
  %v232 = vadd.f32 %v165, %v215
  %v233 = vadd.f32 %v166, %v215
  %v234 = vadd.f32 %v167, %v215
  %v235 = vadd.f32 %v168, %v215
  %v236 = vadd.f32 %v169, %v215
  %v237 = vadd.f32 %v170, %v215
  %v238 = vadd.f32 %v171, %v215
  %v239 = vadd.f32 %v172, %v215
  %v240 = vadd.f32 %v173, %v215
  %v241 = vadd.f32 %v174, %v215
  %v242 = vadd.f32 %v175, %v215
  %v243 = vadd.f32 %v176, %v215
  %v244 = vadd.f32 %v177, %v215
  %v245 = vadd.f32 %v178, %v215
  %v246 = vadd.f32 %v179, %v215
  %v247 = vadd.f32 %v180, %v215
  %v248 = vadd.f32 %v181, %v215
  %v249 = vadd.f32 %v182, %v215
  %v250 = vadd.f32 %v183, %v215
  %v251 = vadd.f32 %v184, %v215
  %v252 = vadd.f32 %v185, %v215
  %v253 = vadd.f32 %v186, %v215
  %v254 = vadd.f32 %v187, %v215
  %v255 = vadd.f32 %v188, %v215
  %v256 = vadd.f32 %v189, %v215
  %v257 = vadd.f32 %v190, %v215
  %v258 = vadd.f32 %v191, %v215
  %v259 = vadd.f32 %v192, %v215
  %v260 = vadd.f32 %v193, %v215
  %v261 = vadd.f32 %v194, %v215
  %v262 = vadd.f32 %v195, %v215
  %v263 = vadd.f32 %v196, %v215
  %v264 = vadd.f32 %v197, %v215
  %v265 = vadd.f32 %v198, %v215
  %v266 = vadd.f32 %v199, %v215
  %v267 = vadd.f32 %v200, %v215
  %v268 = vadd.f32 %v201, %v215
  %v269 = vadd.f32 %v202, %v215
  %v270 = vadd.f32 %v203, %v215
  %v271 = vadd.f32 %v204, %v215
  %v272 = vadd.f32 %v205, %v215
  %v273 = vadd.f32 %v206, %v215
  %v274 = vadd.f32 %v207, %v215
  %v275 = vadd.f32 %v208, %v215
  %v276 = vadd.f32 %v209, %v215
  %v277 = vadd.f32 %v210, %v215
  %v278 = vadd.f32 %v211, %v215
  %v279 = vadd.f32 %v212, %v215
  %v280 = vadd.f32 %v213, %v215
  %v281 = vld [vmem:[%s3] sm:$0xff]
  %v282 = vld [vmem:[%s3 + $0x8] sm:$0xff]
  %v283 = vld [vmem:[%s3 + $0x10] sm:$0xff]
  %v284 = vld [vmem:[%s3 + $0x18] sm:$0xff]
  %v285 = vld [vmem:[%s3 + $0x20] sm:$0xff]
  %v286 = vld [vmem:[%s3 + $0x28] sm:$0xff]
  %v287 = vld [vmem:[%s3 + $0x30] sm:$0xff]
  %v288 = vld [vmem:[%s3 + $0x38] sm:$0xff]
  %v289 = vld [vmem:[%s3 + $0x40] sm:$0xff]
  %v290 = vld [vmem:[%s3 + $0x48] sm:$0xff]
  %v291 = vld [vmem:[%s3 + $0x50] sm:$0xff]
  %v292 = vld [vmem:[%s3 + $0x58] sm:$0xff]
  %v293 = vld [vmem:[%s3 + $0x60] sm:$0xff]
  %v294 = vld [vmem:[%s3 + $0x68] sm:$0xff]
  %v295 = vld [vmem:[%s3 + $0x70] sm:$0xff]
  %v296 = vld [vmem:[%s3 + $0x78] sm:$0xff]
  %v297 = vld [vmem:[%s3 + $0x80] sm:$0xff]
  %v298 = vld [vmem:[%s3 + $0x88] sm:$0xff]
  %v299 = vld [vmem:[%s3 + $0x90] sm:$0xff]
  %v300 = vld [vmem:[%s3 + $0x98] sm:$0xff]
  %v301 = vld [vmem:[%s3 + $0xa0] sm:$0xff]
  %v302 = vld [vmem:[%s3 + $0xa8] sm:$0xff]
  %v303 = vld [vmem:[%s3 + $0xb0] sm:$0xff]
  %v304 = vld [vmem:[%s3 + $0xb8] sm:$0xff]
  %v305 = vld [vmem:[%s3 + $0xc0] sm:$0xff]
  %v306 = vld [vmem:[%s3 + $0xc8] sm:$0xff]
  %v307 = vld [vmem:[%s3 + $0xd0] sm:$0xff]
  %v308 = vld [vmem:[%s3 + $0xd8] sm:$0xff]
  %v309 = vld [vmem:[%s3 + $0xe0] sm:$0xff]
  %v310 = vld [vmem:[%s3 + $0xe8] sm:$0xff]
  %v311 = vld [vmem:[%s3 + $0xf0] sm:$0xff]
  %v312 = vld [vmem:[%s3 + $0xf8] sm:$0xff]
  %v313 = vld [vmem:[%s3 + $0x100] sm:$0xff]
  %v314 = vld [vmem:[%s3 + $0x108] sm:$0xff]
  %v315 = vld [vmem:[%s3 + $0x110] sm:$0xff]
  %v316 = vld [vmem:[%s3 + $0x118] sm:$0xff]
  %v317 = vld [vmem:[%s3 + $0x120] sm:$0xff]
  %v318 = vld [vmem:[%s3 + $0x128] sm:$0xff]
  %v319 = vld [vmem:[%s3 + $0x130] sm:$0xff]
  %v320 = vld [vmem:[%s3 + $0x138] sm:$0xff]
  %v321 = vld [vmem:[%s3 + $0x140] sm:$0xff]
  %v322 = vld [vmem:[%s3 + $0x148] sm:$0xff]
  %v323 = vld [vmem:[%s3 + $0x150] sm:$0xff]
  %v324 = vld [vmem:[%s3 + $0x158] sm:$0xff]
  %v325 = vld [vmem:[%s3 + $0x160] sm:$0xff]
  %v326 = vld [vmem:[%s3 + $0x168] sm:$0xff]
  %v327 = vld [vmem:[%s3 + $0x170] sm:$0xff]
  %v328 = vld [vmem:[%s3 + $0x178] sm:$0xff]
  %v329 = vld [vmem:[%s3 + $0x180] sm:$0xff]
  %v330 = vld [vmem:[%s3 + $0x188] sm:$0xff]
  %v331 = vld [vmem:[%s3 + $0x190] sm:$0xff]
  %v332 = vld [vmem:[%s3 + $0x198] sm:$0xff]
  %v333 = vld [vmem:[%s3 + $0x1a0] sm:$0xff]
  %v334 = vld [vmem:[%s3 + $0x1a8] sm:$0xff]
  %v335 = vld [vmem:[%s3 + $0x1b0] sm:$0xff]
  %v336 = vld [vmem:[%s3 + $0x1b8] sm:$0xff]
  %v337 = vld [vmem:[%s3 + $0x1c0] sm:$0xff]
  %v338 = vld [vmem:[%s3 + $0x1c8] sm:$0xff]
  %v339 = vld [vmem:[%s3 + $0x1d0] sm:$0xff]
  %v340 = vld [vmem:[%s3 + $0x1d8] sm:$0xff]
  %v341 = vld [vmem:[%s3 + $0x1e0] sm:$0xff]
  %v342 = vld [vmem:[%s3 + $0x1e8] sm:$0xff]
  %v343 = vld [vmem:[%s3 + $0x1f0] sm:$0xff]
  %v344 = vld [vmem:[%s3 + $0x1f8] sm:$0xff]
  %v345 = vadd.f32 %v217, %v281
  %v346 = vadd.f32 %v218, %v282
  %v347 = vadd.f32 %v219, %v283
  %v348 = vadd.f32 %v220, %v284
  %v349 = vadd.f32 %v221, %v285
  %v350 = vadd.f32 %v222, %v286
  %v351 = vadd.f32 %v223, %v287
  %v352 = vadd.f32 %v224, %v288
  %v353 = vadd.f32 %v225, %v289
  %v354 = vadd.f32 %v226, %v290
  %v355 = vadd.f32 %v227, %v291
  %v356 = vadd.f32 %v228, %v292
  %v357 = vadd.f32 %v229, %v293
  %v358 = vadd.f32 %v230, %v294
  %v359 = vadd.f32 %v231, %v295
  %v360 = vadd.f32 %v232, %v296
  %v361 = vadd.f32 %v233, %v297
  %v362 = vadd.f32 %v234, %v298
  %v363 = vadd.f32 %v235, %v299
  %v364 = vadd.f32 %v236, %v300
  %v365 = vadd.f32 %v237, %v301
  %v366 = vadd.f32 %v238, %v302
  %v367 = vadd.f32 %v239, %v303
  %v368 = vadd.f32 %v240, %v304
  %v369 = vadd.f32 %v241, %v305
  %v370 = vadd.f32 %v242, %v306
  %v371 = vadd.f32 %v243, %v307
  %v372 = vadd.f32 %v244, %v308
  %v373 = vadd.f32 %v245, %v309
  %v374 = vadd.f32 %v246, %v310
  %v375 = vadd.f32 %v247, %v311
  %v376 = vadd.f32 %v248, %v312
  %v377 = vadd.f32 %v249, %v313
  %v378 = vadd.f32 %v250, %v314
  %v379 = vadd.f32 %v251, %v315
  %v380 = vadd.f32 %v252, %v316
  %v381 = vadd.f32 %v253, %v317
  %v382 = vadd.f32 %v254, %v318
  %v383 = vadd.f32 %v255, %v319
  %v384 = vadd.f32 %v256, %v320
  %v385 = vadd.f32 %v257, %v321
  %v386 = vadd.f32 %v258, %v322
  %v387 = vadd.f32 %v259, %v323
  %v388 = vadd.f32 %v260, %v324
  %v389 = vadd.f32 %v261, %v325
  %v390 = vadd.f32 %v262, %v326
  %v391 = vadd.f32 %v263, %v327
  %v392 = vadd.f32 %v264, %v328
  %v393 = vadd.f32 %v265, %v329
  %v394 = vadd.f32 %v266, %v330
  %v395 = vadd.f32 %v267, %v331
  %v396 = vadd.f32 %v268, %v332
  %v397 = vadd.f32 %v269, %v333
  %v398 = vadd.f32 %v270, %v334
  %v399 = vadd.f32 %v271, %v335
  %v400 = vadd.f32 %v272, %v336
  %v401 = vadd.f32 %v273, %v337
  %v402 = vadd.f32 %v274, %v338
  %v403 = vadd.f32 %v275, %v339
  %v404 = vadd.f32 %v276, %v340
  %v405 = vadd.f32 %v277, %v341
  %v406 = vadd.f32 %v278, %v342
  %v407 = vadd.f32 %v279, %v343
  %v408 = vadd.f32 %v280, %v344
  %v409 = vmax.f32 %v345, 0.0
  %v410 = vmax.f32 %v346, 0.0
  %v411 = vmax.f32 %v347, 0.0
  %v412 = vmax.f32 %v348, 0.0
  %v413 = vmax.f32 %v349, 0.0
  %v414 = vmax.f32 %v350, 0.0
  %v415 = vmax.f32 %v351, 0.0
  %v416 = vmax.f32 %v352, 0.0
  %v417 = vmax.f32 %v353, 0.0
  %v418 = vmax.f32 %v354, 0.0
  %v419 = vmax.f32 %v355, 0.0
  %v420 = vmax.f32 %v356, 0.0
  %v421 = vmax.f32 %v357, 0.0
  %v422 = vmax.f32 %v358, 0.0
  %v423 = vmax.f32 %v359, 0.0
  %v424 = vmax.f32 %v360, 0.0
  %v425 = vmax.f32 %v361, 0.0
  %v426 = vmax.f32 %v362, 0.0
  %v427 = vmax.f32 %v363, 0.0
  %v428 = vmax.f32 %v364, 0.0
  %v429 = vmax.f32 %v365, 0.0
  %v430 = vmax.f32 %v366, 0.0
  %v431 = vmax.f32 %v367, 0.0
  %v432 = vmax.f32 %v368, 0.0
  %v433 = vmax.f32 %v369, 0.0
  %v434 = vmax.f32 %v370, 0.0
  %v435 = vmax.f32 %v371, 0.0
  %v436 = vmax.f32 %v372, 0.0
  %v437 = vmax.f32 %v373, 0.0
  %v438 = vmax.f32 %v374, 0.0
  %v439 = vmax.f32 %v375, 0.0
  %v440 = vmax.f32 %v376, 0.0
  %v441 = vmax.f32 %v377, 0.0
  %v442 = vmax.f32 %v378, 0.0
  %v443 = vmax.f32 %v379, 0.0
  %v444 = vmax.f32 %v380, 0.0
  %v445 = vmax.f32 %v381, 0.0
  %v446 = vmax.f32 %v382, 0.0
  %v447 = vmax.f32 %v383, 0.0
  %v448 = vmax.f32 %v384, 0.0
  %v449 = vmax.f32 %v385, 0.0
  %v450 = vmax.f32 %v386, 0.0
  %v451 = vmax.f32 %v387, 0.0
  %v452 = vmax.f32 %v388, 0.0
  %v453 = vmax.f32 %v389, 0.0
  %v454 = vmax.f32 %v390, 0.0
  %v455 = vmax.f32 %v391, 0.0
  %v456 = vmax.f32 %v392, 0.0
  %v457 = vmax.f32 %v393, 0.0
  %v458 = vmax.f32 %v394, 0.0
  %v459 = vmax.f32 %v395, 0.0
  %v460 = vmax.f32 %v396, 0.0
  %v461 = vmax.f32 %v397, 0.0
  %v462 = vmax.f32 %v398, 0.0
  %v463 = vmax.f32 %v399, 0.0
  %v464 = vmax.f32 %v400, 0.0
  %v465 = vmax.f32 %v401, 0.0
  %v466 = vmax.f32 %v402, 0.0
  %v467 = vmax.f32 %v403, 0.0
  %v468 = vmax.f32 %v404, 0.0
  %v469 = vmax.f32 %v405, 0.0
  %v470 = vmax.f32 %v406, 0.0
  %v471 = vmax.f32 %v407, 0.0
  %v472 = vmax.f32 %v408, 0.0
  %473 = vst [vmem:[%s4] sm:$0xff] %v409
  %474 = vst [vmem:[%s4 + $0x8] sm:$0xff] %v410
  %475 = vst [vmem:[%s4 + $0x10] sm:$0xff] %v411
  %476 = vst [vmem:[%s4 + $0x18] sm:$0xff] %v412
  %477 = vst [vmem:[%s4 + $0x20] sm:$0xff] %v413
  %478 = vst [vmem:[%s4 + $0x28] sm:$0xff] %v414
  %479 = vst [vmem:[%s4 + $0x30] sm:$0xff] %v415
  %480 = vst [vmem:[%s4 + $0x38] sm:$0xff] %v416
  %481 = vst [vmem:[%s4 + $0x40] sm:$0xff] %v417
  %482 = vst [vmem:[%s4 + $0x48] sm:$0xff] %v418
  %483 = vst [vmem:[%s4 + $0x50] sm:$0xff] %v419
  %484 = vst [vmem:[%s4 + $0x58] sm:$0xff] %v420
  %485 = vst [vmem:[%s4 + $0x60] sm:$0xff] %v421
  %486 = vst [vmem:[%s4 + $0x68] sm:$0xff] %v422
  %487 = vst [vmem:[%s4 + $0x70] sm:$0xff] %v423
  %488 = vst [vmem:[%s4 + $0x78] sm:$0xff] %v424
  %489 = vst [vmem:[%s4 + $0x80] sm:$0xff] %v425
  %490 = vst [vmem:[%s4 + $0x88] sm:$0xff] %v426
  %491 = vst [vmem:[%s4 + $0x90] sm:$0xff] %v427
  %492 = vst [vmem:[%s4 + $0x98] sm:$0xff] %v428
  %493 = vst [vmem:[%s4 + $0xa0] sm:$0xff] %v429
  %494 = vst [vmem:[%s4 + $0xa8] sm:$0xff] %v430
  %495 = vst [vmem:[%s4 + $0xb0] sm:$0xff] %v431
  %496 = vst [vmem:[%s4 + $0xb8] sm:$0xff] %v432
  %497 = vst [vmem:[%s4 + $0xc0] sm:$0xff] %v433
  %498 = vst [vmem:[%s4 + $0xc8] sm:$0xff] %v434
  %499 = vst [vmem:[%s4 + $0xd0] sm:$0xff] %v435
  %500 = vst [vmem:[%s4 + $0xd8] sm:$0xff] %v436
  %501 = vst [vmem:[%s4 + $0xe0] sm:$0xff] %v437
  %502 = vst [vmem:[%s4 + $0xe8] sm:$0xff] %v438
  %503 = vst [vmem:[%s4 + $0xf0] sm:$0xff] %v439
  %504 = vst [vmem:[%s4 + $0xf8] sm:$0xff] %v440
  %505 = vst [vmem:[%s4 + $0x100] sm:$0xff] %v441
  %506 = vst [vmem:[%s4 + $0x108] sm:$0xff] %v442
  %507 = vst [vmem:[%s4 + $0x110] sm:$0xff] %v443
  %508 = vst [vmem:[%s4 + $0x118] sm:$0xff] %v444
  %509 = vst [vmem:[%s4 + $0x120] sm:$0xff] %v445
  %510 = vst [vmem:[%s4 + $0x128] sm:$0xff] %v446
  %511 = vst [vmem:[%s4 + $0x130] sm:$0xff] %v447
  %512 = vst [vmem:[%s4 + $0x138] sm:$0xff] %v448
  %513 = vst [vmem:[%s4 + $0x140] sm:$0xff] %v449
  %514 = vst [vmem:[%s4 + $0x148] sm:$0xff] %v450
  %515 = vst [vmem:[%s4 + $0x150] sm:$0xff] %v451
  %516 = vst [vmem:[%s4 + $0x158] sm:$0xff] %v452
  %517 = vst [vmem:[%s4 + $0x160] sm:$0xff] %v453
  %518 = vst [vmem:[%s4 + $0x168] sm:$0xff] %v454
  %519 = vst [vmem:[%s4 + $0x170] sm:$0xff] %v455
  %520 = vst [vmem:[%s4 + $0x178] sm:$0xff] %v456
  %521 = vst [vmem:[%s4 + $0x180] sm:$0xff] %v457
  %522 = vst [vmem:[%s4 + $0x188] sm:$0xff] %v458
  %523 = vst [vmem:[%s4 + $0x190] sm:$0xff] %v459
  %524 = vst [vmem:[%s4 + $0x198] sm:$0xff] %v460
  %525 = vst [vmem:[%s4 + $0x1a0] sm:$0xff] %v461
  %526 = vst [vmem:[%s4 + $0x1a8] sm:$0xff] %v462
  %527 = vst [vmem:[%s4 + $0x1b0] sm:$0xff] %v463
  %528 = vst [vmem:[%s4 + $0x1b8] sm:$0xff] %v464
  %529 = vst [vmem:[%s4 + $0x1c0] sm:$0xff] %v465
  %530 = vst [vmem:[%s4 + $0x1c8] sm:$0xff] %v466
  %531 = vst [vmem:[%s4 + $0x1d0] sm:$0xff] %v467
  %532 = vst [vmem:[%s4 + $0x1d8] sm:$0xff] %v468
  %533 = vst [vmem:[%s4 + $0x1e0] sm:$0xff] %v469
  %534 = vst [vmem:[%s4 + $0x1e8] sm:$0xff] %v470
  %535 = vst [vmem:[%s4 + $0x1f0] sm:$0xff] %v471
  %536 = vst [vmem:[%s4 + $0x1f8] sm:$0xff] %v472
  // Predicated region
  $region18: #{basic_block.5} parent=0 // pred_check
    _
  $region19: #{basic_block.5} parent=0 // pred_check_branch
    %538 = sbr.rel (0) target = $region21
  $region20: #{basic_block.5} parent=0 // pred_region
    _
  $region21: #{basic_block.5} parent=0 // pred_fallthru
    _
  // Predicated region
  $region22: #{basic_block.5} parent=0 // pred_check
    _
  $region23: #{basic_block.5} parent=0 // pred_check_branch
    %540 = sbr.rel (0) target = $region25
  $region24: #{basic_block.5} parent=0 // pred_region
    _
  $region25: #{basic_block.5} parent=0 // pred_fallthru
    _

// kernel: basic_block.4
$region0: #{basic_block.4}
  #allocation0 [shape = 'u32[]', space=smem, size = 0x4, offset = 0x4, fixed_abs, tag = 'smem constant byte address 0x4 - core index']
  #allocation1 [shape = 'u32[72,128]{1,0:T(1,128)}', space=vmem, size = 0x9000, scoped, tag = 'internal scratch']
  #allocation2 [shape = 'bf16[10,18,128]{2,1,0:T(8,128)(2,1)}', space=vmem, size = 0xf000, scoped, tag = 'scratch operand']
  #allocation3 [shape = 'bf16[8,16,1152]{2,1,0:T(8,128)(2,1)}', space=vmem, size = 0x48000, scoped, tag = 'scratch operand']
  %s0 = inlined_call_operand.vmem [shape: bf16[2,16,16,128], index: 0, kind: input, shape index: {}]
  %s1 = inlined_call_operand.vmem [shape: f32[1,128], index: 1, kind: input, shape index: {}]
  %s2 = inlined_call_operand.vmem [shape: f32[1,128], index: 2, kind: input, shape index: {}]
  %s3 = inlined_call_operand.vmem [shape: bf16[1152,128], index: 3, kind: input, shape index: {}]
  %s4 = inlined_call_operand.vmem [shape: bf16[2,16,16,128], index: 4, kind: output, shape index: {0}]
  %s5 = inlined_call_operand.vmem [shape: f32[2,2,128], index: 5, kind: output, shape index: {1}]
  %6 = xla_tuple %s4, %s5
  %s7 = sld [smem:[#allocation0]]
  $region77: #{basic_block.4} parent=0
    _
  %s9 = ssub.s32 1, %s7
  %s10 = scalar_select 0, %s9, %s7
  loop: start=0, step=1, limit=6
  $region2: #{basic_block.4} parent=0 // loop_pre_header
    _
  $region3: #{basic_block.4} parent=0 // loop_header
    %s12 = sphi 0, %s16
    %p13 = scmp.ge.s32.totalorder %s12, 6
    %s19 = sphi 0, %s31
    %s20 = sphi 0, %s27
    %s21 = sphi 0, %s19
    %s22 = sphi 0, %s20
    %s23 = sphi 0, %s21
    %s24 = sphi 0, %s22
    %s34 = sphi 0, %s36
    %s37 = sphi 0, %s34
    %s38 = sphi 0, %s37
    %s54 = sphi 0, %s38
    %s58 = sphi 0, %s58
    %s60 = sphi 0, %s58
    %s61 = sphi 0, %s60
    %s75 = sphi 0, %s61
    %s79 = sphi 0, %s79
    %s81 = sphi 0, %s79
    %s82 = sphi 0, %s81
    %s96 = sphi 0, %s82
    %s100 = sphi 0, %s100
    %s102 = sphi 0, %s100
    %s103 = sphi 0, %s102
    %s117 = sphi 0, %s103
    %s125 = sphi 0, %s127
    %s128 = sphi 0, %s125
    %s129 = sphi 0, %s128
    %s145 = sphi 0, %s129
    %s151 = sphi 0, %s153
    %s154 = sphi 0, %s151
    %s155 = sphi 0, %s154
    %s171 = sphi 0, %s155
  $region4: #{basic_block.4} parent=0 // loop_header_branch
    %15 = sbr.rel (%p13) target = $region8
  $region5: #{basic_block.4} parent=0 // loop_body
    %s17 = ssub.s32 %s12, 1
    %s18 = ssub.s32 %s12, 2
    %s25 = sadd.s32 1, %s20
    %p26 = scmp.ge.s32.totalorder %s25, 2
    %s27 = scalar_select %p26, 0, %s25
    %s28 = sadd.s32 1, %s19
    %s29 = scalar_select %p26, %s28, %s19
    %p30 = scmp.ge.s32.totalorder %s29, 2
    %s31 = scalar_select %p30, 0, %s29
    %s32 = ssub.s32 %s19, %s31
    %p33 = scmp.eq.s32.totalorder %s32, 0
    %s35 = sadd.s32 %s34, 1
    %s36 = scalar_select %p33, %s34, %s35
    %p39 = pneg %p33
    %p40 = scmp.eq.s32.totalorder %s12, 3
    %p41 = por %p39, %p40
    %p42 = scmp.ne.s32.totalorder %s34, %s37
    %p43 = scmp.eq.s32.totalorder %s12, 0
    %p44 = por %p42, %p43
    %p45 = scmp.ne.s32.totalorder %s34, %s37
    %p46 = scmp.eq.s32.totalorder %s17, 3
    %p47 = por %p45, %p46
    %p48 = scmp.ne.s32.totalorder %s37, %s38
    %p49 = scmp.eq.s32.totalorder %s17, 0
    %p50 = por %p48, %p49
    %p51 = scmp.ne.s32.totalorder %s37, %s38
    %p52 = scmp.eq.s32.totalorder %s18, 3
    %p53 = por %p51, %p52
    %p55 = scmp.ne.s32.totalorder %s38, %s54
    %p56 = scmp.eq.s32.totalorder %s18, 0
    %p57 = por %p55, %p56
    %s59 = sadd.s32 %s58, 1
    %p62 = scmp.eq.s32.totalorder %s12, 3
    %p63 = scmp.ne.s32.totalorder %s58, %s60
    %p64 = scmp.eq.s32.totalorder %s12, 0
    %p65 = por %p63, %p64
    %p66 = scmp.ne.s32.totalorder %s58, %s60
    %p67 = scmp.eq.s32.totalorder %s17, 3
    %p68 = por %p66, %p67
    %p69 = scmp.ne.s32.totalorder %s60, %s61
    %p70 = scmp.eq.s32.totalorder %s17, 0
    %p71 = por %p69, %p70
    %p72 = scmp.ne.s32.totalorder %s60, %s61
    %p73 = scmp.eq.s32.totalorder %s18, 3
    %p74 = por %p72, %p73
    %p76 = scmp.ne.s32.totalorder %s61, %s75
    %p77 = scmp.eq.s32.totalorder %s18, 0
    %p78 = por %p76, %p77
    %s80 = sadd.s32 %s79, 1
    %p83 = scmp.eq.s32.totalorder %s12, 3
    %p84 = scmp.ne.s32.totalorder %s79, %s81
    %p85 = scmp.eq.s32.totalorder %s12, 0
    %p86 = por %p84, %p85
    %p87 = scmp.ne.s32.totalorder %s79, %s81
    %p88 = scmp.eq.s32.totalorder %s17, 3
    %p89 = por %p87, %p88
    %p90 = scmp.ne.s32.totalorder %s81, %s82
    %p91 = scmp.eq.s32.totalorder %s17, 0
    %p92 = por %p90, %p91
    %p93 = scmp.ne.s32.totalorder %s81, %s82
    %p94 = scmp.eq.s32.totalorder %s18, 3
    %p95 = por %p93, %p94
    %p97 = scmp.ne.s32.totalorder %s82, %s96
    %p98 = scmp.eq.s32.totalorder %s18, 0
    %p99 = por %p97, %p98
    %s101 = sadd.s32 %s100, 1
    %p104 = scmp.eq.s32.totalorder %s12, 3
    %p105 = scmp.ne.s32.totalorder %s100, %s102
    %p106 = scmp.eq.s32.totalorder %s12, 0
    %p107 = por %p105, %p106
    %p108 = scmp.ne.s32.totalorder %s100, %s102
    %p109 = scmp.eq.s32.totalorder %s17, 3
    %p110 = por %p108, %p109
    %p111 = scmp.ne.s32.totalorder %s102, %s103
    %p112 = scmp.eq.s32.totalorder %s17, 0
    %p113 = por %p111, %p112
    %p114 = scmp.ne.s32.totalorder %s102, %s103
    %p115 = scmp.eq.s32.totalorder %s18, 3
    %p116 = por %p114, %p115
    %p118 = scmp.ne.s32.totalorder %s103, %s117
    %p119 = scmp.eq.s32.totalorder %s18, 0
    %p120 = por %p118, %p119
    %s121 = ssub.s32 %s19, %s31
    %s122 = ssub.s32 %s20, %s27
    %s123 = sor.u32 %s121, %s122
    %p124 = scmp.eq.s32.totalorder %s123, 0
    %s126 = sadd.s32 %s125, 1
    %s127 = scalar_select %p124, %s125, %s126
    %p130 = pneg %p124
    %p131 = scmp.eq.s32.totalorder %s12, 3
    %p132 = por %p130, %p131
    %p133 = scmp.ne.s32.totalorder %s125, %s128
    %p134 = scmp.eq.s32.totalorder %s12, 0
    %p135 = por %p133, %p134
    %p136 = scmp.ne.s32.totalorder %s125, %s128
    %p137 = scmp.eq.s32.totalorder %s17, 3
    %p138 = por %p136, %p137
    %p139 = scmp.ne.s32.totalorder %s128, %s129
    %p140 = scmp.eq.s32.totalorder %s17, 0
    %p141 = por %p139, %p140
    %p142 = scmp.ne.s32.totalorder %s128, %s129
    %p143 = scmp.eq.s32.totalorder %s18, 3
    %p144 = por %p142, %p143
    %p146 = scmp.ne.s32.totalorder %s129, %s145
    %p147 = scmp.eq.s32.totalorder %s18, 0
    %p148 = por %p146, %p147
    %s149 = ssub.s32 %s19, %s31
    %p150 = scmp.eq.s32.totalorder %s149, 0
    %s152 = sadd.s32 %s151, 1
    %s153 = scalar_select %p150, %s151, %s152
    %p156 = pneg %p150
    %p157 = scmp.eq.s32.totalorder %s12, 3
    %p158 = por %p156, %p157
    %p159 = scmp.ne.s32.totalorder %s151, %s154
    %p160 = scmp.eq.s32.totalorder %s12, 0
    %p161 = por %p159, %p160
    %p162 = scmp.ne.s32.totalorder %s151, %s154
    %p163 = scmp.eq.s32.totalorder %s17, 3
    %p164 = por %p162, %p163
    %p165 = scmp.ne.s32.totalorder %s154, %s155
    %p166 = scmp.eq.s32.totalorder %s17, 0
    %p167 = por %p165, %p166
    %p168 = scmp.ne.s32.totalorder %s154, %s155
    %p169 = scmp.eq.s32.totalorder %s18, 3
    %p170 = por %p168, %p169
    %p172 = scmp.ne.s32.totalorder %s155, %s171
    %p173 = scmp.eq.s32.totalorder %s18, 0
    %p174 = por %p172, %p173
    %p175 = scmp.le.s32.totalorder 1, %s12
    %p176 = scmp.lt.s32.totalorder %s12, 5
    %p177 = pnand %p175, %p176
    %p178 = pneg %p177
    // Predicated region
    $region9: #{basic_block.4} parent=5 // pred_check
      _
    $region10: #{basic_block.4} parent=5 // pred_check_branch
      %180 = sbr.rel (%p177) target = $region12
    $region11: #{basic_block.4} parent=5 // pred_region
      %s181 = ssub.s32 %s12, 1
      // Predicated region
      $region13: #{basic_block.4} parent=11 // pred_check
        %p182 = pneg %p71
      $region14: #{basic_block.4} parent=11 // pred_check_branch
        %184 = sbr.rel (%p182) target = $region16
      $region15: #{basic_block.4} parent=11 // pred_region
        _
      $region16: #{basic_block.4} parent=11 // pred_fallthru
        _
      // Predicated region
      $region17: #{basic_block.4} parent=11 // pred_check
        %p185 = pneg %p92
      $region18: #{basic_block.4} parent=11 // pred_check_branch
        %187 = sbr.rel (%p185) target = $region20
      $region19: #{basic_block.4} parent=11 // pred_region
        _
      $region20: #{basic_block.4} parent=11 // pred_fallthru
        _
      // Predicated region
      $region21: #{basic_block.4} parent=11 // pred_check
        %p188 = pneg %p113
      $region22: #{basic_block.4} parent=11 // pred_check_branch
        %190 = sbr.rel (%p188) target = $region24
      $region23: #{basic_block.4} parent=11 // pred_region
        _
      $region24: #{basic_block.4} parent=11 // pred_fallthru
        _
    $region12: #{basic_block.4} parent=5 // pred_fallthru
      _
    %p191 = scmp.lt.s32.totalorder %s12, 4
    // Predicated region
    $region25: #{basic_block.4} parent=5 // pred_check
      %p192 = pneg %p191
    $region26: #{basic_block.4} parent=5 // pred_check_branch
      %194 = sbr.rel (%p192) target = $region28
    $region27: #{basic_block.4} parent=5 // pred_region
      // Predicated region
      $region29: #{basic_block.4} parent=27 // pred_check
        %p195 = pneg %p44
      $region30: #{basic_block.4} parent=27 // pred_check_branch
        %197 = sbr.rel (%p195) target = $region32
      $region31: #{basic_block.4} parent=27 // pred_region
        %p198 = scmp.lt.s32.totalorder %s19, 1
        %s199 = scalar_select %p198, %s19, 1
        %s200 = smul.addr %s199, 32
        %s201 = smul.addr %s200, 4
        %s202 = scalar_lea.vmem %s0, %s201
      $region32: #{basic_block.4} parent=27 // pred_fallthru
        _
    $region28: #{basic_block.4} parent=5 // pred_fallthru
      _
    %p203 = scmp.le.s32.totalorder 1, %s12
    %p204 = scmp.lt.s32.totalorder %s12, 5
    %p205 = pnand %p203, %p204
    %p206 = pneg %p205
    // Predicated region
    $region33: #{basic_block.4} parent=5 // pred_check
      _
    $region34: #{basic_block.4} parent=5 // pred_check_branch
      %208 = sbr.rel (%p205) target = $region36
    $region35: #{basic_block.4} parent=5 // pred_region
      %s209 = ssub.s32 %s12, 1
      %p210 = scmp.lt.s32.totalorder %s21, 1
      %s211 = scalar_select %p210, %s21, 1
      %s212 = smul.addr %s211, 32
      %s213 = smul.addr %s212, 4
      %s214 = scalar_lea.vmem %s0, %s213
      %p215 = pneg %p50
      %p216 = pneg %p47
      %p217 = pneg %p71
      %p218 = pneg %p68
      %p219 = pneg %p92
      %p220 = pneg %p89
      %p221 = pneg %p113
      %p222 = pneg %p110
      %p223 = pneg %p141
      %p224 = pneg %p138
      %s225 = smul.u32 8, %s22
      %p226 = scmp.lt.s32.totalorder %s21, 1
      %s227 = scalar_select %p226, %s21, 1
      %p228 = scmp.lt.s32.totalorder %s225, 15
      %s229 = scalar_select %p228, %s225, 15
      %s230 = smul.addr %s229, 2
      %s231 = smul.addr %s227, 32
      %s232 = sadd.s32 %s230, %s231
      %s233 = smul.addr %s232, 4
      %s234 = scalar_lea.vmem %s4, %s233
      %p235 = pneg %p167
      %p236 = pneg %p164
      %p237 = scmp.lt.s32.totalorder %s21, 1
      %s238 = scalar_select %p237, %s21, 1
      %s239 = smul.addr %s238, 2
      %s240 = scalar_lea.vmem %s5, %s239
      %p241 = scmp.lt.s32.totalorder %s21, 1
      %s242 = scalar_select %p241, %s21, 1
      %s243 = smul.addr %s242, 32
      %s244 = smul.addr %s243, 4
      %s245 = scalar_lea.vmem %s0, %s244
      %s246 = smul.u32 8, %s22
      %p247 = scmp.lt.s32.totalorder %s21, 1
      %s248 = scalar_select %p247, %s21, 1
      %p249 = scmp.lt.s32.totalorder %s246, 15
      %s250 = scalar_select %p249, %s246, 15
      %s251 = smul.addr %s250, 2
      %s252 = smul.addr %s248, 32
      %s253 = sadd.s32 %s251, %s252
      %s254 = smul.addr %s253, 4
      %s255 = scalar_lea.vmem %s4, %s254
      %s256 = smul.u32 8, %s22
      %p257 = scmp.lt.s32.totalorder %s21, 1
      %s258 = scalar_select %p257, %s21, 1
      %s259 = smul.addr %s258, 2
      %s260 = scalar_lea.vmem %s5, %s259
      %s262 = smul.u32 %s22, 8
      %vm263 = vcmask 1040384
      %vm264 = vsmask.f32 256
      %vm265 = vmand %vm263, %vm264
      %v266 = vld [vmem:[#allocation2] sm:$0x1]
      %v267 = vsel %vm265, 0, %v266
      %268 = vst [vmem:[#allocation2] sm:$0x1] %v267
      %v269 = vld [vmem:[#allocation2 + $0xc] sm:$0x1]
      %v270 = vsel %vm265, 0, %v269
      %271 = vst [vmem:[#allocation2 + $0xc] sm:$0x1] %v270
      %v272 = vld [vmem:[#allocation2 + $0x18] sm:$0x1]
      %v273 = vsel %vm265, 0, %v272
      %274 = vst [vmem:[#allocation2 + $0x18] sm:$0x1] %v273
      %v275 = vld [vmem:[#allocation2 + $0x24] sm:$0x1]
      %v276 = vsel %vm265, 0, %v275
      %277 = vst [vmem:[#allocation2 + $0x24] sm:$0x1] %v276
      %v278 = vld [vmem:[#allocation2 + $0x30] sm:$0x1]
      %v279 = vsel %vm265, 0, %v278
      %280 = vst [vmem:[#allocation2 + $0x30] sm:$0x1] %v279
      %v281 = vld [vmem:[#allocation2 + $0x3c] sm:$0x1]
      %v282 = vsel %vm265, 0, %v281
      %283 = vst [vmem:[#allocation2 + $0x3c] sm:$0x1] %v282
      %v284 = vld [vmem:[#allocation2 + $0x48] sm:$0x1]
      %v285 = vsel %vm265, 0, %v284
      %286 = vst [vmem:[#allocation2 + $0x48] sm:$0x1] %v285
      %v287 = vld [vmem:[#allocation2 + $0x54] sm:$0x1]
      %v288 = vsel %vm265, 0, %v287
      %289 = vst [vmem:[#allocation2 + $0x54] sm:$0x1] %v288
      %v290 = vld [vmem:[#allocation2 + $0x60] sm:$0x1]
      %v291 = vsel %vm265, 0, %v290
      %292 = vst [vmem:[#allocation2 + $0x60] sm:$0x1] %v291
      %v293 = vld [vmem:[#allocation2 + $0x6c] sm:$0x1]
      %v294 = vsel %vm265, 0, %v293
      %295 = vst [vmem:[#allocation2 + $0x6c] sm:$0x1] %v294
      %vm296 = vsmask.f32 7938
      %vm297 = vmand %vm263, %vm296
      %v298 = vld [vmem:[#allocation2 + $0x8] sm:$0x1]
      %v299 = vsel %vm297, 0, %v298
      %300 = vst [vmem:[#allocation2 + $0x8] sm:$0x1] %v299
      %v301 = vld [vmem:[#allocation2 + $0x14] sm:$0x1]
      %v302 = vsel %vm297, 0, %v301
      %303 = vst [vmem:[#allocation2 + $0x14] sm:$0x1] %v302
      %v304 = vld [vmem:[#allocation2 + $0x20] sm:$0x1]
      %v305 = vsel %vm297, 0, %v304
      %306 = vst [vmem:[#allocation2 + $0x20] sm:$0x1] %v305
      %v307 = vld [vmem:[#allocation2 + $0x2c] sm:$0x1]
      %v308 = vsel %vm297, 0, %v307
      %309 = vst [vmem:[#allocation2 + $0x2c] sm:$0x1] %v308
      %v310 = vld [vmem:[#allocation2 + $0x38] sm:$0x1]
      %v311 = vsel %vm297, 0, %v310
      %312 = vst [vmem:[#allocation2 + $0x38] sm:$0x1] %v311
      %v313 = vld [vmem:[#allocation2 + $0x44] sm:$0x1]
      %v314 = vsel %vm297, 0, %v313
      %315 = vst [vmem:[#allocation2 + $0x44] sm:$0x1] %v314
      %v316 = vld [vmem:[#allocation2 + $0x50] sm:$0x1]
      %v317 = vsel %vm297, 0, %v316
      %318 = vst [vmem:[#allocation2 + $0x50] sm:$0x1] %v317
      %v319 = vld [vmem:[#allocation2 + $0x5c] sm:$0x1]
      %v320 = vsel %vm297, 0, %v319
      %321 = vst [vmem:[#allocation2 + $0x5c] sm:$0x1] %v320
      %v322 = vld [vmem:[#allocation2 + $0x68] sm:$0x1]
      %v323 = vsel %vm297, 0, %v322
      %324 = vst [vmem:[#allocation2 + $0x68] sm:$0x1] %v323
      %v325 = vld [vmem:[#allocation2 + $0x74] sm:$0x1]
      %v326 = vsel %vm297, 0, %v325
      %327 = vst [vmem:[#allocation2 + $0x74] sm:$0x1] %v326
      %s328 = smul.u32 %s262, 2
      %s329 = smul.addr %s328, 4
      %s330 = scalar_lea.vmem %s245, %s329
      %v331 = vld [vmem:[%s330] sm:$0xf]
      %v332 = vld [vmem:[%s330 + $0x4] sm:$0xf]
      %v333 = vld [vmem:[%s330 + $0x8] sm:$0xf]
      %v334 = vld [vmem:[%s330 + $0xc] sm:$0xf]
      %v335 = vld [vmem:[%s330 + $0x10] sm:$0xf]
      %v336 = vld [vmem:[%s330 + $0x14] sm:$0xf]
      %v337 = vld [vmem:[%s330 + $0x18] sm:$0xf]
      %v338 = vld [vmem:[%s330 + $0x1c] sm:$0xf]
      %v339 = vld [vmem:[%s330 + $0x20] sm:$0xf]
      %v340 = vld [vmem:[%s330 + $0x24] sm:$0xf]
      %v341 = vld [vmem:[%s330 + $0x28] sm:$0xf]
      %v342 = vld [vmem:[%s330 + $0x2c] sm:$0xf]
      %v343 = vld [vmem:[%s330 + $0x30] sm:$0xf]
      %v344 = vld [vmem:[%s330 + $0x34] sm:$0xf]
      %v345 = vld [vmem:[%s330 + $0x38] sm:$0xf]
      %v346 = vld [vmem:[%s330 + $0x3c] sm:$0xf]
      %v347 = vunpack.c.l.bf16 %v331
      %v348 = vunpack.c.l.bf16 %v332
      %v349 = vunpack.c.l.bf16 %v333
      %v350 = vunpack.c.l.bf16 %v334
      %v351 = vunpack.c.l.bf16 %v335
      %v352 = vunpack.c.l.bf16 %v336
      %v353 = vunpack.c.l.bf16 %v337
      %v354 = vunpack.c.l.bf16 %v338
      %v355 = vunpack.c.l.bf16 %v339
      %v356 = vunpack.c.l.bf16 %v340
      %v357 = vunpack.c.l.bf16 %v341
      %v358 = vunpack.c.l.bf16 %v342
      %v359 = vunpack.c.l.bf16 %v343
      %v360 = vunpack.c.l.bf16 %v344
      %v361 = vunpack.c.l.bf16 %v345
      %v362 = vunpack.c.l.bf16 %v346
      %v363 = vld [vmem:[%s1] sm:$0x1]
      %v364 = vld [vmem:[%s2] sm:$0x1]
      %v366 = vperm.slane %v363, 0
      %v368 = vmul.f32 %v347, %v366
      %v369 = vmul.f32 %v348, %v366
      %v370 = vmul.f32 %v349, %v366
      %v371 = vmul.f32 %v350, %v366
      %v372 = vmul.f32 %v351, %v366
      %v373 = vmul.f32 %v352, %v366
      %v374 = vmul.f32 %v353, %v366
      %v375 = vmul.f32 %v354, %v366
      %v376 = vmul.f32 %v355, %v366
      %v377 = vmul.f32 %v356, %v366
      %v378 = vmul.f32 %v357, %v366
      %v379 = vmul.f32 %v358, %v366
      %v380 = vmul.f32 %v359, %v366
      %v381 = vmul.f32 %v360, %v366
      %v382 = vmul.f32 %v361, %v366
      %v383 = vmul.f32 %v362, %v366
      %v385 = vperm.slane %v364, 0
      %v387 = vadd.f32 %v368, %v385
      %v388 = vadd.f32 %v369, %v385
      %v389 = vadd.f32 %v370, %v385
      %v390 = vadd.f32 %v371, %v385
      %v391 = vadd.f32 %v372, %v385
      %v392 = vadd.f32 %v373, %v385
      %v393 = vadd.f32 %v374, %v385
      %v394 = vadd.f32 %v375, %v385
      %v395 = vadd.f32 %v376, %v385
      %v396 = vadd.f32 %v377, %v385
      %v397 = vadd.f32 %v378, %v385
      %v398 = vadd.f32 %v379, %v385
      %v399 = vadd.f32 %v380, %v385
      %v400 = vadd.f32 %v381, %v385
      %v401 = vadd.f32 %v382, %v385
      %v402 = vadd.f32 %v383, %v385
      %v403 = vmax.f32 %v387, 0.0
      %v404 = vmax.f32 %v388, 0.0
      %v405 = vmax.f32 %v389, 0.0
      %v406 = vmax.f32 %v390, 0.0
      %v407 = vmax.f32 %v391, 0.0
      %v408 = vmax.f32 %v392, 0.0
      %v409 = vmax.f32 %v393, 0.0
      %v410 = vmax.f32 %v394, 0.0
      %v411 = vmax.f32 %v395, 0.0
      %v412 = vmax.f32 %v396, 0.0
      %v413 = vmax.f32 %v397, 0.0
      %v414 = vmax.f32 %v398, 0.0
      %v415 = vmax.f32 %v399, 0.0
      %v416 = vmax.f32 %v400, 0.0
      %v417 = vmax.f32 %v401, 0.0
      %v418 = vmax.f32 %v402, 0.0
      %v419 = vpack.c.bf16 %v403, %v403
      %v420 = vpack.c.bf16 %v404, %v404
      %v421 = vpack.c.bf16 %v405, %v405
      %v422 = vpack.c.bf16 %v406, %v406
      %v423 = vpack.c.bf16 %v407, %v407
      %v424 = vpack.c.bf16 %v408, %v408
      %v425 = vpack.c.bf16 %v409, %v409
      %v426 = vpack.c.bf16 %v410, %v410
      %v427 = vpack.c.bf16 %v411, %v411
      %v428 = vpack.c.bf16 %v412, %v412
      %v429 = vpack.c.bf16 %v413, %v413
      %v430 = vpack.c.bf16 %v414, %v414
      %v431 = vpack.c.bf16 %v415, %v415
      %v432 = vpack.c.bf16 %v416, %v416
      %v433 = vpack.c.bf16 %v417, %v417
      %v434 = vpack.c.bf16 %v418, %v418
      %vm435 = vsmask.f32 4368
      %vm436 = vmor %vm264, %vm435
      %v438 = vshrl.u32 %v419, 16
      %v440 = vrot.slane %v438, 7
      %v441 = vshll.u32 %v419, 16
      %v443 = vor.u32 %v440, %v441
      %v444 = vrot.slane %v440, 4
      %v446 = vshrl.u32 %v420, 16
      %v448 = vrot.slane %v446, 7
      %v449 = vshll.u32 %v420, 16
      %v451 = vor.u32 %v448, %v449
      %v452 = vsel %vm436, %v444, %v451
      %v453 = vrot.slane %v448, 4
      %v455 = vshrl.u32 %v421, 16
      %v457 = vrot.slane %v455, 7
      %v458 = vshll.u32 %v421, 16
      %v460 = vor.u32 %v457, %v458
      %v461 = vrot.slane %v457, 4
      %v463 = vshrl.u32 %v422, 16
      %v465 = vrot.slane %v463, 7
      %v466 = vshll.u32 %v422, 16
      %v468 = vor.u32 %v465, %v466
      %v469 = vsel %vm436, %v461, %v468
      %v470 = vrot.slane %v465, 4
      %v472 = vshrl.u32 %v423, 16
      %v474 = vrot.slane %v472, 7
      %v475 = vshll.u32 %v423, 16
      %v477 = vor.u32 %v474, %v475
      %v478 = vrot.slane %v474, 4
      %v480 = vshrl.u32 %v424, 16
      %v482 = vrot.slane %v480, 7
      %v483 = vshll.u32 %v424, 16
      %v485 = vor.u32 %v482, %v483
      %v486 = vsel %vm436, %v478, %v485
      %v487 = vrot.slane %v482, 4
      %v489 = vshrl.u32 %v425, 16
      %v491 = vrot.slane %v489, 7
      %v492 = vshll.u32 %v425, 16
      %v494 = vor.u32 %v491, %v492
      %v495 = vrot.slane %v491, 4
      %v497 = vshrl.u32 %v426, 16
      %v499 = vrot.slane %v497, 7
      %v500 = vshll.u32 %v426, 16
      %v502 = vor.u32 %v499, %v500
      %v503 = vsel %vm436, %v495, %v502
      %v504 = vrot.slane %v499, 4
      %v506 = vshrl.u32 %v427, 16
      %v508 = vrot.slane %v506, 7
      %v509 = vshll.u32 %v427, 16
      %v511 = vor.u32 %v508, %v509
      %v512 = vrot.slane %v508, 4
      %v514 = vshrl.u32 %v428, 16
      %v516 = vrot.slane %v514, 7
      %v517 = vshll.u32 %v428, 16
      %v519 = vor.u32 %v516, %v517
      %v520 = vsel %vm436, %v512, %v519
      %v521 = vrot.slane %v516, 4
      %v523 = vshrl.u32 %v429, 16
      %v525 = vrot.slane %v523, 7
      %v526 = vshll.u32 %v429, 16
      %v528 = vor.u32 %v525, %v526
      %v529 = vrot.slane %v525, 4
      %v531 = vshrl.u32 %v430, 16
      %v533 = vrot.slane %v531, 7
      %v534 = vshll.u32 %v430, 16
      %v536 = vor.u32 %v533, %v534
      %v537 = vsel %vm436, %v529, %v536
      %v538 = vrot.slane %v533, 4
      %v540 = vshrl.u32 %v431, 16
      %v542 = vrot.slane %v540, 7
      %v543 = vshll.u32 %v431, 16
      %v545 = vor.u32 %v542, %v543
      %v546 = vrot.slane %v542, 4
      %v548 = vshrl.u32 %v432, 16
      %v550 = vrot.slane %v548, 7
      %v551 = vshll.u32 %v432, 16
      %v553 = vor.u32 %v550, %v551
      %v554 = vsel %vm436, %v546, %v553
      %v555 = vrot.slane %v550, 4
      %v557 = vshrl.u32 %v433, 16
      %v559 = vrot.slane %v557, 7
      %v560 = vshll.u32 %v433, 16
      %v562 = vor.u32 %v559, %v560
      %v563 = vrot.slane %v559, 4
      %v565 = vshrl.u32 %v434, 16
      %v567 = vrot.slane %v565, 7
      %v568 = vshll.u32 %v434, 16
      %v570 = vor.u32 %v567, %v568
      %v571 = vsel %vm436, %v563, %v570
      %v572 = vrot.slane %v567, 4
      %s597 = scalar_lea.vmem [#allocation2], 12
      %vm598 = vcmask 1043456
      %vm599 = vmand %vm598, %vm296
      %v600 = vld [vmem:[%s597] sm:$0xf]
      %v601 = vsel %vm599, %v443, %v600
      %602 = vst [vmem:[%s597] sm:$0xf] %v601
      %603 = vst [vmem:[%s597 + $0x4] sm:$0xf] %v452
      %v604 = vld [vmem:[%s597 + $0x8] sm:$0x1]
      %v605 = vsel %vm265, %v453, %v604
      %606 = vst [vmem:[%s597 + $0x8] sm:$0x1] %v605
      %v607 = vld [vmem:[%s597 + $0xc] sm:$0xf]
      %v608 = vsel %vm599, %v460, %v607
      %609 = vst [vmem:[%s597 + $0xc] sm:$0xf] %v608
      %610 = vst [vmem:[%s597 + $0x10] sm:$0xf] %v469
      %v611 = vld [vmem:[%s597 + $0x14] sm:$0x1]
      %v612 = vsel %vm265, %v470, %v611
      %613 = vst [vmem:[%s597 + $0x14] sm:$0x1] %v612
      %v614 = vld [vmem:[%s597 + $0x18] sm:$0xf]
      %v615 = vsel %vm599, %v477, %v614
      %616 = vst [vmem:[%s597 + $0x18] sm:$0xf] %v615
      %617 = vst [vmem:[%s597 + $0x1c] sm:$0xf] %v486
      %v618 = vld [vmem:[%s597 + $0x20] sm:$0x1]
      %v619 = vsel %vm265, %v487, %v618
      %620 = vst [vmem:[%s597 + $0x20] sm:$0x1] %v619
      %v621 = vld [vmem:[%s597 + $0x24] sm:$0xf]
      %v622 = vsel %vm599, %v494, %v621
      %623 = vst [vmem:[%s597 + $0x24] sm:$0xf] %v622
      %624 = vst [vmem:[%s597 + $0x28] sm:$0xf] %v503
      %v625 = vld [vmem:[%s597 + $0x2c] sm:$0x1]
      %v626 = vsel %vm265, %v504, %v625
      %627 = vst [vmem:[%s597 + $0x2c] sm:$0x1] %v626
      %v628 = vld [vmem:[%s597 + $0x30] sm:$0xf]
      %v629 = vsel %vm599, %v511, %v628
      %630 = vst [vmem:[%s597 + $0x30] sm:$0xf] %v629
      %631 = vst [vmem:[%s597 + $0x34] sm:$0xf] %v520
      %v632 = vld [vmem:[%s597 + $0x38] sm:$0x1]
      %v633 = vsel %vm265, %v521, %v632
      %634 = vst [vmem:[%s597 + $0x38] sm:$0x1] %v633
      %v635 = vld [vmem:[%s597 + $0x3c] sm:$0xf]
      %v636 = vsel %vm599, %v528, %v635
      %637 = vst [vmem:[%s597 + $0x3c] sm:$0xf] %v636
      %638 = vst [vmem:[%s597 + $0x40] sm:$0xf] %v537
      %v639 = vld [vmem:[%s597 + $0x44] sm:$0x1]
      %v640 = vsel %vm265, %v538, %v639
      %641 = vst [vmem:[%s597 + $0x44] sm:$0x1] %v640
      %v642 = vld [vmem:[%s597 + $0x48] sm:$0xf]
      %v643 = vsel %vm599, %v545, %v642
      %644 = vst [vmem:[%s597 + $0x48] sm:$0xf] %v643
      %645 = vst [vmem:[%s597 + $0x4c] sm:$0xf] %v554
      %v646 = vld [vmem:[%s597 + $0x50] sm:$0x1]
      %v647 = vsel %vm265, %v555, %v646
      %648 = vst [vmem:[%s597 + $0x50] sm:$0x1] %v647
      %v649 = vld [vmem:[%s597 + $0x54] sm:$0xf]
      %v650 = vsel %vm599, %v562, %v649
      %651 = vst [vmem:[%s597 + $0x54] sm:$0xf] %v650
      %652 = vst [vmem:[%s597 + $0x58] sm:$0xf] %v571
      %v653 = vld [vmem:[%s597 + $0x5c] sm:$0x1]
      %v654 = vsel %vm265, %v572, %v653
      %655 = vst [vmem:[%s597 + $0x5c] sm:$0x1] %v654
      %p656 = scmp.eq.s32.totalorder %s22, 0
      // Predicated region
      $region37: #{basic_block.4} parent=35 // pred_check
        %p657 = pneg %p656
      $region38: #{basic_block.4} parent=35 // pred_check_branch
        %659 = sbr.rel (%p657) target = $region40
      $region39: #{basic_block.4} parent=35 // pred_region
        %v660 = vld [vmem:[#allocation2] sm:$0xf]
        %v661 = vsel %vm599, 0, %v660
        %662 = vst [vmem:[#allocation2] sm:$0xf] %v661
        %663 = vst [vmem:[#allocation2 + $0x4] sm:$0xf] 0
        %v664 = vld [vmem:[#allocation2 + $0x8] sm:$0x1]
        %v665 = vsel %vm265, 0, %v664
        %666 = vst [vmem:[#allocation2 + $0x8] sm:$0x1] %v665
      $region40: #{basic_block.4} parent=35 // pred_fallthru
        _
      %p667 = scmp.gt.s32.totalorder %s22, 0
      // Predicated region
      $region41: #{basic_block.4} parent=35 // pred_check
        %p668 = pneg %p667
      $region42: #{basic_block.4} parent=35 // pred_check_branch
        %670 = sbr.rel (%p668) target = $region44
      $region43: #{basic_block.4} parent=35 // pred_region
        %s671 = ssub.s32 %s262, 1
        %s672 = smul.u32 %s671, 2
        %s673 = smul.addr %s672, 4
        %s674 = scalar_lea.vmem %s245, %s673
        %v675 = vld [vmem:[%s674] sm:$0xf]
        %v676 = vld [vmem:[%s674 + $0x4] sm:$0xf]
        %v677 = vunpack.c.l.bf16 %v675
        %v678 = vunpack.c.l.bf16 %v676
        %v679 = vld [vmem:[%s1] sm:$0x1]
        %v680 = vld [vmem:[%s2] sm:$0x1]
        %v682 = vperm.slane %v679, 0
        %v684 = vmul.f32 %v677, %v682
        %v685 = vmul.f32 %v678, %v682
        %v687 = vperm.slane %v680, 0
        %v689 = vadd.f32 %v684, %v687
        %v690 = vadd.f32 %v685, %v687
        %v691 = vmax.f32 %v689, 0.0
        %v692 = vmax.f32 %v690, 0.0
        %v693 = vpack.c.bf16 %v691, %v691
        %v694 = vpack.c.bf16 %v692, %v692
        %v696 = vshrl.u32 %v693, 16
        %v698 = vrot.slane %v696, 7
        %v699 = vshll.u32 %v693, 16
        %v701 = vor.u32 %v698, %v699
        %v702 = vrot.slane %v698, 4
        %v704 = vshrl.u32 %v694, 16
        %v706 = vrot.slane %v704, 7
        %v707 = vshll.u32 %v694, 16
        %v709 = vor.u32 %v706, %v707
        %v710 = vsel %vm436, %v702, %v709
        %v711 = vrot.slane %v706, 4
        %v715 = vld [vmem:[#allocation2] sm:$0xf]
        %v716 = vsel %vm599, %v701, %v715
        %717 = vst [vmem:[#allocation2] sm:$0xf] %v716
        %718 = vst [vmem:[#allocation2 + $0x4] sm:$0xf] %v710
        %v719 = vld [vmem:[#allocation2 + $0x8] sm:$0x1]
        %v720 = vsel %vm265, %v711, %v719
        %721 = vst [vmem:[#allocation2 + $0x8] sm:$0x1] %v720
      $region44: #{basic_block.4} parent=35 // pred_fallthru
        _
      %p722 = scmp.eq.s32.totalorder %s22, 1
      // Predicated region
      $region45: #{basic_block.4} parent=35 // pred_check
        %p723 = pneg %p722
      $region46: #{basic_block.4} parent=35 // pred_check_branch
        %725 = sbr.rel (%p723) target = $region48
      $region47: #{basic_block.4} parent=35 // pred_region
        %s726 = scalar_lea.vmem [#allocation2], 108
        %v727 = vld [vmem:[%s726] sm:$0xf]
        %v728 = vsel %vm599, 0, %v727
        %729 = vst [vmem:[%s726] sm:$0xf] %v728
        %730 = vst [vmem:[%s726 + $0x4] sm:$0xf] 0
        %v731 = vld [vmem:[%s726 + $0x8] sm:$0x1]
        %v732 = vsel %vm265, 0, %v731
        %733 = vst [vmem:[%s726 + $0x8] sm:$0x1] %v732
      $region48: #{basic_block.4} parent=35 // pred_fallthru
        _
      %p734 = scmp.lt.s32.totalorder %s22, 1
      // Predicated region
      $region49: #{basic_block.4} parent=35 // pred_check
        %p735 = pneg %p734
      $region50: #{basic_block.4} parent=35 // pred_check_branch
        %737 = sbr.rel (%p735) target = $region52
      $region51: #{basic_block.4} parent=35 // pred_region
        %s738 = sadd.s32 %s262, 8
        %s739 = smul.u32 %s738, 2
        %s740 = smul.addr %s739, 4
        %s741 = scalar_lea.vmem %s245, %s740
        %v742 = vld [vmem:[%s741] sm:$0xf]
        %v743 = vld [vmem:[%s741 + $0x4] sm:$0xf]
        %v744 = vunpack.c.l.bf16 %v742
        %v745 = vunpack.c.l.bf16 %v743
        %v746 = vld [vmem:[%s1] sm:$0x1]
        %v747 = vld [vmem:[%s2] sm:$0x1]
        %v749 = vperm.slane %v746, 0
        %v751 = vmul.f32 %v744, %v749
        %v752 = vmul.f32 %v745, %v749
        %v754 = vperm.slane %v747, 0
        %v756 = vadd.f32 %v751, %v754
        %v757 = vadd.f32 %v752, %v754
        %v758 = vmax.f32 %v756, 0.0
        %v759 = vmax.f32 %v757, 0.0
        %v760 = vpack.c.bf16 %v758, %v758
        %v761 = vpack.c.bf16 %v759, %v759
        %v763 = vshrl.u32 %v760, 16
        %v765 = vrot.slane %v763, 7
        %v766 = vshll.u32 %v760, 16
        %v768 = vor.u32 %v765, %v766
        %v769 = vrot.slane %v765, 4
        %v771 = vshrl.u32 %v761, 16
        %v773 = vrot.slane %v771, 7
        %v774 = vshll.u32 %v761, 16
        %v776 = vor.u32 %v773, %v774
        %v777 = vsel %vm436, %v769, %v776
        %v778 = vrot.slane %v773, 4
        %s782 = scalar_lea.vmem [#allocation2], 108
        %v783 = vld [vmem:[%s782] sm:$0xf]
        %v784 = vsel %vm599, %v768, %v783
        %785 = vst [vmem:[%s782] sm:$0xf] %v784
        %786 = vst [vmem:[%s782 + $0x4] sm:$0xf] %v777
        %v787 = vld [vmem:[%s782 + $0x8] sm:$0x1]
        %v788 = vsel %vm265, %v778, %v787
        %789 = vst [vmem:[%s782 + $0x8] sm:$0x1] %v788
      $region52: #{basic_block.4} parent=35 // pred_fallthru
        _
      %v790 = vld [vmem:[#allocation2] sm:$0xf]
      %v791 = vld [vmem:[#allocation2 + $0x4] sm:$0xf]
      %v792 = vld [vmem:[#allocation2 + $0xc] sm:$0xf]
      %v793 = vld [vmem:[#allocation2 + $0x10] sm:$0xf]
      %v794 = vld [vmem:[#allocation2 + $0x18] sm:$0xf]
      %v795 = vld [vmem:[#allocation2 + $0x1c] sm:$0xf]
      %v796 = vld [vmem:[#allocation2 + $0x24] sm:$0xf]
      %v797 = vld [vmem:[#allocation2 + $0x28] sm:$0xf]
      %v798 = vld [vmem:[#allocation2 + $0x30] sm:$0xf]
      %v799 = vld [vmem:[#allocation2 + $0x34] sm:$0xf]
      %v800 = vld [vmem:[#allocation2 + $0x3c] sm:$0xf]
      %v801 = vld [vmem:[#allocation2 + $0x40] sm:$0xf]
      %v802 = vld [vmem:[#allocation2 + $0x48] sm:$0xf]
      %v803 = vld [vmem:[#allocation2 + $0x4c] sm:$0xf]
      %v804 = vld [vmem:[#allocation2 + $0x54] sm:$0xf]
      %v805 = vld [vmem:[#allocation2 + $0x58] sm:$0xf]
      %806 = vst [vmem:[#allocation3] sm:$0xf] %v790
      %807 = vst [vmem:[#allocation3 + $0x24] sm:$0xf] %v791
      %808 = vst [vmem:[#allocation3 + $0x48] sm:$0xf] %v792
      %809 = vst [vmem:[#allocation3 + $0x6c] sm:$0xf] %v793
      %810 = vst [vmem:[#allocation3 + $0x90] sm:$0xf] %v794
      %811 = vst [vmem:[#allocation3 + $0xb4] sm:$0xf] %v795
      %812 = vst [vmem:[#allocation3 + $0xd8] sm:$0xf] %v796
      %813 = vst [vmem:[#allocation3 + $0xfc] sm:$0xf] %v797
      %814 = vst [vmem:[#allocation3 + $0x120] sm:$0xf] %v798
      %815 = vst [vmem:[#allocation3 + $0x144] sm:$0xf] %v799
      %816 = vst [vmem:[#allocation3 + $0x168] sm:$0xf] %v800
      %817 = vst [vmem:[#allocation3 + $0x18c] sm:$0xf] %v801
      %818 = vst [vmem:[#allocation3 + $0x1b0] sm:$0xf] %v802
      %819 = vst [vmem:[#allocation3 + $0x1d4] sm:$0xf] %v803
      %820 = vst [vmem:[#allocation3 + $0x1f8] sm:$0xf] %v804
      %821 = vst [vmem:[#allocation3 + $0x21c] sm:$0xf] %v805
      %v822 = vld [vmem:[#allocation2] sm:$0xf]
      %v823 = vld [vmem:[#allocation2 + $0x4] sm:$0xf]
      %v824 = vld [vmem:[#allocation2 + $0x8] sm:$0x1]
      %v825 = vld [vmem:[#allocation2 + $0xc] sm:$0xf]
      %v826 = vld [vmem:[#allocation2 + $0x10] sm:$0xf]
      %v827 = vld [vmem:[#allocation2 + $0x14] sm:$0x1]
      %v828 = vld [vmem:[#allocation2 + $0x18] sm:$0xf]
      %v829 = vld [vmem:[#allocation2 + $0x1c] sm:$0xf]
      %v830 = vld [vmem:[#allocation2 + $0x20] sm:$0x1]
      %v831 = vld [vmem:[#allocation2 + $0x24] sm:$0xf]
      %v832 = vld [vmem:[#allocation2 + $0x28] sm:$0xf]
      %v833 = vld [vmem:[#allocation2 + $0x2c] sm:$0x1]
      %v834 = vld [vmem:[#allocation2 + $0x30] sm:$0xf]
      %v835 = vld [vmem:[#allocation2 + $0x34] sm:$0xf]
      %v836 = vld [vmem:[#allocation2 + $0x38] sm:$0x1]
      %v837 = vld [vmem:[#allocation2 + $0x3c] sm:$0xf]
      %v838 = vld [vmem:[#allocation2 + $0x40] sm:$0xf]
      %v839 = vld [vmem:[#allocation2 + $0x44] sm:$0x1]
      %v840 = vld [vmem:[#allocation2 + $0x48] sm:$0xf]
      %v841 = vld [vmem:[#allocation2 + $0x4c] sm:$0xf]
      %v842 = vld [vmem:[#allocation2 + $0x50] sm:$0x1]
      %v843 = vld [vmem:[#allocation2 + $0x54] sm:$0xf]
      %v844 = vld [vmem:[#allocation2 + $0x58] sm:$0xf]
      %v845 = vld [vmem:[#allocation2 + $0x5c] sm:$0x1]
      %vm846 = vsmask.f32 3328
      %vm847 = vsmask.f32 7440
      %vm848 = vmor %vm846, %vm847
      %v850 = vshrl.u32 %v822, 16
      %v852 = vrot.slane %v850, 4
      %v853 = vshll.u32 %v822, 16
      %v855 = vrot.slane %v853, 5
      %v856 = vor.u32 %v852, %v855
      %v857 = vrot.slane %v856, 4
      %v859 = vshll.u32 %v823, 16
      %v861 = vrot.slane %v859, 5
      %v862 = vsel %vm848, %v857, %v861
      %v863 = vshrl.u32 %v823, 16
      %v865 = vrot.slane %v863, 4
      %v866 = vor.u32 %v865, %v861
      %v867 = vrot.slane %v866, 4
      %v869 = vshll.u32 %v824, 16
      %v871 = vrot.slane %v869, 5
      %v872 = vsel %vm848, %v867, %v871
      %v874 = vshrl.u32 %v825, 16
      %v876 = vrot.slane %v874, 4
      %v877 = vshll.u32 %v825, 16
      %v879 = vrot.slane %v877, 5
      %v880 = vor.u32 %v876, %v879
      %v881 = vrot.slane %v880, 4
      %v883 = vshll.u32 %v826, 16
      %v885 = vrot.slane %v883, 5
      %v886 = vsel %vm848, %v881, %v885
      %v887 = vshrl.u32 %v826, 16
      %v889 = vrot.slane %v887, 4
      %v890 = vor.u32 %v889, %v885
      %v891 = vrot.slane %v890, 4
      %v893 = vshll.u32 %v827, 16
      %v895 = vrot.slane %v893, 5
      %v896 = vsel %vm848, %v891, %v895
      %v898 = vshrl.u32 %v828, 16
      %v900 = vrot.slane %v898, 4
      %v901 = vshll.u32 %v828, 16
      %v903 = vrot.slane %v901, 5
      %v904 = vor.u32 %v900, %v903
      %v905 = vrot.slane %v904, 4
      %v907 = vshll.u32 %v829, 16
      %v909 = vrot.slane %v907, 5
      %v910 = vsel %vm848, %v905, %v909
      %v911 = vshrl.u32 %v829, 16
      %v913 = vrot.slane %v911, 4
      %v914 = vor.u32 %v913, %v909
      %v915 = vrot.slane %v914, 4
      %v917 = vshll.u32 %v830, 16
      %v919 = vrot.slane %v917, 5
      %v920 = vsel %vm848, %v915, %v919
      %v922 = vshrl.u32 %v831, 16
      %v924 = vrot.slane %v922, 4
      %v925 = vshll.u32 %v831, 16
      %v927 = vrot.slane %v925, 5
      %v928 = vor.u32 %v924, %v927
      %v929 = vrot.slane %v928, 4
      %v931 = vshll.u32 %v832, 16
      %v933 = vrot.slane %v931, 5
      %v934 = vsel %vm848, %v929, %v933
      %v935 = vshrl.u32 %v832, 16
      %v937 = vrot.slane %v935, 4
      %v938 = vor.u32 %v937, %v933
      %v939 = vrot.slane %v938, 4
      %v941 = vshll.u32 %v833, 16
      %v943 = vrot.slane %v941, 5
      %v944 = vsel %vm848, %v939, %v943
      %v946 = vshrl.u32 %v834, 16
      %v948 = vrot.slane %v946, 4
      %v949 = vshll.u32 %v834, 16
      %v951 = vrot.slane %v949, 5
      %v952 = vor.u32 %v948, %v951
      %v953 = vrot.slane %v952, 4
      %v955 = vshll.u32 %v835, 16
      %v957 = vrot.slane %v955, 5
      %v958 = vsel %vm848, %v953, %v957
      %v959 = vshrl.u32 %v835, 16
      %v961 = vrot.slane %v959, 4
      %v962 = vor.u32 %v961, %v957
      %v963 = vrot.slane %v962, 4
      %v965 = vshll.u32 %v836, 16
      %v967 = vrot.slane %v965, 5
      %v968 = vsel %vm848, %v963, %v967
      %v970 = vshrl.u32 %v837, 16
      %v972 = vrot.slane %v970, 4
      %v973 = vshll.u32 %v837, 16
      %v975 = vrot.slane %v973, 5
      %v976 = vor.u32 %v972, %v975
      %v977 = vrot.slane %v976, 4
      %v979 = vshll.u32 %v838, 16
      %v981 = vrot.slane %v979, 5
      %v982 = vsel %vm848, %v977, %v981
      %v983 = vshrl.u32 %v838, 16
      %v985 = vrot.slane %v983, 4
      %v986 = vor.u32 %v985, %v981
      %v987 = vrot.slane %v986, 4
      %v989 = vshll.u32 %v839, 16
      %v991 = vrot.slane %v989, 5
      %v992 = vsel %vm848, %v987, %v991
      %v994 = vshrl.u32 %v840, 16
      %v996 = vrot.slane %v994, 4
      %v997 = vshll.u32 %v840, 16
      %v999 = vrot.slane %v997, 5
      %v1000 = vor.u32 %v996, %v999
      %v1001 = vrot.slane %v1000, 4
      %v1003 = vshll.u32 %v841, 16
      %v1005 = vrot.slane %v1003, 5
      %v1006 = vsel %vm848, %v1001, %v1005
      %v1007 = vshrl.u32 %v841, 16
      %v1009 = vrot.slane %v1007, 4
      %v1010 = vor.u32 %v1009, %v1005
      %v1011 = vrot.slane %v1010, 4
      %v1013 = vshll.u32 %v842, 16
      %v1015 = vrot.slane %v1013, 5
      %v1016 = vsel %vm848, %v1011, %v1015
      %v1018 = vshrl.u32 %v843, 16
      %v1020 = vrot.slane %v1018, 4
      %v1021 = vshll.u32 %v843, 16
      %v1023 = vrot.slane %v1021, 5
      %v1024 = vor.u32 %v1020, %v1023
      %v1025 = vrot.slane %v1024, 4
      %v1027 = vshll.u32 %v844, 16
      %v1029 = vrot.slane %v1027, 5
      %v1030 = vsel %vm848, %v1025, %v1029
      %v1031 = vshrl.u32 %v844, 16
      %v1033 = vrot.slane %v1031, 4
      %v1034 = vor.u32 %v1033, %v1029
      %v1035 = vrot.slane %v1034, 4
      %v1037 = vshll.u32 %v845, 16
      %v1039 = vrot.slane %v1037, 5
      %v1040 = vsel %vm848, %v1035, %v1039
      %1057 = vst [vmem:[#allocation3 + $0x4] sm:$0xf] %v862
      %1058 = vst [vmem:[#allocation3 + $0x28] sm:$0xf] %v872
      %1059 = vst [vmem:[#allocation3 + $0x4c] sm:$0xf] %v886
      %1060 = vst [vmem:[#allocation3 + $0x70] sm:$0xf] %v896
      %1061 = vst [vmem:[#allocation3 + $0x94] sm:$0xf] %v910
      %1062 = vst [vmem:[#allocation3 + $0xb8] sm:$0xf] %v920
      %1063 = vst [vmem:[#allocation3 + $0xdc] sm:$0xf] %v934
      %1064 = vst [vmem:[#allocation3 + $0x100] sm:$0xf] %v944
      %1065 = vst [vmem:[#allocation3 + $0x124] sm:$0xf] %v958
      %1066 = vst [vmem:[#allocation3 + $0x148] sm:$0xf] %v968
      %1067 = vst [vmem:[#allocation3 + $0x16c] sm:$0xf] %v982
      %1068 = vst [vmem:[#allocation3 + $0x190] sm:$0xf] %v992
      %1069 = vst [vmem:[#allocation3 + $0x1b4] sm:$0xf] %v1006
      %1070 = vst [vmem:[#allocation3 + $0x1d8] sm:$0xf] %v1016
      %1071 = vst [vmem:[#allocation3 + $0x1fc] sm:$0xf] %v1030
      %1072 = vst [vmem:[#allocation3 + $0x220] sm:$0xf] %v1040
      %v1073 = vld [vmem:[#allocation2] sm:$0xe]
      %v1074 = vld [vmem:[#allocation2 + $0x4] sm:$0xf]
      %v1075 = vld [vmem:[#allocation2 + $0x8] sm:$0x1]
      %v1076 = vld [vmem:[#allocation2 + $0xc] sm:$0xe]
      %v1077 = vld [vmem:[#allocation2 + $0x10] sm:$0xf]
      %v1078 = vld [vmem:[#allocation2 + $0x14] sm:$0x1]
      %v1079 = vld [vmem:[#allocation2 + $0x18] sm:$0xe]
      %v1080 = vld [vmem:[#allocation2 + $0x1c] sm:$0xf]
      %v1081 = vld [vmem:[#allocation2 + $0x20] sm:$0x1]
      %v1082 = vld [vmem:[#allocation2 + $0x24] sm:$0xe]
      %v1083 = vld [vmem:[#allocation2 + $0x28] sm:$0xf]
      %v1084 = vld [vmem:[#allocation2 + $0x2c] sm:$0x1]
      %v1085 = vld [vmem:[#allocation2 + $0x30] sm:$0xe]
      %v1086 = vld [vmem:[#allocation2 + $0x34] sm:$0xf]
      %v1087 = vld [vmem:[#allocation2 + $0x38] sm:$0x1]
      %v1088 = vld [vmem:[#allocation2 + $0x3c] sm:$0xe]
      %v1089 = vld [vmem:[#allocation2 + $0x40] sm:$0xf]
      %v1090 = vld [vmem:[#allocation2 + $0x44] sm:$0x1]
      %v1091 = vld [vmem:[#allocation2 + $0x48] sm:$0xe]
      %v1092 = vld [vmem:[#allocation2 + $0x4c] sm:$0xf]
      %v1093 = vld [vmem:[#allocation2 + $0x50] sm:$0x1]
      %v1094 = vld [vmem:[#allocation2 + $0x54] sm:$0xe]
      %v1095 = vld [vmem:[#allocation2 + $0x58] sm:$0xf]
      %v1096 = vld [vmem:[#allocation2 + $0x5c] sm:$0x1]
      %vm1121 = vcmask 1042432
      %vm1122 = vcmask 1046532
      %vm1123 = vmor %vm1121, %vm1122
      %v1124 = vrot.slane %v1073, 5
      %v1125 = vrot.slane %v1124, 4
      %v1126 = vrot.slane %v1074, 5
      %v1127 = vsel %vm1123, %v1125, %v1126
      %v1128 = vrot.slane %v1126, 4
      %v1129 = vrot.slane %v1075, 5
      %v1130 = vsel %vm1123, %v1128, %v1129
      %v1131 = vrot.slane %v1076, 5
      %v1132 = vrot.slane %v1131, 4
      %v1133 = vrot.slane %v1077, 5
      %v1134 = vsel %vm1123, %v1132, %v1133
      %v1135 = vrot.slane %v1133, 4
      %v1136 = vrot.slane %v1078, 5
      %v1137 = vsel %vm1123, %v1135, %v1136
      %v1138 = vrot.slane %v1079, 5
      %v1139 = vrot.slane %v1138, 4
      %v1140 = vrot.slane %v1080, 5
      %v1141 = vsel %vm1123, %v1139, %v1140
      %v1142 = vrot.slane %v1140, 4
      %v1143 = vrot.slane %v1081, 5
      %v1144 = vsel %vm1123, %v1142, %v1143
      %v1145 = vrot.slane %v1082, 5
      %v1146 = vrot.slane %v1145, 4
      %v1147 = vrot.slane %v1083, 5
      %v1148 = vsel %vm1123, %v1146, %v1147
      %v1149 = vrot.slane %v1147, 4
      %v1150 = vrot.slane %v1084, 5
      %v1151 = vsel %vm1123, %v1149, %v1150
      %v1152 = vrot.slane %v1085, 5
      %v1153 = vrot.slane %v1152, 4
      %v1154 = vrot.slane %v1086, 5
      %v1155 = vsel %vm1123, %v1153, %v1154
      %v1156 = vrot.slane %v1154, 4
      %v1157 = vrot.slane %v1087, 5
      %v1158 = vsel %vm1123, %v1156, %v1157
      %v1159 = vrot.slane %v1088, 5
      %v1160 = vrot.slane %v1159, 4
      %v1161 = vrot.slane %v1089, 5
      %v1162 = vsel %vm1123, %v1160, %v1161
      %v1163 = vrot.slane %v1161, 4
      %v1164 = vrot.slane %v1090, 5
      %v1165 = vsel %vm1123, %v1163, %v1164
      %v1166 = vrot.slane %v1091, 5
      %v1167 = vrot.slane %v1166, 4
      %v1168 = vrot.slane %v1092, 5
      %v1169 = vsel %vm1123, %v1167, %v1168
      %v1170 = vrot.slane %v1168, 4
      %v1171 = vrot.slane %v1093, 5
      %v1172 = vsel %vm1123, %v1170, %v1171
      %v1173 = vrot.slane %v1094, 5
      %v1174 = vrot.slane %v1173, 4
      %v1175 = vrot.slane %v1095, 5
      %v1176 = vsel %vm1123, %v1174, %v1175
      %v1177 = vrot.slane %v1175, 4
      %v1178 = vrot.slane %v1096, 5
      %v1179 = vsel %vm1123, %v1177, %v1178
      %1196 = vst [vmem:[#allocation3 + $0x8] sm:$0xf] %v1127
      %1197 = vst [vmem:[#allocation3 + $0x2c] sm:$0xf] %v1130
      %1198 = vst [vmem:[#allocation3 + $0x50] sm:$0xf] %v1134
      %1199 = vst [vmem:[#allocation3 + $0x74] sm:$0xf] %v1137
      %1200 = vst [vmem:[#allocation3 + $0x98] sm:$0xf] %v1141
      %1201 = vst [vmem:[#allocation3 + $0xbc] sm:$0xf] %v1144
      %1202 = vst [vmem:[#allocation3 + $0xe0] sm:$0xf] %v1148
      %1203 = vst [vmem:[#allocation3 + $0x104] sm:$0xf] %v1151
      %1204 = vst [vmem:[#allocation3 + $0x128] sm:$0xf] %v1155
      %1205 = vst [vmem:[#allocation3 + $0x14c] sm:$0xf] %v1158
      %1206 = vst [vmem:[#allocation3 + $0x170] sm:$0xf] %v1162
      %1207 = vst [vmem:[#allocation3 + $0x194] sm:$0xf] %v1165
      %1208 = vst [vmem:[#allocation3 + $0x1b8] sm:$0xf] %v1169
      %1209 = vst [vmem:[#allocation3 + $0x1dc] sm:$0xf] %v1172
      %1210 = vst [vmem:[#allocation3 + $0x200] sm:$0xf] %v1176
      %1211 = vst [vmem:[#allocation3 + $0x224] sm:$0xf] %v1179
      %v1212 = vld [vmem:[%s597] sm:$0xf]
      %v1213 = vld [vmem:[%s597 + $0x4] sm:$0xf]
      %v1214 = vld [vmem:[%s597 + $0xc] sm:$0xf]
      %v1215 = vld [vmem:[%s597 + $0x10] sm:$0xf]
      %v1216 = vld [vmem:[%s597 + $0x18] sm:$0xf]
      %v1217 = vld [vmem:[%s597 + $0x1c] sm:$0xf]
      %v1218 = vld [vmem:[%s597 + $0x24] sm:$0xf]
      %v1219 = vld [vmem:[%s597 + $0x28] sm:$0xf]
      %v1220 = vld [vmem:[%s597 + $0x30] sm:$0xf]
      %v1221 = vld [vmem:[%s597 + $0x34] sm:$0xf]
      %v1222 = vld [vmem:[%s597 + $0x3c] sm:$0xf]
      %v1223 = vld [vmem:[%s597 + $0x40] sm:$0xf]
      %v1224 = vld [vmem:[%s597 + $0x48] sm:$0xf]
      %v1225 = vld [vmem:[%s597 + $0x4c] sm:$0xf]
      %v1226 = vld [vmem:[%s597 + $0x54] sm:$0xf]
      %v1227 = vld [vmem:[%s597 + $0x58] sm:$0xf]
      %1228 = vst [vmem:[#allocation3 + $0xc] sm:$0xf] %v1212
      %1229 = vst [vmem:[#allocation3 + $0x30] sm:$0xf] %v1213
      %1230 = vst [vmem:[#allocation3 + $0x54] sm:$0xf] %v1214
      %1231 = vst [vmem:[#allocation3 + $0x78] sm:$0xf] %v1215
      %1232 = vst [vmem:[#allocation3 + $0x9c] sm:$0xf] %v1216
      %1233 = vst [vmem:[#allocation3 + $0xc0] sm:$0xf] %v1217
      %1234 = vst [vmem:[#allocation3 + $0xe4] sm:$0xf] %v1218
      %1235 = vst [vmem:[#allocation3 + $0x108] sm:$0xf] %v1219
      %1236 = vst [vmem:[#allocation3 + $0x12c] sm:$0xf] %v1220
      %1237 = vst [vmem:[#allocation3 + $0x150] sm:$0xf] %v1221
      %1238 = vst [vmem:[#allocation3 + $0x174] sm:$0xf] %v1222
      %1239 = vst [vmem:[#allocation3 + $0x198] sm:$0xf] %v1223
      %1240 = vst [vmem:[#allocation3 + $0x1bc] sm:$0xf] %v1224
      %1241 = vst [vmem:[#allocation3 + $0x1e0] sm:$0xf] %v1225
      %1242 = vst [vmem:[#allocation3 + $0x204] sm:$0xf] %v1226
      %1243 = vst [vmem:[#allocation3 + $0x228] sm:$0xf] %v1227
      %v1244 = vld [vmem:[%s597] sm:$0xf]
      %v1245 = vld [vmem:[%s597 + $0x4] sm:$0xf]
      %v1246 = vld [vmem:[%s597 + $0x8] sm:$0x1]
      %v1247 = vld [vmem:[%s597 + $0xc] sm:$0xf]
      %v1248 = vld [vmem:[%s597 + $0x10] sm:$0xf]
      %v1249 = vld [vmem:[%s597 + $0x14] sm:$0x1]
      %v1250 = vld [vmem:[%s597 + $0x18] sm:$0xf]
      %v1251 = vld [vmem:[%s597 + $0x1c] sm:$0xf]
      %v1252 = vld [vmem:[%s597 + $0x20] sm:$0x1]
      %v1253 = vld [vmem:[%s597 + $0x24] sm:$0xf]
      %v1254 = vld [vmem:[%s597 + $0x28] sm:$0xf]
      %v1255 = vld [vmem:[%s597 + $0x2c] sm:$0x1]
      %v1256 = vld [vmem:[%s597 + $0x30] sm:$0xf]
      %v1257 = vld [vmem:[%s597 + $0x34] sm:$0xf]
      %v1258 = vld [vmem:[%s597 + $0x38] sm:$0x1]
      %v1259 = vld [vmem:[%s597 + $0x3c] sm:$0xf]
      %v1260 = vld [vmem:[%s597 + $0x40] sm:$0xf]
      %v1261 = vld [vmem:[%s597 + $0x44] sm:$0x1]
      %v1262 = vld [vmem:[%s597 + $0x48] sm:$0xf]
      %v1263 = vld [vmem:[%s597 + $0x4c] sm:$0xf]
      %v1264 = vld [vmem:[%s597 + $0x50] sm:$0x1]
      %v1265 = vld [vmem:[%s597 + $0x54] sm:$0xf]
      %v1266 = vld [vmem:[%s597 + $0x58] sm:$0xf]
      %v1267 = vld [vmem:[%s597 + $0x5c] sm:$0x1]
      %v1269 = vshrl.u32 %v1244, 16
      %v1271 = vrot.slane %v1269, 4
      %v1272 = vshll.u32 %v1244, 16
      %v1274 = vrot.slane %v1272, 5
      %v1275 = vor.u32 %v1271, %v1274
      %v1276 = vrot.slane %v1275, 4
      %v1278 = vshll.u32 %v1245, 16
      %v1280 = vrot.slane %v1278, 5
      %v1281 = vsel %vm848, %v1276, %v1280
      %v1282 = vshrl.u32 %v1245, 16
      %v1284 = vrot.slane %v1282, 4
      %v1285 = vor.u32 %v1284, %v1280
      %v1286 = vrot.slane %v1285, 4
      %v1288 = vshll.u32 %v1246, 16
      %v1290 = vrot.slane %v1288, 5
      %v1291 = vsel %vm848, %v1286, %v1290
      %v1293 = vshrl.u32 %v1247, 16
      %v1295 = vrot.slane %v1293, 4
      %v1296 = vshll.u32 %v1247, 16
      %v1298 = vrot.slane %v1296, 5
      %v1299 = vor.u32 %v1295, %v1298
      %v1300 = vrot.slane %v1299, 4
      %v1302 = vshll.u32 %v1248, 16
      %v1304 = vrot.slane %v1302, 5
      %v1305 = vsel %vm848, %v1300, %v1304
      %v1306 = vshrl.u32 %v1248, 16
      %v1308 = vrot.slane %v1306, 4
      %v1309 = vor.u32 %v1308, %v1304
      %v1310 = vrot.slane %v1309, 4
      %v1312 = vshll.u32 %v1249, 16
      %v1314 = vrot.slane %v1312, 5
      %v1315 = vsel %vm848, %v1310, %v1314
      %v1317 = vshrl.u32 %v1250, 16
      %v1319 = vrot.slane %v1317, 4
      %v1320 = vshll.u32 %v1250, 16
      %v1322 = vrot.slane %v1320, 5
      %v1323 = vor.u32 %v1319, %v1322
      %v1324 = vrot.slane %v1323, 4
      %v1326 = vshll.u32 %v1251, 16
      %v1328 = vrot.slane %v1326, 5
      %v1329 = vsel %vm848, %v1324, %v1328
      %v1330 = vshrl.u32 %v1251, 16
      %v1332 = vrot.slane %v1330, 4
      %v1333 = vor.u32 %v1332, %v1328
      %v1334 = vrot.slane %v1333, 4
      %v1336 = vshll.u32 %v1252, 16
      %v1338 = vrot.slane %v1336, 5
      %v1339 = vsel %vm848, %v1334, %v1338
      %v1341 = vshrl.u32 %v1253, 16
      %v1343 = vrot.slane %v1341, 4
      %v1344 = vshll.u32 %v1253, 16
      %v1346 = vrot.slane %v1344, 5
      %v1347 = vor.u32 %v1343, %v1346
      %v1348 = vrot.slane %v1347, 4
      %v1350 = vshll.u32 %v1254, 16
      %v1352 = vrot.slane %v1350, 5
      %v1353 = vsel %vm848, %v1348, %v1352
      %v1354 = vshrl.u32 %v1254, 16
      %v1356 = vrot.slane %v1354, 4
      %v1357 = vor.u32 %v1356, %v1352
      %v1358 = vrot.slane %v1357, 4
      %v1360 = vshll.u32 %v1255, 16
      %v1362 = vrot.slane %v1360, 5
      %v1363 = vsel %vm848, %v1358, %v1362
      %v1365 = vshrl.u32 %v1256, 16
      %v1367 = vrot.slane %v1365, 4
      %v1368 = vshll.u32 %v1256, 16
      %v1370 = vrot.slane %v1368, 5
      %v1371 = vor.u32 %v1367, %v1370
      %v1372 = vrot.slane %v1371, 4
      %v1374 = vshll.u32 %v1257, 16
      %v1376 = vrot.slane %v1374, 5
      %v1377 = vsel %vm848, %v1372, %v1376
      %v1378 = vshrl.u32 %v1257, 16
      %v1380 = vrot.slane %v1378, 4
      %v1381 = vor.u32 %v1380, %v1376
      %v1382 = vrot.slane %v1381, 4
      %v1384 = vshll.u32 %v1258, 16
      %v1386 = vrot.slane %v1384, 5
      %v1387 = vsel %vm848, %v1382, %v1386
      %v1389 = vshrl.u32 %v1259, 16
      %v1391 = vrot.slane %v1389, 4
      %v1392 = vshll.u32 %v1259, 16
      %v1394 = vrot.slane %v1392, 5
      %v1395 = vor.u32 %v1391, %v1394
      %v1396 = vrot.slane %v1395, 4
      %v1398 = vshll.u32 %v1260, 16
      %v1400 = vrot.slane %v1398, 5
      %v1401 = vsel %vm848, %v1396, %v1400
      %v1402 = vshrl.u32 %v1260, 16
      %v1404 = vrot.slane %v1402, 4
      %v1405 = vor.u32 %v1404, %v1400
      %v1406 = vrot.slane %v1405, 4
      %v1408 = vshll.u32 %v1261, 16
      %v1410 = vrot.slane %v1408, 5
      %v1411 = vsel %vm848, %v1406, %v1410
      %v1413 = vshrl.u32 %v1262, 16
      %v1415 = vrot.slane %v1413, 4
      %v1416 = vshll.u32 %v1262, 16
      %v1418 = vrot.slane %v1416, 5
      %v1419 = vor.u32 %v1415, %v1418
      %v1420 = vrot.slane %v1419, 4
      %v1422 = vshll.u32 %v1263, 16
      %v1424 = vrot.slane %v1422, 5
      %v1425 = vsel %vm848, %v1420, %v1424
      %v1426 = vshrl.u32 %v1263, 16
      %v1428 = vrot.slane %v1426, 4
      %v1429 = vor.u32 %v1428, %v1424
      %v1430 = vrot.slane %v1429, 4
      %v1432 = vshll.u32 %v1264, 16
      %v1434 = vrot.slane %v1432, 5
      %v1435 = vsel %vm848, %v1430, %v1434
      %v1437 = vshrl.u32 %v1265, 16
      %v1439 = vrot.slane %v1437, 4
      %v1440 = vshll.u32 %v1265, 16
      %v1442 = vrot.slane %v1440, 5
      %v1443 = vor.u32 %v1439, %v1442
      %v1444 = vrot.slane %v1443, 4
      %v1446 = vshll.u32 %v1266, 16
      %v1448 = vrot.slane %v1446, 5
      %v1449 = vsel %vm848, %v1444, %v1448
      %v1450 = vshrl.u32 %v1266, 16
      %v1452 = vrot.slane %v1450, 4
      %v1453 = vor.u32 %v1452, %v1448
      %v1454 = vrot.slane %v1453, 4
      %v1456 = vshll.u32 %v1267, 16
      %v1458 = vrot.slane %v1456, 5
      %v1459 = vsel %vm848, %v1454, %v1458
      %1476 = vst [vmem:[#allocation3 + $0x10] sm:$0xf] %v1281
      %1477 = vst [vmem:[#allocation3 + $0x34] sm:$0xf] %v1291
      %1478 = vst [vmem:[#allocation3 + $0x58] sm:$0xf] %v1305
      %1479 = vst [vmem:[#allocation3 + $0x7c] sm:$0xf] %v1315
      %1480 = vst [vmem:[#allocation3 + $0xa0] sm:$0xf] %v1329
      %1481 = vst [vmem:[#allocation3 + $0xc4] sm:$0xf] %v1339
      %1482 = vst [vmem:[#allocation3 + $0xe8] sm:$0xf] %v1353
      %1483 = vst [vmem:[#allocation3 + $0x10c] sm:$0xf] %v1363
      %1484 = vst [vmem:[#allocation3 + $0x130] sm:$0xf] %v1377
      %1485 = vst [vmem:[#allocation3 + $0x154] sm:$0xf] %v1387
      %1486 = vst [vmem:[#allocation3 + $0x178] sm:$0xf] %v1401
      %1487 = vst [vmem:[#allocation3 + $0x19c] sm:$0xf] %v1411
      %1488 = vst [vmem:[#allocation3 + $0x1c0] sm:$0xf] %v1425
      %1489 = vst [vmem:[#allocation3 + $0x1e4] sm:$0xf] %v1435
      %1490 = vst [vmem:[#allocation3 + $0x208] sm:$0xf] %v1449
      %1491 = vst [vmem:[#allocation3 + $0x22c] sm:$0xf] %v1459
      %v1492 = vld [vmem:[%s597] sm:$0xe]
      %v1493 = vld [vmem:[%s597 + $0x4] sm:$0xf]
      %v1494 = vld [vmem:[%s597 + $0x8] sm:$0x1]
      %v1495 = vld [vmem:[%s597 + $0xc] sm:$0xe]
      %v1496 = vld [vmem:[%s597 + $0x10] sm:$0xf]
      %v1497 = vld [vmem:[%s597 + $0x14] sm:$0x1]
      %v1498 = vld [vmem:[%s597 + $0x18] sm:$0xe]
      %v1499 = vld [vmem:[%s597 + $0x1c] sm:$0xf]
      %v1500 = vld [vmem:[%s597 + $0x20] sm:$0x1]
      %v1501 = vld [vmem:[%s597 + $0x24] sm:$0xe]
      %v1502 = vld [vmem:[%s597 + $0x28] sm:$0xf]
      %v1503 = vld [vmem:[%s597 + $0x2c] sm:$0x1]
      %v1504 = vld [vmem:[%s597 + $0x30] sm:$0xe]
      %v1505 = vld [vmem:[%s597 + $0x34] sm:$0xf]
      %v1506 = vld [vmem:[%s597 + $0x38] sm:$0x1]
      %v1507 = vld [vmem:[%s597 + $0x3c] sm:$0xe]
      %v1508 = vld [vmem:[%s597 + $0x40] sm:$0xf]
      %v1509 = vld [vmem:[%s597 + $0x44] sm:$0x1]
      %v1510 = vld [vmem:[%s597 + $0x48] sm:$0xe]
      %v1511 = vld [vmem:[%s597 + $0x4c] sm:$0xf]
      %v1512 = vld [vmem:[%s597 + $0x50] sm:$0x1]
      %v1513 = vld [vmem:[%s597 + $0x54] sm:$0xe]
      %v1514 = vld [vmem:[%s597 + $0x58] sm:$0xf]
      %v1515 = vld [vmem:[%s597 + $0x5c] sm:$0x1]
      %v1540 = vrot.slane %v1492, 5
      %v1541 = vrot.slane %v1540, 4
      %v1542 = vrot.slane %v1493, 5
      %v1543 = vsel %vm1123, %v1541, %v1542
      %v1544 = vrot.slane %v1542, 4
      %v1545 = vrot.slane %v1494, 5
      %v1546 = vsel %vm1123, %v1544, %v1545
      %v1547 = vrot.slane %v1495, 5
      %v1548 = vrot.slane %v1547, 4
      %v1549 = vrot.slane %v1496, 5
      %v1550 = vsel %vm1123, %v1548, %v1549
      %v1551 = vrot.slane %v1549, 4
      %v1552 = vrot.slane %v1497, 5
      %v1553 = vsel %vm1123, %v1551, %v1552
      %v1554 = vrot.slane %v1498, 5
      %v1555 = vrot.slane %v1554, 4
      %v1556 = vrot.slane %v1499, 5
      %v1557 = vsel %vm1123, %v1555, %v1556
      %v1558 = vrot.slane %v1556, 4
      %v1559 = vrot.slane %v1500, 5
      %v1560 = vsel %vm1123, %v1558, %v1559
      %v1561 = vrot.slane %v1501, 5
      %v1562 = vrot.slane %v1561, 4
      %v1563 = vrot.slane %v1502, 5
      %v1564 = vsel %vm1123, %v1562, %v1563
      %v1565 = vrot.slane %v1563, 4
      %v1566 = vrot.slane %v1503, 5
      %v1567 = vsel %vm1123, %v1565, %v1566
      %v1568 = vrot.slane %v1504, 5
      %v1569 = vrot.slane %v1568, 4
      %v1570 = vrot.slane %v1505, 5
      %v1571 = vsel %vm1123, %v1569, %v1570
      %v1572 = vrot.slane %v1570, 4
      %v1573 = vrot.slane %v1506, 5
      %v1574 = vsel %vm1123, %v1572, %v1573
      %v1575 = vrot.slane %v1507, 5
      %v1576 = vrot.slane %v1575, 4
      %v1577 = vrot.slane %v1508, 5
      %v1578 = vsel %vm1123, %v1576, %v1577
      %v1579 = vrot.slane %v1577, 4
      %v1580 = vrot.slane %v1509, 5
      %v1581 = vsel %vm1123, %v1579, %v1580
      %v1582 = vrot.slane %v1510, 5
      %v1583 = vrot.slane %v1582, 4
      %v1584 = vrot.slane %v1511, 5
      %v1585 = vsel %vm1123, %v1583, %v1584
      %v1586 = vrot.slane %v1584, 4
      %v1587 = vrot.slane %v1512, 5
      %v1588 = vsel %vm1123, %v1586, %v1587
      %v1589 = vrot.slane %v1513, 5
      %v1590 = vrot.slane %v1589, 4
      %v1591 = vrot.slane %v1514, 5
      %v1592 = vsel %vm1123, %v1590, %v1591
      %v1593 = vrot.slane %v1591, 4
      %v1594 = vrot.slane %v1515, 5
      %v1595 = vsel %vm1123, %v1593, %v1594
      %1612 = vst [vmem:[#allocation3 + $0x14] sm:$0xf] %v1543
      %1613 = vst [vmem:[#allocation3 + $0x38] sm:$0xf] %v1546
      %1614 = vst [vmem:[#allocation3 + $0x5c] sm:$0xf] %v1550
      %1615 = vst [vmem:[#allocation3 + $0x80] sm:$0xf] %v1553
      %1616 = vst [vmem:[#allocation3 + $0xa4] sm:$0xf] %v1557
      %1617 = vst [vmem:[#allocation3 + $0xc8] sm:$0xf] %v1560
      %1618 = vst [vmem:[#allocation3 + $0xec] sm:$0xf] %v1564
      %1619 = vst [vmem:[#allocation3 + $0x110] sm:$0xf] %v1567
      %1620 = vst [vmem:[#allocation3 + $0x134] sm:$0xf] %v1571
      %1621 = vst [vmem:[#allocation3 + $0x158] sm:$0xf] %v1574
      %1622 = vst [vmem:[#allocation3 + $0x17c] sm:$0xf] %v1578
      %1623 = vst [vmem:[#allocation3 + $0x1a0] sm:$0xf] %v1581
      %1624 = vst [vmem:[#allocation3 + $0x1c4] sm:$0xf] %v1585
      %1625 = vst [vmem:[#allocation3 + $0x1e8] sm:$0xf] %v1588
      %1626 = vst [vmem:[#allocation3 + $0x20c] sm:$0xf] %v1592
      %1627 = vst [vmem:[#allocation3 + $0x230] sm:$0xf] %v1595
      %s1628 = scalar_lea.vmem [#allocation2], 24
      %v1629 = vld [vmem:[%s1628] sm:$0xf]
      %v1630 = vld [vmem:[%s1628 + $0x4] sm:$0xf]
      %v1631 = vld [vmem:[%s1628 + $0xc] sm:$0xf]
      %v1632 = vld [vmem:[%s1628 + $0x10] sm:$0xf]
      %v1633 = vld [vmem:[%s1628 + $0x18] sm:$0xf]
      %v1634 = vld [vmem:[%s1628 + $0x1c] sm:$0xf]
      %v1635 = vld [vmem:[%s1628 + $0x24] sm:$0xf]
      %v1636 = vld [vmem:[%s1628 + $0x28] sm:$0xf]
      %v1637 = vld [vmem:[%s1628 + $0x30] sm:$0xf]
      %v1638 = vld [vmem:[%s1628 + $0x34] sm:$0xf]
      %v1639 = vld [vmem:[%s1628 + $0x3c] sm:$0xf]
      %v1640 = vld [vmem:[%s1628 + $0x40] sm:$0xf]
      %v1641 = vld [vmem:[%s1628 + $0x48] sm:$0xf]
      %v1642 = vld [vmem:[%s1628 + $0x4c] sm:$0xf]
      %v1643 = vld [vmem:[%s1628 + $0x54] sm:$0xf]
      %v1644 = vld [vmem:[%s1628 + $0x58] sm:$0xf]
      %1645 = vst [vmem:[#allocation3 + $0x18] sm:$0xf] %v1629
      %1646 = vst [vmem:[#allocation3 + $0x3c] sm:$0xf] %v1630
      %1647 = vst [vmem:[#allocation3 + $0x60] sm:$0xf] %v1631
      %1648 = vst [vmem:[#allocation3 + $0x84] sm:$0xf] %v1632
      %1649 = vst [vmem:[#allocation3 + $0xa8] sm:$0xf] %v1633
      %1650 = vst [vmem:[#allocation3 + $0xcc] sm:$0xf] %v1634
      %1651 = vst [vmem:[#allocation3 + $0xf0] sm:$0xf] %v1635
      %1652 = vst [vmem:[#allocation3 + $0x114] sm:$0xf] %v1636
      %1653 = vst [vmem:[#allocation3 + $0x138] sm:$0xf] %v1637
      %1654 = vst [vmem:[#allocation3 + $0x15c] sm:$0xf] %v1638
      %1655 = vst [vmem:[#allocation3 + $0x180] sm:$0xf] %v1639
      %1656 = vst [vmem:[#allocation3 + $0x1a4] sm:$0xf] %v1640
      %1657 = vst [vmem:[#allocation3 + $0x1c8] sm:$0xf] %v1641
      %1658 = vst [vmem:[#allocation3 + $0x1ec] sm:$0xf] %v1642
      %1659 = vst [vmem:[#allocation3 + $0x210] sm:$0xf] %v1643
      %1660 = vst [vmem:[#allocation3 + $0x234] sm:$0xf] %v1644
      %v1661 = vld [vmem:[%s1628] sm:$0xf]
      %v1662 = vld [vmem:[%s1628 + $0x4] sm:$0xf]
      %v1663 = vld [vmem:[%s1628 + $0x8] sm:$0x1]
      %v1664 = vld [vmem:[%s1628 + $0xc] sm:$0xf]
      %v1665 = vld [vmem:[%s1628 + $0x10] sm:$0xf]
      %v1666 = vld [vmem:[%s1628 + $0x14] sm:$0x1]
      %v1667 = vld [vmem:[%s1628 + $0x18] sm:$0xf]
      %v1668 = vld [vmem:[%s1628 + $0x1c] sm:$0xf]
      %v1669 = vld [vmem:[%s1628 + $0x20] sm:$0x1]
      %v1670 = vld [vmem:[%s1628 + $0x24] sm:$0xf]
      %v1671 = vld [vmem:[%s1628 + $0x28] sm:$0xf]
      %v1672 = vld [vmem:[%s1628 + $0x2c] sm:$0x1]
      %v1673 = vld [vmem:[%s1628 + $0x30] sm:$0xf]
      %v1674 = vld [vmem:[%s1628 + $0x34] sm:$0xf]
      %v1675 = vld [vmem:[%s1628 + $0x38] sm:$0x1]
      %v1676 = vld [vmem:[%s1628 + $0x3c] sm:$0xf]
      %v1677 = vld [vmem:[%s1628 + $0x40] sm:$0xf]
      %v1678 = vld [vmem:[%s1628 + $0x44] sm:$0x1]
      %v1679 = vld [vmem:[%s1628 + $0x48] sm:$0xf]
      %v1680 = vld [vmem:[%s1628 + $0x4c] sm:$0xf]
      %v1681 = vld [vmem:[%s1628 + $0x50] sm:$0x1]
      %v1682 = vld [vmem:[%s1628 + $0x54] sm:$0xf]
      %v1683 = vld [vmem:[%s1628 + $0x58] sm:$0xf]
      %v1684 = vld [vmem:[%s1628 + $0x5c] sm:$0x1]
      %v1686 = vshrl.u32 %v1661, 16
      %v1688 = vrot.slane %v1686, 4
      %v1689 = vshll.u32 %v1661, 16
      %v1691 = vrot.slane %v1689, 5
      %v1692 = vor.u32 %v1688, %v1691
      %v1693 = vrot.slane %v1692, 4
      %v1695 = vshll.u32 %v1662, 16
      %v1697 = vrot.slane %v1695, 5
      %v1698 = vsel %vm848, %v1693, %v1697
      %v1699 = vshrl.u32 %v1662, 16
      %v1701 = vrot.slane %v1699, 4
      %v1702 = vor.u32 %v1701, %v1697
      %v1703 = vrot.slane %v1702, 4
      %v1705 = vshll.u32 %v1663, 16
      %v1707 = vrot.slane %v1705, 5
      %v1708 = vsel %vm848, %v1703, %v1707
      %v1710 = vshrl.u32 %v1664, 16
      %v1712 = vrot.slane %v1710, 4
      %v1713 = vshll.u32 %v1664, 16
      %v1715 = vrot.slane %v1713, 5
      %v1716 = vor.u32 %v1712, %v1715
      %v1717 = vrot.slane %v1716, 4
      %v1719 = vshll.u32 %v1665, 16
      %v1721 = vrot.slane %v1719, 5
      %v1722 = vsel %vm848, %v1717, %v1721
      %v1723 = vshrl.u32 %v1665, 16
      %v1725 = vrot.slane %v1723, 4
      %v1726 = vor.u32 %v1725, %v1721
      %v1727 = vrot.slane %v1726, 4
      %v1729 = vshll.u32 %v1666, 16
      %v1731 = vrot.slane %v1729, 5
      %v1732 = vsel %vm848, %v1727, %v1731
      %v1734 = vshrl.u32 %v1667, 16
      %v1736 = vrot.slane %v1734, 4
      %v1737 = vshll.u32 %v1667, 16
      %v1739 = vrot.slane %v1737, 5
      %v1740 = vor.u32 %v1736, %v1739
      %v1741 = vrot.slane %v1740, 4
      %v1743 = vshll.u32 %v1668, 16
      %v1745 = vrot.slane %v1743, 5
      %v1746 = vsel %vm848, %v1741, %v1745
      %v1747 = vshrl.u32 %v1668, 16
      %v1749 = vrot.slane %v1747, 4
      %v1750 = vor.u32 %v1749, %v1745
      %v1751 = vrot.slane %v1750, 4
      %v1753 = vshll.u32 %v1669, 16
      %v1755 = vrot.slane %v1753, 5
      %v1756 = vsel %vm848, %v1751, %v1755
      %v1758 = vshrl.u32 %v1670, 16
      %v1760 = vrot.slane %v1758, 4
      %v1761 = vshll.u32 %v1670, 16
      %v1763 = vrot.slane %v1761, 5
      %v1764 = vor.u32 %v1760, %v1763
      %v1765 = vrot.slane %v1764, 4
      %v1767 = vshll.u32 %v1671, 16
      %v1769 = vrot.slane %v1767, 5
      %v1770 = vsel %vm848, %v1765, %v1769
      %v1771 = vshrl.u32 %v1671, 16
      %v1773 = vrot.slane %v1771, 4
      %v1774 = vor.u32 %v1773, %v1769
      %v1775 = vrot.slane %v1774, 4
      %v1777 = vshll.u32 %v1672, 16
      %v1779 = vrot.slane %v1777, 5
      %v1780 = vsel %vm848, %v1775, %v1779
      %v1782 = vshrl.u32 %v1673, 16
      %v1784 = vrot.slane %v1782, 4
      %v1785 = vshll.u32 %v1673, 16
      %v1787 = vrot.slane %v1785, 5
      %v1788 = vor.u32 %v1784, %v1787
      %v1789 = vrot.slane %v1788, 4
      %v1791 = vshll.u32 %v1674, 16
      %v1793 = vrot.slane %v1791, 5
      %v1794 = vsel %vm848, %v1789, %v1793
      %v1795 = vshrl.u32 %v1674, 16
      %v1797 = vrot.slane %v1795, 4
      %v1798 = vor.u32 %v1797, %v1793
      %v1799 = vrot.slane %v1798, 4
      %v1801 = vshll.u32 %v1675, 16
      %v1803 = vrot.slane %v1801, 5
      %v1804 = vsel %vm848, %v1799, %v1803
      %v1806 = vshrl.u32 %v1676, 16
      %v1808 = vrot.slane %v1806, 4
      %v1809 = vshll.u32 %v1676, 16
      %v1811 = vrot.slane %v1809, 5
      %v1812 = vor.u32 %v1808, %v1811
      %v1813 = vrot.slane %v1812, 4
      %v1815 = vshll.u32 %v1677, 16
      %v1817 = vrot.slane %v1815, 5
      %v1818 = vsel %vm848, %v1813, %v1817
      %v1819 = vshrl.u32 %v1677, 16
      %v1821 = vrot.slane %v1819, 4
      %v1822 = vor.u32 %v1821, %v1817
      %v1823 = vrot.slane %v1822, 4
      %v1825 = vshll.u32 %v1678, 16
      %v1827 = vrot.slane %v1825, 5
      %v1828 = vsel %vm848, %v1823, %v1827
      %v1830 = vshrl.u32 %v1679, 16
      %v1832 = vrot.slane %v1830, 4
      %v1833 = vshll.u32 %v1679, 16
      %v1835 = vrot.slane %v1833, 5
      %v1836 = vor.u32 %v1832, %v1835
      %v1837 = vrot.slane %v1836, 4
      %v1839 = vshll.u32 %v1680, 16
      %v1841 = vrot.slane %v1839, 5
      %v1842 = vsel %vm848, %v1837, %v1841
      %v1843 = vshrl.u32 %v1680, 16
      %v1845 = vrot.slane %v1843, 4
      %v1846 = vor.u32 %v1845, %v1841
      %v1847 = vrot.slane %v1846, 4
      %v1849 = vshll.u32 %v1681, 16
      %v1851 = vrot.slane %v1849, 5
      %v1852 = vsel %vm848, %v1847, %v1851
      %v1854 = vshrl.u32 %v1682, 16
      %v1856 = vrot.slane %v1854, 4
      %v1857 = vshll.u32 %v1682, 16
      %v1859 = vrot.slane %v1857, 5
      %v1860 = vor.u32 %v1856, %v1859
      %v1861 = vrot.slane %v1860, 4
      %v1863 = vshll.u32 %v1683, 16
      %v1865 = vrot.slane %v1863, 5
      %v1866 = vsel %vm848, %v1861, %v1865
      %v1867 = vshrl.u32 %v1683, 16
      %v1869 = vrot.slane %v1867, 4
      %v1870 = vor.u32 %v1869, %v1865
      %v1871 = vrot.slane %v1870, 4
      %v1873 = vshll.u32 %v1684, 16
      %v1875 = vrot.slane %v1873, 5
      %v1876 = vsel %vm848, %v1871, %v1875
      %1893 = vst [vmem:[#allocation3 + $0x1c] sm:$0xf] %v1698
      %1894 = vst [vmem:[#allocation3 + $0x40] sm:$0xf] %v1708
      %1895 = vst [vmem:[#allocation3 + $0x64] sm:$0xf] %v1722
      %1896 = vst [vmem:[#allocation3 + $0x88] sm:$0xf] %v1732
      %1897 = vst [vmem:[#allocation3 + $0xac] sm:$0xf] %v1746
      %1898 = vst [vmem:[#allocation3 + $0xd0] sm:$0xf] %v1756
      %1899 = vst [vmem:[#allocation3 + $0xf4] sm:$0xf] %v1770
      %1900 = vst [vmem:[#allocation3 + $0x118] sm:$0xf] %v1780
      %1901 = vst [vmem:[#allocation3 + $0x13c] sm:$0xf] %v1794
      %1902 = vst [vmem:[#allocation3 + $0x160] sm:$0xf] %v1804
      %1903 = vst [vmem:[#allocation3 + $0x184] sm:$0xf] %v1818
      %1904 = vst [vmem:[#allocation3 + $0x1a8] sm:$0xf] %v1828
      %1905 = vst [vmem:[#allocation3 + $0x1cc] sm:$0xf] %v1842
      %1906 = vst [vmem:[#allocation3 + $0x1f0] sm:$0xf] %v1852
      %1907 = vst [vmem:[#allocation3 + $0x214] sm:$0xf] %v1866
      %1908 = vst [vmem:[#allocation3 + $0x238] sm:$0xf] %v1876
      %v1909 = vld [vmem:[%s1628] sm:$0xe]
      %v1910 = vld [vmem:[%s1628 + $0x4] sm:$0xf]
      %v1911 = vld [vmem:[%s1628 + $0x8] sm:$0x1]
      %v1912 = vld [vmem:[%s1628 + $0xc] sm:$0xe]
      %v1913 = vld [vmem:[%s1628 + $0x10] sm:$0xf]
      %v1914 = vld [vmem:[%s1628 + $0x14] sm:$0x1]
      %v1915 = vld [vmem:[%s1628 + $0x18] sm:$0xe]
      %v1916 = vld [vmem:[%s1628 + $0x1c] sm:$0xf]
      %v1917 = vld [vmem:[%s1628 + $0x20] sm:$0x1]
      %v1918 = vld [vmem:[%s1628 + $0x24] sm:$0xe]
      %v1919 = vld [vmem:[%s1628 + $0x28] sm:$0xf]
      %v1920 = vld [vmem:[%s1628 + $0x2c] sm:$0x1]
      %v1921 = vld [vmem:[%s1628 + $0x30] sm:$0xe]
      %v1922 = vld [vmem:[%s1628 + $0x34] sm:$0xf]
      %v1923 = vld [vmem:[%s1628 + $0x38] sm:$0x1]
      %v1924 = vld [vmem:[%s1628 + $0x3c] sm:$0xe]
      %v1925 = vld [vmem:[%s1628 + $0x40] sm:$0xf]
      %v1926 = vld [vmem:[%s1628 + $0x44] sm:$0x1]
      %v1927 = vld [vmem:[%s1628 + $0x48] sm:$0xe]
      %v1928 = vld [vmem:[%s1628 + $0x4c] sm:$0xf]
      %v1929 = vld [vmem:[%s1628 + $0x50] sm:$0x1]
      %v1930 = vld [vmem:[%s1628 + $0x54] sm:$0xe]
      %v1931 = vld [vmem:[%s1628 + $0x58] sm:$0xf]
      %v1932 = vld [vmem:[%s1628 + $0x5c] sm:$0x1]
      %v1957 = vrot.slane %v1909, 5
      %v1958 = vrot.slane %v1957, 4
      %v1959 = vrot.slane %v1910, 5
      %v1960 = vsel %vm1123, %v1958, %v1959
      %v1961 = vrot.slane %v1959, 4
      %v1962 = vrot.slane %v1911, 5
      %v1963 = vsel %vm1123, %v1961, %v1962
      %v1964 = vrot.slane %v1912, 5
      %v1965 = vrot.slane %v1964, 4
      %v1966 = vrot.slane %v1913, 5
      %v1967 = vsel %vm1123, %v1965, %v1966
      %v1968 = vrot.slane %v1966, 4
      %v1969 = vrot.slane %v1914, 5
      %v1970 = vsel %vm1123, %v1968, %v1969
      %v1971 = vrot.slane %v1915, 5
      %v1972 = vrot.slane %v1971, 4
      %v1973 = vrot.slane %v1916, 5
      %v1974 = vsel %vm1123, %v1972, %v1973
      %v1975 = vrot.slane %v1973, 4
      %v1976 = vrot.slane %v1917, 5
      %v1977 = vsel %vm1123, %v1975, %v1976
      %v1978 = vrot.slane %v1918, 5
      %v1979 = vrot.slane %v1978, 4
      %v1980 = vrot.slane %v1919, 5
      %v1981 = vsel %vm1123, %v1979, %v1980
      %v1982 = vrot.slane %v1980, 4
      %v1983 = vrot.slane %v1920, 5
      %v1984 = vsel %vm1123, %v1982, %v1983
      %v1985 = vrot.slane %v1921, 5
      %v1986 = vrot.slane %v1985, 4
      %v1987 = vrot.slane %v1922, 5
      %v1988 = vsel %vm1123, %v1986, %v1987
      %v1989 = vrot.slane %v1987, 4
      %v1990 = vrot.slane %v1923, 5
      %v1991 = vsel %vm1123, %v1989, %v1990
      %v1992 = vrot.slane %v1924, 5
      %v1993 = vrot.slane %v1992, 4
      %v1994 = vrot.slane %v1925, 5
      %v1995 = vsel %vm1123, %v1993, %v1994
      %v1996 = vrot.slane %v1994, 4
      %v1997 = vrot.slane %v1926, 5
      %v1998 = vsel %vm1123, %v1996, %v1997
      %v1999 = vrot.slane %v1927, 5
      %v2000 = vrot.slane %v1999, 4
      %v2001 = vrot.slane %v1928, 5
      %v2002 = vsel %vm1123, %v2000, %v2001
      %v2003 = vrot.slane %v2001, 4
      %v2004 = vrot.slane %v1929, 5
      %v2005 = vsel %vm1123, %v2003, %v2004
      %v2006 = vrot.slane %v1930, 5
      %v2007 = vrot.slane %v2006, 4
      %v2008 = vrot.slane %v1931, 5
      %v2009 = vsel %vm1123, %v2007, %v2008
      %v2010 = vrot.slane %v2008, 4
      %v2011 = vrot.slane %v1932, 5
      %v2012 = vsel %vm1123, %v2010, %v2011
      %2029 = vst [vmem:[#allocation3 + $0x20] sm:$0xf] %v1960
      %2030 = vst [vmem:[#allocation3 + $0x44] sm:$0xf] %v1963
      %2031 = vst [vmem:[#allocation3 + $0x68] sm:$0xf] %v1967
      %2032 = vst [vmem:[#allocation3 + $0x8c] sm:$0xf] %v1970
      %2033 = vst [vmem:[#allocation3 + $0xb0] sm:$0xf] %v1974
      %2034 = vst [vmem:[#allocation3 + $0xd4] sm:$0xf] %v1977
      %2035 = vst [vmem:[#allocation3 + $0xf8] sm:$0xf] %v1981
      %2036 = vst [vmem:[#allocation3 + $0x11c] sm:$0xf] %v1984
      %2037 = vst [vmem:[#allocation3 + $0x140] sm:$0xf] %v1988
      %2038 = vst [vmem:[#allocation3 + $0x164] sm:$0xf] %v1991
      %2039 = vst [vmem:[#allocation3 + $0x188] sm:$0xf] %v1995
      %2040 = vst [vmem:[#allocation3 + $0x1ac] sm:$0xf] %v1998
      %2041 = vst [vmem:[#allocation3 + $0x1d0] sm:$0xf] %v2002
      %2042 = vst [vmem:[#allocation3 + $0x1f4] sm:$0xf] %v2005
      %2043 = vst [vmem:[#allocation3 + $0x218] sm:$0xf] %v2009
      %2044 = vst [vmem:[#allocation3 + $0x23c] sm:$0xf] %v2012
      %v2045 = vld [vmem:[#allocation3] sm:$0xff]
      %v2046 = vld [vmem:[#allocation3 + $0x8] sm:$0xff]
      %v2047 = vld [vmem:[#allocation3 + $0x10] sm:$0xff]
      %v2048 = vld [vmem:[#allocation3 + $0x18] sm:$0xff]
      %v2049 = vld [vmem:[#allocation3 + $0x20] sm:$0xf]
      %v2050 = vld [vmem:[#allocation3 + $0x24] sm:$0xff]
      %v2051 = vld [vmem:[#allocation3 + $0x2c] sm:$0xff]
      %v2052 = vld [vmem:[#allocation3 + $0x34] sm:$0xff]
      %v2053 = vld [vmem:[#allocation3 + $0x3c] sm:$0xff]
      %v2054 = vld [vmem:[#allocation3 + $0x44] sm:$0xf]
      %v2055 = vld [vmem:[#allocation3 + $0x48] sm:$0xff]
      %v2056 = vld [vmem:[#allocation3 + $0x50] sm:$0xff]
      %v2057 = vld [vmem:[#allocation3 + $0x58] sm:$0xff]
      %v2058 = vld [vmem:[#allocation3 + $0x60] sm:$0xff]
      %v2059 = vld [vmem:[#allocation3 + $0x68] sm:$0xf]
      %v2060 = vld [vmem:[#allocation3 + $0x6c] sm:$0xff]
      %v2061 = vld [vmem:[#allocation3 + $0x74] sm:$0xff]
      %v2062 = vld [vmem:[#allocation3 + $0x7c] sm:$0xff]
      %v2063 = vld [vmem:[#allocation3 + $0x84] sm:$0xff]
      %v2064 = vld [vmem:[#allocation3 + $0x8c] sm:$0xf]
      %v2065 = vld [vmem:[#allocation3 + $0x90] sm:$0xff]
      %v2066 = vld [vmem:[#allocation3 + $0x98] sm:$0xff]
      %v2067 = vld [vmem:[#allocation3 + $0xa0] sm:$0xff]
      %v2068 = vld [vmem:[#allocation3 + $0xa8] sm:$0xff]
      %v2069 = vld [vmem:[#allocation3 + $0xb0] sm:$0xf]
      %v2070 = vld [vmem:[#allocation3 + $0xb4] sm:$0xff]
      %v2071 = vld [vmem:[#allocation3 + $0xbc] sm:$0xff]
      %v2072 = vld [vmem:[#allocation3 + $0xc4] sm:$0xff]
      %v2073 = vld [vmem:[#allocation3 + $0xcc] sm:$0xff]
      %v2074 = vld [vmem:[#allocation3 + $0xd4] sm:$0xf]
      %v2075 = vld [vmem:[#allocation3 + $0xd8] sm:$0xff]
      %v2076 = vld [vmem:[#allocation3 + $0xe0] sm:$0xff]
      %v2077 = vld [vmem:[#allocation3 + $0xe8] sm:$0xff]
      %v2078 = vld [vmem:[#allocation3 + $0xf0] sm:$0xff]
      %v2079 = vld [vmem:[#allocation3 + $0xf8] sm:$0xf]
      %v2080 = vld [vmem:[#allocation3 + $0xfc] sm:$0xff]
      %v2081 = vld [vmem:[#allocation3 + $0x104] sm:$0xff]
      %v2082 = vld [vmem:[#allocation3 + $0x10c] sm:$0xff]
      %v2083 = vld [vmem:[#allocation3 + $0x114] sm:$0xff]
      %v2084 = vld [vmem:[#allocation3 + $0x11c] sm:$0xf]
      %v2085 = vld [vmem:[#allocation3 + $0x120] sm:$0xff]
      %v2086 = vld [vmem:[#allocation3 + $0x128] sm:$0xff]
      %v2087 = vld [vmem:[#allocation3 + $0x130] sm:$0xff]
      %v2088 = vld [vmem:[#allocation3 + $0x138] sm:$0xff]
      %v2089 = vld [vmem:[#allocation3 + $0x140] sm:$0xf]
      %v2090 = vld [vmem:[#allocation3 + $0x144] sm:$0xff]
      %v2091 = vld [vmem:[#allocation3 + $0x14c] sm:$0xff]
      %v2092 = vld [vmem:[#allocation3 + $0x154] sm:$0xff]
      %v2093 = vld [vmem:[#allocation3 + $0x15c] sm:$0xff]
      %v2094 = vld [vmem:[#allocation3 + $0x164] sm:$0xf]
      %v2095 = vld [vmem:[#allocation3 + $0x168] sm:$0xff]
      %v2096 = vld [vmem:[#allocation3 + $0x170] sm:$0xff]
      %v2097 = vld [vmem:[#allocation3 + $0x178] sm:$0xff]
      %v2098 = vld [vmem:[#allocation3 + $0x180] sm:$0xff]
      %v2099 = vld [vmem:[#allocation3 + $0x188] sm:$0xf]
      %v2100 = vld [vmem:[#allocation3 + $0x18c] sm:$0xff]
      %v2101 = vld [vmem:[#allocation3 + $0x194] sm:$0xff]
      %v2102 = vld [vmem:[#allocation3 + $0x19c] sm:$0xff]
      %v2103 = vld [vmem:[#allocation3 + $0x1a4] sm:$0xff]
      %v2104 = vld [vmem:[#allocation3 + $0x1ac] sm:$0xf]
      %v2105 = vld [vmem:[#allocation3 + $0x1b0] sm:$0xff]
      %v2106 = vld [vmem:[#allocation3 + $0x1b8] sm:$0xff]
      %v2107 = vld [vmem:[#allocation3 + $0x1c0] sm:$0xff]
      %v2108 = vld [vmem:[#allocation3 + $0x1c8] sm:$0xff]
      %v2109 = vld [vmem:[#allocation3 + $0x1d0] sm:$0xf]
      %v2110 = vld [vmem:[#allocation3 + $0x1d4] sm:$0xff]
      %v2111 = vld [vmem:[#allocation3 + $0x1dc] sm:$0xff]
      %v2112 = vld [vmem:[#allocation3 + $0x1e4] sm:$0xff]
      %v2113 = vld [vmem:[#allocation3 + $0x1ec] sm:$0xff]
      %v2114 = vld [vmem:[#allocation3 + $0x1f4] sm:$0xf]
      %v2115 = vld [vmem:[#allocation3 + $0x1f8] sm:$0xff]
      %v2116 = vld [vmem:[#allocation3 + $0x200] sm:$0xff]
      %v2117 = vld [vmem:[#allocation3 + $0x208] sm:$0xff]
      %v2118 = vld [vmem:[#allocation3 + $0x210] sm:$0xff]
      %v2119 = vld [vmem:[#allocation3 + $0x218] sm:$0xf]
      %v2120 = vld [vmem:[#allocation3 + $0x21c] sm:$0xff]
      %v2121 = vld [vmem:[#allocation3 + $0x224] sm:$0xff]
      %v2122 = vld [vmem:[#allocation3 + $0x22c] sm:$0xff]
      %v2123 = vld [vmem:[#allocation3 + $0x234] sm:$0xff]
      %v2124 = vld [vmem:[#allocation3 + $0x23c] sm:$0xf]
      %v2125 = vld [vmem:[%s3] sm:$0xf]
      %v2126 = vld [vmem:[%s3 + $0x4] sm:$0xf]
      %v2127 = vld [vmem:[%s3 + $0x8] sm:$0xf]
      %v2128 = vld [vmem:[%s3 + $0xc] sm:$0xf]
      %v2129 = vld [vmem:[%s3 + $0x10] sm:$0xf]
      %v2130 = vld [vmem:[%s3 + $0x14] sm:$0xf]
      %v2131 = vld [vmem:[%s3 + $0x18] sm:$0xf]
      %v2132 = vld [vmem:[%s3 + $0x1c] sm:$0xf]
      %v2133 = vld [vmem:[%s3 + $0x20] sm:$0xf]
      %v2134 = vld [vmem:[%s3 + $0x24] sm:$0xf]
      %v2135 = vld [vmem:[%s3 + $0x28] sm:$0xf]
      %v2136 = vld [vmem:[%s3 + $0x2c] sm:$0xf]
      %v2137 = vld [vmem:[%s3 + $0x30] sm:$0xf]
      %v2138 = vld [vmem:[%s3 + $0x34] sm:$0xf]
      %v2139 = vld [vmem:[%s3 + $0x38] sm:$0xf]
      %v2140 = vld [vmem:[%s3 + $0x3c] sm:$0xf]
      %v2141 = vld [vmem:[%s3 + $0x40] sm:$0xf]
      %v2142 = vld [vmem:[%s3 + $0x44] sm:$0xf]
      %v2143 = vld [vmem:[%s3 + $0x48] sm:$0xf]
      %v2144 = vld [vmem:[%s3 + $0x4c] sm:$0xf]
      %v2145 = vld [vmem:[%s3 + $0x50] sm:$0xf]
      %v2146 = vld [vmem:[%s3 + $0x54] sm:$0xf]
      %v2147 = vld [vmem:[%s3 + $0x58] sm:$0xf]
      %v2148 = vld [vmem:[%s3 + $0x5c] sm:$0xf]
      %v2149 = vld [vmem:[%s3 + $0x60] sm:$0xf]
      %v2150 = vld [vmem:[%s3 + $0x64] sm:$0xf]
      %v2151 = vld [vmem:[%s3 + $0x68] sm:$0xf]
      %v2152 = vld [vmem:[%s3 + $0x6c] sm:$0xf]
      %v2153 = vld [vmem:[%s3 + $0x70] sm:$0xf]
      %v2154 = vld [vmem:[%s3 + $0x74] sm:$0xf]
      %v2155 = vld [vmem:[%s3 + $0x78] sm:$0xf]
      %v2156 = vld [vmem:[%s3 + $0x7c] sm:$0xf]
      %v2157 = vld [vmem:[%s3 + $0x80] sm:$0xf]
      %v2158 = vld [vmem:[%s3 + $0x84] sm:$0xf]
      %v2159 = vld [vmem:[%s3 + $0x88] sm:$0xf]
      %v2160 = vld [vmem:[%s3 + $0x8c] sm:$0xf]
      %v2161 = vld [vmem:[%s3 + $0x90] sm:$0xf]
      %v2162 = vld [vmem:[%s3 + $0x94] sm:$0xf]
      %v2163 = vld [vmem:[%s3 + $0x98] sm:$0xf]
      %v2164 = vld [vmem:[%s3 + $0x9c] sm:$0xf]
      %v2165 = vld [vmem:[%s3 + $0xa0] sm:$0xf]
      %v2166 = vld [vmem:[%s3 + $0xa4] sm:$0xf]
      %v2167 = vld [vmem:[%s3 + $0xa8] sm:$0xf]
      %v2168 = vld [vmem:[%s3 + $0xac] sm:$0xf]
      %v2169 = vld [vmem:[%s3 + $0xb0] sm:$0xf]
      %v2170 = vld [vmem:[%s3 + $0xb4] sm:$0xf]
      %v2171 = vld [vmem:[%s3 + $0xb8] sm:$0xf]
      %v2172 = vld [vmem:[%s3 + $0xbc] sm:$0xf]
      %v2173 = vld [vmem:[%s3 + $0xc0] sm:$0xf]
      %v2174 = vld [vmem:[%s3 + $0xc4] sm:$0xf]
      %v2175 = vld [vmem:[%s3 + $0xc8] sm:$0xf]
      %v2176 = vld [vmem:[%s3 + $0xcc] sm:$0xf]
      %v2177 = vld [vmem:[%s3 + $0xd0] sm:$0xf]
      %v2178 = vld [vmem:[%s3 + $0xd4] sm:$0xf]
      %v2179 = vld [vmem:[%s3 + $0xd8] sm:$0xf]
      %v2180 = vld [vmem:[%s3 + $0xdc] sm:$0xf]
      %v2181 = vld [vmem:[%s3 + $0xe0] sm:$0xf]
      %v2182 = vld [vmem:[%s3 + $0xe4] sm:$0xf]
      %v2183 = vld [vmem:[%s3 + $0xe8] sm:$0xf]
      %v2184 = vld [vmem:[%s3 + $0xec] sm:$0xf]
      %v2185 = vld [vmem:[%s3 + $0xf0] sm:$0xf]
      %v2186 = vld [vmem:[%s3 + $0xf4] sm:$0xf]
      %v2187 = vld [vmem:[%s3 + $0xf8] sm:$0xf]
      %v2188 = vld [vmem:[%s3 + $0xfc] sm:$0xf]
      %v2189 = vld [vmem:[%s3 + $0x100] sm:$0xf]
      %v2190 = vld [vmem:[%s3 + $0x104] sm:$0xf]
      %v2191 = vld [vmem:[%s3 + $0x108] sm:$0xf]
      %v2192 = vld [vmem:[%s3 + $0x10c] sm:$0xf]
      %v2193 = vld [vmem:[%s3 + $0x110] sm:$0xf]
      %v2194 = vld [vmem:[%s3 + $0x114] sm:$0xf]
      %v2195 = vld [vmem:[%s3 + $0x118] sm:$0xf]
      %v2196 = vld [vmem:[%s3 + $0x11c] sm:$0xf]
      %v2197 = vld [vmem:[%s3 + $0x120] sm:$0xf]
      %v2198 = vld [vmem:[%s3 + $0x124] sm:$0xf]
      %v2199 = vld [vmem:[%s3 + $0x128] sm:$0xf]
      %v2200 = vld [vmem:[%s3 + $0x12c] sm:$0xf]
      %v2201 = vld [vmem:[%s3 + $0x130] sm:$0xf]
      %v2202 = vld [vmem:[%s3 + $0x134] sm:$0xf]
      %v2203 = vld [vmem:[%s3 + $0x138] sm:$0xf]
      %v2204 = vld [vmem:[%s3 + $0x13c] sm:$0xf]
      %v2205 = vld [vmem:[%s3 + $0x140] sm:$0xf]
      %v2206 = vld [vmem:[%s3 + $0x144] sm:$0xf]
      %v2207 = vld [vmem:[%s3 + $0x148] sm:$0xf]
      %v2208 = vld [vmem:[%s3 + $0x14c] sm:$0xf]
      %v2209 = vld [vmem:[%s3 + $0x150] sm:$0xf]
      %v2210 = vld [vmem:[%s3 + $0x154] sm:$0xf]
      %v2211 = vld [vmem:[%s3 + $0x158] sm:$0xf]
      %v2212 = vld [vmem:[%s3 + $0x15c] sm:$0xf]
      %v2213 = vld [vmem:[%s3 + $0x160] sm:$0xf]
      %v2214 = vld [vmem:[%s3 + $0x164] sm:$0xf]
      %v2215 = vld [vmem:[%s3 + $0x168] sm:$0xf]
      %v2216 = vld [vmem:[%s3 + $0x16c] sm:$0xf]
      %v2217 = vld [vmem:[%s3 + $0x170] sm:$0xf]
      %v2218 = vld [vmem:[%s3 + $0x174] sm:$0xf]
      %v2219 = vld [vmem:[%s3 + $0x178] sm:$0xf]
      %v2220 = vld [vmem:[%s3 + $0x17c] sm:$0xf]
      %v2221 = vld [vmem:[%s3 + $0x180] sm:$0xf]
      %v2222 = vld [vmem:[%s3 + $0x184] sm:$0xf]
      %v2223 = vld [vmem:[%s3 + $0x188] sm:$0xf]
      %v2224 = vld [vmem:[%s3 + $0x18c] sm:$0xf]
      %v2225 = vld [vmem:[%s3 + $0x190] sm:$0xf]
      %v2226 = vld [vmem:[%s3 + $0x194] sm:$0xf]
      %v2227 = vld [vmem:[%s3 + $0x198] sm:$0xf]
      %v2228 = vld [vmem:[%s3 + $0x19c] sm:$0xf]
      %v2229 = vld [vmem:[%s3 + $0x1a0] sm:$0xf]
      %v2230 = vld [vmem:[%s3 + $0x1a4] sm:$0xf]
      %v2231 = vld [vmem:[%s3 + $0x1a8] sm:$0xf]
      %v2232 = vld [vmem:[%s3 + $0x1ac] sm:$0xf]
      %v2233 = vld [vmem:[%s3 + $0x1b0] sm:$0xf]
      %v2234 = vld [vmem:[%s3 + $0x1b4] sm:$0xf]
      %v2235 = vld [vmem:[%s3 + $0x1b8] sm:$0xf]
      %v2236 = vld [vmem:[%s3 + $0x1bc] sm:$0xf]
      %v2237 = vld [vmem:[%s3 + $0x1c0] sm:$0xf]
      %v2238 = vld [vmem:[%s3 + $0x1c4] sm:$0xf]
      %v2239 = vld [vmem:[%s3 + $0x1c8] sm:$0xf]
      %v2240 = vld [vmem:[%s3 + $0x1cc] sm:$0xf]
      %v2241 = vld [vmem:[%s3 + $0x1d0] sm:$0xf]
      %v2242 = vld [vmem:[%s3 + $0x1d4] sm:$0xf]
      %v2243 = vld [vmem:[%s3 + $0x1d8] sm:$0xf]
      %v2244 = vld [vmem:[%s3 + $0x1dc] sm:$0xf]
      %v2245 = vld [vmem:[%s3 + $0x1e0] sm:$0xf]
      %v2246 = vld [vmem:[%s3 + $0x1e4] sm:$0xf]
      %v2247 = vld [vmem:[%s3 + $0x1e8] sm:$0xf]
      %v2248 = vld [vmem:[%s3 + $0x1ec] sm:$0xf]
      %v2249 = vld [vmem:[%s3 + $0x1f0] sm:$0xf]
      %v2250 = vld [vmem:[%s3 + $0x1f4] sm:$0xf]
      %v2251 = vld [vmem:[%s3 + $0x1f8] sm:$0xf]
      %v2252 = vld [vmem:[%s3 + $0x1fc] sm:$0xf]
      %v2253 = vld [vmem:[%s3 + $0x200] sm:$0xf]
      %v2254 = vld [vmem:[%s3 + $0x204] sm:$0xf]
      %v2255 = vld [vmem:[%s3 + $0x208] sm:$0xf]
      %v2256 = vld [vmem:[%s3 + $0x20c] sm:$0xf]
      %v2257 = vld [vmem:[%s3 + $0x210] sm:$0xf]
      %v2258 = vld [vmem:[%s3 + $0x214] sm:$0xf]
      %v2259 = vld [vmem:[%s3 + $0x218] sm:$0xf]
      %v2260 = vld [vmem:[%s3 + $0x21c] sm:$0xf]
      %v2261 = vld [vmem:[%s3 + $0x220] sm:$0xf]
      %v2262 = vld [vmem:[%s3 + $0x224] sm:$0xf]
      %v2263 = vld [vmem:[%s3 + $0x228] sm:$0xf]
      %v2264 = vld [vmem:[%s3 + $0x22c] sm:$0xf]
      %v2265 = vld [vmem:[%s3 + $0x230] sm:$0xf]
      %v2266 = vld [vmem:[%s3 + $0x234] sm:$0xf]
      %v2267 = vld [vmem:[%s3 + $0x238] sm:$0xf]
      %v2268 = vld [vmem:[%s3 + $0x23c] sm:$0xf]
      %v2349 = vunpack.c.l.b16 %v2045
      %v2350 = vunpack.c.h.b16 %v2045
      %v2351 = vunpack.c.l.b16 %v2046
      %v2352 = vunpack.c.h.b16 %v2046
      %v2353 = vunpack.c.l.b16 %v2047
      %v2354 = vunpack.c.h.b16 %v2047
      %v2355 = vunpack.c.l.b16 %v2048
      %v2356 = vunpack.c.h.b16 %v2048
      %v2357 = vunpack.c.l.b16 %v2049
      %v2358 = vunpack.c.l.b16 %v2050
      %v2359 = vunpack.c.h.b16 %v2050
      %v2360 = vunpack.c.l.b16 %v2051
      %v2361 = vunpack.c.h.b16 %v2051
      %v2362 = vunpack.c.l.b16 %v2052
      %v2363 = vunpack.c.h.b16 %v2052
      %v2364 = vunpack.c.l.b16 %v2053
      %v2365 = vunpack.c.h.b16 %v2053
      %v2366 = vunpack.c.l.b16 %v2054
      %v2367 = vunpack.c.l.b16 %v2055
      %v2368 = vunpack.c.h.b16 %v2055
      %v2369 = vunpack.c.l.b16 %v2056
      %v2370 = vunpack.c.h.b16 %v2056
      %v2371 = vunpack.c.l.b16 %v2057
      %v2372 = vunpack.c.h.b16 %v2057
      %v2373 = vunpack.c.l.b16 %v2058
      %v2374 = vunpack.c.h.b16 %v2058
      %v2375 = vunpack.c.l.b16 %v2059
      %v2376 = vunpack.c.l.b16 %v2060
      %v2377 = vunpack.c.h.b16 %v2060
      %v2378 = vunpack.c.l.b16 %v2061
      %v2379 = vunpack.c.h.b16 %v2061
      %v2380 = vunpack.c.l.b16 %v2062
      %v2381 = vunpack.c.h.b16 %v2062
      %v2382 = vunpack.c.l.b16 %v2063
      %v2383 = vunpack.c.h.b16 %v2063
      %v2384 = vunpack.c.l.b16 %v2064
      %v2385 = vunpack.c.l.b16 %v2065
      %v2386 = vunpack.c.h.b16 %v2065
      %v2387 = vunpack.c.l.b16 %v2066
      %v2388 = vunpack.c.h.b16 %v2066
      %v2389 = vunpack.c.l.b16 %v2067
      %v2390 = vunpack.c.h.b16 %v2067
      %v2391 = vunpack.c.l.b16 %v2068
      %v2392 = vunpack.c.h.b16 %v2068
      %v2393 = vunpack.c.l.b16 %v2069
      %v2394 = vunpack.c.l.b16 %v2070
      %v2395 = vunpack.c.h.b16 %v2070
      %v2396 = vunpack.c.l.b16 %v2071
      %v2397 = vunpack.c.h.b16 %v2071
      %v2398 = vunpack.c.l.b16 %v2072
      %v2399 = vunpack.c.h.b16 %v2072
      %v2400 = vunpack.c.l.b16 %v2073
      %v2401 = vunpack.c.h.b16 %v2073
      %v2402 = vunpack.c.l.b16 %v2074
      %v2403 = vunpack.c.l.b16 %v2075
      %v2404 = vunpack.c.h.b16 %v2075
      %v2405 = vunpack.c.l.b16 %v2076
      %v2406 = vunpack.c.h.b16 %v2076
      %v2407 = vunpack.c.l.b16 %v2077
      %v2408 = vunpack.c.h.b16 %v2077
      %v2409 = vunpack.c.l.b16 %v2078
      %v2410 = vunpack.c.h.b16 %v2078
      %v2411 = vunpack.c.l.b16 %v2079
      %v2412 = vunpack.c.l.b16 %v2080
      %v2413 = vunpack.c.h.b16 %v2080
      %v2414 = vunpack.c.l.b16 %v2081
      %v2415 = vunpack.c.h.b16 %v2081
      %v2416 = vunpack.c.l.b16 %v2082
      %v2417 = vunpack.c.h.b16 %v2082
      %v2418 = vunpack.c.l.b16 %v2083
      %v2419 = vunpack.c.h.b16 %v2083
      %v2420 = vunpack.c.l.b16 %v2084
      %v2421 = vunpack.c.l.b16 %v2085
      %v2422 = vunpack.c.h.b16 %v2085
      %v2423 = vunpack.c.l.b16 %v2086
      %v2424 = vunpack.c.h.b16 %v2086
      %v2425 = vunpack.c.l.b16 %v2087
      %v2426 = vunpack.c.h.b16 %v2087
      %v2427 = vunpack.c.l.b16 %v2088
      %v2428 = vunpack.c.h.b16 %v2088
      %v2429 = vunpack.c.l.b16 %v2089
      %v2430 = vunpack.c.l.b16 %v2090
      %v2431 = vunpack.c.h.b16 %v2090
      %v2432 = vunpack.c.l.b16 %v2091
      %v2433 = vunpack.c.h.b16 %v2091
      %v2434 = vunpack.c.l.b16 %v2092
      %v2435 = vunpack.c.h.b16 %v2092
      %v2436 = vunpack.c.l.b16 %v2093
      %v2437 = vunpack.c.h.b16 %v2093
      %v2438 = vunpack.c.l.b16 %v2094
      %v2439 = vunpack.c.l.b16 %v2095
      %v2440 = vunpack.c.h.b16 %v2095
      %v2441 = vunpack.c.l.b16 %v2096
      %v2442 = vunpack.c.h.b16 %v2096
      %v2443 = vunpack.c.l.b16 %v2097
      %v2444 = vunpack.c.h.b16 %v2097
      %v2445 = vunpack.c.l.b16 %v2098
      %v2446 = vunpack.c.h.b16 %v2098
      %v2447 = vunpack.c.l.b16 %v2099
      %v2448 = vunpack.c.l.b16 %v2100
      %v2449 = vunpack.c.h.b16 %v2100
      %v2450 = vunpack.c.l.b16 %v2101
      %v2451 = vunpack.c.h.b16 %v2101
      %v2452 = vunpack.c.l.b16 %v2102
      %v2453 = vunpack.c.h.b16 %v2102
      %v2454 = vunpack.c.l.b16 %v2103
      %v2455 = vunpack.c.h.b16 %v2103
      %v2456 = vunpack.c.l.b16 %v2104
      %v2457 = vunpack.c.l.b16 %v2105
      %v2458 = vunpack.c.h.b16 %v2105
      %v2459 = vunpack.c.l.b16 %v2106
      %v2460 = vunpack.c.h.b16 %v2106
      %v2461 = vunpack.c.l.b16 %v2107
      %v2462 = vunpack.c.h.b16 %v2107
      %v2463 = vunpack.c.l.b16 %v2108
      %v2464 = vunpack.c.h.b16 %v2108
      %v2465 = vunpack.c.l.b16 %v2109
      %v2466 = vunpack.c.l.b16 %v2110
      %v2467 = vunpack.c.h.b16 %v2110
      %v2468 = vunpack.c.l.b16 %v2111
      %v2469 = vunpack.c.h.b16 %v2111
      %v2470 = vunpack.c.l.b16 %v2112
      %v2471 = vunpack.c.h.b16 %v2112
      %v2472 = vunpack.c.l.b16 %v2113
      %v2473 = vunpack.c.h.b16 %v2113
      %v2474 = vunpack.c.l.b16 %v2114
      %v2475 = vunpack.c.l.b16 %v2115
      %v2476 = vunpack.c.h.b16 %v2115
      %v2477 = vunpack.c.l.b16 %v2116
      %v2478 = vunpack.c.h.b16 %v2116
      %v2479 = vunpack.c.l.b16 %v2117
      %v2480 = vunpack.c.h.b16 %v2117
      %v2481 = vunpack.c.l.b16 %v2118
      %v2482 = vunpack.c.h.b16 %v2118
      %v2483 = vunpack.c.l.b16 %v2119
      %v2484 = vunpack.c.l.b16 %v2120
      %v2485 = vunpack.c.h.b16 %v2120
      %v2486 = vunpack.c.l.b16 %v2121
      %v2487 = vunpack.c.h.b16 %v2121
      %v2488 = vunpack.c.l.b16 %v2122
      %v2489 = vunpack.c.h.b16 %v2122
      %v2490 = vunpack.c.l.b16 %v2123
      %v2491 = vunpack.c.h.b16 %v2123
      %v2492 = vunpack.c.l.b16 %v2124
      %v2493 = vpack.c.b16 %v2358, %v2349
      %v2494 = vpack.c.b16 %v2359, %v2350
      %v2495 = vpack.c.b16 %v2360, %v2351
      %v2496 = vpack.c.b16 %v2361, %v2352
      %v2497 = vpack.c.b16 %v2362, %v2353
      %v2498 = vpack.c.b16 %v2363, %v2354
      %v2499 = vpack.c.b16 %v2364, %v2355
      %v2500 = vpack.c.b16 %v2365, %v2356
      %v2501 = vpack.c.b16 %v2366, %v2357
      %v2502 = vpack.c.b16 %v2376, %v2367
      %v2503 = vpack.c.b16 %v2377, %v2368
      %v2504 = vpack.c.b16 %v2378, %v2369
      %v2505 = vpack.c.b16 %v2379, %v2370
      %v2506 = vpack.c.b16 %v2380, %v2371
      %v2507 = vpack.c.b16 %v2381, %v2372
      %v2508 = vpack.c.b16 %v2382, %v2373
      %v2509 = vpack.c.b16 %v2383, %v2374
      %v2510 = vpack.c.b16 %v2384, %v2375
      %v2511 = vpack.c.b16 %v2394, %v2385
      %v2512 = vpack.c.b16 %v2395, %v2386
      %v2513 = vpack.c.b16 %v2396, %v2387
      %v2514 = vpack.c.b16 %v2397, %v2388
      %v2515 = vpack.c.b16 %v2398, %v2389
      %v2516 = vpack.c.b16 %v2399, %v2390
      %v2517 = vpack.c.b16 %v2400, %v2391
      %v2518 = vpack.c.b16 %v2401, %v2392
      %v2519 = vpack.c.b16 %v2402, %v2393
      %v2520 = vpack.c.b16 %v2412, %v2403
      %v2521 = vpack.c.b16 %v2413, %v2404
      %v2522 = vpack.c.b16 %v2414, %v2405
      %v2523 = vpack.c.b16 %v2415, %v2406
      %v2524 = vpack.c.b16 %v2416, %v2407
      %v2525 = vpack.c.b16 %v2417, %v2408
      %v2526 = vpack.c.b16 %v2418, %v2409
      %v2527 = vpack.c.b16 %v2419, %v2410
      %v2528 = vpack.c.b16 %v2420, %v2411
      %v2529 = vpack.c.b16 %v2430, %v2421
      %v2530 = vpack.c.b16 %v2431, %v2422
      %v2531 = vpack.c.b16 %v2432, %v2423
      %v2532 = vpack.c.b16 %v2433, %v2424
      %v2533 = vpack.c.b16 %v2434, %v2425
      %v2534 = vpack.c.b16 %v2435, %v2426
      %v2535 = vpack.c.b16 %v2436, %v2427
      %v2536 = vpack.c.b16 %v2437, %v2428
      %v2537 = vpack.c.b16 %v2438, %v2429
      %v2538 = vpack.c.b16 %v2448, %v2439
      %v2539 = vpack.c.b16 %v2449, %v2440
      %v2540 = vpack.c.b16 %v2450, %v2441
      %v2541 = vpack.c.b16 %v2451, %v2442
      %v2542 = vpack.c.b16 %v2452, %v2443
      %v2543 = vpack.c.b16 %v2453, %v2444
      %v2544 = vpack.c.b16 %v2454, %v2445
      %v2545 = vpack.c.b16 %v2455, %v2446
      %v2546 = vpack.c.b16 %v2456, %v2447
      %v2547 = vpack.c.b16 %v2466, %v2457
      %v2548 = vpack.c.b16 %v2467, %v2458
      %v2549 = vpack.c.b16 %v2468, %v2459
      %v2550 = vpack.c.b16 %v2469, %v2460
      %v2551 = vpack.c.b16 %v2470, %v2461
      %v2552 = vpack.c.b16 %v2471, %v2462
      %v2553 = vpack.c.b16 %v2472, %v2463
      %v2554 = vpack.c.b16 %v2473, %v2464
      %v2555 = vpack.c.b16 %v2474, %v2465
      %v2556 = vpack.c.b16 %v2484, %v2475
      %v2557 = vpack.c.b16 %v2485, %v2476
      %v2558 = vpack.c.b16 %v2486, %v2477
      %v2559 = vpack.c.b16 %v2487, %v2478
      %v2560 = vpack.c.b16 %v2488, %v2479
      %v2561 = vpack.c.b16 %v2489, %v2480
      %v2562 = vpack.c.b16 %v2490, %v2481
      %v2563 = vpack.c.b16 %v2491, %v2482
      %v2564 = vpack.c.b16 %v2492, %v2483
      %v2781 = vunpack.c.l.b16 %v2125
      %v2782 = vunpack.c.l.b16 %v2126
      %v2783 = vunpack.c.l.b16 %v2127
      %v2784 = vunpack.c.l.b16 %v2128
      %v2785 = vunpack.c.l.b16 %v2129
      %v2786 = vunpack.c.l.b16 %v2130
      %v2787 = vunpack.c.l.b16 %v2131
      %v2788 = vunpack.c.l.b16 %v2132
      %v2789 = vunpack.c.l.b16 %v2133
      %v2790 = vunpack.c.l.b16 %v2134
      %v2791 = vunpack.c.l.b16 %v2135
      %v2792 = vunpack.c.l.b16 %v2136
      %v2793 = vunpack.c.l.b16 %v2137
      %v2794 = vunpack.c.l.b16 %v2138
      %v2795 = vunpack.c.l.b16 %v2139
      %v2796 = vunpack.c.l.b16 %v2140
      %v2797 = vunpack.c.l.b16 %v2141
      %v2798 = vunpack.c.l.b16 %v2142
      %v2799 = vunpack.c.l.b16 %v2143
      %v2800 = vunpack.c.l.b16 %v2144
      %v2801 = vunpack.c.l.b16 %v2145
      %v2802 = vunpack.c.l.b16 %v2146
      %v2803 = vunpack.c.l.b16 %v2147
      %v2804 = vunpack.c.l.b16 %v2148
      %v2805 = vunpack.c.l.b16 %v2149
      %v2806 = vunpack.c.l.b16 %v2150
      %v2807 = vunpack.c.l.b16 %v2151
      %v2808 = vunpack.c.l.b16 %v2152
      %v2809 = vunpack.c.l.b16 %v2153
      %v2810 = vunpack.c.l.b16 %v2154
      %v2811 = vunpack.c.l.b16 %v2155
      %v2812 = vunpack.c.l.b16 %v2156
      %v2813 = vunpack.c.l.b16 %v2157
      %v2814 = vunpack.c.l.b16 %v2158
      %v2815 = vunpack.c.l.b16 %v2159
      %v2816 = vunpack.c.l.b16 %v2160
      %v2817 = vunpack.c.l.b16 %v2161
      %v2818 = vunpack.c.l.b16 %v2162
      %v2819 = vunpack.c.l.b16 %v2163
      %v2820 = vunpack.c.l.b16 %v2164
      %v2821 = vunpack.c.l.b16 %v2165
      %v2822 = vunpack.c.l.b16 %v2166
      %v2823 = vunpack.c.l.b16 %v2167
      %v2824 = vunpack.c.l.b16 %v2168
      %v2825 = vunpack.c.l.b16 %v2169
      %v2826 = vunpack.c.l.b16 %v2170
      %v2827 = vunpack.c.l.b16 %v2171
      %v2828 = vunpack.c.l.b16 %v2172
      %v2829 = vunpack.c.l.b16 %v2173
      %v2830 = vunpack.c.l.b16 %v2174
      %v2831 = vunpack.c.l.b16 %v2175
      %v2832 = vunpack.c.l.b16 %v2176
      %v2833 = vunpack.c.l.b16 %v2177
      %v2834 = vunpack.c.l.b16 %v2178
      %v2835 = vunpack.c.l.b16 %v2179
      %v2836 = vunpack.c.l.b16 %v2180
      %v2837 = vunpack.c.l.b16 %v2181
      %v2838 = vunpack.c.l.b16 %v2182
      %v2839 = vunpack.c.l.b16 %v2183
      %v2840 = vunpack.c.l.b16 %v2184
      %v2841 = vunpack.c.l.b16 %v2185
      %v2842 = vunpack.c.l.b16 %v2186
      %v2843 = vunpack.c.l.b16 %v2187
      %v2844 = vunpack.c.l.b16 %v2188
      %v2845 = vunpack.c.l.b16 %v2189
      %v2846 = vunpack.c.l.b16 %v2190
      %v2847 = vunpack.c.l.b16 %v2191
      %v2848 = vunpack.c.l.b16 %v2192
      %v2849 = vunpack.c.l.b16 %v2193
      %v2850 = vunpack.c.l.b16 %v2194
      %v2851 = vunpack.c.l.b16 %v2195
      %v2852 = vunpack.c.l.b16 %v2196
      %v2853 = vunpack.c.l.b16 %v2197
      %v2854 = vunpack.c.l.b16 %v2198
      %v2855 = vunpack.c.l.b16 %v2199
      %v2856 = vunpack.c.l.b16 %v2200
      %v2857 = vunpack.c.l.b16 %v2201
      %v2858 = vunpack.c.l.b16 %v2202
      %v2859 = vunpack.c.l.b16 %v2203
      %v2860 = vunpack.c.l.b16 %v2204
      %v2861 = vunpack.c.l.b16 %v2205
      %v2862 = vunpack.c.l.b16 %v2206
      %v2863 = vunpack.c.l.b16 %v2207
      %v2864 = vunpack.c.l.b16 %v2208
      %v2865 = vunpack.c.l.b16 %v2209
      %v2866 = vunpack.c.l.b16 %v2210
      %v2867 = vunpack.c.l.b16 %v2211
      %v2868 = vunpack.c.l.b16 %v2212
      %v2869 = vunpack.c.l.b16 %v2213
      %v2870 = vunpack.c.l.b16 %v2214
      %v2871 = vunpack.c.l.b16 %v2215
      %v2872 = vunpack.c.l.b16 %v2216
      %v2873 = vunpack.c.l.b16 %v2217
      %v2874 = vunpack.c.l.b16 %v2218
      %v2875 = vunpack.c.l.b16 %v2219
      %v2876 = vunpack.c.l.b16 %v2220
      %v2877 = vunpack.c.l.b16 %v2221
      %v2878 = vunpack.c.l.b16 %v2222
      %v2879 = vunpack.c.l.b16 %v2223
      %v2880 = vunpack.c.l.b16 %v2224
      %v2881 = vunpack.c.l.b16 %v2225
      %v2882 = vunpack.c.l.b16 %v2226
      %v2883 = vunpack.c.l.b16 %v2227
      %v2884 = vunpack.c.l.b16 %v2228
      %v2885 = vunpack.c.l.b16 %v2229
      %v2886 = vunpack.c.l.b16 %v2230
      %v2887 = vunpack.c.l.b16 %v2231
      %v2888 = vunpack.c.l.b16 %v2232
      %v2889 = vunpack.c.l.b16 %v2233
      %v2890 = vunpack.c.l.b16 %v2234
      %v2891 = vunpack.c.l.b16 %v2235
      %v2892 = vunpack.c.l.b16 %v2236
      %v2893 = vunpack.c.l.b16 %v2237
      %v2894 = vunpack.c.l.b16 %v2238
      %v2895 = vunpack.c.l.b16 %v2239
      %v2896 = vunpack.c.l.b16 %v2240
      %v2897 = vunpack.c.l.b16 %v2241
      %v2898 = vunpack.c.l.b16 %v2242
      %v2899 = vunpack.c.l.b16 %v2243
      %v2900 = vunpack.c.l.b16 %v2244
      %v2901 = vunpack.c.l.b16 %v2245
      %v2902 = vunpack.c.l.b16 %v2246
      %v2903 = vunpack.c.l.b16 %v2247
      %v2904 = vunpack.c.l.b16 %v2248
      %v2905 = vunpack.c.l.b16 %v2249
      %v2906 = vunpack.c.l.b16 %v2250
      %v2907 = vunpack.c.l.b16 %v2251
      %v2908 = vunpack.c.l.b16 %v2252
      %v2909 = vunpack.c.l.b16 %v2253
      %v2910 = vunpack.c.l.b16 %v2254
      %v2911 = vunpack.c.l.b16 %v2255
      %v2912 = vunpack.c.l.b16 %v2256
      %v2913 = vunpack.c.l.b16 %v2257
      %v2914 = vunpack.c.l.b16 %v2258
      %v2915 = vunpack.c.l.b16 %v2259
      %v2916 = vunpack.c.l.b16 %v2260
      %v2917 = vunpack.c.l.b16 %v2261
      %v2918 = vunpack.c.l.b16 %v2262
      %v2919 = vunpack.c.l.b16 %v2263
      %v2920 = vunpack.c.l.b16 %v2264
      %v2921 = vunpack.c.l.b16 %v2265
      %v2922 = vunpack.c.l.b16 %v2266
      %v2923 = vunpack.c.l.b16 %v2267
      %v2924 = vunpack.c.l.b16 %v2268
      %v2925 = vpack.c.b16 %v2782, %v2781
      %v2926 = vpack.c.b16 %v2784, %v2783
      %v2927 = vpack.c.b16 %v2786, %v2785
      %v2928 = vpack.c.b16 %v2788, %v2787
      %v2929 = vpack.c.b16 %v2790, %v2789
      %v2930 = vpack.c.b16 %v2792, %v2791
      %v2931 = vpack.c.b16 %v2794, %v2793
      %v2932 = vpack.c.b16 %v2796, %v2795
      %v2933 = vpack.c.b16 %v2798, %v2797
      %v2934 = vpack.c.b16 %v2800, %v2799
      %v2935 = vpack.c.b16 %v2802, %v2801
      %v2936 = vpack.c.b16 %v2804, %v2803
      %v2937 = vpack.c.b16 %v2806, %v2805
      %v2938 = vpack.c.b16 %v2808, %v2807
      %v2939 = vpack.c.b16 %v2810, %v2809
      %v2940 = vpack.c.b16 %v2812, %v2811
      %v2941 = vpack.c.b16 %v2814, %v2813
      %v2942 = vpack.c.b16 %v2816, %v2815
      %v2943 = vpack.c.b16 %v2818, %v2817
      %v2944 = vpack.c.b16 %v2820, %v2819
      %v2945 = vpack.c.b16 %v2822, %v2821
      %v2946 = vpack.c.b16 %v2824, %v2823
      %v2947 = vpack.c.b16 %v2826, %v2825
      %v2948 = vpack.c.b16 %v2828, %v2827
      %v2949 = vpack.c.b16 %v2830, %v2829
      %v2950 = vpack.c.b16 %v2832, %v2831
      %v2951 = vpack.c.b16 %v2834, %v2833
      %v2952 = vpack.c.b16 %v2836, %v2835
      %v2953 = vpack.c.b16 %v2838, %v2837
      %v2954 = vpack.c.b16 %v2840, %v2839
      %v2955 = vpack.c.b16 %v2842, %v2841
      %v2956 = vpack.c.b16 %v2844, %v2843
      %v2957 = vpack.c.b16 %v2846, %v2845
      %v2958 = vpack.c.b16 %v2848, %v2847
      %v2959 = vpack.c.b16 %v2850, %v2849
      %v2960 = vpack.c.b16 %v2852, %v2851
      %v2961 = vpack.c.b16 %v2854, %v2853
      %v2962 = vpack.c.b16 %v2856, %v2855
      %v2963 = vpack.c.b16 %v2858, %v2857
      %v2964 = vpack.c.b16 %v2860, %v2859
      %v2965 = vpack.c.b16 %v2862, %v2861
      %v2966 = vpack.c.b16 %v2864, %v2863
      %v2967 = vpack.c.b16 %v2866, %v2865
      %v2968 = vpack.c.b16 %v2868, %v2867
      %v2969 = vpack.c.b16 %v2870, %v2869
      %v2970 = vpack.c.b16 %v2872, %v2871
      %v2971 = vpack.c.b16 %v2874, %v2873
      %v2972 = vpack.c.b16 %v2876, %v2875
      %v2973 = vpack.c.b16 %v2878, %v2877
      %v2974 = vpack.c.b16 %v2880, %v2879
      %v2975 = vpack.c.b16 %v2882, %v2881
      %v2976 = vpack.c.b16 %v2884, %v2883
      %v2977 = vpack.c.b16 %v2886, %v2885
      %v2978 = vpack.c.b16 %v2888, %v2887
      %v2979 = vpack.c.b16 %v2890, %v2889
      %v2980 = vpack.c.b16 %v2892, %v2891
      %v2981 = vpack.c.b16 %v2894, %v2893
      %v2982 = vpack.c.b16 %v2896, %v2895
      %v2983 = vpack.c.b16 %v2898, %v2897
      %v2984 = vpack.c.b16 %v2900, %v2899
      %v2985 = vpack.c.b16 %v2902, %v2901
      %v2986 = vpack.c.b16 %v2904, %v2903
      %v2987 = vpack.c.b16 %v2906, %v2905
      %v2988 = vpack.c.b16 %v2908, %v2907
      %v2989 = vpack.c.b16 %v2910, %v2909
      %v2990 = vpack.c.b16 %v2912, %v2911
      %v2991 = vpack.c.b16 %v2914, %v2913
      %v2992 = vpack.c.b16 %v2916, %v2915
      %v2993 = vpack.c.b16 %v2918, %v2917
      %v2994 = vpack.c.b16 %v2920, %v2919
      %v2995 = vpack.c.b16 %v2922, %v2921
      %v2996 = vpack.c.b16 %v2924, %v2923
      %3069 = vmatpush.bf16.msra.mxu0 %v2932
      %3070 = vmatpush.bf16.msra.mxu0 %v2931
      %3071 = vmatpush.bf16.msra.mxu0 %v2930
      %3072 = vmatpush.bf16.msra.mxu0 %v2929
      %3073 = vmatpush.bf16.msra.mxu0 %v2928
      %3074 = vmatpush.bf16.msra.mxu0 %v2927
      %3075 = vmatpush.bf16.msra.mxu0 %v2926
      %3076 = vmatpush.bf16.msra.mxu0 %v2925
      %3077 = vmatmul.bf16.gmra.mxu0 %v2493
      %v3078 = vpop.f32.mrf.mxu0
      %v3079 = vadd.f32 0.0, %v3078
      %v3080 = vpop.f32.mrf.mxu0
      %v3081 = vadd.f32 0.0, %v3080
      %3082 = vmatmul.bf16.gmra.mxu0 %v2502
      %v3083 = vpop.f32.mrf.mxu0
      %v3084 = vadd.f32 0.0, %v3083
      %v3085 = vpop.f32.mrf.mxu0
      %v3086 = vadd.f32 0.0, %v3085
      %3087 = vmatmul.bf16.gmra.mxu0 %v2511
      %v3088 = vpop.f32.mrf.mxu0
      %v3089 = vadd.f32 0.0, %v3088
      %v3090 = vpop.f32.mrf.mxu0
      %v3091 = vadd.f32 0.0, %v3090
      %3092 = vmatmul.bf16.gmra.mxu0 %v2520
      %v3093 = vpop.f32.mrf.mxu0
      %v3094 = vadd.f32 0.0, %v3093
      %v3095 = vpop.f32.mrf.mxu0
      %v3096 = vadd.f32 0.0, %v3095
      %3097 = vmatmul.bf16.gmra.mxu0 %v2529
      %v3098 = vpop.f32.mrf.mxu0
      %v3099 = vadd.f32 0.0, %v3098
      %v3100 = vpop.f32.mrf.mxu0
      %v3101 = vadd.f32 0.0, %v3100
      %3102 = vmatmul.bf16.gmra.mxu0 %v2538
      %v3103 = vpop.f32.mrf.mxu0
      %v3104 = vadd.f32 0.0, %v3103
      %v3105 = vpop.f32.mrf.mxu0
      %v3106 = vadd.f32 0.0, %v3105
      %3107 = vmatmul.bf16.gmra.mxu0 %v2547
      %v3108 = vpop.f32.mrf.mxu0
      %v3109 = vadd.f32 0.0, %v3108
      %v3110 = vpop.f32.mrf.mxu0
      %v3111 = vadd.f32 0.0, %v3110
      %3112 = vmatmul.bf16.gmra.mxu0 %v2556
      %v3113 = vpop.f32.mrf.mxu0
      %v3114 = vadd.f32 0.0, %v3113
      %v3115 = vpop.f32.mrf.mxu0
      %v3116 = vadd.f32 0.0, %v3115
      %3117 = vdwg.mxu0
      %3118 = vmatpush.bf16.msra.mxu0 %v2940
      %3119 = vmatpush.bf16.msra.mxu0 %v2939
      %3120 = vmatpush.bf16.msra.mxu0 %v2938
      %3121 = vmatpush.bf16.msra.mxu0 %v2937
      %3122 = vmatpush.bf16.msra.mxu0 %v2936
      %3123 = vmatpush.bf16.msra.mxu0 %v2935
      %3124 = vmatpush.bf16.msra.mxu0 %v2934
      %3125 = vmatpush.bf16.msra.mxu0 %v2933
      %3126 = vmatmul.bf16.gmra.mxu0 %v2494
      %v3127 = vpop.f32.mrf.mxu0
      %v3128 = vadd.f32 %v3079, %v3127
      %v3129 = vpop.f32.mrf.mxu0
      %v3130 = vadd.f32 %v3081, %v3129
      %3131 = vmatmul.bf16.gmra.mxu0 %v2503
      %v3132 = vpop.f32.mrf.mxu0
      %v3133 = vadd.f32 %v3084, %v3132
      %v3134 = vpop.f32.mrf.mxu0
      %v3135 = vadd.f32 %v3086, %v3134
      %3136 = vmatmul.bf16.gmra.mxu0 %v2512
      %v3137 = vpop.f32.mrf.mxu0
      %v3138 = vadd.f32 %v3089, %v3137
      %v3139 = vpop.f32.mrf.mxu0
      %v3140 = vadd.f32 %v3091, %v3139
      %3141 = vmatmul.bf16.gmra.mxu0 %v2521
      %v3142 = vpop.f32.mrf.mxu0
      %v3143 = vadd.f32 %v3094, %v3142
      %v3144 = vpop.f32.mrf.mxu0
      %v3145 = vadd.f32 %v3096, %v3144
      %3146 = vmatmul.bf16.gmra.mxu0 %v2530
      %v3147 = vpop.f32.mrf.mxu0
      %v3148 = vadd.f32 %v3099, %v3147
      %v3149 = vpop.f32.mrf.mxu0
      %v3150 = vadd.f32 %v3101, %v3149
      %3151 = vmatmul.bf16.gmra.mxu0 %v2539
      %v3152 = vpop.f32.mrf.mxu0
      %v3153 = vadd.f32 %v3104, %v3152
      %v3154 = vpop.f32.mrf.mxu0
      %v3155 = vadd.f32 %v3106, %v3154
      %3156 = vmatmul.bf16.gmra.mxu0 %v2548
      %v3157 = vpop.f32.mrf.mxu0
      %v3158 = vadd.f32 %v3109, %v3157
      %v3159 = vpop.f32.mrf.mxu0
      %v3160 = vadd.f32 %v3111, %v3159
      %3161 = vmatmul.bf16.gmra.mxu0 %v2557
      %v3162 = vpop.f32.mrf.mxu0
      %v3163 = vadd.f32 %v3114, %v3162
      %v3164 = vpop.f32.mrf.mxu0
      %v3165 = vadd.f32 %v3116, %v3164
      %3166 = vdwg.mxu0
      %3167 = vmatpush.bf16.msra.mxu0 %v2948
      %3168 = vmatpush.bf16.msra.mxu0 %v2947
      %3169 = vmatpush.bf16.msra.mxu0 %v2946
      %3170 = vmatpush.bf16.msra.mxu0 %v2945
      %3171 = vmatpush.bf16.msra.mxu0 %v2944
      %3172 = vmatpush.bf16.msra.mxu0 %v2943
      %3173 = vmatpush.bf16.msra.mxu0 %v2942
      %3174 = vmatpush.bf16.msra.mxu0 %v2941
      %3175 = vmatmul.bf16.gmra.mxu0 %v2495
      %v3176 = vpop.f32.mrf.mxu0
      %v3177 = vadd.f32 %v3128, %v3176
      %v3178 = vpop.f32.mrf.mxu0
      %v3179 = vadd.f32 %v3130, %v3178
      %3180 = vmatmul.bf16.gmra.mxu0 %v2504
      %v3181 = vpop.f32.mrf.mxu0
      %v3182 = vadd.f32 %v3133, %v3181
      %v3183 = vpop.f32.mrf.mxu0
      %v3184 = vadd.f32 %v3135, %v3183
      %3185 = vmatmul.bf16.gmra.mxu0 %v2513
      %v3186 = vpop.f32.mrf.mxu0
      %v3187 = vadd.f32 %v3138, %v3186
      %v3188 = vpop.f32.mrf.mxu0
      %v3189 = vadd.f32 %v3140, %v3188
      %3190 = vmatmul.bf16.gmra.mxu0 %v2522
      %v3191 = vpop.f32.mrf.mxu0
      %v3192 = vadd.f32 %v3143, %v3191
      %v3193 = vpop.f32.mrf.mxu0
      %v3194 = vadd.f32 %v3145, %v3193
      %3195 = vmatmul.bf16.gmra.mxu0 %v2531
      %v3196 = vpop.f32.mrf.mxu0
      %v3197 = vadd.f32 %v3148, %v3196
      %v3198 = vpop.f32.mrf.mxu0
      %v3199 = vadd.f32 %v3150, %v3198
      %3200 = vmatmul.bf16.gmra.mxu0 %v2540
      %v3201 = vpop.f32.mrf.mxu0
      %v3202 = vadd.f32 %v3153, %v3201
      %v3203 = vpop.f32.mrf.mxu0
      %v3204 = vadd.f32 %v3155, %v3203
      %3205 = vmatmul.bf16.gmra.mxu0 %v2549
      %v3206 = vpop.f32.mrf.mxu0
      %v3207 = vadd.f32 %v3158, %v3206
      %v3208 = vpop.f32.mrf.mxu0
      %v3209 = vadd.f32 %v3160, %v3208
      %3210 = vmatmul.bf16.gmra.mxu0 %v2558
      %v3211 = vpop.f32.mrf.mxu0
      %v3212 = vadd.f32 %v3163, %v3211
      %v3213 = vpop.f32.mrf.mxu0
      %v3214 = vadd.f32 %v3165, %v3213
      %3215 = vdwg.mxu0
      %3216 = vmatpush.bf16.msra.mxu0 %v2956
      %3217 = vmatpush.bf16.msra.mxu0 %v2955
      %3218 = vmatpush.bf16.msra.mxu0 %v2954
      %3219 = vmatpush.bf16.msra.mxu0 %v2953
      %3220 = vmatpush.bf16.msra.mxu0 %v2952
      %3221 = vmatpush.bf16.msra.mxu0 %v2951
      %3222 = vmatpush.bf16.msra.mxu0 %v2950
      %3223 = vmatpush.bf16.msra.mxu0 %v2949
      %3224 = vmatmul.bf16.gmra.mxu0 %v2496
      %v3225 = vpop.f32.mrf.mxu0
      %v3226 = vadd.f32 %v3177, %v3225
      %v3227 = vpop.f32.mrf.mxu0
      %v3228 = vadd.f32 %v3179, %v3227
      %3229 = vmatmul.bf16.gmra.mxu0 %v2505
      %v3230 = vpop.f32.mrf.mxu0
      %v3231 = vadd.f32 %v3182, %v3230
      %v3232 = vpop.f32.mrf.mxu0
      %v3233 = vadd.f32 %v3184, %v3232
      %3234 = vmatmul.bf16.gmra.mxu0 %v2514
      %v3235 = vpop.f32.mrf.mxu0
      %v3236 = vadd.f32 %v3187, %v3235
      %v3237 = vpop.f32.mrf.mxu0
      %v3238 = vadd.f32 %v3189, %v3237
      %3239 = vmatmul.bf16.gmra.mxu0 %v2523
      %v3240 = vpop.f32.mrf.mxu0
      %v3241 = vadd.f32 %v3192, %v3240
      %v3242 = vpop.f32.mrf.mxu0
      %v3243 = vadd.f32 %v3194, %v3242
      %3244 = vmatmul.bf16.gmra.mxu0 %v2532
      %v3245 = vpop.f32.mrf.mxu0
      %v3246 = vadd.f32 %v3197, %v3245
      %v3247 = vpop.f32.mrf.mxu0
      %v3248 = vadd.f32 %v3199, %v3247
      %3249 = vmatmul.bf16.gmra.mxu0 %v2541
      %v3250 = vpop.f32.mrf.mxu0
      %v3251 = vadd.f32 %v3202, %v3250
      %v3252 = vpop.f32.mrf.mxu0
      %v3253 = vadd.f32 %v3204, %v3252
      %3254 = vmatmul.bf16.gmra.mxu0 %v2550
      %v3255 = vpop.f32.mrf.mxu0
      %v3256 = vadd.f32 %v3207, %v3255
      %v3257 = vpop.f32.mrf.mxu0
      %v3258 = vadd.f32 %v3209, %v3257
      %3259 = vmatmul.bf16.gmra.mxu0 %v2559
      %v3260 = vpop.f32.mrf.mxu0
      %v3261 = vadd.f32 %v3212, %v3260
      %v3262 = vpop.f32.mrf.mxu0
      %v3263 = vadd.f32 %v3214, %v3262
      %3264 = vdwg.mxu0
      %3265 = vmatpush.bf16.msra.mxu0 %v2964
      %3266 = vmatpush.bf16.msra.mxu0 %v2963
      %3267 = vmatpush.bf16.msra.mxu0 %v2962
      %3268 = vmatpush.bf16.msra.mxu0 %v2961
      %3269 = vmatpush.bf16.msra.mxu0 %v2960
      %3270 = vmatpush.bf16.msra.mxu0 %v2959
      %3271 = vmatpush.bf16.msra.mxu0 %v2958
      %3272 = vmatpush.bf16.msra.mxu0 %v2957
      %3273 = vmatmul.bf16.gmra.mxu0 %v2497
      %v3274 = vpop.f32.mrf.mxu0
      %v3275 = vadd.f32 %v3226, %v3274
      %v3276 = vpop.f32.mrf.mxu0
      %v3277 = vadd.f32 %v3228, %v3276
      %3278 = vmatmul.bf16.gmra.mxu0 %v2506
      %v3279 = vpop.f32.mrf.mxu0
      %v3280 = vadd.f32 %v3231, %v3279
      %v3281 = vpop.f32.mrf.mxu0
      %v3282 = vadd.f32 %v3233, %v3281
      %3283 = vmatmul.bf16.gmra.mxu0 %v2515
      %v3284 = vpop.f32.mrf.mxu0
      %v3285 = vadd.f32 %v3236, %v3284
      %v3286 = vpop.f32.mrf.mxu0
      %v3287 = vadd.f32 %v3238, %v3286
      %3288 = vmatmul.bf16.gmra.mxu0 %v2524
      %v3289 = vpop.f32.mrf.mxu0
      %v3290 = vadd.f32 %v3241, %v3289
      %v3291 = vpop.f32.mrf.mxu0
      %v3292 = vadd.f32 %v3243, %v3291
      %3293 = vmatmul.bf16.gmra.mxu0 %v2533
      %v3294 = vpop.f32.mrf.mxu0
      %v3295 = vadd.f32 %v3246, %v3294
      %v3296 = vpop.f32.mrf.mxu0
      %v3297 = vadd.f32 %v3248, %v3296
      %3298 = vmatmul.bf16.gmra.mxu0 %v2542
      %v3299 = vpop.f32.mrf.mxu0
      %v3300 = vadd.f32 %v3251, %v3299
      %v3301 = vpop.f32.mrf.mxu0
      %v3302 = vadd.f32 %v3253, %v3301
      %3303 = vmatmul.bf16.gmra.mxu0 %v2551
      %v3304 = vpop.f32.mrf.mxu0
      %v3305 = vadd.f32 %v3256, %v3304
      %v3306 = vpop.f32.mrf.mxu0
      %v3307 = vadd.f32 %v3258, %v3306
      %3308 = vmatmul.bf16.gmra.mxu0 %v2560
      %v3309 = vpop.f32.mrf.mxu0
      %v3310 = vadd.f32 %v3261, %v3309
      %v3311 = vpop.f32.mrf.mxu0
      %v3312 = vadd.f32 %v3263, %v3311
      %3313 = vdwg.mxu0
      %3314 = vmatpush.bf16.msra.mxu0 %v2972
      %3315 = vmatpush.bf16.msra.mxu0 %v2971
      %3316 = vmatpush.bf16.msra.mxu0 %v2970
      %3317 = vmatpush.bf16.msra.mxu0 %v2969
      %3318 = vmatpush.bf16.msra.mxu0 %v2968
      %3319 = vmatpush.bf16.msra.mxu0 %v2967
      %3320 = vmatpush.bf16.msra.mxu0 %v2966
      %3321 = vmatpush.bf16.msra.mxu0 %v2965
      %3322 = vmatmul.bf16.gmra.mxu0 %v2498
      %v3323 = vpop.f32.mrf.mxu0
      %v3324 = vadd.f32 %v3275, %v3323
      %v3325 = vpop.f32.mrf.mxu0
      %v3326 = vadd.f32 %v3277, %v3325
      %3327 = vmatmul.bf16.gmra.mxu0 %v2507
      %v3328 = vpop.f32.mrf.mxu0
      %v3329 = vadd.f32 %v3280, %v3328
      %v3330 = vpop.f32.mrf.mxu0
      %v3331 = vadd.f32 %v3282, %v3330
      %3332 = vmatmul.bf16.gmra.mxu0 %v2516
      %v3333 = vpop.f32.mrf.mxu0
      %v3334 = vadd.f32 %v3285, %v3333
      %v3335 = vpop.f32.mrf.mxu0
      %v3336 = vadd.f32 %v3287, %v3335
      %3337 = vmatmul.bf16.gmra.mxu0 %v2525
      %v3338 = vpop.f32.mrf.mxu0
      %v3339 = vadd.f32 %v3290, %v3338
      %v3340 = vpop.f32.mrf.mxu0
      %v3341 = vadd.f32 %v3292, %v3340
      %3342 = vmatmul.bf16.gmra.mxu0 %v2534
      %v3343 = vpop.f32.mrf.mxu0
      %v3344 = vadd.f32 %v3295, %v3343
      %v3345 = vpop.f32.mrf.mxu0
      %v3346 = vadd.f32 %v3297, %v3345
      %3347 = vmatmul.bf16.gmra.mxu0 %v2543
      %v3348 = vpop.f32.mrf.mxu0
      %v3349 = vadd.f32 %v3300, %v3348
      %v3350 = vpop.f32.mrf.mxu0
      %v3351 = vadd.f32 %v3302, %v3350
      %3352 = vmatmul.bf16.gmra.mxu0 %v2552
      %v3353 = vpop.f32.mrf.mxu0
      %v3354 = vadd.f32 %v3305, %v3353
      %v3355 = vpop.f32.mrf.mxu0
      %v3356 = vadd.f32 %v3307, %v3355
      %3357 = vmatmul.bf16.gmra.mxu0 %v2561
      %v3358 = vpop.f32.mrf.mxu0
      %v3359 = vadd.f32 %v3310, %v3358
      %v3360 = vpop.f32.mrf.mxu0
      %v3361 = vadd.f32 %v3312, %v3360
      %3362 = vdwg.mxu0
      %3363 = vmatpush.bf16.msra.mxu0 %v2980
      %3364 = vmatpush.bf16.msra.mxu0 %v2979
      %3365 = vmatpush.bf16.msra.mxu0 %v2978
      %3366 = vmatpush.bf16.msra.mxu0 %v2977
      %3367 = vmatpush.bf16.msra.mxu0 %v2976
      %3368 = vmatpush.bf16.msra.mxu0 %v2975
      %3369 = vmatpush.bf16.msra.mxu0 %v2974
      %3370 = vmatpush.bf16.msra.mxu0 %v2973
      %3371 = vmatmul.bf16.gmra.mxu0 %v2499
      %v3372 = vpop.f32.mrf.mxu0
      %v3373 = vadd.f32 %v3324, %v3372
      %v3374 = vpop.f32.mrf.mxu0
      %v3375 = vadd.f32 %v3326, %v3374
      %3376 = vmatmul.bf16.gmra.mxu0 %v2508
      %v3377 = vpop.f32.mrf.mxu0
      %v3378 = vadd.f32 %v3329, %v3377
      %v3379 = vpop.f32.mrf.mxu0
      %v3380 = vadd.f32 %v3331, %v3379
      %3381 = vmatmul.bf16.gmra.mxu0 %v2517
      %v3382 = vpop.f32.mrf.mxu0
      %v3383 = vadd.f32 %v3334, %v3382
      %v3384 = vpop.f32.mrf.mxu0
      %v3385 = vadd.f32 %v3336, %v3384
      %3386 = vmatmul.bf16.gmra.mxu0 %v2526
      %v3387 = vpop.f32.mrf.mxu0
      %v3388 = vadd.f32 %v3339, %v3387
      %v3389 = vpop.f32.mrf.mxu0
      %v3390 = vadd.f32 %v3341, %v3389
      %3391 = vmatmul.bf16.gmra.mxu0 %v2535
      %v3392 = vpop.f32.mrf.mxu0
      %v3393 = vadd.f32 %v3344, %v3392
      %v3394 = vpop.f32.mrf.mxu0
      %v3395 = vadd.f32 %v3346, %v3394
      %3396 = vmatmul.bf16.gmra.mxu0 %v2544
      %v3397 = vpop.f32.mrf.mxu0
      %v3398 = vadd.f32 %v3349, %v3397
      %v3399 = vpop.f32.mrf.mxu0
      %v3400 = vadd.f32 %v3351, %v3399
      %3401 = vmatmul.bf16.gmra.mxu0 %v2553
      %v3402 = vpop.f32.mrf.mxu0
      %v3403 = vadd.f32 %v3354, %v3402
      %v3404 = vpop.f32.mrf.mxu0
      %v3405 = vadd.f32 %v3356, %v3404
      %3406 = vmatmul.bf16.gmra.mxu0 %v2562
      %v3407 = vpop.f32.mrf.mxu0
      %v3408 = vadd.f32 %v3359, %v3407
      %v3409 = vpop.f32.mrf.mxu0
      %v3410 = vadd.f32 %v3361, %v3409
      %3411 = vdwg.mxu0
      %3412 = vmatpush.bf16.msra.mxu0 %v2988
      %3413 = vmatpush.bf16.msra.mxu0 %v2987
      %3414 = vmatpush.bf16.msra.mxu0 %v2986
      %3415 = vmatpush.bf16.msra.mxu0 %v2985
      %3416 = vmatpush.bf16.msra.mxu0 %v2984
      %3417 = vmatpush.bf16.msra.mxu0 %v2983
      %3418 = vmatpush.bf16.msra.mxu0 %v2982
      %3419 = vmatpush.bf16.msra.mxu0 %v2981
      %3420 = vmatmul.bf16.gmra.mxu0 %v2500
      %v3421 = vpop.f32.mrf.mxu0
      %v3422 = vadd.f32 %v3373, %v3421
      %v3423 = vpop.f32.mrf.mxu0
      %v3424 = vadd.f32 %v3375, %v3423
      %3425 = vmatmul.bf16.gmra.mxu0 %v2509
      %v3426 = vpop.f32.mrf.mxu0
      %v3427 = vadd.f32 %v3378, %v3426
      %v3428 = vpop.f32.mrf.mxu0
      %v3429 = vadd.f32 %v3380, %v3428
      %3430 = vmatmul.bf16.gmra.mxu0 %v2518
      %v3431 = vpop.f32.mrf.mxu0
      %v3432 = vadd.f32 %v3383, %v3431
      %v3433 = vpop.f32.mrf.mxu0
      %v3434 = vadd.f32 %v3385, %v3433
      %3435 = vmatmul.bf16.gmra.mxu0 %v2527
      %v3436 = vpop.f32.mrf.mxu0
      %v3437 = vadd.f32 %v3388, %v3436
      %v3438 = vpop.f32.mrf.mxu0
      %v3439 = vadd.f32 %v3390, %v3438
      %3440 = vmatmul.bf16.gmra.mxu0 %v2536
      %v3441 = vpop.f32.mrf.mxu0
      %v3442 = vadd.f32 %v3393, %v3441
      %v3443 = vpop.f32.mrf.mxu0
      %v3444 = vadd.f32 %v3395, %v3443
      %3445 = vmatmul.bf16.gmra.mxu0 %v2545
      %v3446 = vpop.f32.mrf.mxu0
      %v3447 = vadd.f32 %v3398, %v3446
      %v3448 = vpop.f32.mrf.mxu0
      %v3449 = vadd.f32 %v3400, %v3448
      %3450 = vmatmul.bf16.gmra.mxu0 %v2554
      %v3451 = vpop.f32.mrf.mxu0
      %v3452 = vadd.f32 %v3403, %v3451
      %v3453 = vpop.f32.mrf.mxu0
      %v3454 = vadd.f32 %v3405, %v3453
      %3455 = vmatmul.bf16.gmra.mxu0 %v2563
      %v3456 = vpop.f32.mrf.mxu0
      %v3457 = vadd.f32 %v3408, %v3456
      %v3458 = vpop.f32.mrf.mxu0
      %v3459 = vadd.f32 %v3410, %v3458
      %3460 = vdwg.mxu0
      %3461 = vmatpush.bf16.msra.mxu0 %v2996
      %3462 = vmatpush.bf16.msra.mxu0 %v2995
      %3463 = vmatpush.bf16.msra.mxu0 %v2994
      %3464 = vmatpush.bf16.msra.mxu0 %v2993
      %3465 = vmatpush.bf16.msra.mxu0 %v2992
      %3466 = vmatpush.bf16.msra.mxu0 %v2991
      %3467 = vmatpush.bf16.msra.mxu0 %v2990
      %3468 = vmatpush.bf16.msra.mxu0 %v2989
      %3469 = vmatmul.bf16.gmra.mxu0 %v2501
      %v3470 = vpop.f32.mrf.mxu0
      %v3471 = vadd.f32 %v3422, %v3470
      %v3472 = vpop.f32.mrf.mxu0
      %v3473 = vadd.f32 %v3424, %v3472
      %3474 = vmatmul.bf16.gmra.mxu0 %v2510
      %v3475 = vpop.f32.mrf.mxu0
      %v3476 = vadd.f32 %v3427, %v3475
      %v3477 = vpop.f32.mrf.mxu0
      %v3478 = vadd.f32 %v3429, %v3477
      %3479 = vmatmul.bf16.gmra.mxu0 %v2519
      %v3480 = vpop.f32.mrf.mxu0
      %v3481 = vadd.f32 %v3432, %v3480
      %v3482 = vpop.f32.mrf.mxu0
      %v3483 = vadd.f32 %v3434, %v3482
      %3484 = vmatmul.bf16.gmra.mxu0 %v2528
      %v3485 = vpop.f32.mrf.mxu0
      %v3486 = vadd.f32 %v3437, %v3485
      %v3487 = vpop.f32.mrf.mxu0
      %v3488 = vadd.f32 %v3439, %v3487
      %3489 = vmatmul.bf16.gmra.mxu0 %v2537
      %v3490 = vpop.f32.mrf.mxu0
      %v3491 = vadd.f32 %v3442, %v3490
      %v3492 = vpop.f32.mrf.mxu0
      %v3493 = vadd.f32 %v3444, %v3492
      %3494 = vmatmul.bf16.gmra.mxu0 %v2546
      %v3495 = vpop.f32.mrf.mxu0
      %v3496 = vadd.f32 %v3447, %v3495
      %v3497 = vpop.f32.mrf.mxu0
      %v3498 = vadd.f32 %v3449, %v3497
      %3499 = vmatmul.bf16.gmra.mxu0 %v2555
      %v3500 = vpop.f32.mrf.mxu0
      %v3501 = vadd.f32 %v3452, %v3500
      %v3502 = vpop.f32.mrf.mxu0
      %v3503 = vadd.f32 %v3454, %v3502
      %3504 = vmatmul.bf16.gmra.mxu0 %v2564
      %v3505 = vpop.f32.mrf.mxu0
      %v3506 = vadd.f32 %v3457, %v3505
      %v3507 = vpop.f32.mrf.mxu0
      %v3508 = vadd.f32 %v3459, %v3507
      %3509 = vdwg.mxu0
      %v3510 = vpack.c.bf16 %v3471, %v3471
      %v3511 = vpack.c.bf16 %v3473, %v3473
      %v3512 = vpack.c.bf16 %v3476, %v3476
      %v3513 = vpack.c.bf16 %v3478, %v3478
      %v3514 = vpack.c.bf16 %v3481, %v3481
      %v3515 = vpack.c.bf16 %v3483, %v3483
      %v3516 = vpack.c.bf16 %v3486, %v3486
      %v3517 = vpack.c.bf16 %v3488, %v3488
      %v3518 = vpack.c.bf16 %v3491, %v3491
      %v3519 = vpack.c.bf16 %v3493, %v3493
      %v3520 = vpack.c.bf16 %v3496, %v3496
      %v3521 = vpack.c.bf16 %v3498, %v3498
      %v3522 = vpack.c.bf16 %v3501, %v3501
      %v3523 = vpack.c.bf16 %v3503, %v3503
      %v3524 = vpack.c.bf16 %v3506, %v3506
      %v3525 = vpack.c.bf16 %v3508, %v3508
      %3526 = vst [vmem:[%s255] sm:$0xf] %v3510
      %3527 = vst [vmem:[%s255 + $0x4] sm:$0xf] %v3511
      %3528 = vst [vmem:[%s255 + $0x8] sm:$0xf] %v3512
      %3529 = vst [vmem:[%s255 + $0xc] sm:$0xf] %v3513
      %3530 = vst [vmem:[%s255 + $0x10] sm:$0xf] %v3514
      %3531 = vst [vmem:[%s255 + $0x14] sm:$0xf] %v3515
      %3532 = vst [vmem:[%s255 + $0x18] sm:$0xf] %v3516
      %3533 = vst [vmem:[%s255 + $0x1c] sm:$0xf] %v3517
      %3534 = vst [vmem:[%s255 + $0x20] sm:$0xf] %v3518
      %3535 = vst [vmem:[%s255 + $0x24] sm:$0xf] %v3519
      %3536 = vst [vmem:[%s255 + $0x28] sm:$0xf] %v3520
      %3537 = vst [vmem:[%s255 + $0x2c] sm:$0xf] %v3521
      %3538 = vst [vmem:[%s255 + $0x30] sm:$0xf] %v3522
      %3539 = vst [vmem:[%s255 + $0x34] sm:$0xf] %v3523
      %3540 = vst [vmem:[%s255 + $0x38] sm:$0xf] %v3524
      %3541 = vst [vmem:[%s255 + $0x3c] sm:$0xf] %v3525
      // Predicated region
      $region53: #{basic_block.4} parent=35 // pred_check
        %p3542 = pneg %p656
      $region54: #{basic_block.4} parent=35 // pred_check_branch
        %3544 = sbr.rel (%p3542) target = $region56
      $region55: #{basic_block.4} parent=35 // pred_region
        %3545 = vst [vmem:[%s260] sm:$0x3] 0.0
      $region56: #{basic_block.4} parent=35 // pred_fallthru
        _
      %v3546 = vadd.f32 %v3471, %v3473
      %v3547 = vadd.f32 %v3546, %v3476
      %v3548 = vadd.f32 %v3547, %v3478
      %v3549 = vadd.f32 %v3548, %v3481
      %v3550 = vadd.f32 %v3549, %v3483
      %v3551 = vadd.f32 %v3550, %v3486
      %v3552 = vadd.f32 %v3551, %v3488
      %v3553 = vadd.f32 %v3552, %v3491
      %v3554 = vadd.f32 %v3553, %v3493
      %v3555 = vadd.f32 %v3554, %v3496
      %v3556 = vadd.f32 %v3555, %v3498
      %v3557 = vadd.f32 %v3556, %v3501
      %v3558 = vadd.f32 %v3557, %v3503
      %v3559 = vadd.f32 %v3558, %v3506
      %v3560 = vadd.f32 %v3559, %v3508
      %v3561 = vrot.slane %v3560, 4
      %v3562 = vadd.f32 %v3560, %v3561
      %v3563 = vrot.slane %v3562, 2
      %v3564 = vadd.f32 %v3562, %v3563
      %v3565 = vrot.slane %v3564, 1
      %v3566 = vadd.f32 %v3564, %v3565
      %v3567 = vmul.f32 %v3471, %v3471
      %v3568 = vmul.f32 %v3473, %v3473
      %v3569 = vmul.f32 %v3476, %v3476
      %v3570 = vmul.f32 %v3478, %v3478
      %v3571 = vmul.f32 %v3481, %v3481
      %v3572 = vmul.f32 %v3483, %v3483
      %v3573 = vmul.f32 %v3486, %v3486
      %v3574 = vmul.f32 %v3488, %v3488
      %v3575 = vmul.f32 %v3491, %v3491
      %v3576 = vmul.f32 %v3493, %v3493
      %v3577 = vmul.f32 %v3496, %v3496
      %v3578 = vmul.f32 %v3498, %v3498
      %v3579 = vmul.f32 %v3501, %v3501
      %v3580 = vmul.f32 %v3503, %v3503
      %v3581 = vmul.f32 %v3506, %v3506
      %v3582 = vmul.f32 %v3508, %v3508
      %v3583 = vadd.f32 %v3567, %v3568
      %v3584 = vadd.f32 %v3583, %v3569
      %v3585 = vadd.f32 %v3584, %v3570
      %v3586 = vadd.f32 %v3585, %v3571
      %v3587 = vadd.f32 %v3586, %v3572
      %v3588 = vadd.f32 %v3587, %v3573
      %v3589 = vadd.f32 %v3588, %v3574
      %v3590 = vadd.f32 %v3589, %v3575
      %v3591 = vadd.f32 %v3590, %v3576
      %v3592 = vadd.f32 %v3591, %v3577
      %v3593 = vadd.f32 %v3592, %v3578
      %v3594 = vadd.f32 %v3593, %v3579
      %v3595 = vadd.f32 %v3594, %v3580
      %v3596 = vadd.f32 %v3595, %v3581
      %v3597 = vadd.f32 %v3596, %v3582
      %v3598 = vrot.slane %v3597, 4
      %v3599 = vadd.f32 %v3597, %v3598
      %v3600 = vrot.slane %v3599, 2
      %v3601 = vadd.f32 %v3599, %v3600
      %v3602 = vrot.slane %v3601, 1
      %v3603 = vadd.f32 %v3601, %v3602
      %v3604 = vld [vmem:[%s260] sm:$0x3]
      %vm3605 = vcmask 1040384
      %v3606 = vsel %vm3605, %v3566, %v3603
      %v3607 = vadd.f32 %v3604, %v3606
      %3608 = vst [vmem:[%s260] sm:$0x3] %v3607
      %s3609 = smul.u32 8, %s22
      %p3610 = scmp.lt.s32.totalorder %s21, 1
      %s3611 = scalar_select %p3610, %s21, 1
      %p3612 = scmp.lt.s32.totalorder %s3609, 15
      %s3613 = scalar_select %p3612, %s3609, 15
      %s3614 = smul.addr %s3613, 2
      %s3615 = smul.addr %s3611, 32
      %s3616 = sadd.s32 %s3614, %s3615
      %s3617 = smul.addr %s3616, 4
      %s3618 = scalar_lea.vmem %s4, %s3617
      %p3619 = scmp.lt.s32.totalorder %s21, 1
      %s3620 = scalar_select %p3619, %s21, 1
      %s3621 = smul.addr %s3620, 2
      %s3622 = scalar_lea.vmem %s5, %s3621
      // Predicated region
      $region57: #{basic_block.4} parent=35 // pred_check
        %p3623 = pneg %p138
      $region58: #{basic_block.4} parent=35 // pred_check_branch
        %3625 = sbr.rel (%p3623) target = $region60
      $region59: #{basic_block.4} parent=35 // pred_region
        %s3626 = smul.u32 8, %s22
      $region60: #{basic_block.4} parent=35 // pred_fallthru
        _
      // Predicated region
      $region61: #{basic_block.4} parent=35 // pred_check
        %p3627 = pneg %p164
      $region62: #{basic_block.4} parent=35 // pred_check_branch
        %3629 = sbr.rel (%p3627) target = $region64
      $region63: #{basic_block.4} parent=35 // pred_region
        _
      $region64: #{basic_block.4} parent=35 // pred_fallthru
        _
    $region36: #{basic_block.4} parent=5 // pred_fallthru
      _
    %p3630 = scmp.le.s32.totalorder 2, %s12
    // Predicated region
    $region65: #{basic_block.4} parent=5 // pred_check
      %p3631 = pneg %p3630
    $region66: #{basic_block.4} parent=5 // pred_check_branch
      %3633 = sbr.rel (%p3631) target = $region68
    $region67: #{basic_block.4} parent=5 // pred_region
      %s3634 = ssub.s32 %s12, 2
      // Predicated region
      $region69: #{basic_block.4} parent=67 // pred_check
        %p3635 = pneg %p144
      $region70: #{basic_block.4} parent=67 // pred_check_branch
        %3637 = sbr.rel (%p3635) target = $region72
      $region71: #{basic_block.4} parent=67 // pred_region
        %s3638 = smul.u32 8, %s24
        %p3639 = scmp.lt.s32.totalorder %s23, 1
        %s3640 = scalar_select %p3639, %s23, 1
        %p3641 = scmp.lt.s32.totalorder %s3638, 15
        %s3642 = scalar_select %p3641, %s3638, 15
        %s3643 = smul.addr %s3642, 2
        %s3644 = smul.addr %s3640, 32
        %s3645 = sadd.s32 %s3643, %s3644
        %s3646 = smul.addr %s3645, 4
        %s3647 = scalar_lea.vmem %s4, %s3646
      $region72: #{basic_block.4} parent=67 // pred_fallthru
        _
      // Predicated region
      $region73: #{basic_block.4} parent=67 // pred_check
        %p3648 = pneg %p170
      $region74: #{basic_block.4} parent=67 // pred_check_branch
        %3650 = sbr.rel (%p3648) target = $region76
      $region75: #{basic_block.4} parent=67 // pred_region
        %p3651 = scmp.lt.s32.totalorder %s23, 1
        %s3652 = scalar_select %p3651, %s23, 1
        %s3653 = smul.addr %s3652, 2
        %s3654 = scalar_lea.vmem %s5, %s3653
      $region76: #{basic_block.4} parent=67 // pred_fallthru
        _
    $region68: #{basic_block.4} parent=5 // pred_fallthru
      _
  $region6: #{basic_block.4} parent=0 // loop_footer
    %s16 = sadd.s32 1, %s12
  $region7: #{basic_block.4} parent=0 // loop_footer_branch
    %11 = sbr.rel target = $region3
  $region8: #{basic_block.4} parent=0 // loop_exit
    _

// kernel: basic_block.3
$region0: #{basic_block.3}
  #allocation0 [shape = 'u32[]', space=smem, size = 0x4, offset = 0x4, fixed_abs, tag = 'smem constant byte address 0x4 - core index']
  #allocation1 [shape = 'u32[72,128]{1,0:T(1,128)}', space=vmem, size = 0x9000, scoped, tag = 'internal scratch']
  #allocation2 [shape = 'bf16[10,18,128]{2,1,0:T(8,128)(2,1)}', space=vmem, size = 0xf000, scoped, tag = 'scratch operand']
  #allocation3 [shape = 'bf16[8,16,1152]{2,1,0:T(8,128)(2,1)}', space=vmem, size = 0x48000, scoped, tag = 'scratch operand']
  %s0 = inlined_call_operand.vmem [shape: f32[2,16,16,128], index: 0, kind: input, shape index: {}]
  %s1 = inlined_call_operand.vmem [shape: f32[1,128], index: 1, kind: input, shape index: {}]
  %s2 = inlined_call_operand.vmem [shape: f32[1,128], index: 2, kind: input, shape index: {}]
  %s3 = inlined_call_operand.vmem [shape: bf16[1152,128], index: 3, kind: input, shape index: {}]
  %s4 = inlined_call_operand.vmem [shape: bf16[2,16,16,128], index: 4, kind: output, shape index: {0}]
  %s5 = inlined_call_operand.vmem [shape: f32[2,2,128], index: 5, kind: output, shape index: {1}]
  %6 = xla_tuple %s4, %s5
  %s7 = sld [smem:[#allocation0]]
  $region77: #{basic_block.3} parent=0
    _
  %s9 = ssub.s32 1, %s7
  %s10 = scalar_select 0, %s9, %s7
  loop: start=0, step=1, limit=6
  $region2: #{basic_block.3} parent=0 // loop_pre_header
    _
  $region3: #{basic_block.3} parent=0 // loop_header
    %s12 = sphi 0, %s16
    %p13 = scmp.ge.s32.totalorder %s12, 6
    %s19 = sphi 0, %s31
    %s20 = sphi 0, %s27
    %s21 = sphi 0, %s19
    %s22 = sphi 0, %s20
    %s23 = sphi 0, %s21
    %s24 = sphi 0, %s22
    %s34 = sphi 0, %s36
    %s37 = sphi 0, %s34
    %s38 = sphi 0, %s37
    %s54 = sphi 0, %s38
    %s58 = sphi 0, %s58
    %s60 = sphi 0, %s58
    %s61 = sphi 0, %s60
    %s75 = sphi 0, %s61
    %s79 = sphi 0, %s79
    %s81 = sphi 0, %s79
    %s82 = sphi 0, %s81
    %s96 = sphi 0, %s82
    %s100 = sphi 0, %s100
    %s102 = sphi 0, %s100
    %s103 = sphi 0, %s102
    %s117 = sphi 0, %s103
    %s125 = sphi 0, %s127
    %s128 = sphi 0, %s125
    %s129 = sphi 0, %s128
    %s145 = sphi 0, %s129
    %s151 = sphi 0, %s153
    %s154 = sphi 0, %s151
    %s155 = sphi 0, %s154
    %s171 = sphi 0, %s155
  $region4: #{basic_block.3} parent=0 // loop_header_branch
    %15 = sbr.rel (%p13) target = $region8
  $region5: #{basic_block.3} parent=0 // loop_body
    %s17 = ssub.s32 %s12, 1
    %s18 = ssub.s32 %s12, 2
    %s25 = sadd.s32 1, %s20
    %p26 = scmp.ge.s32.totalorder %s25, 2
    %s27 = scalar_select %p26, 0, %s25
    %s28 = sadd.s32 1, %s19
    %s29 = scalar_select %p26, %s28, %s19
    %p30 = scmp.ge.s32.totalorder %s29, 2
    %s31 = scalar_select %p30, 0, %s29
    %s32 = ssub.s32 %s19, %s31
    %p33 = scmp.eq.s32.totalorder %s32, 0
    %s35 = sadd.s32 %s34, 1
    %s36 = scalar_select %p33, %s34, %s35
    %p39 = pneg %p33
    %p40 = scmp.eq.s32.totalorder %s12, 3
    %p41 = por %p39, %p40
    %p42 = scmp.ne.s32.totalorder %s34, %s37
    %p43 = scmp.eq.s32.totalorder %s12, 0
    %p44 = por %p42, %p43
    %p45 = scmp.ne.s32.totalorder %s34, %s37
    %p46 = scmp.eq.s32.totalorder %s17, 3
    %p47 = por %p45, %p46
    %p48 = scmp.ne.s32.totalorder %s37, %s38
    %p49 = scmp.eq.s32.totalorder %s17, 0
    %p50 = por %p48, %p49
    %p51 = scmp.ne.s32.totalorder %s37, %s38
    %p52 = scmp.eq.s32.totalorder %s18, 3
    %p53 = por %p51, %p52
    %p55 = scmp.ne.s32.totalorder %s38, %s54
    %p56 = scmp.eq.s32.totalorder %s18, 0
    %p57 = por %p55, %p56
    %s59 = sadd.s32 %s58, 1
    %p62 = scmp.eq.s32.totalorder %s12, 3
    %p63 = scmp.ne.s32.totalorder %s58, %s60
    %p64 = scmp.eq.s32.totalorder %s12, 0
    %p65 = por %p63, %p64
    %p66 = scmp.ne.s32.totalorder %s58, %s60
    %p67 = scmp.eq.s32.totalorder %s17, 3
    %p68 = por %p66, %p67
    %p69 = scmp.ne.s32.totalorder %s60, %s61
    %p70 = scmp.eq.s32.totalorder %s17, 0
    %p71 = por %p69, %p70
    %p72 = scmp.ne.s32.totalorder %s60, %s61
    %p73 = scmp.eq.s32.totalorder %s18, 3
    %p74 = por %p72, %p73
    %p76 = scmp.ne.s32.totalorder %s61, %s75
    %p77 = scmp.eq.s32.totalorder %s18, 0
    %p78 = por %p76, %p77
    %s80 = sadd.s32 %s79, 1
    %p83 = scmp.eq.s32.totalorder %s12, 3
    %p84 = scmp.ne.s32.totalorder %s79, %s81
    %p85 = scmp.eq.s32.totalorder %s12, 0
    %p86 = por %p84, %p85
    %p87 = scmp.ne.s32.totalorder %s79, %s81
    %p88 = scmp.eq.s32.totalorder %s17, 3
    %p89 = por %p87, %p88
    %p90 = scmp.ne.s32.totalorder %s81, %s82
    %p91 = scmp.eq.s32.totalorder %s17, 0
    %p92 = por %p90, %p91
    %p93 = scmp.ne.s32.totalorder %s81, %s82
    %p94 = scmp.eq.s32.totalorder %s18, 3
    %p95 = por %p93, %p94
    %p97 = scmp.ne.s32.totalorder %s82, %s96
    %p98 = scmp.eq.s32.totalorder %s18, 0
    %p99 = por %p97, %p98
    %s101 = sadd.s32 %s100, 1
    %p104 = scmp.eq.s32.totalorder %s12, 3
    %p105 = scmp.ne.s32.totalorder %s100, %s102
    %p106 = scmp.eq.s32.totalorder %s12, 0
    %p107 = por %p105, %p106
    %p108 = scmp.ne.s32.totalorder %s100, %s102
    %p109 = scmp.eq.s32.totalorder %s17, 3
    %p110 = por %p108, %p109
    %p111 = scmp.ne.s32.totalorder %s102, %s103
    %p112 = scmp.eq.s32.totalorder %s17, 0
    %p113 = por %p111, %p112
    %p114 = scmp.ne.s32.totalorder %s102, %s103
    %p115 = scmp.eq.s32.totalorder %s18, 3
    %p116 = por %p114, %p115
    %p118 = scmp.ne.s32.totalorder %s103, %s117
    %p119 = scmp.eq.s32.totalorder %s18, 0
    %p120 = por %p118, %p119
    %s121 = ssub.s32 %s19, %s31
    %s122 = ssub.s32 %s20, %s27
    %s123 = sor.u32 %s121, %s122
    %p124 = scmp.eq.s32.totalorder %s123, 0
    %s126 = sadd.s32 %s125, 1
    %s127 = scalar_select %p124, %s125, %s126
    %p130 = pneg %p124
    %p131 = scmp.eq.s32.totalorder %s12, 3
    %p132 = por %p130, %p131
    %p133 = scmp.ne.s32.totalorder %s125, %s128
    %p134 = scmp.eq.s32.totalorder %s12, 0
    %p135 = por %p133, %p134
    %p136 = scmp.ne.s32.totalorder %s125, %s128
    %p137 = scmp.eq.s32.totalorder %s17, 3
    %p138 = por %p136, %p137
    %p139 = scmp.ne.s32.totalorder %s128, %s129
    %p140 = scmp.eq.s32.totalorder %s17, 0
    %p141 = por %p139, %p140
    %p142 = scmp.ne.s32.totalorder %s128, %s129
    %p143 = scmp.eq.s32.totalorder %s18, 3
    %p144 = por %p142, %p143
    %p146 = scmp.ne.s32.totalorder %s129, %s145
    %p147 = scmp.eq.s32.totalorder %s18, 0
    %p148 = por %p146, %p147
    %s149 = ssub.s32 %s19, %s31
    %p150 = scmp.eq.s32.totalorder %s149, 0
    %s152 = sadd.s32 %s151, 1
    %s153 = scalar_select %p150, %s151, %s152
    %p156 = pneg %p150
    %p157 = scmp.eq.s32.totalorder %s12, 3
    %p158 = por %p156, %p157
    %p159 = scmp.ne.s32.totalorder %s151, %s154
    %p160 = scmp.eq.s32.totalorder %s12, 0
    %p161 = por %p159, %p160
    %p162 = scmp.ne.s32.totalorder %s151, %s154
    %p163 = scmp.eq.s32.totalorder %s17, 3
    %p164 = por %p162, %p163
    %p165 = scmp.ne.s32.totalorder %s154, %s155
    %p166 = scmp.eq.s32.totalorder %s17, 0
    %p167 = por %p165, %p166
    %p168 = scmp.ne.s32.totalorder %s154, %s155
    %p169 = scmp.eq.s32.totalorder %s18, 3
    %p170 = por %p168, %p169
    %p172 = scmp.ne.s32.totalorder %s155, %s171
    %p173 = scmp.eq.s32.totalorder %s18, 0
    %p174 = por %p172, %p173
    %p175 = scmp.le.s32.totalorder 1, %s12
    %p176 = scmp.lt.s32.totalorder %s12, 5
    %p177 = pnand %p175, %p176
    %p178 = pneg %p177
    // Predicated region
    $region9: #{basic_block.3} parent=5 // pred_check
      _
    $region10: #{basic_block.3} parent=5 // pred_check_branch
      %180 = sbr.rel (%p177) target = $region12
    $region11: #{basic_block.3} parent=5 // pred_region
      %s181 = ssub.s32 %s12, 1
      // Predicated region
      $region13: #{basic_block.3} parent=11 // pred_check
        %p182 = pneg %p71
      $region14: #{basic_block.3} parent=11 // pred_check_branch
        %184 = sbr.rel (%p182) target = $region16
      $region15: #{basic_block.3} parent=11 // pred_region
        _
      $region16: #{basic_block.3} parent=11 // pred_fallthru
        _
      // Predicated region
      $region17: #{basic_block.3} parent=11 // pred_check
        %p185 = pneg %p92
      $region18: #{basic_block.3} parent=11 // pred_check_branch
        %187 = sbr.rel (%p185) target = $region20
      $region19: #{basic_block.3} parent=11 // pred_region
        _
      $region20: #{basic_block.3} parent=11 // pred_fallthru
        _
      // Predicated region
      $region21: #{basic_block.3} parent=11 // pred_check
        %p188 = pneg %p113
      $region22: #{basic_block.3} parent=11 // pred_check_branch
        %190 = sbr.rel (%p188) target = $region24
      $region23: #{basic_block.3} parent=11 // pred_region
        _
      $region24: #{basic_block.3} parent=11 // pred_fallthru
        _
    $region12: #{basic_block.3} parent=5 // pred_fallthru
      _
    %p191 = scmp.lt.s32.totalorder %s12, 4
    // Predicated region
    $region25: #{basic_block.3} parent=5 // pred_check
      %p192 = pneg %p191
    $region26: #{basic_block.3} parent=5 // pred_check_branch
      %194 = sbr.rel (%p192) target = $region28
    $region27: #{basic_block.3} parent=5 // pred_region
      // Predicated region
      $region29: #{basic_block.3} parent=27 // pred_check
        %p195 = pneg %p44
      $region30: #{basic_block.3} parent=27 // pred_check_branch
        %197 = sbr.rel (%p195) target = $region32
      $region31: #{basic_block.3} parent=27 // pred_region
        %p198 = scmp.lt.s32.totalorder %s19, 1
        %s199 = scalar_select %p198, %s19, 1
        %s200 = smul.addr %s199, 32
        %s201 = smul.addr %s200, 8
        %s202 = scalar_lea.vmem %s0, %s201
      $region32: #{basic_block.3} parent=27 // pred_fallthru
        _
    $region28: #{basic_block.3} parent=5 // pred_fallthru
      _
    %p203 = scmp.le.s32.totalorder 1, %s12
    %p204 = scmp.lt.s32.totalorder %s12, 5
    %p205 = pnand %p203, %p204
    %p206 = pneg %p205
    // Predicated region
    $region33: #{basic_block.3} parent=5 // pred_check
      _
    $region34: #{basic_block.3} parent=5 // pred_check_branch
      %208 = sbr.rel (%p205) target = $region36
    $region35: #{basic_block.3} parent=5 // pred_region
      %s209 = ssub.s32 %s12, 1
      %p210 = scmp.lt.s32.totalorder %s21, 1
      %s211 = scalar_select %p210, %s21, 1
      %s212 = smul.addr %s211, 32
      %s213 = smul.addr %s212, 8
      %s214 = scalar_lea.vmem %s0, %s213
      %p215 = pneg %p50
      %p216 = pneg %p47
      %p217 = pneg %p71
      %p218 = pneg %p68
      %p219 = pneg %p92
      %p220 = pneg %p89
      %p221 = pneg %p113
      %p222 = pneg %p110
      %p223 = pneg %p141
      %p224 = pneg %p138
      %s225 = smul.u32 8, %s22
      %p226 = scmp.lt.s32.totalorder %s21, 1
      %s227 = scalar_select %p226, %s21, 1
      %p228 = scmp.lt.s32.totalorder %s225, 15
      %s229 = scalar_select %p228, %s225, 15
      %s230 = smul.addr %s229, 2
      %s231 = smul.addr %s227, 32
      %s232 = sadd.s32 %s230, %s231
      %s233 = smul.addr %s232, 4
      %s234 = scalar_lea.vmem %s4, %s233
      %p235 = pneg %p167
      %p236 = pneg %p164
      %p237 = scmp.lt.s32.totalorder %s21, 1
      %s238 = scalar_select %p237, %s21, 1
      %s239 = smul.addr %s238, 2
      %s240 = scalar_lea.vmem %s5, %s239
      %p241 = scmp.lt.s32.totalorder %s21, 1
      %s242 = scalar_select %p241, %s21, 1
      %s243 = smul.addr %s242, 32
      %s244 = smul.addr %s243, 8
      %s245 = scalar_lea.vmem %s0, %s244
      %s246 = smul.u32 8, %s22
      %p247 = scmp.lt.s32.totalorder %s21, 1
      %s248 = scalar_select %p247, %s21, 1
      %p249 = scmp.lt.s32.totalorder %s246, 15
      %s250 = scalar_select %p249, %s246, 15
      %s251 = smul.addr %s250, 2
      %s252 = smul.addr %s248, 32
      %s253 = sadd.s32 %s251, %s252
      %s254 = smul.addr %s253, 4
      %s255 = scalar_lea.vmem %s4, %s254
      %s256 = smul.u32 8, %s22
      %p257 = scmp.lt.s32.totalorder %s21, 1
      %s258 = scalar_select %p257, %s21, 1
      %s259 = smul.addr %s258, 2
      %s260 = scalar_lea.vmem %s5, %s259
      %s262 = smul.u32 %s22, 8
      %vm263 = vcmask 1040384
      %vm264 = vsmask.f32 256
      %vm265 = vmand %vm263, %vm264
      %v266 = vld [vmem:[#allocation2] sm:$0x1]
      %v267 = vsel %vm265, 0, %v266
      %268 = vst [vmem:[#allocation2] sm:$0x1] %v267
      %v269 = vld [vmem:[#allocation2 + $0xc] sm:$0x1]
      %v270 = vsel %vm265, 0, %v269
      %271 = vst [vmem:[#allocation2 + $0xc] sm:$0x1] %v270
      %v272 = vld [vmem:[#allocation2 + $0x18] sm:$0x1]
      %v273 = vsel %vm265, 0, %v272
      %274 = vst [vmem:[#allocation2 + $0x18] sm:$0x1] %v273
      %v275 = vld [vmem:[#allocation2 + $0x24] sm:$0x1]
      %v276 = vsel %vm265, 0, %v275
      %277 = vst [vmem:[#allocation2 + $0x24] sm:$0x1] %v276
      %v278 = vld [vmem:[#allocation2 + $0x30] sm:$0x1]
      %v279 = vsel %vm265, 0, %v278
      %280 = vst [vmem:[#allocation2 + $0x30] sm:$0x1] %v279
      %v281 = vld [vmem:[#allocation2 + $0x3c] sm:$0x1]
      %v282 = vsel %vm265, 0, %v281
      %283 = vst [vmem:[#allocation2 + $0x3c] sm:$0x1] %v282
      %v284 = vld [vmem:[#allocation2 + $0x48] sm:$0x1]
      %v285 = vsel %vm265, 0, %v284
      %286 = vst [vmem:[#allocation2 + $0x48] sm:$0x1] %v285
      %v287 = vld [vmem:[#allocation2 + $0x54] sm:$0x1]
      %v288 = vsel %vm265, 0, %v287
      %289 = vst [vmem:[#allocation2 + $0x54] sm:$0x1] %v288
      %v290 = vld [vmem:[#allocation2 + $0x60] sm:$0x1]
      %v291 = vsel %vm265, 0, %v290
      %292 = vst [vmem:[#allocation2 + $0x60] sm:$0x1] %v291
      %v293 = vld [vmem:[#allocation2 + $0x6c] sm:$0x1]
      %v294 = vsel %vm265, 0, %v293
      %295 = vst [vmem:[#allocation2 + $0x6c] sm:$0x1] %v294
      %vm296 = vsmask.f32 7938
      %vm297 = vmand %vm263, %vm296
      %v298 = vld [vmem:[#allocation2 + $0x8] sm:$0x1]
      %v299 = vsel %vm297, 0, %v298
      %300 = vst [vmem:[#allocation2 + $0x8] sm:$0x1] %v299
      %v301 = vld [vmem:[#allocation2 + $0x14] sm:$0x1]
      %v302 = vsel %vm297, 0, %v301
      %303 = vst [vmem:[#allocation2 + $0x14] sm:$0x1] %v302
      %v304 = vld [vmem:[#allocation2 + $0x20] sm:$0x1]
      %v305 = vsel %vm297, 0, %v304
      %306 = vst [vmem:[#allocation2 + $0x20] sm:$0x1] %v305
      %v307 = vld [vmem:[#allocation2 + $0x2c] sm:$0x1]
      %v308 = vsel %vm297, 0, %v307
      %309 = vst [vmem:[#allocation2 + $0x2c] sm:$0x1] %v308
      %v310 = vld [vmem:[#allocation2 + $0x38] sm:$0x1]
      %v311 = vsel %vm297, 0, %v310
      %312 = vst [vmem:[#allocation2 + $0x38] sm:$0x1] %v311
      %v313 = vld [vmem:[#allocation2 + $0x44] sm:$0x1]
      %v314 = vsel %vm297, 0, %v313
      %315 = vst [vmem:[#allocation2 + $0x44] sm:$0x1] %v314
      %v316 = vld [vmem:[#allocation2 + $0x50] sm:$0x1]
      %v317 = vsel %vm297, 0, %v316
      %318 = vst [vmem:[#allocation2 + $0x50] sm:$0x1] %v317
      %v319 = vld [vmem:[#allocation2 + $0x5c] sm:$0x1]
      %v320 = vsel %vm297, 0, %v319
      %321 = vst [vmem:[#allocation2 + $0x5c] sm:$0x1] %v320
      %v322 = vld [vmem:[#allocation2 + $0x68] sm:$0x1]
      %v323 = vsel %vm297, 0, %v322
      %324 = vst [vmem:[#allocation2 + $0x68] sm:$0x1] %v323
      %v325 = vld [vmem:[#allocation2 + $0x74] sm:$0x1]
      %v326 = vsel %vm297, 0, %v325
      %327 = vst [vmem:[#allocation2 + $0x74] sm:$0x1] %v326
      %s328 = smul.u32 %s262, 16
      %s329 = scalar_lea.vmem %s245, %s328
      %v330 = vld [vmem:[%s329] sm:$0xff]
      %v331 = vld [vmem:[%s329 + $0x8] sm:$0xff]
      %v332 = vld [vmem:[%s329 + $0x10] sm:$0xff]
      %v333 = vld [vmem:[%s329 + $0x18] sm:$0xff]
      %v334 = vld [vmem:[%s329 + $0x20] sm:$0xff]
      %v335 = vld [vmem:[%s329 + $0x28] sm:$0xff]
      %v336 = vld [vmem:[%s329 + $0x30] sm:$0xff]
      %v337 = vld [vmem:[%s329 + $0x38] sm:$0xff]
      %v338 = vld [vmem:[%s329 + $0x40] sm:$0xff]
      %v339 = vld [vmem:[%s329 + $0x48] sm:$0xff]
      %v340 = vld [vmem:[%s329 + $0x50] sm:$0xff]
      %v341 = vld [vmem:[%s329 + $0x58] sm:$0xff]
      %v342 = vld [vmem:[%s329 + $0x60] sm:$0xff]
      %v343 = vld [vmem:[%s329 + $0x68] sm:$0xff]
      %v344 = vld [vmem:[%s329 + $0x70] sm:$0xff]
      %v345 = vld [vmem:[%s329 + $0x78] sm:$0xff]
      %v346 = vpack.c.bf16 %v330, %v330
      %v347 = vpack.c.bf16 %v331, %v331
      %v348 = vpack.c.bf16 %v332, %v332
      %v349 = vpack.c.bf16 %v333, %v333
      %v350 = vpack.c.bf16 %v334, %v334
      %v351 = vpack.c.bf16 %v335, %v335
      %v352 = vpack.c.bf16 %v336, %v336
      %v353 = vpack.c.bf16 %v337, %v337
      %v354 = vpack.c.bf16 %v338, %v338
      %v355 = vpack.c.bf16 %v339, %v339
      %v356 = vpack.c.bf16 %v340, %v340
      %v357 = vpack.c.bf16 %v341, %v341
      %v358 = vpack.c.bf16 %v342, %v342
      %v359 = vpack.c.bf16 %v343, %v343
      %v360 = vpack.c.bf16 %v344, %v344
      %v361 = vpack.c.bf16 %v345, %v345
      %vm362 = vsmask.f32 4368
      %vm363 = vmor %vm264, %vm362
      %v365 = vshrl.u32 %v346, 16
      %v367 = vrot.slane %v365, 7
      %v368 = vshll.u32 %v346, 16
      %v370 = vor.u32 %v367, %v368
      %v371 = vrot.slane %v367, 4
      %v373 = vshrl.u32 %v347, 16
      %v375 = vrot.slane %v373, 7
      %v376 = vshll.u32 %v347, 16
      %v378 = vor.u32 %v375, %v376
      %v379 = vsel %vm363, %v371, %v378
      %v380 = vrot.slane %v375, 4
      %v382 = vshrl.u32 %v348, 16
      %v384 = vrot.slane %v382, 7
      %v385 = vshll.u32 %v348, 16
      %v387 = vor.u32 %v384, %v385
      %v388 = vrot.slane %v384, 4
      %v390 = vshrl.u32 %v349, 16
      %v392 = vrot.slane %v390, 7
      %v393 = vshll.u32 %v349, 16
      %v395 = vor.u32 %v392, %v393
      %v396 = vsel %vm363, %v388, %v395
      %v397 = vrot.slane %v392, 4
      %v399 = vshrl.u32 %v350, 16
      %v401 = vrot.slane %v399, 7
      %v402 = vshll.u32 %v350, 16
      %v404 = vor.u32 %v401, %v402
      %v405 = vrot.slane %v401, 4
      %v407 = vshrl.u32 %v351, 16
      %v409 = vrot.slane %v407, 7
      %v410 = vshll.u32 %v351, 16
      %v412 = vor.u32 %v409, %v410
      %v413 = vsel %vm363, %v405, %v412
      %v414 = vrot.slane %v409, 4
      %v416 = vshrl.u32 %v352, 16
      %v418 = vrot.slane %v416, 7
      %v419 = vshll.u32 %v352, 16
      %v421 = vor.u32 %v418, %v419
      %v422 = vrot.slane %v418, 4
      %v424 = vshrl.u32 %v353, 16
      %v426 = vrot.slane %v424, 7
      %v427 = vshll.u32 %v353, 16
      %v429 = vor.u32 %v426, %v427
      %v430 = vsel %vm363, %v422, %v429
      %v431 = vrot.slane %v426, 4
      %v433 = vshrl.u32 %v354, 16
      %v435 = vrot.slane %v433, 7
      %v436 = vshll.u32 %v354, 16
      %v438 = vor.u32 %v435, %v436
      %v439 = vrot.slane %v435, 4
      %v441 = vshrl.u32 %v355, 16
      %v443 = vrot.slane %v441, 7
      %v444 = vshll.u32 %v355, 16
      %v446 = vor.u32 %v443, %v444
      %v447 = vsel %vm363, %v439, %v446
      %v448 = vrot.slane %v443, 4
      %v450 = vshrl.u32 %v356, 16
      %v452 = vrot.slane %v450, 7
      %v453 = vshll.u32 %v356, 16
      %v455 = vor.u32 %v452, %v453
      %v456 = vrot.slane %v452, 4
      %v458 = vshrl.u32 %v357, 16
      %v460 = vrot.slane %v458, 7
      %v461 = vshll.u32 %v357, 16
      %v463 = vor.u32 %v460, %v461
      %v464 = vsel %vm363, %v456, %v463
      %v465 = vrot.slane %v460, 4
      %v467 = vshrl.u32 %v358, 16
      %v469 = vrot.slane %v467, 7
      %v470 = vshll.u32 %v358, 16
      %v472 = vor.u32 %v469, %v470
      %v473 = vrot.slane %v469, 4
      %v475 = vshrl.u32 %v359, 16
      %v477 = vrot.slane %v475, 7
      %v478 = vshll.u32 %v359, 16
      %v480 = vor.u32 %v477, %v478
      %v481 = vsel %vm363, %v473, %v480
      %v482 = vrot.slane %v477, 4
      %v484 = vshrl.u32 %v360, 16
      %v486 = vrot.slane %v484, 7
      %v487 = vshll.u32 %v360, 16
      %v489 = vor.u32 %v486, %v487
      %v490 = vrot.slane %v486, 4
      %v492 = vshrl.u32 %v361, 16
      %v494 = vrot.slane %v492, 7
      %v495 = vshll.u32 %v361, 16
      %v497 = vor.u32 %v494, %v495
      %v498 = vsel %vm363, %v490, %v497
      %v499 = vrot.slane %v494, 4
      %s524 = scalar_lea.vmem [#allocation2], 12
      %vm525 = vcmask 1043456
      %vm526 = vmand %vm525, %vm296
      %v527 = vld [vmem:[%s524] sm:$0xf]
      %v528 = vsel %vm526, %v370, %v527
      %529 = vst [vmem:[%s524] sm:$0xf] %v528
      %530 = vst [vmem:[%s524 + $0x4] sm:$0xf] %v379
      %v531 = vld [vmem:[%s524 + $0x8] sm:$0x1]
      %v532 = vsel %vm265, %v380, %v531
      %533 = vst [vmem:[%s524 + $0x8] sm:$0x1] %v532
      %v534 = vld [vmem:[%s524 + $0xc] sm:$0xf]
      %v535 = vsel %vm526, %v387, %v534
      %536 = vst [vmem:[%s524 + $0xc] sm:$0xf] %v535
      %537 = vst [vmem:[%s524 + $0x10] sm:$0xf] %v396
      %v538 = vld [vmem:[%s524 + $0x14] sm:$0x1]
      %v539 = vsel %vm265, %v397, %v538
      %540 = vst [vmem:[%s524 + $0x14] sm:$0x1] %v539
      %v541 = vld [vmem:[%s524 + $0x18] sm:$0xf]
      %v542 = vsel %vm526, %v404, %v541
      %543 = vst [vmem:[%s524 + $0x18] sm:$0xf] %v542
      %544 = vst [vmem:[%s524 + $0x1c] sm:$0xf] %v413
      %v545 = vld [vmem:[%s524 + $0x20] sm:$0x1]
      %v546 = vsel %vm265, %v414, %v545
      %547 = vst [vmem:[%s524 + $0x20] sm:$0x1] %v546
      %v548 = vld [vmem:[%s524 + $0x24] sm:$0xf]
      %v549 = vsel %vm526, %v421, %v548
      %550 = vst [vmem:[%s524 + $0x24] sm:$0xf] %v549
      %551 = vst [vmem:[%s524 + $0x28] sm:$0xf] %v430
      %v552 = vld [vmem:[%s524 + $0x2c] sm:$0x1]
      %v553 = vsel %vm265, %v431, %v552
      %554 = vst [vmem:[%s524 + $0x2c] sm:$0x1] %v553
      %v555 = vld [vmem:[%s524 + $0x30] sm:$0xf]
      %v556 = vsel %vm526, %v438, %v555
      %557 = vst [vmem:[%s524 + $0x30] sm:$0xf] %v556
      %558 = vst [vmem:[%s524 + $0x34] sm:$0xf] %v447
      %v559 = vld [vmem:[%s524 + $0x38] sm:$0x1]
      %v560 = vsel %vm265, %v448, %v559
      %561 = vst [vmem:[%s524 + $0x38] sm:$0x1] %v560
      %v562 = vld [vmem:[%s524 + $0x3c] sm:$0xf]
      %v563 = vsel %vm526, %v455, %v562
      %564 = vst [vmem:[%s524 + $0x3c] sm:$0xf] %v563
      %565 = vst [vmem:[%s524 + $0x40] sm:$0xf] %v464
      %v566 = vld [vmem:[%s524 + $0x44] sm:$0x1]
      %v567 = vsel %vm265, %v465, %v566
      %568 = vst [vmem:[%s524 + $0x44] sm:$0x1] %v567
      %v569 = vld [vmem:[%s524 + $0x48] sm:$0xf]
      %v570 = vsel %vm526, %v472, %v569
      %571 = vst [vmem:[%s524 + $0x48] sm:$0xf] %v570
      %572 = vst [vmem:[%s524 + $0x4c] sm:$0xf] %v481
      %v573 = vld [vmem:[%s524 + $0x50] sm:$0x1]
      %v574 = vsel %vm265, %v482, %v573
      %575 = vst [vmem:[%s524 + $0x50] sm:$0x1] %v574
      %v576 = vld [vmem:[%s524 + $0x54] sm:$0xf]
      %v577 = vsel %vm526, %v489, %v576
      %578 = vst [vmem:[%s524 + $0x54] sm:$0xf] %v577
      %579 = vst [vmem:[%s524 + $0x58] sm:$0xf] %v498
      %v580 = vld [vmem:[%s524 + $0x5c] sm:$0x1]
      %v581 = vsel %vm265, %v499, %v580
      %582 = vst [vmem:[%s524 + $0x5c] sm:$0x1] %v581
      %p583 = scmp.eq.s32.totalorder %s22, 0
      // Predicated region
      $region37: #{basic_block.3} parent=35 // pred_check
        %p584 = pneg %p583
      $region38: #{basic_block.3} parent=35 // pred_check_branch
        %586 = sbr.rel (%p584) target = $region40
      $region39: #{basic_block.3} parent=35 // pred_region
        %v587 = vld [vmem:[#allocation2] sm:$0xf]
        %v588 = vsel %vm526, 0, %v587
        %589 = vst [vmem:[#allocation2] sm:$0xf] %v588
        %590 = vst [vmem:[#allocation2 + $0x4] sm:$0xf] 0
        %v591 = vld [vmem:[#allocation2 + $0x8] sm:$0x1]
        %v592 = vsel %vm265, 0, %v591
        %593 = vst [vmem:[#allocation2 + $0x8] sm:$0x1] %v592
      $region40: #{basic_block.3} parent=35 // pred_fallthru
        _
      %p594 = scmp.gt.s32.totalorder %s22, 0
      // Predicated region
      $region41: #{basic_block.3} parent=35 // pred_check
        %p595 = pneg %p594
      $region42: #{basic_block.3} parent=35 // pred_check_branch
        %597 = sbr.rel (%p595) target = $region44
      $region43: #{basic_block.3} parent=35 // pred_region
        %s598 = ssub.s32 %s262, 1
        %s599 = smul.u32 %s598, 16
        %s600 = scalar_lea.vmem %s245, %s599
        %v601 = vld [vmem:[%s600] sm:$0xff]
        %v602 = vld [vmem:[%s600 + $0x8] sm:$0xff]
        %v603 = vpack.c.bf16 %v601, %v601
        %v604 = vpack.c.bf16 %v602, %v602
        %v606 = vshrl.u32 %v603, 16
        %v608 = vrot.slane %v606, 7
        %v609 = vshll.u32 %v603, 16
        %v611 = vor.u32 %v608, %v609
        %v612 = vrot.slane %v608, 4
        %v614 = vshrl.u32 %v604, 16
        %v616 = vrot.slane %v614, 7
        %v617 = vshll.u32 %v604, 16
        %v619 = vor.u32 %v616, %v617
        %v620 = vsel %vm363, %v612, %v619
        %v621 = vrot.slane %v616, 4
        %v625 = vld [vmem:[#allocation2] sm:$0xf]
        %v626 = vsel %vm526, %v611, %v625
        %627 = vst [vmem:[#allocation2] sm:$0xf] %v626
        %628 = vst [vmem:[#allocation2 + $0x4] sm:$0xf] %v620
        %v629 = vld [vmem:[#allocation2 + $0x8] sm:$0x1]
        %v630 = vsel %vm265, %v621, %v629
        %631 = vst [vmem:[#allocation2 + $0x8] sm:$0x1] %v630
      $region44: #{basic_block.3} parent=35 // pred_fallthru
        _
      %p632 = scmp.eq.s32.totalorder %s22, 1
      // Predicated region
      $region45: #{basic_block.3} parent=35 // pred_check
        %p633 = pneg %p632
      $region46: #{basic_block.3} parent=35 // pred_check_branch
        %635 = sbr.rel (%p633) target = $region48
      $region47: #{basic_block.3} parent=35 // pred_region
        %s636 = scalar_lea.vmem [#allocation2], 108
        %v637 = vld [vmem:[%s636] sm:$0xf]
        %v638 = vsel %vm526, 0, %v637
        %639 = vst [vmem:[%s636] sm:$0xf] %v638
        %640 = vst [vmem:[%s636 + $0x4] sm:$0xf] 0
        %v641 = vld [vmem:[%s636 + $0x8] sm:$0x1]
        %v642 = vsel %vm265, 0, %v641
        %643 = vst [vmem:[%s636 + $0x8] sm:$0x1] %v642
      $region48: #{basic_block.3} parent=35 // pred_fallthru
        _
      %p644 = scmp.lt.s32.totalorder %s22, 1
      // Predicated region
      $region49: #{basic_block.3} parent=35 // pred_check
        %p645 = pneg %p644
      $region50: #{basic_block.3} parent=35 // pred_check_branch
        %647 = sbr.rel (%p645) target = $region52
      $region51: #{basic_block.3} parent=35 // pred_region
        %s648 = sadd.s32 %s262, 8
        %s649 = smul.u32 %s648, 16
        %s650 = scalar_lea.vmem %s245, %s649
        %v651 = vld [vmem:[%s650] sm:$0xff]
        %v652 = vld [vmem:[%s650 + $0x8] sm:$0xff]
        %v653 = vpack.c.bf16 %v651, %v651
        %v654 = vpack.c.bf16 %v652, %v652
        %v656 = vshrl.u32 %v653, 16
        %v658 = vrot.slane %v656, 7
        %v659 = vshll.u32 %v653, 16
        %v661 = vor.u32 %v658, %v659
        %v662 = vrot.slane %v658, 4
        %v664 = vshrl.u32 %v654, 16
        %v666 = vrot.slane %v664, 7
        %v667 = vshll.u32 %v654, 16
        %v669 = vor.u32 %v666, %v667
        %v670 = vsel %vm363, %v662, %v669
        %v671 = vrot.slane %v666, 4
        %s675 = scalar_lea.vmem [#allocation2], 108
        %v676 = vld [vmem:[%s675] sm:$0xf]
        %v677 = vsel %vm526, %v661, %v676
        %678 = vst [vmem:[%s675] sm:$0xf] %v677
        %679 = vst [vmem:[%s675 + $0x4] sm:$0xf] %v670
        %v680 = vld [vmem:[%s675 + $0x8] sm:$0x1]
        %v681 = vsel %vm265, %v671, %v680
        %682 = vst [vmem:[%s675 + $0x8] sm:$0x1] %v681
      $region52: #{basic_block.3} parent=35 // pred_fallthru
        _
      %v683 = vld [vmem:[#allocation2] sm:$0xf]
      %v684 = vld [vmem:[#allocation2 + $0x4] sm:$0xf]
      %v685 = vld [vmem:[#allocation2 + $0xc] sm:$0xf]
      %v686 = vld [vmem:[#allocation2 + $0x10] sm:$0xf]
      %v687 = vld [vmem:[#allocation2 + $0x18] sm:$0xf]
      %v688 = vld [vmem:[#allocation2 + $0x1c] sm:$0xf]
      %v689 = vld [vmem:[#allocation2 + $0x24] sm:$0xf]
      %v690 = vld [vmem:[#allocation2 + $0x28] sm:$0xf]
      %v691 = vld [vmem:[#allocation2 + $0x30] sm:$0xf]
      %v692 = vld [vmem:[#allocation2 + $0x34] sm:$0xf]
      %v693 = vld [vmem:[#allocation2 + $0x3c] sm:$0xf]
      %v694 = vld [vmem:[#allocation2 + $0x40] sm:$0xf]
      %v695 = vld [vmem:[#allocation2 + $0x48] sm:$0xf]
      %v696 = vld [vmem:[#allocation2 + $0x4c] sm:$0xf]
      %v697 = vld [vmem:[#allocation2 + $0x54] sm:$0xf]
      %v698 = vld [vmem:[#allocation2 + $0x58] sm:$0xf]
      %699 = vst [vmem:[#allocation3] sm:$0xf] %v683
      %700 = vst [vmem:[#allocation3 + $0x24] sm:$0xf] %v684
      %701 = vst [vmem:[#allocation3 + $0x48] sm:$0xf] %v685
      %702 = vst [vmem:[#allocation3 + $0x6c] sm:$0xf] %v686
      %703 = vst [vmem:[#allocation3 + $0x90] sm:$0xf] %v687
      %704 = vst [vmem:[#allocation3 + $0xb4] sm:$0xf] %v688
      %705 = vst [vmem:[#allocation3 + $0xd8] sm:$0xf] %v689
      %706 = vst [vmem:[#allocation3 + $0xfc] sm:$0xf] %v690
      %707 = vst [vmem:[#allocation3 + $0x120] sm:$0xf] %v691
      %708 = vst [vmem:[#allocation3 + $0x144] sm:$0xf] %v692
      %709 = vst [vmem:[#allocation3 + $0x168] sm:$0xf] %v693
      %710 = vst [vmem:[#allocation3 + $0x18c] sm:$0xf] %v694
      %711 = vst [vmem:[#allocation3 + $0x1b0] sm:$0xf] %v695
      %712 = vst [vmem:[#allocation3 + $0x1d4] sm:$0xf] %v696
      %713 = vst [vmem:[#allocation3 + $0x1f8] sm:$0xf] %v697
      %714 = vst [vmem:[#allocation3 + $0x21c] sm:$0xf] %v698
      %v715 = vld [vmem:[#allocation2] sm:$0xf]
      %v716 = vld [vmem:[#allocation2 + $0x4] sm:$0xf]
      %v717 = vld [vmem:[#allocation2 + $0x8] sm:$0x1]
      %v718 = vld [vmem:[#allocation2 + $0xc] sm:$0xf]
      %v719 = vld [vmem:[#allocation2 + $0x10] sm:$0xf]
      %v720 = vld [vmem:[#allocation2 + $0x14] sm:$0x1]
      %v721 = vld [vmem:[#allocation2 + $0x18] sm:$0xf]
      %v722 = vld [vmem:[#allocation2 + $0x1c] sm:$0xf]
      %v723 = vld [vmem:[#allocation2 + $0x20] sm:$0x1]
      %v724 = vld [vmem:[#allocation2 + $0x24] sm:$0xf]
      %v725 = vld [vmem:[#allocation2 + $0x28] sm:$0xf]
      %v726 = vld [vmem:[#allocation2 + $0x2c] sm:$0x1]
      %v727 = vld [vmem:[#allocation2 + $0x30] sm:$0xf]
      %v728 = vld [vmem:[#allocation2 + $0x34] sm:$0xf]
      %v729 = vld [vmem:[#allocation2 + $0x38] sm:$0x1]
      %v730 = vld [vmem:[#allocation2 + $0x3c] sm:$0xf]
      %v731 = vld [vmem:[#allocation2 + $0x40] sm:$0xf]
      %v732 = vld [vmem:[#allocation2 + $0x44] sm:$0x1]
      %v733 = vld [vmem:[#allocation2 + $0x48] sm:$0xf]
      %v734 = vld [vmem:[#allocation2 + $0x4c] sm:$0xf]
      %v735 = vld [vmem:[#allocation2 + $0x50] sm:$0x1]
      %v736 = vld [vmem:[#allocation2 + $0x54] sm:$0xf]
      %v737 = vld [vmem:[#allocation2 + $0x58] sm:$0xf]
      %v738 = vld [vmem:[#allocation2 + $0x5c] sm:$0x1]
      %vm739 = vsmask.f32 3328
      %vm740 = vsmask.f32 7440
      %vm741 = vmor %vm739, %vm740
      %v743 = vshrl.u32 %v715, 16
      %v745 = vrot.slane %v743, 4
      %v746 = vshll.u32 %v715, 16
      %v748 = vrot.slane %v746, 5
      %v749 = vor.u32 %v745, %v748
      %v750 = vrot.slane %v749, 4
      %v752 = vshll.u32 %v716, 16
      %v754 = vrot.slane %v752, 5
      %v755 = vsel %vm741, %v750, %v754
      %v756 = vshrl.u32 %v716, 16
      %v758 = vrot.slane %v756, 4
      %v759 = vor.u32 %v758, %v754
      %v760 = vrot.slane %v759, 4
      %v762 = vshll.u32 %v717, 16
      %v764 = vrot.slane %v762, 5
      %v765 = vsel %vm741, %v760, %v764
      %v767 = vshrl.u32 %v718, 16
      %v769 = vrot.slane %v767, 4
      %v770 = vshll.u32 %v718, 16
      %v772 = vrot.slane %v770, 5
      %v773 = vor.u32 %v769, %v772
      %v774 = vrot.slane %v773, 4
      %v776 = vshll.u32 %v719, 16
      %v778 = vrot.slane %v776, 5
      %v779 = vsel %vm741, %v774, %v778
      %v780 = vshrl.u32 %v719, 16
      %v782 = vrot.slane %v780, 4
      %v783 = vor.u32 %v782, %v778
      %v784 = vrot.slane %v783, 4
      %v786 = vshll.u32 %v720, 16
      %v788 = vrot.slane %v786, 5
      %v789 = vsel %vm741, %v784, %v788
      %v791 = vshrl.u32 %v721, 16
      %v793 = vrot.slane %v791, 4
      %v794 = vshll.u32 %v721, 16
      %v796 = vrot.slane %v794, 5
      %v797 = vor.u32 %v793, %v796
      %v798 = vrot.slane %v797, 4
      %v800 = vshll.u32 %v722, 16
      %v802 = vrot.slane %v800, 5
      %v803 = vsel %vm741, %v798, %v802
      %v804 = vshrl.u32 %v722, 16
      %v806 = vrot.slane %v804, 4
      %v807 = vor.u32 %v806, %v802
      %v808 = vrot.slane %v807, 4
      %v810 = vshll.u32 %v723, 16
      %v812 = vrot.slane %v810, 5
      %v813 = vsel %vm741, %v808, %v812
      %v815 = vshrl.u32 %v724, 16
      %v817 = vrot.slane %v815, 4
      %v818 = vshll.u32 %v724, 16
      %v820 = vrot.slane %v818, 5
      %v821 = vor.u32 %v817, %v820
      %v822 = vrot.slane %v821, 4
      %v824 = vshll.u32 %v725, 16
      %v826 = vrot.slane %v824, 5
      %v827 = vsel %vm741, %v822, %v826
      %v828 = vshrl.u32 %v725, 16
      %v830 = vrot.slane %v828, 4
      %v831 = vor.u32 %v830, %v826
      %v832 = vrot.slane %v831, 4
      %v834 = vshll.u32 %v726, 16
      %v836 = vrot.slane %v834, 5
      %v837 = vsel %vm741, %v832, %v836
      %v839 = vshrl.u32 %v727, 16
      %v841 = vrot.slane %v839, 4
      %v842 = vshll.u32 %v727, 16
      %v844 = vrot.slane %v842, 5
      %v845 = vor.u32 %v841, %v844
      %v846 = vrot.slane %v845, 4
      %v848 = vshll.u32 %v728, 16
      %v850 = vrot.slane %v848, 5
      %v851 = vsel %vm741, %v846, %v850
      %v852 = vshrl.u32 %v728, 16
      %v854 = vrot.slane %v852, 4
      %v855 = vor.u32 %v854, %v850
      %v856 = vrot.slane %v855, 4
      %v858 = vshll.u32 %v729, 16
      %v860 = vrot.slane %v858, 5
      %v861 = vsel %vm741, %v856, %v860
      %v863 = vshrl.u32 %v730, 16
      %v865 = vrot.slane %v863, 4
      %v866 = vshll.u32 %v730, 16
      %v868 = vrot.slane %v866, 5
      %v869 = vor.u32 %v865, %v868
      %v870 = vrot.slane %v869, 4
      %v872 = vshll.u32 %v731, 16
      %v874 = vrot.slane %v872, 5
      %v875 = vsel %vm741, %v870, %v874
      %v876 = vshrl.u32 %v731, 16
      %v878 = vrot.slane %v876, 4
      %v879 = vor.u32 %v878, %v874
      %v880 = vrot.slane %v879, 4
      %v882 = vshll.u32 %v732, 16
      %v884 = vrot.slane %v882, 5
      %v885 = vsel %vm741, %v880, %v884
      %v887 = vshrl.u32 %v733, 16
      %v889 = vrot.slane %v887, 4
      %v890 = vshll.u32 %v733, 16
      %v892 = vrot.slane %v890, 5
      %v893 = vor.u32 %v889, %v892
      %v894 = vrot.slane %v893, 4
      %v896 = vshll.u32 %v734, 16
      %v898 = vrot.slane %v896, 5
      %v899 = vsel %vm741, %v894, %v898
      %v900 = vshrl.u32 %v734, 16
      %v902 = vrot.slane %v900, 4
      %v903 = vor.u32 %v902, %v898
      %v904 = vrot.slane %v903, 4
      %v906 = vshll.u32 %v735, 16
      %v908 = vrot.slane %v906, 5
      %v909 = vsel %vm741, %v904, %v908
      %v911 = vshrl.u32 %v736, 16
      %v913 = vrot.slane %v911, 4
      %v914 = vshll.u32 %v736, 16
      %v916 = vrot.slane %v914, 5
      %v917 = vor.u32 %v913, %v916
      %v918 = vrot.slane %v917, 4
      %v920 = vshll.u32 %v737, 16
      %v922 = vrot.slane %v920, 5
      %v923 = vsel %vm741, %v918, %v922
      %v924 = vshrl.u32 %v737, 16
      %v926 = vrot.slane %v924, 4
      %v927 = vor.u32 %v926, %v922
      %v928 = vrot.slane %v927, 4
      %v930 = vshll.u32 %v738, 16
      %v932 = vrot.slane %v930, 5
      %v933 = vsel %vm741, %v928, %v932
      %950 = vst [vmem:[#allocation3 + $0x4] sm:$0xf] %v755
      %951 = vst [vmem:[#allocation3 + $0x28] sm:$0xf] %v765
      %952 = vst [vmem:[#allocation3 + $0x4c] sm:$0xf] %v779
      %953 = vst [vmem:[#allocation3 + $0x70] sm:$0xf] %v789
      %954 = vst [vmem:[#allocation3 + $0x94] sm:$0xf] %v803
      %955 = vst [vmem:[#allocation3 + $0xb8] sm:$0xf] %v813
      %956 = vst [vmem:[#allocation3 + $0xdc] sm:$0xf] %v827
      %957 = vst [vmem:[#allocation3 + $0x100] sm:$0xf] %v837
      %958 = vst [vmem:[#allocation3 + $0x124] sm:$0xf] %v851
      %959 = vst [vmem:[#allocation3 + $0x148] sm:$0xf] %v861
      %960 = vst [vmem:[#allocation3 + $0x16c] sm:$0xf] %v875
      %961 = vst [vmem:[#allocation3 + $0x190] sm:$0xf] %v885
      %962 = vst [vmem:[#allocation3 + $0x1b4] sm:$0xf] %v899
      %963 = vst [vmem:[#allocation3 + $0x1d8] sm:$0xf] %v909
      %964 = vst [vmem:[#allocation3 + $0x1fc] sm:$0xf] %v923
      %965 = vst [vmem:[#allocation3 + $0x220] sm:$0xf] %v933
      %v966 = vld [vmem:[#allocation2] sm:$0xe]
      %v967 = vld [vmem:[#allocation2 + $0x4] sm:$0xf]
      %v968 = vld [vmem:[#allocation2 + $0x8] sm:$0x1]
      %v969 = vld [vmem:[#allocation2 + $0xc] sm:$0xe]
      %v970 = vld [vmem:[#allocation2 + $0x10] sm:$0xf]
      %v971 = vld [vmem:[#allocation2 + $0x14] sm:$0x1]
      %v972 = vld [vmem:[#allocation2 + $0x18] sm:$0xe]
      %v973 = vld [vmem:[#allocation2 + $0x1c] sm:$0xf]
      %v974 = vld [vmem:[#allocation2 + $0x20] sm:$0x1]
      %v975 = vld [vmem:[#allocation2 + $0x24] sm:$0xe]
      %v976 = vld [vmem:[#allocation2 + $0x28] sm:$0xf]
      %v977 = vld [vmem:[#allocation2 + $0x2c] sm:$0x1]
      %v978 = vld [vmem:[#allocation2 + $0x30] sm:$0xe]
      %v979 = vld [vmem:[#allocation2 + $0x34] sm:$0xf]
      %v980 = vld [vmem:[#allocation2 + $0x38] sm:$0x1]
      %v981 = vld [vmem:[#allocation2 + $0x3c] sm:$0xe]
      %v982 = vld [vmem:[#allocation2 + $0x40] sm:$0xf]
      %v983 = vld [vmem:[#allocation2 + $0x44] sm:$0x1]
      %v984 = vld [vmem:[#allocation2 + $0x48] sm:$0xe]
      %v985 = vld [vmem:[#allocation2 + $0x4c] sm:$0xf]
      %v986 = vld [vmem:[#allocation2 + $0x50] sm:$0x1]
      %v987 = vld [vmem:[#allocation2 + $0x54] sm:$0xe]
      %v988 = vld [vmem:[#allocation2 + $0x58] sm:$0xf]
      %v989 = vld [vmem:[#allocation2 + $0x5c] sm:$0x1]
      %vm1014 = vcmask 1042432
      %vm1015 = vcmask 1046532
      %vm1016 = vmor %vm1014, %vm1015
      %v1017 = vrot.slane %v966, 5
      %v1018 = vrot.slane %v1017, 4
      %v1019 = vrot.slane %v967, 5
      %v1020 = vsel %vm1016, %v1018, %v1019
      %v1021 = vrot.slane %v1019, 4
      %v1022 = vrot.slane %v968, 5
      %v1023 = vsel %vm1016, %v1021, %v1022
      %v1024 = vrot.slane %v969, 5
      %v1025 = vrot.slane %v1024, 4
      %v1026 = vrot.slane %v970, 5
      %v1027 = vsel %vm1016, %v1025, %v1026
      %v1028 = vrot.slane %v1026, 4
      %v1029 = vrot.slane %v971, 5
      %v1030 = vsel %vm1016, %v1028, %v1029
      %v1031 = vrot.slane %v972, 5
      %v1032 = vrot.slane %v1031, 4
      %v1033 = vrot.slane %v973, 5
      %v1034 = vsel %vm1016, %v1032, %v1033
      %v1035 = vrot.slane %v1033, 4
      %v1036 = vrot.slane %v974, 5
      %v1037 = vsel %vm1016, %v1035, %v1036
      %v1038 = vrot.slane %v975, 5
      %v1039 = vrot.slane %v1038, 4
      %v1040 = vrot.slane %v976, 5
      %v1041 = vsel %vm1016, %v1039, %v1040
      %v1042 = vrot.slane %v1040, 4
      %v1043 = vrot.slane %v977, 5
      %v1044 = vsel %vm1016, %v1042, %v1043
      %v1045 = vrot.slane %v978, 5
      %v1046 = vrot.slane %v1045, 4
      %v1047 = vrot.slane %v979, 5
      %v1048 = vsel %vm1016, %v1046, %v1047
      %v1049 = vrot.slane %v1047, 4
      %v1050 = vrot.slane %v980, 5
      %v1051 = vsel %vm1016, %v1049, %v1050
      %v1052 = vrot.slane %v981, 5
      %v1053 = vrot.slane %v1052, 4
      %v1054 = vrot.slane %v982, 5
      %v1055 = vsel %vm1016, %v1053, %v1054
      %v1056 = vrot.slane %v1054, 4
      %v1057 = vrot.slane %v983, 5
      %v1058 = vsel %vm1016, %v1056, %v1057
      %v1059 = vrot.slane %v984, 5
      %v1060 = vrot.slane %v1059, 4
      %v1061 = vrot.slane %v985, 5
      %v1062 = vsel %vm1016, %v1060, %v1061
      %v1063 = vrot.slane %v1061, 4
      %v1064 = vrot.slane %v986, 5
      %v1065 = vsel %vm1016, %v1063, %v1064
      %v1066 = vrot.slane %v987, 5
      %v1067 = vrot.slane %v1066, 4
      %v1068 = vrot.slane %v988, 5
      %v1069 = vsel %vm1016, %v1067, %v1068
      %v1070 = vrot.slane %v1068, 4
      %v1071 = vrot.slane %v989, 5
      %v1072 = vsel %vm1016, %v1070, %v1071
      %1089 = vst [vmem:[#allocation3 + $0x8] sm:$0xf] %v1020
      %1090 = vst [vmem:[#allocation3 + $0x2c] sm:$0xf] %v1023
      %1091 = vst [vmem:[#allocation3 + $0x50] sm:$0xf] %v1027
      %1092 = vst [vmem:[#allocation3 + $0x74] sm:$0xf] %v1030
      %1093 = vst [vmem:[#allocation3 + $0x98] sm:$0xf] %v1034
      %1094 = vst [vmem:[#allocation3 + $0xbc] sm:$0xf] %v1037
      %1095 = vst [vmem:[#allocation3 + $0xe0] sm:$0xf] %v1041
      %1096 = vst [vmem:[#allocation3 + $0x104] sm:$0xf] %v1044
      %1097 = vst [vmem:[#allocation3 + $0x128] sm:$0xf] %v1048
      %1098 = vst [vmem:[#allocation3 + $0x14c] sm:$0xf] %v1051
      %1099 = vst [vmem:[#allocation3 + $0x170] sm:$0xf] %v1055
      %1100 = vst [vmem:[#allocation3 + $0x194] sm:$0xf] %v1058
      %1101 = vst [vmem:[#allocation3 + $0x1b8] sm:$0xf] %v1062
      %1102 = vst [vmem:[#allocation3 + $0x1dc] sm:$0xf] %v1065
      %1103 = vst [vmem:[#allocation3 + $0x200] sm:$0xf] %v1069
      %1104 = vst [vmem:[#allocation3 + $0x224] sm:$0xf] %v1072
      %v1105 = vld [vmem:[%s524] sm:$0xf]
      %v1106 = vld [vmem:[%s524 + $0x4] sm:$0xf]
      %v1107 = vld [vmem:[%s524 + $0xc] sm:$0xf]
      %v1108 = vld [vmem:[%s524 + $0x10] sm:$0xf]
      %v1109 = vld [vmem:[%s524 + $0x18] sm:$0xf]
      %v1110 = vld [vmem:[%s524 + $0x1c] sm:$0xf]
      %v1111 = vld [vmem:[%s524 + $0x24] sm:$0xf]
      %v1112 = vld [vmem:[%s524 + $0x28] sm:$0xf]
      %v1113 = vld [vmem:[%s524 + $0x30] sm:$0xf]
      %v1114 = vld [vmem:[%s524 + $0x34] sm:$0xf]
      %v1115 = vld [vmem:[%s524 + $0x3c] sm:$0xf]
      %v1116 = vld [vmem:[%s524 + $0x40] sm:$0xf]
      %v1117 = vld [vmem:[%s524 + $0x48] sm:$0xf]
      %v1118 = vld [vmem:[%s524 + $0x4c] sm:$0xf]
      %v1119 = vld [vmem:[%s524 + $0x54] sm:$0xf]
      %v1120 = vld [vmem:[%s524 + $0x58] sm:$0xf]
      %1121 = vst [vmem:[#allocation3 + $0xc] sm:$0xf] %v1105
      %1122 = vst [vmem:[#allocation3 + $0x30] sm:$0xf] %v1106
      %1123 = vst [vmem:[#allocation3 + $0x54] sm:$0xf] %v1107
      %1124 = vst [vmem:[#allocation3 + $0x78] sm:$0xf] %v1108
      %1125 = vst [vmem:[#allocation3 + $0x9c] sm:$0xf] %v1109
      %1126 = vst [vmem:[#allocation3 + $0xc0] sm:$0xf] %v1110
      %1127 = vst [vmem:[#allocation3 + $0xe4] sm:$0xf] %v1111
      %1128 = vst [vmem:[#allocation3 + $0x108] sm:$0xf] %v1112
      %1129 = vst [vmem:[#allocation3 + $0x12c] sm:$0xf] %v1113
      %1130 = vst [vmem:[#allocation3 + $0x150] sm:$0xf] %v1114
      %1131 = vst [vmem:[#allocation3 + $0x174] sm:$0xf] %v1115
      %1132 = vst [vmem:[#allocation3 + $0x198] sm:$0xf] %v1116
      %1133 = vst [vmem:[#allocation3 + $0x1bc] sm:$0xf] %v1117
      %1134 = vst [vmem:[#allocation3 + $0x1e0] sm:$0xf] %v1118
      %1135 = vst [vmem:[#allocation3 + $0x204] sm:$0xf] %v1119
      %1136 = vst [vmem:[#allocation3 + $0x228] sm:$0xf] %v1120
      %v1137 = vld [vmem:[%s524] sm:$0xf]
      %v1138 = vld [vmem:[%s524 + $0x4] sm:$0xf]
      %v1139 = vld [vmem:[%s524 + $0x8] sm:$0x1]
      %v1140 = vld [vmem:[%s524 + $0xc] sm:$0xf]
      %v1141 = vld [vmem:[%s524 + $0x10] sm:$0xf]
      %v1142 = vld [vmem:[%s524 + $0x14] sm:$0x1]
      %v1143 = vld [vmem:[%s524 + $0x18] sm:$0xf]
      %v1144 = vld [vmem:[%s524 + $0x1c] sm:$0xf]
      %v1145 = vld [vmem:[%s524 + $0x20] sm:$0x1]
      %v1146 = vld [vmem:[%s524 + $0x24] sm:$0xf]
      %v1147 = vld [vmem:[%s524 + $0x28] sm:$0xf]
      %v1148 = vld [vmem:[%s524 + $0x2c] sm:$0x1]
      %v1149 = vld [vmem:[%s524 + $0x30] sm:$0xf]
      %v1150 = vld [vmem:[%s524 + $0x34] sm:$0xf]
      %v1151 = vld [vmem:[%s524 + $0x38] sm:$0x1]
      %v1152 = vld [vmem:[%s524 + $0x3c] sm:$0xf]
      %v1153 = vld [vmem:[%s524 + $0x40] sm:$0xf]
      %v1154 = vld [vmem:[%s524 + $0x44] sm:$0x1]
      %v1155 = vld [vmem:[%s524 + $0x48] sm:$0xf]
      %v1156 = vld [vmem:[%s524 + $0x4c] sm:$0xf]
      %v1157 = vld [vmem:[%s524 + $0x50] sm:$0x1]
      %v1158 = vld [vmem:[%s524 + $0x54] sm:$0xf]
      %v1159 = vld [vmem:[%s524 + $0x58] sm:$0xf]
      %v1160 = vld [vmem:[%s524 + $0x5c] sm:$0x1]
      %v1162 = vshrl.u32 %v1137, 16
      %v1164 = vrot.slane %v1162, 4
      %v1165 = vshll.u32 %v1137, 16
      %v1167 = vrot.slane %v1165, 5
      %v1168 = vor.u32 %v1164, %v1167
      %v1169 = vrot.slane %v1168, 4
      %v1171 = vshll.u32 %v1138, 16
      %v1173 = vrot.slane %v1171, 5
      %v1174 = vsel %vm741, %v1169, %v1173
      %v1175 = vshrl.u32 %v1138, 16
      %v1177 = vrot.slane %v1175, 4
      %v1178 = vor.u32 %v1177, %v1173
      %v1179 = vrot.slane %v1178, 4
      %v1181 = vshll.u32 %v1139, 16
      %v1183 = vrot.slane %v1181, 5
      %v1184 = vsel %vm741, %v1179, %v1183
      %v1186 = vshrl.u32 %v1140, 16
      %v1188 = vrot.slane %v1186, 4
      %v1189 = vshll.u32 %v1140, 16
      %v1191 = vrot.slane %v1189, 5
      %v1192 = vor.u32 %v1188, %v1191
      %v1193 = vrot.slane %v1192, 4
      %v1195 = vshll.u32 %v1141, 16
      %v1197 = vrot.slane %v1195, 5
      %v1198 = vsel %vm741, %v1193, %v1197
      %v1199 = vshrl.u32 %v1141, 16
      %v1201 = vrot.slane %v1199, 4
      %v1202 = vor.u32 %v1201, %v1197
      %v1203 = vrot.slane %v1202, 4
      %v1205 = vshll.u32 %v1142, 16
      %v1207 = vrot.slane %v1205, 5
      %v1208 = vsel %vm741, %v1203, %v1207
      %v1210 = vshrl.u32 %v1143, 16
      %v1212 = vrot.slane %v1210, 4
      %v1213 = vshll.u32 %v1143, 16
      %v1215 = vrot.slane %v1213, 5
      %v1216 = vor.u32 %v1212, %v1215
      %v1217 = vrot.slane %v1216, 4
      %v1219 = vshll.u32 %v1144, 16
      %v1221 = vrot.slane %v1219, 5
      %v1222 = vsel %vm741, %v1217, %v1221
      %v1223 = vshrl.u32 %v1144, 16
      %v1225 = vrot.slane %v1223, 4
      %v1226 = vor.u32 %v1225, %v1221
      %v1227 = vrot.slane %v1226, 4
      %v1229 = vshll.u32 %v1145, 16
      %v1231 = vrot.slane %v1229, 5
      %v1232 = vsel %vm741, %v1227, %v1231
      %v1234 = vshrl.u32 %v1146, 16
      %v1236 = vrot.slane %v1234, 4
      %v1237 = vshll.u32 %v1146, 16
      %v1239 = vrot.slane %v1237, 5
      %v1240 = vor.u32 %v1236, %v1239
      %v1241 = vrot.slane %v1240, 4
      %v1243 = vshll.u32 %v1147, 16
      %v1245 = vrot.slane %v1243, 5
      %v1246 = vsel %vm741, %v1241, %v1245
      %v1247 = vshrl.u32 %v1147, 16
      %v1249 = vrot.slane %v1247, 4
      %v1250 = vor.u32 %v1249, %v1245
      %v1251 = vrot.slane %v1250, 4
      %v1253 = vshll.u32 %v1148, 16
      %v1255 = vrot.slane %v1253, 5
      %v1256 = vsel %vm741, %v1251, %v1255
      %v1258 = vshrl.u32 %v1149, 16
      %v1260 = vrot.slane %v1258, 4
      %v1261 = vshll.u32 %v1149, 16
      %v1263 = vrot.slane %v1261, 5
      %v1264 = vor.u32 %v1260, %v1263
      %v1265 = vrot.slane %v1264, 4
      %v1267 = vshll.u32 %v1150, 16
      %v1269 = vrot.slane %v1267, 5
      %v1270 = vsel %vm741, %v1265, %v1269
      %v1271 = vshrl.u32 %v1150, 16
      %v1273 = vrot.slane %v1271, 4
      %v1274 = vor.u32 %v1273, %v1269
      %v1275 = vrot.slane %v1274, 4
      %v1277 = vshll.u32 %v1151, 16
      %v1279 = vrot.slane %v1277, 5
      %v1280 = vsel %vm741, %v1275, %v1279
      %v1282 = vshrl.u32 %v1152, 16
      %v1284 = vrot.slane %v1282, 4
      %v1285 = vshll.u32 %v1152, 16
      %v1287 = vrot.slane %v1285, 5
      %v1288 = vor.u32 %v1284, %v1287
      %v1289 = vrot.slane %v1288, 4
      %v1291 = vshll.u32 %v1153, 16
      %v1293 = vrot.slane %v1291, 5
      %v1294 = vsel %vm741, %v1289, %v1293
      %v1295 = vshrl.u32 %v1153, 16
      %v1297 = vrot.slane %v1295, 4
      %v1298 = vor.u32 %v1297, %v1293
      %v1299 = vrot.slane %v1298, 4
      %v1301 = vshll.u32 %v1154, 16
      %v1303 = vrot.slane %v1301, 5
      %v1304 = vsel %vm741, %v1299, %v1303
      %v1306 = vshrl.u32 %v1155, 16
      %v1308 = vrot.slane %v1306, 4
      %v1309 = vshll.u32 %v1155, 16
      %v1311 = vrot.slane %v1309, 5
      %v1312 = vor.u32 %v1308, %v1311
      %v1313 = vrot.slane %v1312, 4
      %v1315 = vshll.u32 %v1156, 16
      %v1317 = vrot.slane %v1315, 5
      %v1318 = vsel %vm741, %v1313, %v1317
      %v1319 = vshrl.u32 %v1156, 16
      %v1321 = vrot.slane %v1319, 4
      %v1322 = vor.u32 %v1321, %v1317
      %v1323 = vrot.slane %v1322, 4
      %v1325 = vshll.u32 %v1157, 16
      %v1327 = vrot.slane %v1325, 5
      %v1328 = vsel %vm741, %v1323, %v1327
      %v1330 = vshrl.u32 %v1158, 16
      %v1332 = vrot.slane %v1330, 4
      %v1333 = vshll.u32 %v1158, 16
      %v1335 = vrot.slane %v1333, 5
      %v1336 = vor.u32 %v1332, %v1335
      %v1337 = vrot.slane %v1336, 4
      %v1339 = vshll.u32 %v1159, 16
      %v1341 = vrot.slane %v1339, 5
      %v1342 = vsel %vm741, %v1337, %v1341
      %v1343 = vshrl.u32 %v1159, 16
      %v1345 = vrot.slane %v1343, 4
      %v1346 = vor.u32 %v1345, %v1341
      %v1347 = vrot.slane %v1346, 4
      %v1349 = vshll.u32 %v1160, 16
      %v1351 = vrot.slane %v1349, 5
      %v1352 = vsel %vm741, %v1347, %v1351
      %1369 = vst [vmem:[#allocation3 + $0x10] sm:$0xf] %v1174
      %1370 = vst [vmem:[#allocation3 + $0x34] sm:$0xf] %v1184
      %1371 = vst [vmem:[#allocation3 + $0x58] sm:$0xf] %v1198
      %1372 = vst [vmem:[#allocation3 + $0x7c] sm:$0xf] %v1208
      %1373 = vst [vmem:[#allocation3 + $0xa0] sm:$0xf] %v1222
      %1374 = vst [vmem:[#allocation3 + $0xc4] sm:$0xf] %v1232
      %1375 = vst [vmem:[#allocation3 + $0xe8] sm:$0xf] %v1246
      %1376 = vst [vmem:[#allocation3 + $0x10c] sm:$0xf] %v1256
      %1377 = vst [vmem:[#allocation3 + $0x130] sm:$0xf] %v1270
      %1378 = vst [vmem:[#allocation3 + $0x154] sm:$0xf] %v1280
      %1379 = vst [vmem:[#allocation3 + $0x178] sm:$0xf] %v1294
      %1380 = vst [vmem:[#allocation3 + $0x19c] sm:$0xf] %v1304
      %1381 = vst [vmem:[#allocation3 + $0x1c0] sm:$0xf] %v1318
      %1382 = vst [vmem:[#allocation3 + $0x1e4] sm:$0xf] %v1328
      %1383 = vst [vmem:[#allocation3 + $0x208] sm:$0xf] %v1342
      %1384 = vst [vmem:[#allocation3 + $0x22c] sm:$0xf] %v1352
      %v1385 = vld [vmem:[%s524] sm:$0xe]
      %v1386 = vld [vmem:[%s524 + $0x4] sm:$0xf]
      %v1387 = vld [vmem:[%s524 + $0x8] sm:$0x1]
      %v1388 = vld [vmem:[%s524 + $0xc] sm:$0xe]
      %v1389 = vld [vmem:[%s524 + $0x10] sm:$0xf]
      %v1390 = vld [vmem:[%s524 + $0x14] sm:$0x1]
      %v1391 = vld [vmem:[%s524 + $0x18] sm:$0xe]
      %v1392 = vld [vmem:[%s524 + $0x1c] sm:$0xf]
      %v1393 = vld [vmem:[%s524 + $0x20] sm:$0x1]
      %v1394 = vld [vmem:[%s524 + $0x24] sm:$0xe]
      %v1395 = vld [vmem:[%s524 + $0x28] sm:$0xf]
      %v1396 = vld [vmem:[%s524 + $0x2c] sm:$0x1]
      %v1397 = vld [vmem:[%s524 + $0x30] sm:$0xe]
      %v1398 = vld [vmem:[%s524 + $0x34] sm:$0xf]
      %v1399 = vld [vmem:[%s524 + $0x38] sm:$0x1]
      %v1400 = vld [vmem:[%s524 + $0x3c] sm:$0xe]
      %v1401 = vld [vmem:[%s524 + $0x40] sm:$0xf]
      %v1402 = vld [vmem:[%s524 + $0x44] sm:$0x1]
      %v1403 = vld [vmem:[%s524 + $0x48] sm:$0xe]
      %v1404 = vld [vmem:[%s524 + $0x4c] sm:$0xf]
      %v1405 = vld [vmem:[%s524 + $0x50] sm:$0x1]
      %v1406 = vld [vmem:[%s524 + $0x54] sm:$0xe]
      %v1407 = vld [vmem:[%s524 + $0x58] sm:$0xf]
      %v1408 = vld [vmem:[%s524 + $0x5c] sm:$0x1]
      %v1433 = vrot.slane %v1385, 5
      %v1434 = vrot.slane %v1433, 4
      %v1435 = vrot.slane %v1386, 5
      %v1436 = vsel %vm1016, %v1434, %v1435
      %v1437 = vrot.slane %v1435, 4
      %v1438 = vrot.slane %v1387, 5
      %v1439 = vsel %vm1016, %v1437, %v1438
      %v1440 = vrot.slane %v1388, 5
      %v1441 = vrot.slane %v1440, 4
      %v1442 = vrot.slane %v1389, 5
      %v1443 = vsel %vm1016, %v1441, %v1442
      %v1444 = vrot.slane %v1442, 4
      %v1445 = vrot.slane %v1390, 5
      %v1446 = vsel %vm1016, %v1444, %v1445
      %v1447 = vrot.slane %v1391, 5
      %v1448 = vrot.slane %v1447, 4
      %v1449 = vrot.slane %v1392, 5
      %v1450 = vsel %vm1016, %v1448, %v1449
      %v1451 = vrot.slane %v1449, 4
      %v1452 = vrot.slane %v1393, 5
      %v1453 = vsel %vm1016, %v1451, %v1452
      %v1454 = vrot.slane %v1394, 5
      %v1455 = vrot.slane %v1454, 4
      %v1456 = vrot.slane %v1395, 5
      %v1457 = vsel %vm1016, %v1455, %v1456
      %v1458 = vrot.slane %v1456, 4
      %v1459 = vrot.slane %v1396, 5
      %v1460 = vsel %vm1016, %v1458, %v1459
      %v1461 = vrot.slane %v1397, 5
      %v1462 = vrot.slane %v1461, 4
      %v1463 = vrot.slane %v1398, 5
      %v1464 = vsel %vm1016, %v1462, %v1463
      %v1465 = vrot.slane %v1463, 4
      %v1466 = vrot.slane %v1399, 5
      %v1467 = vsel %vm1016, %v1465, %v1466
      %v1468 = vrot.slane %v1400, 5
      %v1469 = vrot.slane %v1468, 4
      %v1470 = vrot.slane %v1401, 5
      %v1471 = vsel %vm1016, %v1469, %v1470
      %v1472 = vrot.slane %v1470, 4
      %v1473 = vrot.slane %v1402, 5
      %v1474 = vsel %vm1016, %v1472, %v1473
      %v1475 = vrot.slane %v1403, 5
      %v1476 = vrot.slane %v1475, 4
      %v1477 = vrot.slane %v1404, 5
      %v1478 = vsel %vm1016, %v1476, %v1477
      %v1479 = vrot.slane %v1477, 4
      %v1480 = vrot.slane %v1405, 5
      %v1481 = vsel %vm1016, %v1479, %v1480
      %v1482 = vrot.slane %v1406, 5
      %v1483 = vrot.slane %v1482, 4
      %v1484 = vrot.slane %v1407, 5
      %v1485 = vsel %vm1016, %v1483, %v1484
      %v1486 = vrot.slane %v1484, 4
      %v1487 = vrot.slane %v1408, 5
      %v1488 = vsel %vm1016, %v1486, %v1487
      %1505 = vst [vmem:[#allocation3 + $0x14] sm:$0xf] %v1436
      %1506 = vst [vmem:[#allocation3 + $0x38] sm:$0xf] %v1439
      %1507 = vst [vmem:[#allocation3 + $0x5c] sm:$0xf] %v1443
      %1508 = vst [vmem:[#allocation3 + $0x80] sm:$0xf] %v1446
      %1509 = vst [vmem:[#allocation3 + $0xa4] sm:$0xf] %v1450
      %1510 = vst [vmem:[#allocation3 + $0xc8] sm:$0xf] %v1453
      %1511 = vst [vmem:[#allocation3 + $0xec] sm:$0xf] %v1457
      %1512 = vst [vmem:[#allocation3 + $0x110] sm:$0xf] %v1460
      %1513 = vst [vmem:[#allocation3 + $0x134] sm:$0xf] %v1464
      %1514 = vst [vmem:[#allocation3 + $0x158] sm:$0xf] %v1467
      %1515 = vst [vmem:[#allocation3 + $0x17c] sm:$0xf] %v1471
      %1516 = vst [vmem:[#allocation3 + $0x1a0] sm:$0xf] %v1474
      %1517 = vst [vmem:[#allocation3 + $0x1c4] sm:$0xf] %v1478
      %1518 = vst [vmem:[#allocation3 + $0x1e8] sm:$0xf] %v1481
      %1519 = vst [vmem:[#allocation3 + $0x20c] sm:$0xf] %v1485
      %1520 = vst [vmem:[#allocation3 + $0x230] sm:$0xf] %v1488
      %s1521 = scalar_lea.vmem [#allocation2], 24
      %v1522 = vld [vmem:[%s1521] sm:$0xf]
      %v1523 = vld [vmem:[%s1521 + $0x4] sm:$0xf]
      %v1524 = vld [vmem:[%s1521 + $0xc] sm:$0xf]
      %v1525 = vld [vmem:[%s1521 + $0x10] sm:$0xf]
      %v1526 = vld [vmem:[%s1521 + $0x18] sm:$0xf]
      %v1527 = vld [vmem:[%s1521 + $0x1c] sm:$0xf]
      %v1528 = vld [vmem:[%s1521 + $0x24] sm:$0xf]
      %v1529 = vld [vmem:[%s1521 + $0x28] sm:$0xf]
      %v1530 = vld [vmem:[%s1521 + $0x30] sm:$0xf]
      %v1531 = vld [vmem:[%s1521 + $0x34] sm:$0xf]
      %v1532 = vld [vmem:[%s1521 + $0x3c] sm:$0xf]
      %v1533 = vld [vmem:[%s1521 + $0x40] sm:$0xf]
      %v1534 = vld [vmem:[%s1521 + $0x48] sm:$0xf]
      %v1535 = vld [vmem:[%s1521 + $0x4c] sm:$0xf]
      %v1536 = vld [vmem:[%s1521 + $0x54] sm:$0xf]
      %v1537 = vld [vmem:[%s1521 + $0x58] sm:$0xf]
      %1538 = vst [vmem:[#allocation3 + $0x18] sm:$0xf] %v1522
      %1539 = vst [vmem:[#allocation3 + $0x3c] sm:$0xf] %v1523
      %1540 = vst [vmem:[#allocation3 + $0x60] sm:$0xf] %v1524
      %1541 = vst [vmem:[#allocation3 + $0x84] sm:$0xf] %v1525
      %1542 = vst [vmem:[#allocation3 + $0xa8] sm:$0xf] %v1526
      %1543 = vst [vmem:[#allocation3 + $0xcc] sm:$0xf] %v1527
      %1544 = vst [vmem:[#allocation3 + $0xf0] sm:$0xf] %v1528
      %1545 = vst [vmem:[#allocation3 + $0x114] sm:$0xf] %v1529
      %1546 = vst [vmem:[#allocation3 + $0x138] sm:$0xf] %v1530
      %1547 = vst [vmem:[#allocation3 + $0x15c] sm:$0xf] %v1531
      %1548 = vst [vmem:[#allocation3 + $0x180] sm:$0xf] %v1532
      %1549 = vst [vmem:[#allocation3 + $0x1a4] sm:$0xf] %v1533
      %1550 = vst [vmem:[#allocation3 + $0x1c8] sm:$0xf] %v1534
      %1551 = vst [vmem:[#allocation3 + $0x1ec] sm:$0xf] %v1535
      %1552 = vst [vmem:[#allocation3 + $0x210] sm:$0xf] %v1536
      %1553 = vst [vmem:[#allocation3 + $0x234] sm:$0xf] %v1537
      %v1554 = vld [vmem:[%s1521] sm:$0xf]
      %v1555 = vld [vmem:[%s1521 + $0x4] sm:$0xf]
      %v1556 = vld [vmem:[%s1521 + $0x8] sm:$0x1]
      %v1557 = vld [vmem:[%s1521 + $0xc] sm:$0xf]
      %v1558 = vld [vmem:[%s1521 + $0x10] sm:$0xf]
      %v1559 = vld [vmem:[%s1521 + $0x14] sm:$0x1]
      %v1560 = vld [vmem:[%s1521 + $0x18] sm:$0xf]
      %v1561 = vld [vmem:[%s1521 + $0x1c] sm:$0xf]
      %v1562 = vld [vmem:[%s1521 + $0x20] sm:$0x1]
      %v1563 = vld [vmem:[%s1521 + $0x24] sm:$0xf]
      %v1564 = vld [vmem:[%s1521 + $0x28] sm:$0xf]
      %v1565 = vld [vmem:[%s1521 + $0x2c] sm:$0x1]
      %v1566 = vld [vmem:[%s1521 + $0x30] sm:$0xf]
      %v1567 = vld [vmem:[%s1521 + $0x34] sm:$0xf]
      %v1568 = vld [vmem:[%s1521 + $0x38] sm:$0x1]
      %v1569 = vld [vmem:[%s1521 + $0x3c] sm:$0xf]
      %v1570 = vld [vmem:[%s1521 + $0x40] sm:$0xf]
      %v1571 = vld [vmem:[%s1521 + $0x44] sm:$0x1]
      %v1572 = vld [vmem:[%s1521 + $0x48] sm:$0xf]
      %v1573 = vld [vmem:[%s1521 + $0x4c] sm:$0xf]
      %v1574 = vld [vmem:[%s1521 + $0x50] sm:$0x1]
      %v1575 = vld [vmem:[%s1521 + $0x54] sm:$0xf]
      %v1576 = vld [vmem:[%s1521 + $0x58] sm:$0xf]
      %v1577 = vld [vmem:[%s1521 + $0x5c] sm:$0x1]
      %v1579 = vshrl.u32 %v1554, 16
      %v1581 = vrot.slane %v1579, 4
      %v1582 = vshll.u32 %v1554, 16
      %v1584 = vrot.slane %v1582, 5
      %v1585 = vor.u32 %v1581, %v1584
      %v1586 = vrot.slane %v1585, 4
      %v1588 = vshll.u32 %v1555, 16
      %v1590 = vrot.slane %v1588, 5
      %v1591 = vsel %vm741, %v1586, %v1590
      %v1592 = vshrl.u32 %v1555, 16
      %v1594 = vrot.slane %v1592, 4
      %v1595 = vor.u32 %v1594, %v1590
      %v1596 = vrot.slane %v1595, 4
      %v1598 = vshll.u32 %v1556, 16
      %v1600 = vrot.slane %v1598, 5
      %v1601 = vsel %vm741, %v1596, %v1600
      %v1603 = vshrl.u32 %v1557, 16
      %v1605 = vrot.slane %v1603, 4
      %v1606 = vshll.u32 %v1557, 16
      %v1608 = vrot.slane %v1606, 5
      %v1609 = vor.u32 %v1605, %v1608
      %v1610 = vrot.slane %v1609, 4
      %v1612 = vshll.u32 %v1558, 16
      %v1614 = vrot.slane %v1612, 5
      %v1615 = vsel %vm741, %v1610, %v1614
      %v1616 = vshrl.u32 %v1558, 16
      %v1618 = vrot.slane %v1616, 4
      %v1619 = vor.u32 %v1618, %v1614
      %v1620 = vrot.slane %v1619, 4
      %v1622 = vshll.u32 %v1559, 16
      %v1624 = vrot.slane %v1622, 5
      %v1625 = vsel %vm741, %v1620, %v1624
      %v1627 = vshrl.u32 %v1560, 16
      %v1629 = vrot.slane %v1627, 4
      %v1630 = vshll.u32 %v1560, 16
      %v1632 = vrot.slane %v1630, 5
      %v1633 = vor.u32 %v1629, %v1632
      %v1634 = vrot.slane %v1633, 4
      %v1636 = vshll.u32 %v1561, 16
      %v1638 = vrot.slane %v1636, 5
      %v1639 = vsel %vm741, %v1634, %v1638
      %v1640 = vshrl.u32 %v1561, 16
      %v1642 = vrot.slane %v1640, 4
      %v1643 = vor.u32 %v1642, %v1638
      %v1644 = vrot.slane %v1643, 4
      %v1646 = vshll.u32 %v1562, 16
      %v1648 = vrot.slane %v1646, 5
      %v1649 = vsel %vm741, %v1644, %v1648
      %v1651 = vshrl.u32 %v1563, 16
      %v1653 = vrot.slane %v1651, 4
      %v1654 = vshll.u32 %v1563, 16
      %v1656 = vrot.slane %v1654, 5
      %v1657 = vor.u32 %v1653, %v1656
      %v1658 = vrot.slane %v1657, 4
      %v1660 = vshll.u32 %v1564, 16
      %v1662 = vrot.slane %v1660, 5
      %v1663 = vsel %vm741, %v1658, %v1662
      %v1664 = vshrl.u32 %v1564, 16
      %v1666 = vrot.slane %v1664, 4
      %v1667 = vor.u32 %v1666, %v1662
      %v1668 = vrot.slane %v1667, 4
      %v1670 = vshll.u32 %v1565, 16
      %v1672 = vrot.slane %v1670, 5
      %v1673 = vsel %vm741, %v1668, %v1672
      %v1675 = vshrl.u32 %v1566, 16
      %v1677 = vrot.slane %v1675, 4
      %v1678 = vshll.u32 %v1566, 16
      %v1680 = vrot.slane %v1678, 5
      %v1681 = vor.u32 %v1677, %v1680
      %v1682 = vrot.slane %v1681, 4
      %v1684 = vshll.u32 %v1567, 16
      %v1686 = vrot.slane %v1684, 5
      %v1687 = vsel %vm741, %v1682, %v1686
      %v1688 = vshrl.u32 %v1567, 16
      %v1690 = vrot.slane %v1688, 4
      %v1691 = vor.u32 %v1690, %v1686
      %v1692 = vrot.slane %v1691, 4
      %v1694 = vshll.u32 %v1568, 16
      %v1696 = vrot.slane %v1694, 5
      %v1697 = vsel %vm741, %v1692, %v1696
      %v1699 = vshrl.u32 %v1569, 16
      %v1701 = vrot.slane %v1699, 4
      %v1702 = vshll.u32 %v1569, 16
      %v1704 = vrot.slane %v1702, 5
      %v1705 = vor.u32 %v1701, %v1704
      %v1706 = vrot.slane %v1705, 4
      %v1708 = vshll.u32 %v1570, 16
      %v1710 = vrot.slane %v1708, 5
      %v1711 = vsel %vm741, %v1706, %v1710
      %v1712 = vshrl.u32 %v1570, 16
      %v1714 = vrot.slane %v1712, 4
      %v1715 = vor.u32 %v1714, %v1710
      %v1716 = vrot.slane %v1715, 4
      %v1718 = vshll.u32 %v1571, 16
      %v1720 = vrot.slane %v1718, 5
      %v1721 = vsel %vm741, %v1716, %v1720
      %v1723 = vshrl.u32 %v1572, 16
      %v1725 = vrot.slane %v1723, 4
      %v1726 = vshll.u32 %v1572, 16
      %v1728 = vrot.slane %v1726, 5
      %v1729 = vor.u32 %v1725, %v1728
      %v1730 = vrot.slane %v1729, 4
      %v1732 = vshll.u32 %v1573, 16
      %v1734 = vrot.slane %v1732, 5
      %v1735 = vsel %vm741, %v1730, %v1734
      %v1736 = vshrl.u32 %v1573, 16
      %v1738 = vrot.slane %v1736, 4
      %v1739 = vor.u32 %v1738, %v1734
      %v1740 = vrot.slane %v1739, 4
      %v1742 = vshll.u32 %v1574, 16
      %v1744 = vrot.slane %v1742, 5
      %v1745 = vsel %vm741, %v1740, %v1744
      %v1747 = vshrl.u32 %v1575, 16
      %v1749 = vrot.slane %v1747, 4
      %v1750 = vshll.u32 %v1575, 16
      %v1752 = vrot.slane %v1750, 5
      %v1753 = vor.u32 %v1749, %v1752
      %v1754 = vrot.slane %v1753, 4
      %v1756 = vshll.u32 %v1576, 16
      %v1758 = vrot.slane %v1756, 5
      %v1759 = vsel %vm741, %v1754, %v1758
      %v1760 = vshrl.u32 %v1576, 16
      %v1762 = vrot.slane %v1760, 4
      %v1763 = vor.u32 %v1762, %v1758
      %v1764 = vrot.slane %v1763, 4
      %v1766 = vshll.u32 %v1577, 16
      %v1768 = vrot.slane %v1766, 5
      %v1769 = vsel %vm741, %v1764, %v1768
      %1786 = vst [vmem:[#allocation3 + $0x1c] sm:$0xf] %v1591
      %1787 = vst [vmem:[#allocation3 + $0x40] sm:$0xf] %v1601
      %1788 = vst [vmem:[#allocation3 + $0x64] sm:$0xf] %v1615
      %1789 = vst [vmem:[#allocation3 + $0x88] sm:$0xf] %v1625
      %1790 = vst [vmem:[#allocation3 + $0xac] sm:$0xf] %v1639
      %1791 = vst [vmem:[#allocation3 + $0xd0] sm:$0xf] %v1649
      %1792 = vst [vmem:[#allocation3 + $0xf4] sm:$0xf] %v1663
      %1793 = vst [vmem:[#allocation3 + $0x118] sm:$0xf] %v1673
      %1794 = vst [vmem:[#allocation3 + $0x13c] sm:$0xf] %v1687
      %1795 = vst [vmem:[#allocation3 + $0x160] sm:$0xf] %v1697
      %1796 = vst [vmem:[#allocation3 + $0x184] sm:$0xf] %v1711
      %1797 = vst [vmem:[#allocation3 + $0x1a8] sm:$0xf] %v1721
      %1798 = vst [vmem:[#allocation3 + $0x1cc] sm:$0xf] %v1735
      %1799 = vst [vmem:[#allocation3 + $0x1f0] sm:$0xf] %v1745
      %1800 = vst [vmem:[#allocation3 + $0x214] sm:$0xf] %v1759
      %1801 = vst [vmem:[#allocation3 + $0x238] sm:$0xf] %v1769
      %v1802 = vld [vmem:[%s1521] sm:$0xe]
      %v1803 = vld [vmem:[%s1521 + $0x4] sm:$0xf]
      %v1804 = vld [vmem:[%s1521 + $0x8] sm:$0x1]
      %v1805 = vld [vmem:[%s1521 + $0xc] sm:$0xe]
      %v1806 = vld [vmem:[%s1521 + $0x10] sm:$0xf]
      %v1807 = vld [vmem:[%s1521 + $0x14] sm:$0x1]
      %v1808 = vld [vmem:[%s1521 + $0x18] sm:$0xe]
      %v1809 = vld [vmem:[%s1521 + $0x1c] sm:$0xf]
      %v1810 = vld [vmem:[%s1521 + $0x20] sm:$0x1]
      %v1811 = vld [vmem:[%s1521 + $0x24] sm:$0xe]
      %v1812 = vld [vmem:[%s1521 + $0x28] sm:$0xf]
      %v1813 = vld [vmem:[%s1521 + $0x2c] sm:$0x1]
      %v1814 = vld [vmem:[%s1521 + $0x30] sm:$0xe]
      %v1815 = vld [vmem:[%s1521 + $0x34] sm:$0xf]
      %v1816 = vld [vmem:[%s1521 + $0x38] sm:$0x1]
      %v1817 = vld [vmem:[%s1521 + $0x3c] sm:$0xe]
      %v1818 = vld [vmem:[%s1521 + $0x40] sm:$0xf]
      %v1819 = vld [vmem:[%s1521 + $0x44] sm:$0x1]
      %v1820 = vld [vmem:[%s1521 + $0x48] sm:$0xe]
      %v1821 = vld [vmem:[%s1521 + $0x4c] sm:$0xf]
      %v1822 = vld [vmem:[%s1521 + $0x50] sm:$0x1]
      %v1823 = vld [vmem:[%s1521 + $0x54] sm:$0xe]
      %v1824 = vld [vmem:[%s1521 + $0x58] sm:$0xf]
      %v1825 = vld [vmem:[%s1521 + $0x5c] sm:$0x1]
      %v1850 = vrot.slane %v1802, 5
      %v1851 = vrot.slane %v1850, 4
      %v1852 = vrot.slane %v1803, 5
      %v1853 = vsel %vm1016, %v1851, %v1852
      %v1854 = vrot.slane %v1852, 4
      %v1855 = vrot.slane %v1804, 5
      %v1856 = vsel %vm1016, %v1854, %v1855
      %v1857 = vrot.slane %v1805, 5
      %v1858 = vrot.slane %v1857, 4
      %v1859 = vrot.slane %v1806, 5
      %v1860 = vsel %vm1016, %v1858, %v1859
      %v1861 = vrot.slane %v1859, 4
      %v1862 = vrot.slane %v1807, 5
      %v1863 = vsel %vm1016, %v1861, %v1862
      %v1864 = vrot.slane %v1808, 5
      %v1865 = vrot.slane %v1864, 4
      %v1866 = vrot.slane %v1809, 5
      %v1867 = vsel %vm1016, %v1865, %v1866
      %v1868 = vrot.slane %v1866, 4
      %v1869 = vrot.slane %v1810, 5
      %v1870 = vsel %vm1016, %v1868, %v1869
      %v1871 = vrot.slane %v1811, 5
      %v1872 = vrot.slane %v1871, 4
      %v1873 = vrot.slane %v1812, 5
      %v1874 = vsel %vm1016, %v1872, %v1873
      %v1875 = vrot.slane %v1873, 4
      %v1876 = vrot.slane %v1813, 5
      %v1877 = vsel %vm1016, %v1875, %v1876
      %v1878 = vrot.slane %v1814, 5
      %v1879 = vrot.slane %v1878, 4
      %v1880 = vrot.slane %v1815, 5
      %v1881 = vsel %vm1016, %v1879, %v1880
      %v1882 = vrot.slane %v1880, 4
      %v1883 = vrot.slane %v1816, 5
      %v1884 = vsel %vm1016, %v1882, %v1883
      %v1885 = vrot.slane %v1817, 5
      %v1886 = vrot.slane %v1885, 4
      %v1887 = vrot.slane %v1818, 5
      %v1888 = vsel %vm1016, %v1886, %v1887
      %v1889 = vrot.slane %v1887, 4
      %v1890 = vrot.slane %v1819, 5
      %v1891 = vsel %vm1016, %v1889, %v1890
      %v1892 = vrot.slane %v1820, 5
      %v1893 = vrot.slane %v1892, 4
      %v1894 = vrot.slane %v1821, 5
      %v1895 = vsel %vm1016, %v1893, %v1894
      %v1896 = vrot.slane %v1894, 4
      %v1897 = vrot.slane %v1822, 5
      %v1898 = vsel %vm1016, %v1896, %v1897
      %v1899 = vrot.slane %v1823, 5
      %v1900 = vrot.slane %v1899, 4
      %v1901 = vrot.slane %v1824, 5
      %v1902 = vsel %vm1016, %v1900, %v1901
      %v1903 = vrot.slane %v1901, 4
      %v1904 = vrot.slane %v1825, 5
      %v1905 = vsel %vm1016, %v1903, %v1904
      %1922 = vst [vmem:[#allocation3 + $0x20] sm:$0xf] %v1853
      %1923 = vst [vmem:[#allocation3 + $0x44] sm:$0xf] %v1856
      %1924 = vst [vmem:[#allocation3 + $0x68] sm:$0xf] %v1860
      %1925 = vst [vmem:[#allocation3 + $0x8c] sm:$0xf] %v1863
      %1926 = vst [vmem:[#allocation3 + $0xb0] sm:$0xf] %v1867
      %1927 = vst [vmem:[#allocation3 + $0xd4] sm:$0xf] %v1870
      %1928 = vst [vmem:[#allocation3 + $0xf8] sm:$0xf] %v1874
      %1929 = vst [vmem:[#allocation3 + $0x11c] sm:$0xf] %v1877
      %1930 = vst [vmem:[#allocation3 + $0x140] sm:$0xf] %v1881
      %1931 = vst [vmem:[#allocation3 + $0x164] sm:$0xf] %v1884
      %1932 = vst [vmem:[#allocation3 + $0x188] sm:$0xf] %v1888
      %1933 = vst [vmem:[#allocation3 + $0x1ac] sm:$0xf] %v1891
      %1934 = vst [vmem:[#allocation3 + $0x1d0] sm:$0xf] %v1895
      %1935 = vst [vmem:[#allocation3 + $0x1f4] sm:$0xf] %v1898
      %1936 = vst [vmem:[#allocation3 + $0x218] sm:$0xf] %v1902
      %1937 = vst [vmem:[#allocation3 + $0x23c] sm:$0xf] %v1905
      %v1938 = vld [vmem:[#allocation3] sm:$0xff]
      %v1939 = vld [vmem:[#allocation3 + $0x8] sm:$0xff]
      %v1940 = vld [vmem:[#allocation3 + $0x10] sm:$0xff]
      %v1941 = vld [vmem:[#allocation3 + $0x18] sm:$0xff]
      %v1942 = vld [vmem:[#allocation3 + $0x20] sm:$0xf]
      %v1943 = vld [vmem:[#allocation3 + $0x24] sm:$0xff]
      %v1944 = vld [vmem:[#allocation3 + $0x2c] sm:$0xff]
      %v1945 = vld [vmem:[#allocation3 + $0x34] sm:$0xff]
      %v1946 = vld [vmem:[#allocation3 + $0x3c] sm:$0xff]
      %v1947 = vld [vmem:[#allocation3 + $0x44] sm:$0xf]
      %v1948 = vld [vmem:[#allocation3 + $0x48] sm:$0xff]
      %v1949 = vld [vmem:[#allocation3 + $0x50] sm:$0xff]
      %v1950 = vld [vmem:[#allocation3 + $0x58] sm:$0xff]
      %v1951 = vld [vmem:[#allocation3 + $0x60] sm:$0xff]
      %v1952 = vld [vmem:[#allocation3 + $0x68] sm:$0xf]
      %v1953 = vld [vmem:[#allocation3 + $0x6c] sm:$0xff]
      %v1954 = vld [vmem:[#allocation3 + $0x74] sm:$0xff]
      %v1955 = vld [vmem:[#allocation3 + $0x7c] sm:$0xff]
      %v1956 = vld [vmem:[#allocation3 + $0x84] sm:$0xff]
      %v1957 = vld [vmem:[#allocation3 + $0x8c] sm:$0xf]
      %v1958 = vld [vmem:[#allocation3 + $0x90] sm:$0xff]
      %v1959 = vld [vmem:[#allocation3 + $0x98] sm:$0xff]
      %v1960 = vld [vmem:[#allocation3 + $0xa0] sm:$0xff]
      %v1961 = vld [vmem:[#allocation3 + $0xa8] sm:$0xff]
      %v1962 = vld [vmem:[#allocation3 + $0xb0] sm:$0xf]
      %v1963 = vld [vmem:[#allocation3 + $0xb4] sm:$0xff]
      %v1964 = vld [vmem:[#allocation3 + $0xbc] sm:$0xff]
      %v1965 = vld [vmem:[#allocation3 + $0xc4] sm:$0xff]
      %v1966 = vld [vmem:[#allocation3 + $0xcc] sm:$0xff]
      %v1967 = vld [vmem:[#allocation3 + $0xd4] sm:$0xf]
      %v1968 = vld [vmem:[#allocation3 + $0xd8] sm:$0xff]
      %v1969 = vld [vmem:[#allocation3 + $0xe0] sm:$0xff]
      %v1970 = vld [vmem:[#allocation3 + $0xe8] sm:$0xff]
      %v1971 = vld [vmem:[#allocation3 + $0xf0] sm:$0xff]
      %v1972 = vld [vmem:[#allocation3 + $0xf8] sm:$0xf]
      %v1973 = vld [vmem:[#allocation3 + $0xfc] sm:$0xff]
      %v1974 = vld [vmem:[#allocation3 + $0x104] sm:$0xff]
      %v1975 = vld [vmem:[#allocation3 + $0x10c] sm:$0xff]
      %v1976 = vld [vmem:[#allocation3 + $0x114] sm:$0xff]
      %v1977 = vld [vmem:[#allocation3 + $0x11c] sm:$0xf]
      %v1978 = vld [vmem:[#allocation3 + $0x120] sm:$0xff]
      %v1979 = vld [vmem:[#allocation3 + $0x128] sm:$0xff]
      %v1980 = vld [vmem:[#allocation3 + $0x130] sm:$0xff]
      %v1981 = vld [vmem:[#allocation3 + $0x138] sm:$0xff]
      %v1982 = vld [vmem:[#allocation3 + $0x140] sm:$0xf]
      %v1983 = vld [vmem:[#allocation3 + $0x144] sm:$0xff]
      %v1984 = vld [vmem:[#allocation3 + $0x14c] sm:$0xff]
      %v1985 = vld [vmem:[#allocation3 + $0x154] sm:$0xff]
      %v1986 = vld [vmem:[#allocation3 + $0x15c] sm:$0xff]
      %v1987 = vld [vmem:[#allocation3 + $0x164] sm:$0xf]
      %v1988 = vld [vmem:[#allocation3 + $0x168] sm:$0xff]
      %v1989 = vld [vmem:[#allocation3 + $0x170] sm:$0xff]
      %v1990 = vld [vmem:[#allocation3 + $0x178] sm:$0xff]
      %v1991 = vld [vmem:[#allocation3 + $0x180] sm:$0xff]
      %v1992 = vld [vmem:[#allocation3 + $0x188] sm:$0xf]
      %v1993 = vld [vmem:[#allocation3 + $0x18c] sm:$0xff]
      %v1994 = vld [vmem:[#allocation3 + $0x194] sm:$0xff]
      %v1995 = vld [vmem:[#allocation3 + $0x19c] sm:$0xff]
      %v1996 = vld [vmem:[#allocation3 + $0x1a4] sm:$0xff]
      %v1997 = vld [vmem:[#allocation3 + $0x1ac] sm:$0xf]
      %v1998 = vld [vmem:[#allocation3 + $0x1b0] sm:$0xff]
      %v1999 = vld [vmem:[#allocation3 + $0x1b8] sm:$0xff]
      %v2000 = vld [vmem:[#allocation3 + $0x1c0] sm:$0xff]
      %v2001 = vld [vmem:[#allocation3 + $0x1c8] sm:$0xff]
      %v2002 = vld [vmem:[#allocation3 + $0x1d0] sm:$0xf]
      %v2003 = vld [vmem:[#allocation3 + $0x1d4] sm:$0xff]
      %v2004 = vld [vmem:[#allocation3 + $0x1dc] sm:$0xff]
      %v2005 = vld [vmem:[#allocation3 + $0x1e4] sm:$0xff]
      %v2006 = vld [vmem:[#allocation3 + $0x1ec] sm:$0xff]
      %v2007 = vld [vmem:[#allocation3 + $0x1f4] sm:$0xf]
      %v2008 = vld [vmem:[#allocation3 + $0x1f8] sm:$0xff]
      %v2009 = vld [vmem:[#allocation3 + $0x200] sm:$0xff]
      %v2010 = vld [vmem:[#allocation3 + $0x208] sm:$0xff]
      %v2011 = vld [vmem:[#allocation3 + $0x210] sm:$0xff]
      %v2012 = vld [vmem:[#allocation3 + $0x218] sm:$0xf]
      %v2013 = vld [vmem:[#allocation3 + $0x21c] sm:$0xff]
      %v2014 = vld [vmem:[#allocation3 + $0x224] sm:$0xff]
      %v2015 = vld [vmem:[#allocation3 + $0x22c] sm:$0xff]
      %v2016 = vld [vmem:[#allocation3 + $0x234] sm:$0xff]
      %v2017 = vld [vmem:[#allocation3 + $0x23c] sm:$0xf]
      %v2018 = vld [vmem:[%s3] sm:$0xf]
      %v2019 = vld [vmem:[%s3 + $0x4] sm:$0xf]
      %v2020 = vld [vmem:[%s3 + $0x8] sm:$0xf]
      %v2021 = vld [vmem:[%s3 + $0xc] sm:$0xf]
      %v2022 = vld [vmem:[%s3 + $0x10] sm:$0xf]
      %v2023 = vld [vmem:[%s3 + $0x14] sm:$0xf]
      %v2024 = vld [vmem:[%s3 + $0x18] sm:$0xf]
      %v2025 = vld [vmem:[%s3 + $0x1c] sm:$0xf]
      %v2026 = vld [vmem:[%s3 + $0x20] sm:$0xf]
      %v2027 = vld [vmem:[%s3 + $0x24] sm:$0xf]
      %v2028 = vld [vmem:[%s3 + $0x28] sm:$0xf]
      %v2029 = vld [vmem:[%s3 + $0x2c] sm:$0xf]
      %v2030 = vld [vmem:[%s3 + $0x30] sm:$0xf]
      %v2031 = vld [vmem:[%s3 + $0x34] sm:$0xf]
      %v2032 = vld [vmem:[%s3 + $0x38] sm:$0xf]
      %v2033 = vld [vmem:[%s3 + $0x3c] sm:$0xf]
      %v2034 = vld [vmem:[%s3 + $0x40] sm:$0xf]
      %v2035 = vld [vmem:[%s3 + $0x44] sm:$0xf]
      %v2036 = vld [vmem:[%s3 + $0x48] sm:$0xf]
      %v2037 = vld [vmem:[%s3 + $0x4c] sm:$0xf]
      %v2038 = vld [vmem:[%s3 + $0x50] sm:$0xf]
      %v2039 = vld [vmem:[%s3 + $0x54] sm:$0xf]
      %v2040 = vld [vmem:[%s3 + $0x58] sm:$0xf]
      %v2041 = vld [vmem:[%s3 + $0x5c] sm:$0xf]
      %v2042 = vld [vmem:[%s3 + $0x60] sm:$0xf]
      %v2043 = vld [vmem:[%s3 + $0x64] sm:$0xf]
      %v2044 = vld [vmem:[%s3 + $0x68] sm:$0xf]
      %v2045 = vld [vmem:[%s3 + $0x6c] sm:$0xf]
      %v2046 = vld [vmem:[%s3 + $0x70] sm:$0xf]
      %v2047 = vld [vmem:[%s3 + $0x74] sm:$0xf]
      %v2048 = vld [vmem:[%s3 + $0x78] sm:$0xf]
      %v2049 = vld [vmem:[%s3 + $0x7c] sm:$0xf]
      %v2050 = vld [vmem:[%s3 + $0x80] sm:$0xf]
      %v2051 = vld [vmem:[%s3 + $0x84] sm:$0xf]
      %v2052 = vld [vmem:[%s3 + $0x88] sm:$0xf]
      %v2053 = vld [vmem:[%s3 + $0x8c] sm:$0xf]
      %v2054 = vld [vmem:[%s3 + $0x90] sm:$0xf]
      %v2055 = vld [vmem:[%s3 + $0x94] sm:$0xf]
      %v2056 = vld [vmem:[%s3 + $0x98] sm:$0xf]
      %v2057 = vld [vmem:[%s3 + $0x9c] sm:$0xf]
      %v2058 = vld [vmem:[%s3 + $0xa0] sm:$0xf]
      %v2059 = vld [vmem:[%s3 + $0xa4] sm:$0xf]
      %v2060 = vld [vmem:[%s3 + $0xa8] sm:$0xf]
      %v2061 = vld [vmem:[%s3 + $0xac] sm:$0xf]
      %v2062 = vld [vmem:[%s3 + $0xb0] sm:$0xf]
      %v2063 = vld [vmem:[%s3 + $0xb4] sm:$0xf]
      %v2064 = vld [vmem:[%s3 + $0xb8] sm:$0xf]
      %v2065 = vld [vmem:[%s3 + $0xbc] sm:$0xf]
      %v2066 = vld [vmem:[%s3 + $0xc0] sm:$0xf]
      %v2067 = vld [vmem:[%s3 + $0xc4] sm:$0xf]
      %v2068 = vld [vmem:[%s3 + $0xc8] sm:$0xf]
      %v2069 = vld [vmem:[%s3 + $0xcc] sm:$0xf]
      %v2070 = vld [vmem:[%s3 + $0xd0] sm:$0xf]
      %v2071 = vld [vmem:[%s3 + $0xd4] sm:$0xf]
      %v2072 = vld [vmem:[%s3 + $0xd8] sm:$0xf]
      %v2073 = vld [vmem:[%s3 + $0xdc] sm:$0xf]
      %v2074 = vld [vmem:[%s3 + $0xe0] sm:$0xf]
      %v2075 = vld [vmem:[%s3 + $0xe4] sm:$0xf]
      %v2076 = vld [vmem:[%s3 + $0xe8] sm:$0xf]
      %v2077 = vld [vmem:[%s3 + $0xec] sm:$0xf]
      %v2078 = vld [vmem:[%s3 + $0xf0] sm:$0xf]
      %v2079 = vld [vmem:[%s3 + $0xf4] sm:$0xf]
      %v2080 = vld [vmem:[%s3 + $0xf8] sm:$0xf]
      %v2081 = vld [vmem:[%s3 + $0xfc] sm:$0xf]
      %v2082 = vld [vmem:[%s3 + $0x100] sm:$0xf]
      %v2083 = vld [vmem:[%s3 + $0x104] sm:$0xf]
      %v2084 = vld [vmem:[%s3 + $0x108] sm:$0xf]
      %v2085 = vld [vmem:[%s3 + $0x10c] sm:$0xf]
      %v2086 = vld [vmem:[%s3 + $0x110] sm:$0xf]
      %v2087 = vld [vmem:[%s3 + $0x114] sm:$0xf]
      %v2088 = vld [vmem:[%s3 + $0x118] sm:$0xf]
      %v2089 = vld [vmem:[%s3 + $0x11c] sm:$0xf]
      %v2090 = vld [vmem:[%s3 + $0x120] sm:$0xf]
      %v2091 = vld [vmem:[%s3 + $0x124] sm:$0xf]
      %v2092 = vld [vmem:[%s3 + $0x128] sm:$0xf]
      %v2093 = vld [vmem:[%s3 + $0x12c] sm:$0xf]
      %v2094 = vld [vmem:[%s3 + $0x130] sm:$0xf]
      %v2095 = vld [vmem:[%s3 + $0x134] sm:$0xf]
      %v2096 = vld [vmem:[%s3 + $0x138] sm:$0xf]
      %v2097 = vld [vmem:[%s3 + $0x13c] sm:$0xf]
      %v2098 = vld [vmem:[%s3 + $0x140] sm:$0xf]
      %v2099 = vld [vmem:[%s3 + $0x144] sm:$0xf]
      %v2100 = vld [vmem:[%s3 + $0x148] sm:$0xf]
      %v2101 = vld [vmem:[%s3 + $0x14c] sm:$0xf]
      %v2102 = vld [vmem:[%s3 + $0x150] sm:$0xf]
      %v2103 = vld [vmem:[%s3 + $0x154] sm:$0xf]
      %v2104 = vld [vmem:[%s3 + $0x158] sm:$0xf]
      %v2105 = vld [vmem:[%s3 + $0x15c] sm:$0xf]
      %v2106 = vld [vmem:[%s3 + $0x160] sm:$0xf]
      %v2107 = vld [vmem:[%s3 + $0x164] sm:$0xf]
      %v2108 = vld [vmem:[%s3 + $0x168] sm:$0xf]
      %v2109 = vld [vmem:[%s3 + $0x16c] sm:$0xf]
      %v2110 = vld [vmem:[%s3 + $0x170] sm:$0xf]
      %v2111 = vld [vmem:[%s3 + $0x174] sm:$0xf]
      %v2112 = vld [vmem:[%s3 + $0x178] sm:$0xf]
      %v2113 = vld [vmem:[%s3 + $0x17c] sm:$0xf]
      %v2114 = vld [vmem:[%s3 + $0x180] sm:$0xf]
      %v2115 = vld [vmem:[%s3 + $0x184] sm:$0xf]
      %v2116 = vld [vmem:[%s3 + $0x188] sm:$0xf]
      %v2117 = vld [vmem:[%s3 + $0x18c] sm:$0xf]
      %v2118 = vld [vmem:[%s3 + $0x190] sm:$0xf]
      %v2119 = vld [vmem:[%s3 + $0x194] sm:$0xf]
      %v2120 = vld [vmem:[%s3 + $0x198] sm:$0xf]
      %v2121 = vld [vmem:[%s3 + $0x19c] sm:$0xf]
      %v2122 = vld [vmem:[%s3 + $0x1a0] sm:$0xf]
      %v2123 = vld [vmem:[%s3 + $0x1a4] sm:$0xf]
      %v2124 = vld [vmem:[%s3 + $0x1a8] sm:$0xf]
      %v2125 = vld [vmem:[%s3 + $0x1ac] sm:$0xf]
      %v2126 = vld [vmem:[%s3 + $0x1b0] sm:$0xf]
      %v2127 = vld [vmem:[%s3 + $0x1b4] sm:$0xf]
      %v2128 = vld [vmem:[%s3 + $0x1b8] sm:$0xf]
      %v2129 = vld [vmem:[%s3 + $0x1bc] sm:$0xf]
      %v2130 = vld [vmem:[%s3 + $0x1c0] sm:$0xf]
      %v2131 = vld [vmem:[%s3 + $0x1c4] sm:$0xf]
      %v2132 = vld [vmem:[%s3 + $0x1c8] sm:$0xf]
      %v2133 = vld [vmem:[%s3 + $0x1cc] sm:$0xf]
      %v2134 = vld [vmem:[%s3 + $0x1d0] sm:$0xf]
      %v2135 = vld [vmem:[%s3 + $0x1d4] sm:$0xf]
      %v2136 = vld [vmem:[%s3 + $0x1d8] sm:$0xf]
      %v2137 = vld [vmem:[%s3 + $0x1dc] sm:$0xf]
      %v2138 = vld [vmem:[%s3 + $0x1e0] sm:$0xf]
      %v2139 = vld [vmem:[%s3 + $0x1e4] sm:$0xf]
      %v2140 = vld [vmem:[%s3 + $0x1e8] sm:$0xf]
      %v2141 = vld [vmem:[%s3 + $0x1ec] sm:$0xf]
      %v2142 = vld [vmem:[%s3 + $0x1f0] sm:$0xf]
      %v2143 = vld [vmem:[%s3 + $0x1f4] sm:$0xf]
      %v2144 = vld [vmem:[%s3 + $0x1f8] sm:$0xf]
      %v2145 = vld [vmem:[%s3 + $0x1fc] sm:$0xf]
      %v2146 = vld [vmem:[%s3 + $0x200] sm:$0xf]
      %v2147 = vld [vmem:[%s3 + $0x204] sm:$0xf]
      %v2148 = vld [vmem:[%s3 + $0x208] sm:$0xf]
      %v2149 = vld [vmem:[%s3 + $0x20c] sm:$0xf]
      %v2150 = vld [vmem:[%s3 + $0x210] sm:$0xf]
      %v2151 = vld [vmem:[%s3 + $0x214] sm:$0xf]
      %v2152 = vld [vmem:[%s3 + $0x218] sm:$0xf]
      %v2153 = vld [vmem:[%s3 + $0x21c] sm:$0xf]
      %v2154 = vld [vmem:[%s3 + $0x220] sm:$0xf]
      %v2155 = vld [vmem:[%s3 + $0x224] sm:$0xf]
      %v2156 = vld [vmem:[%s3 + $0x228] sm:$0xf]
      %v2157 = vld [vmem:[%s3 + $0x22c] sm:$0xf]
      %v2158 = vld [vmem:[%s3 + $0x230] sm:$0xf]
      %v2159 = vld [vmem:[%s3 + $0x234] sm:$0xf]
      %v2160 = vld [vmem:[%s3 + $0x238] sm:$0xf]
      %v2161 = vld [vmem:[%s3 + $0x23c] sm:$0xf]
      %v2242 = vunpack.c.l.b16 %v1938
      %v2243 = vunpack.c.h.b16 %v1938
      %v2244 = vunpack.c.l.b16 %v1939
      %v2245 = vunpack.c.h.b16 %v1939
      %v2246 = vunpack.c.l.b16 %v1940
      %v2247 = vunpack.c.h.b16 %v1940
      %v2248 = vunpack.c.l.b16 %v1941
      %v2249 = vunpack.c.h.b16 %v1941
      %v2250 = vunpack.c.l.b16 %v1942
      %v2251 = vunpack.c.l.b16 %v1943
      %v2252 = vunpack.c.h.b16 %v1943
      %v2253 = vunpack.c.l.b16 %v1944
      %v2254 = vunpack.c.h.b16 %v1944
      %v2255 = vunpack.c.l.b16 %v1945
      %v2256 = vunpack.c.h.b16 %v1945
      %v2257 = vunpack.c.l.b16 %v1946
      %v2258 = vunpack.c.h.b16 %v1946
      %v2259 = vunpack.c.l.b16 %v1947
      %v2260 = vunpack.c.l.b16 %v1948
      %v2261 = vunpack.c.h.b16 %v1948
      %v2262 = vunpack.c.l.b16 %v1949
      %v2263 = vunpack.c.h.b16 %v1949
      %v2264 = vunpack.c.l.b16 %v1950
      %v2265 = vunpack.c.h.b16 %v1950
      %v2266 = vunpack.c.l.b16 %v1951
      %v2267 = vunpack.c.h.b16 %v1951
      %v2268 = vunpack.c.l.b16 %v1952
      %v2269 = vunpack.c.l.b16 %v1953
      %v2270 = vunpack.c.h.b16 %v1953
      %v2271 = vunpack.c.l.b16 %v1954
      %v2272 = vunpack.c.h.b16 %v1954
      %v2273 = vunpack.c.l.b16 %v1955
      %v2274 = vunpack.c.h.b16 %v1955
      %v2275 = vunpack.c.l.b16 %v1956
      %v2276 = vunpack.c.h.b16 %v1956
      %v2277 = vunpack.c.l.b16 %v1957
      %v2278 = vunpack.c.l.b16 %v1958
      %v2279 = vunpack.c.h.b16 %v1958
      %v2280 = vunpack.c.l.b16 %v1959
      %v2281 = vunpack.c.h.b16 %v1959
      %v2282 = vunpack.c.l.b16 %v1960
      %v2283 = vunpack.c.h.b16 %v1960
      %v2284 = vunpack.c.l.b16 %v1961
      %v2285 = vunpack.c.h.b16 %v1961
      %v2286 = vunpack.c.l.b16 %v1962
      %v2287 = vunpack.c.l.b16 %v1963
      %v2288 = vunpack.c.h.b16 %v1963
      %v2289 = vunpack.c.l.b16 %v1964
      %v2290 = vunpack.c.h.b16 %v1964
      %v2291 = vunpack.c.l.b16 %v1965
      %v2292 = vunpack.c.h.b16 %v1965
      %v2293 = vunpack.c.l.b16 %v1966
      %v2294 = vunpack.c.h.b16 %v1966
      %v2295 = vunpack.c.l.b16 %v1967
      %v2296 = vunpack.c.l.b16 %v1968
      %v2297 = vunpack.c.h.b16 %v1968
      %v2298 = vunpack.c.l.b16 %v1969
      %v2299 = vunpack.c.h.b16 %v1969
      %v2300 = vunpack.c.l.b16 %v1970
      %v2301 = vunpack.c.h.b16 %v1970
      %v2302 = vunpack.c.l.b16 %v1971
      %v2303 = vunpack.c.h.b16 %v1971
      %v2304 = vunpack.c.l.b16 %v1972
      %v2305 = vunpack.c.l.b16 %v1973
      %v2306 = vunpack.c.h.b16 %v1973
      %v2307 = vunpack.c.l.b16 %v1974
      %v2308 = vunpack.c.h.b16 %v1974
      %v2309 = vunpack.c.l.b16 %v1975
      %v2310 = vunpack.c.h.b16 %v1975
      %v2311 = vunpack.c.l.b16 %v1976
      %v2312 = vunpack.c.h.b16 %v1976
      %v2313 = vunpack.c.l.b16 %v1977
      %v2314 = vunpack.c.l.b16 %v1978
      %v2315 = vunpack.c.h.b16 %v1978
      %v2316 = vunpack.c.l.b16 %v1979
      %v2317 = vunpack.c.h.b16 %v1979
      %v2318 = vunpack.c.l.b16 %v1980
      %v2319 = vunpack.c.h.b16 %v1980
      %v2320 = vunpack.c.l.b16 %v1981
      %v2321 = vunpack.c.h.b16 %v1981
      %v2322 = vunpack.c.l.b16 %v1982
      %v2323 = vunpack.c.l.b16 %v1983
      %v2324 = vunpack.c.h.b16 %v1983
      %v2325 = vunpack.c.l.b16 %v1984
      %v2326 = vunpack.c.h.b16 %v1984
      %v2327 = vunpack.c.l.b16 %v1985
      %v2328 = vunpack.c.h.b16 %v1985
      %v2329 = vunpack.c.l.b16 %v1986
      %v2330 = vunpack.c.h.b16 %v1986
      %v2331 = vunpack.c.l.b16 %v1987
      %v2332 = vunpack.c.l.b16 %v1988
      %v2333 = vunpack.c.h.b16 %v1988
      %v2334 = vunpack.c.l.b16 %v1989
      %v2335 = vunpack.c.h.b16 %v1989
      %v2336 = vunpack.c.l.b16 %v1990
      %v2337 = vunpack.c.h.b16 %v1990
      %v2338 = vunpack.c.l.b16 %v1991
      %v2339 = vunpack.c.h.b16 %v1991
      %v2340 = vunpack.c.l.b16 %v1992
      %v2341 = vunpack.c.l.b16 %v1993
      %v2342 = vunpack.c.h.b16 %v1993
      %v2343 = vunpack.c.l.b16 %v1994
      %v2344 = vunpack.c.h.b16 %v1994
      %v2345 = vunpack.c.l.b16 %v1995
      %v2346 = vunpack.c.h.b16 %v1995
      %v2347 = vunpack.c.l.b16 %v1996
      %v2348 = vunpack.c.h.b16 %v1996
      %v2349 = vunpack.c.l.b16 %v1997
      %v2350 = vunpack.c.l.b16 %v1998
      %v2351 = vunpack.c.h.b16 %v1998
      %v2352 = vunpack.c.l.b16 %v1999
      %v2353 = vunpack.c.h.b16 %v1999
      %v2354 = vunpack.c.l.b16 %v2000
      %v2355 = vunpack.c.h.b16 %v2000
      %v2356 = vunpack.c.l.b16 %v2001
      %v2357 = vunpack.c.h.b16 %v2001
      %v2358 = vunpack.c.l.b16 %v2002
      %v2359 = vunpack.c.l.b16 %v2003
      %v2360 = vunpack.c.h.b16 %v2003
      %v2361 = vunpack.c.l.b16 %v2004
      %v2362 = vunpack.c.h.b16 %v2004
      %v2363 = vunpack.c.l.b16 %v2005
      %v2364 = vunpack.c.h.b16 %v2005
      %v2365 = vunpack.c.l.b16 %v2006
      %v2366 = vunpack.c.h.b16 %v2006
      %v2367 = vunpack.c.l.b16 %v2007
      %v2368 = vunpack.c.l.b16 %v2008
      %v2369 = vunpack.c.h.b16 %v2008
      %v2370 = vunpack.c.l.b16 %v2009
      %v2371 = vunpack.c.h.b16 %v2009
      %v2372 = vunpack.c.l.b16 %v2010
      %v2373 = vunpack.c.h.b16 %v2010
      %v2374 = vunpack.c.l.b16 %v2011
      %v2375 = vunpack.c.h.b16 %v2011
      %v2376 = vunpack.c.l.b16 %v2012
      %v2377 = vunpack.c.l.b16 %v2013
      %v2378 = vunpack.c.h.b16 %v2013
      %v2379 = vunpack.c.l.b16 %v2014
      %v2380 = vunpack.c.h.b16 %v2014
      %v2381 = vunpack.c.l.b16 %v2015
      %v2382 = vunpack.c.h.b16 %v2015
      %v2383 = vunpack.c.l.b16 %v2016
      %v2384 = vunpack.c.h.b16 %v2016
      %v2385 = vunpack.c.l.b16 %v2017
      %v2386 = vpack.c.b16 %v2251, %v2242
      %v2387 = vpack.c.b16 %v2252, %v2243
      %v2388 = vpack.c.b16 %v2253, %v2244
      %v2389 = vpack.c.b16 %v2254, %v2245
      %v2390 = vpack.c.b16 %v2255, %v2246
      %v2391 = vpack.c.b16 %v2256, %v2247
      %v2392 = vpack.c.b16 %v2257, %v2248
      %v2393 = vpack.c.b16 %v2258, %v2249
      %v2394 = vpack.c.b16 %v2259, %v2250
      %v2395 = vpack.c.b16 %v2269, %v2260
      %v2396 = vpack.c.b16 %v2270, %v2261
      %v2397 = vpack.c.b16 %v2271, %v2262
      %v2398 = vpack.c.b16 %v2272, %v2263
      %v2399 = vpack.c.b16 %v2273, %v2264
      %v2400 = vpack.c.b16 %v2274, %v2265
      %v2401 = vpack.c.b16 %v2275, %v2266
      %v2402 = vpack.c.b16 %v2276, %v2267
      %v2403 = vpack.c.b16 %v2277, %v2268
      %v2404 = vpack.c.b16 %v2287, %v2278
      %v2405 = vpack.c.b16 %v2288, %v2279
      %v2406 = vpack.c.b16 %v2289, %v2280
      %v2407 = vpack.c.b16 %v2290, %v2281
      %v2408 = vpack.c.b16 %v2291, %v2282
      %v2409 = vpack.c.b16 %v2292, %v2283
      %v2410 = vpack.c.b16 %v2293, %v2284
      %v2411 = vpack.c.b16 %v2294, %v2285
      %v2412 = vpack.c.b16 %v2295, %v2286
      %v2413 = vpack.c.b16 %v2305, %v2296
      %v2414 = vpack.c.b16 %v2306, %v2297
      %v2415 = vpack.c.b16 %v2307, %v2298
      %v2416 = vpack.c.b16 %v2308, %v2299
      %v2417 = vpack.c.b16 %v2309, %v2300
      %v2418 = vpack.c.b16 %v2310, %v2301
      %v2419 = vpack.c.b16 %v2311, %v2302
      %v2420 = vpack.c.b16 %v2312, %v2303
      %v2421 = vpack.c.b16 %v2313, %v2304
      %v2422 = vpack.c.b16 %v2323, %v2314
      %v2423 = vpack.c.b16 %v2324, %v2315
      %v2424 = vpack.c.b16 %v2325, %v2316
      %v2425 = vpack.c.b16 %v2326, %v2317
      %v2426 = vpack.c.b16 %v2327, %v2318
      %v2427 = vpack.c.b16 %v2328, %v2319
      %v2428 = vpack.c.b16 %v2329, %v2320
      %v2429 = vpack.c.b16 %v2330, %v2321
      %v2430 = vpack.c.b16 %v2331, %v2322
      %v2431 = vpack.c.b16 %v2341, %v2332
      %v2432 = vpack.c.b16 %v2342, %v2333
      %v2433 = vpack.c.b16 %v2343, %v2334
      %v2434 = vpack.c.b16 %v2344, %v2335
      %v2435 = vpack.c.b16 %v2345, %v2336
      %v2436 = vpack.c.b16 %v2346, %v2337
      %v2437 = vpack.c.b16 %v2347, %v2338
      %v2438 = vpack.c.b16 %v2348, %v2339
      %v2439 = vpack.c.b16 %v2349, %v2340
      %v2440 = vpack.c.b16 %v2359, %v2350
      %v2441 = vpack.c.b16 %v2360, %v2351
      %v2442 = vpack.c.b16 %v2361, %v2352
      %v2443 = vpack.c.b16 %v2362, %v2353
      %v2444 = vpack.c.b16 %v2363, %v2354
      %v2445 = vpack.c.b16 %v2364, %v2355
      %v2446 = vpack.c.b16 %v2365, %v2356
      %v2447 = vpack.c.b16 %v2366, %v2357
      %v2448 = vpack.c.b16 %v2367, %v2358
      %v2449 = vpack.c.b16 %v2377, %v2368
      %v2450 = vpack.c.b16 %v2378, %v2369
      %v2451 = vpack.c.b16 %v2379, %v2370
      %v2452 = vpack.c.b16 %v2380, %v2371
      %v2453 = vpack.c.b16 %v2381, %v2372
      %v2454 = vpack.c.b16 %v2382, %v2373
      %v2455 = vpack.c.b16 %v2383, %v2374
      %v2456 = vpack.c.b16 %v2384, %v2375
      %v2457 = vpack.c.b16 %v2385, %v2376
      %v2674 = vunpack.c.l.b16 %v2018
      %v2675 = vunpack.c.l.b16 %v2019
      %v2676 = vunpack.c.l.b16 %v2020
      %v2677 = vunpack.c.l.b16 %v2021
      %v2678 = vunpack.c.l.b16 %v2022
      %v2679 = vunpack.c.l.b16 %v2023
      %v2680 = vunpack.c.l.b16 %v2024
      %v2681 = vunpack.c.l.b16 %v2025
      %v2682 = vunpack.c.l.b16 %v2026
      %v2683 = vunpack.c.l.b16 %v2027
      %v2684 = vunpack.c.l.b16 %v2028
      %v2685 = vunpack.c.l.b16 %v2029
      %v2686 = vunpack.c.l.b16 %v2030
      %v2687 = vunpack.c.l.b16 %v2031
      %v2688 = vunpack.c.l.b16 %v2032
      %v2689 = vunpack.c.l.b16 %v2033
      %v2690 = vunpack.c.l.b16 %v2034
      %v2691 = vunpack.c.l.b16 %v2035
      %v2692 = vunpack.c.l.b16 %v2036
      %v2693 = vunpack.c.l.b16 %v2037
      %v2694 = vunpack.c.l.b16 %v2038
      %v2695 = vunpack.c.l.b16 %v2039
      %v2696 = vunpack.c.l.b16 %v2040
      %v2697 = vunpack.c.l.b16 %v2041
      %v2698 = vunpack.c.l.b16 %v2042
      %v2699 = vunpack.c.l.b16 %v2043
      %v2700 = vunpack.c.l.b16 %v2044
      %v2701 = vunpack.c.l.b16 %v2045
      %v2702 = vunpack.c.l.b16 %v2046
      %v2703 = vunpack.c.l.b16 %v2047
      %v2704 = vunpack.c.l.b16 %v2048
      %v2705 = vunpack.c.l.b16 %v2049
      %v2706 = vunpack.c.l.b16 %v2050
      %v2707 = vunpack.c.l.b16 %v2051
      %v2708 = vunpack.c.l.b16 %v2052
      %v2709 = vunpack.c.l.b16 %v2053
      %v2710 = vunpack.c.l.b16 %v2054
      %v2711 = vunpack.c.l.b16 %v2055
      %v2712 = vunpack.c.l.b16 %v2056
      %v2713 = vunpack.c.l.b16 %v2057
      %v2714 = vunpack.c.l.b16 %v2058
      %v2715 = vunpack.c.l.b16 %v2059
      %v2716 = vunpack.c.l.b16 %v2060
      %v2717 = vunpack.c.l.b16 %v2061
      %v2718 = vunpack.c.l.b16 %v2062
      %v2719 = vunpack.c.l.b16 %v2063
      %v2720 = vunpack.c.l.b16 %v2064
      %v2721 = vunpack.c.l.b16 %v2065
      %v2722 = vunpack.c.l.b16 %v2066
      %v2723 = vunpack.c.l.b16 %v2067
      %v2724 = vunpack.c.l.b16 %v2068
      %v2725 = vunpack.c.l.b16 %v2069
      %v2726 = vunpack.c.l.b16 %v2070
      %v2727 = vunpack.c.l.b16 %v2071
      %v2728 = vunpack.c.l.b16 %v2072
      %v2729 = vunpack.c.l.b16 %v2073
      %v2730 = vunpack.c.l.b16 %v2074
      %v2731 = vunpack.c.l.b16 %v2075
      %v2732 = vunpack.c.l.b16 %v2076
      %v2733 = vunpack.c.l.b16 %v2077
      %v2734 = vunpack.c.l.b16 %v2078
      %v2735 = vunpack.c.l.b16 %v2079
      %v2736 = vunpack.c.l.b16 %v2080
      %v2737 = vunpack.c.l.b16 %v2081
      %v2738 = vunpack.c.l.b16 %v2082
      %v2739 = vunpack.c.l.b16 %v2083
      %v2740 = vunpack.c.l.b16 %v2084
      %v2741 = vunpack.c.l.b16 %v2085
      %v2742 = vunpack.c.l.b16 %v2086
      %v2743 = vunpack.c.l.b16 %v2087
      %v2744 = vunpack.c.l.b16 %v2088
      %v2745 = vunpack.c.l.b16 %v2089
      %v2746 = vunpack.c.l.b16 %v2090
      %v2747 = vunpack.c.l.b16 %v2091
      %v2748 = vunpack.c.l.b16 %v2092
      %v2749 = vunpack.c.l.b16 %v2093
      %v2750 = vunpack.c.l.b16 %v2094
      %v2751 = vunpack.c.l.b16 %v2095
      %v2752 = vunpack.c.l.b16 %v2096
      %v2753 = vunpack.c.l.b16 %v2097
      %v2754 = vunpack.c.l.b16 %v2098
      %v2755 = vunpack.c.l.b16 %v2099
      %v2756 = vunpack.c.l.b16 %v2100
      %v2757 = vunpack.c.l.b16 %v2101
      %v2758 = vunpack.c.l.b16 %v2102
      %v2759 = vunpack.c.l.b16 %v2103
      %v2760 = vunpack.c.l.b16 %v2104
      %v2761 = vunpack.c.l.b16 %v2105
      %v2762 = vunpack.c.l.b16 %v2106
      %v2763 = vunpack.c.l.b16 %v2107
      %v2764 = vunpack.c.l.b16 %v2108
      %v2765 = vunpack.c.l.b16 %v2109
      %v2766 = vunpack.c.l.b16 %v2110
      %v2767 = vunpack.c.l.b16 %v2111
      %v2768 = vunpack.c.l.b16 %v2112
      %v2769 = vunpack.c.l.b16 %v2113
      %v2770 = vunpack.c.l.b16 %v2114
      %v2771 = vunpack.c.l.b16 %v2115
      %v2772 = vunpack.c.l.b16 %v2116
      %v2773 = vunpack.c.l.b16 %v2117
      %v2774 = vunpack.c.l.b16 %v2118
      %v2775 = vunpack.c.l.b16 %v2119
      %v2776 = vunpack.c.l.b16 %v2120
      %v2777 = vunpack.c.l.b16 %v2121
      %v2778 = vunpack.c.l.b16 %v2122
      %v2779 = vunpack.c.l.b16 %v2123
      %v2780 = vunpack.c.l.b16 %v2124
      %v2781 = vunpack.c.l.b16 %v2125
      %v2782 = vunpack.c.l.b16 %v2126
      %v2783 = vunpack.c.l.b16 %v2127
      %v2784 = vunpack.c.l.b16 %v2128
      %v2785 = vunpack.c.l.b16 %v2129
      %v2786 = vunpack.c.l.b16 %v2130
      %v2787 = vunpack.c.l.b16 %v2131
      %v2788 = vunpack.c.l.b16 %v2132
      %v2789 = vunpack.c.l.b16 %v2133
      %v2790 = vunpack.c.l.b16 %v2134
      %v2791 = vunpack.c.l.b16 %v2135
      %v2792 = vunpack.c.l.b16 %v2136
      %v2793 = vunpack.c.l.b16 %v2137
      %v2794 = vunpack.c.l.b16 %v2138
      %v2795 = vunpack.c.l.b16 %v2139
      %v2796 = vunpack.c.l.b16 %v2140
      %v2797 = vunpack.c.l.b16 %v2141
      %v2798 = vunpack.c.l.b16 %v2142
      %v2799 = vunpack.c.l.b16 %v2143
      %v2800 = vunpack.c.l.b16 %v2144
      %v2801 = vunpack.c.l.b16 %v2145
      %v2802 = vunpack.c.l.b16 %v2146
      %v2803 = vunpack.c.l.b16 %v2147
      %v2804 = vunpack.c.l.b16 %v2148
      %v2805 = vunpack.c.l.b16 %v2149
      %v2806 = vunpack.c.l.b16 %v2150
      %v2807 = vunpack.c.l.b16 %v2151
      %v2808 = vunpack.c.l.b16 %v2152
      %v2809 = vunpack.c.l.b16 %v2153
      %v2810 = vunpack.c.l.b16 %v2154
      %v2811 = vunpack.c.l.b16 %v2155
      %v2812 = vunpack.c.l.b16 %v2156
      %v2813 = vunpack.c.l.b16 %v2157
      %v2814 = vunpack.c.l.b16 %v2158
      %v2815 = vunpack.c.l.b16 %v2159
      %v2816 = vunpack.c.l.b16 %v2160
      %v2817 = vunpack.c.l.b16 %v2161
      %v2818 = vpack.c.b16 %v2675, %v2674
      %v2819 = vpack.c.b16 %v2677, %v2676
      %v2820 = vpack.c.b16 %v2679, %v2678
      %v2821 = vpack.c.b16 %v2681, %v2680
      %v2822 = vpack.c.b16 %v2683, %v2682
      %v2823 = vpack.c.b16 %v2685, %v2684
      %v2824 = vpack.c.b16 %v2687, %v2686
      %v2825 = vpack.c.b16 %v2689, %v2688
      %v2826 = vpack.c.b16 %v2691, %v2690
      %v2827 = vpack.c.b16 %v2693, %v2692
      %v2828 = vpack.c.b16 %v2695, %v2694
      %v2829 = vpack.c.b16 %v2697, %v2696
      %v2830 = vpack.c.b16 %v2699, %v2698
      %v2831 = vpack.c.b16 %v2701, %v2700
      %v2832 = vpack.c.b16 %v2703, %v2702
      %v2833 = vpack.c.b16 %v2705, %v2704
      %v2834 = vpack.c.b16 %v2707, %v2706
      %v2835 = vpack.c.b16 %v2709, %v2708
      %v2836 = vpack.c.b16 %v2711, %v2710
      %v2837 = vpack.c.b16 %v2713, %v2712
      %v2838 = vpack.c.b16 %v2715, %v2714
      %v2839 = vpack.c.b16 %v2717, %v2716
      %v2840 = vpack.c.b16 %v2719, %v2718
      %v2841 = vpack.c.b16 %v2721, %v2720
      %v2842 = vpack.c.b16 %v2723, %v2722
      %v2843 = vpack.c.b16 %v2725, %v2724
      %v2844 = vpack.c.b16 %v2727, %v2726
      %v2845 = vpack.c.b16 %v2729, %v2728
      %v2846 = vpack.c.b16 %v2731, %v2730
      %v2847 = vpack.c.b16 %v2733, %v2732
      %v2848 = vpack.c.b16 %v2735, %v2734
      %v2849 = vpack.c.b16 %v2737, %v2736
      %v2850 = vpack.c.b16 %v2739, %v2738
      %v2851 = vpack.c.b16 %v2741, %v2740
      %v2852 = vpack.c.b16 %v2743, %v2742
      %v2853 = vpack.c.b16 %v2745, %v2744
      %v2854 = vpack.c.b16 %v2747, %v2746
      %v2855 = vpack.c.b16 %v2749, %v2748
      %v2856 = vpack.c.b16 %v2751, %v2750
      %v2857 = vpack.c.b16 %v2753, %v2752
      %v2858 = vpack.c.b16 %v2755, %v2754
      %v2859 = vpack.c.b16 %v2757, %v2756
      %v2860 = vpack.c.b16 %v2759, %v2758
      %v2861 = vpack.c.b16 %v2761, %v2760
      %v2862 = vpack.c.b16 %v2763, %v2762
      %v2863 = vpack.c.b16 %v2765, %v2764
      %v2864 = vpack.c.b16 %v2767, %v2766
      %v2865 = vpack.c.b16 %v2769, %v2768
      %v2866 = vpack.c.b16 %v2771, %v2770
      %v2867 = vpack.c.b16 %v2773, %v2772
      %v2868 = vpack.c.b16 %v2775, %v2774
      %v2869 = vpack.c.b16 %v2777, %v2776
      %v2870 = vpack.c.b16 %v2779, %v2778
      %v2871 = vpack.c.b16 %v2781, %v2780
      %v2872 = vpack.c.b16 %v2783, %v2782
      %v2873 = vpack.c.b16 %v2785, %v2784
      %v2874 = vpack.c.b16 %v2787, %v2786
      %v2875 = vpack.c.b16 %v2789, %v2788
      %v2876 = vpack.c.b16 %v2791, %v2790
      %v2877 = vpack.c.b16 %v2793, %v2792
      %v2878 = vpack.c.b16 %v2795, %v2794
      %v2879 = vpack.c.b16 %v2797, %v2796
      %v2880 = vpack.c.b16 %v2799, %v2798
      %v2881 = vpack.c.b16 %v2801, %v2800
      %v2882 = vpack.c.b16 %v2803, %v2802
      %v2883 = vpack.c.b16 %v2805, %v2804
      %v2884 = vpack.c.b16 %v2807, %v2806
      %v2885 = vpack.c.b16 %v2809, %v2808
      %v2886 = vpack.c.b16 %v2811, %v2810
      %v2887 = vpack.c.b16 %v2813, %v2812
      %v2888 = vpack.c.b16 %v2815, %v2814
      %v2889 = vpack.c.b16 %v2817, %v2816
      %2962 = vmatpush.bf16.msra.mxu0 %v2825
      %2963 = vmatpush.bf16.msra.mxu0 %v2824
      %2964 = vmatpush.bf16.msra.mxu0 %v2823
      %2965 = vmatpush.bf16.msra.mxu0 %v2822
      %2966 = vmatpush.bf16.msra.mxu0 %v2821
      %2967 = vmatpush.bf16.msra.mxu0 %v2820
      %2968 = vmatpush.bf16.msra.mxu0 %v2819
      %2969 = vmatpush.bf16.msra.mxu0 %v2818
      %2970 = vmatmul.bf16.gmra.mxu0 %v2386
      %v2971 = vpop.f32.mrf.mxu0
      %v2972 = vadd.f32 0.0, %v2971
      %v2973 = vpop.f32.mrf.mxu0
      %v2974 = vadd.f32 0.0, %v2973
      %2975 = vmatmul.bf16.gmra.mxu0 %v2395
      %v2976 = vpop.f32.mrf.mxu0
      %v2977 = vadd.f32 0.0, %v2976
      %v2978 = vpop.f32.mrf.mxu0
      %v2979 = vadd.f32 0.0, %v2978
      %2980 = vmatmul.bf16.gmra.mxu0 %v2404
      %v2981 = vpop.f32.mrf.mxu0
      %v2982 = vadd.f32 0.0, %v2981
      %v2983 = vpop.f32.mrf.mxu0
      %v2984 = vadd.f32 0.0, %v2983
      %2985 = vmatmul.bf16.gmra.mxu0 %v2413
      %v2986 = vpop.f32.mrf.mxu0
      %v2987 = vadd.f32 0.0, %v2986
      %v2988 = vpop.f32.mrf.mxu0
      %v2989 = vadd.f32 0.0, %v2988
      %2990 = vmatmul.bf16.gmra.mxu0 %v2422
      %v2991 = vpop.f32.mrf.mxu0
      %v2992 = vadd.f32 0.0, %v2991
      %v2993 = vpop.f32.mrf.mxu0
      %v2994 = vadd.f32 0.0, %v2993
      %2995 = vmatmul.bf16.gmra.mxu0 %v2431
      %v2996 = vpop.f32.mrf.mxu0
      %v2997 = vadd.f32 0.0, %v2996
      %v2998 = vpop.f32.mrf.mxu0
      %v2999 = vadd.f32 0.0, %v2998
      %3000 = vmatmul.bf16.gmra.mxu0 %v2440
      %v3001 = vpop.f32.mrf.mxu0
      %v3002 = vadd.f32 0.0, %v3001
      %v3003 = vpop.f32.mrf.mxu0
      %v3004 = vadd.f32 0.0, %v3003
      %3005 = vmatmul.bf16.gmra.mxu0 %v2449
      %v3006 = vpop.f32.mrf.mxu0
      %v3007 = vadd.f32 0.0, %v3006
      %v3008 = vpop.f32.mrf.mxu0
      %v3009 = vadd.f32 0.0, %v3008
      %3010 = vdwg.mxu0
      %3011 = vmatpush.bf16.msra.mxu0 %v2833
      %3012 = vmatpush.bf16.msra.mxu0 %v2832
      %3013 = vmatpush.bf16.msra.mxu0 %v2831
      %3014 = vmatpush.bf16.msra.mxu0 %v2830
      %3015 = vmatpush.bf16.msra.mxu0 %v2829
      %3016 = vmatpush.bf16.msra.mxu0 %v2828
      %3017 = vmatpush.bf16.msra.mxu0 %v2827
      %3018 = vmatpush.bf16.msra.mxu0 %v2826
      %3019 = vmatmul.bf16.gmra.mxu0 %v2387
      %v3020 = vpop.f32.mrf.mxu0
      %v3021 = vadd.f32 %v2972, %v3020
      %v3022 = vpop.f32.mrf.mxu0
      %v3023 = vadd.f32 %v2974, %v3022
      %3024 = vmatmul.bf16.gmra.mxu0 %v2396
      %v3025 = vpop.f32.mrf.mxu0
      %v3026 = vadd.f32 %v2977, %v3025
      %v3027 = vpop.f32.mrf.mxu0
      %v3028 = vadd.f32 %v2979, %v3027
      %3029 = vmatmul.bf16.gmra.mxu0 %v2405
      %v3030 = vpop.f32.mrf.mxu0
      %v3031 = vadd.f32 %v2982, %v3030
      %v3032 = vpop.f32.mrf.mxu0
      %v3033 = vadd.f32 %v2984, %v3032
      %3034 = vmatmul.bf16.gmra.mxu0 %v2414
      %v3035 = vpop.f32.mrf.mxu0
      %v3036 = vadd.f32 %v2987, %v3035
      %v3037 = vpop.f32.mrf.mxu0
      %v3038 = vadd.f32 %v2989, %v3037
      %3039 = vmatmul.bf16.gmra.mxu0 %v2423
      %v3040 = vpop.f32.mrf.mxu0
      %v3041 = vadd.f32 %v2992, %v3040
      %v3042 = vpop.f32.mrf.mxu0
      %v3043 = vadd.f32 %v2994, %v3042
      %3044 = vmatmul.bf16.gmra.mxu0 %v2432
      %v3045 = vpop.f32.mrf.mxu0
      %v3046 = vadd.f32 %v2997, %v3045
      %v3047 = vpop.f32.mrf.mxu0
      %v3048 = vadd.f32 %v2999, %v3047
      %3049 = vmatmul.bf16.gmra.mxu0 %v2441
      %v3050 = vpop.f32.mrf.mxu0
      %v3051 = vadd.f32 %v3002, %v3050
      %v3052 = vpop.f32.mrf.mxu0
      %v3053 = vadd.f32 %v3004, %v3052
      %3054 = vmatmul.bf16.gmra.mxu0 %v2450
      %v3055 = vpop.f32.mrf.mxu0
      %v3056 = vadd.f32 %v3007, %v3055
      %v3057 = vpop.f32.mrf.mxu0
      %v3058 = vadd.f32 %v3009, %v3057
      %3059 = vdwg.mxu0
      %3060 = vmatpush.bf16.msra.mxu0 %v2841
      %3061 = vmatpush.bf16.msra.mxu0 %v2840
      %3062 = vmatpush.bf16.msra.mxu0 %v2839
      %3063 = vmatpush.bf16.msra.mxu0 %v2838
      %3064 = vmatpush.bf16.msra.mxu0 %v2837
      %3065 = vmatpush.bf16.msra.mxu0 %v2836
      %3066 = vmatpush.bf16.msra.mxu0 %v2835
      %3067 = vmatpush.bf16.msra.mxu0 %v2834
      %3068 = vmatmul.bf16.gmra.mxu0 %v2388
      %v3069 = vpop.f32.mrf.mxu0
      %v3070 = vadd.f32 %v3021, %v3069
      %v3071 = vpop.f32.mrf.mxu0
      %v3072 = vadd.f32 %v3023, %v3071
      %3073 = vmatmul.bf16.gmra.mxu0 %v2397
      %v3074 = vpop.f32.mrf.mxu0
      %v3075 = vadd.f32 %v3026, %v3074
      %v3076 = vpop.f32.mrf.mxu0
      %v3077 = vadd.f32 %v3028, %v3076
      %3078 = vmatmul.bf16.gmra.mxu0 %v2406
      %v3079 = vpop.f32.mrf.mxu0
      %v3080 = vadd.f32 %v3031, %v3079
      %v3081 = vpop.f32.mrf.mxu0
      %v3082 = vadd.f32 %v3033, %v3081
      %3083 = vmatmul.bf16.gmra.mxu0 %v2415
      %v3084 = vpop.f32.mrf.mxu0
      %v3085 = vadd.f32 %v3036, %v3084
      %v3086 = vpop.f32.mrf.mxu0
      %v3087 = vadd.f32 %v3038, %v3086
      %3088 = vmatmul.bf16.gmra.mxu0 %v2424
      %v3089 = vpop.f32.mrf.mxu0
      %v3090 = vadd.f32 %v3041, %v3089
      %v3091 = vpop.f32.mrf.mxu0
      %v3092 = vadd.f32 %v3043, %v3091
      %3093 = vmatmul.bf16.gmra.mxu0 %v2433
      %v3094 = vpop.f32.mrf.mxu0
      %v3095 = vadd.f32 %v3046, %v3094
      %v3096 = vpop.f32.mrf.mxu0
      %v3097 = vadd.f32 %v3048, %v3096
      %3098 = vmatmul.bf16.gmra.mxu0 %v2442
      %v3099 = vpop.f32.mrf.mxu0
      %v3100 = vadd.f32 %v3051, %v3099
      %v3101 = vpop.f32.mrf.mxu0
      %v3102 = vadd.f32 %v3053, %v3101
      %3103 = vmatmul.bf16.gmra.mxu0 %v2451
      %v3104 = vpop.f32.mrf.mxu0
      %v3105 = vadd.f32 %v3056, %v3104
      %v3106 = vpop.f32.mrf.mxu0
      %v3107 = vadd.f32 %v3058, %v3106
      %3108 = vdwg.mxu0
      %3109 = vmatpush.bf16.msra.mxu0 %v2849
      %3110 = vmatpush.bf16.msra.mxu0 %v2848
      %3111 = vmatpush.bf16.msra.mxu0 %v2847
      %3112 = vmatpush.bf16.msra.mxu0 %v2846
      %3113 = vmatpush.bf16.msra.mxu0 %v2845
      %3114 = vmatpush.bf16.msra.mxu0 %v2844
      %3115 = vmatpush.bf16.msra.mxu0 %v2843
      %3116 = vmatpush.bf16.msra.mxu0 %v2842
      %3117 = vmatmul.bf16.gmra.mxu0 %v2389
      %v3118 = vpop.f32.mrf.mxu0
      %v3119 = vadd.f32 %v3070, %v3118
      %v3120 = vpop.f32.mrf.mxu0
      %v3121 = vadd.f32 %v3072, %v3120
      %3122 = vmatmul.bf16.gmra.mxu0 %v2398
      %v3123 = vpop.f32.mrf.mxu0
      %v3124 = vadd.f32 %v3075, %v3123
      %v3125 = vpop.f32.mrf.mxu0
      %v3126 = vadd.f32 %v3077, %v3125
      %3127 = vmatmul.bf16.gmra.mxu0 %v2407
      %v3128 = vpop.f32.mrf.mxu0
      %v3129 = vadd.f32 %v3080, %v3128
      %v3130 = vpop.f32.mrf.mxu0
      %v3131 = vadd.f32 %v3082, %v3130
      %3132 = vmatmul.bf16.gmra.mxu0 %v2416
      %v3133 = vpop.f32.mrf.mxu0
      %v3134 = vadd.f32 %v3085, %v3133
      %v3135 = vpop.f32.mrf.mxu0
      %v3136 = vadd.f32 %v3087, %v3135
      %3137 = vmatmul.bf16.gmra.mxu0 %v2425
      %v3138 = vpop.f32.mrf.mxu0
      %v3139 = vadd.f32 %v3090, %v3138
      %v3140 = vpop.f32.mrf.mxu0
      %v3141 = vadd.f32 %v3092, %v3140
      %3142 = vmatmul.bf16.gmra.mxu0 %v2434
      %v3143 = vpop.f32.mrf.mxu0
      %v3144 = vadd.f32 %v3095, %v3143
      %v3145 = vpop.f32.mrf.mxu0
      %v3146 = vadd.f32 %v3097, %v3145
      %3147 = vmatmul.bf16.gmra.mxu0 %v2443
      %v3148 = vpop.f32.mrf.mxu0
      %v3149 = vadd.f32 %v3100, %v3148
      %v3150 = vpop.f32.mrf.mxu0
      %v3151 = vadd.f32 %v3102, %v3150
      %3152 = vmatmul.bf16.gmra.mxu0 %v2452
      %v3153 = vpop.f32.mrf.mxu0
      %v3154 = vadd.f32 %v3105, %v3153
      %v3155 = vpop.f32.mrf.mxu0
      %v3156 = vadd.f32 %v3107, %v3155
      %3157 = vdwg.mxu0
      %3158 = vmatpush.bf16.msra.mxu0 %v2857
      %3159 = vmatpush.bf16.msra.mxu0 %v2856
      %3160 = vmatpush.bf16.msra.mxu0 %v2855
      %3161 = vmatpush.bf16.msra.mxu0 %v2854
      %3162 = vmatpush.bf16.msra.mxu0 %v2853
      %3163 = vmatpush.bf16.msra.mxu0 %v2852
      %3164 = vmatpush.bf16.msra.mxu0 %v2851
      %3165 = vmatpush.bf16.msra.mxu0 %v2850
      %3166 = vmatmul.bf16.gmra.mxu0 %v2390
      %v3167 = vpop.f32.mrf.mxu0
      %v3168 = vadd.f32 %v3119, %v3167
      %v3169 = vpop.f32.mrf.mxu0
      %v3170 = vadd.f32 %v3121, %v3169
      %3171 = vmatmul.bf16.gmra.mxu0 %v2399
      %v3172 = vpop.f32.mrf.mxu0
      %v3173 = vadd.f32 %v3124, %v3172
      %v3174 = vpop.f32.mrf.mxu0
      %v3175 = vadd.f32 %v3126, %v3174
      %3176 = vmatmul.bf16.gmra.mxu0 %v2408
      %v3177 = vpop.f32.mrf.mxu0
      %v3178 = vadd.f32 %v3129, %v3177
      %v3179 = vpop.f32.mrf.mxu0
      %v3180 = vadd.f32 %v3131, %v3179
      %3181 = vmatmul.bf16.gmra.mxu0 %v2417
      %v3182 = vpop.f32.mrf.mxu0
      %v3183 = vadd.f32 %v3134, %v3182
      %v3184 = vpop.f32.mrf.mxu0
      %v3185 = vadd.f32 %v3136, %v3184
      %3186 = vmatmul.bf16.gmra.mxu0 %v2426
      %v3187 = vpop.f32.mrf.mxu0
      %v3188 = vadd.f32 %v3139, %v3187
      %v3189 = vpop.f32.mrf.mxu0
      %v3190 = vadd.f32 %v3141, %v3189
      %3191 = vmatmul.bf16.gmra.mxu0 %v2435
      %v3192 = vpop.f32.mrf.mxu0
      %v3193 = vadd.f32 %v3144, %v3192
      %v3194 = vpop.f32.mrf.mxu0
      %v3195 = vadd.f32 %v3146, %v3194
      %3196 = vmatmul.bf16.gmra.mxu0 %v2444
      %v3197 = vpop.f32.mrf.mxu0
      %v3198 = vadd.f32 %v3149, %v3197
      %v3199 = vpop.f32.mrf.mxu0
      %v3200 = vadd.f32 %v3151, %v3199
      %3201 = vmatmul.bf16.gmra.mxu0 %v2453
      %v3202 = vpop.f32.mrf.mxu0
      %v3203 = vadd.f32 %v3154, %v3202
      %v3204 = vpop.f32.mrf.mxu0
      %v3205 = vadd.f32 %v3156, %v3204
      %3206 = vdwg.mxu0
      %3207 = vmatpush.bf16.msra.mxu0 %v2865
      %3208 = vmatpush.bf16.msra.mxu0 %v2864
      %3209 = vmatpush.bf16.msra.mxu0 %v2863
      %3210 = vmatpush.bf16.msra.mxu0 %v2862
      %3211 = vmatpush.bf16.msra.mxu0 %v2861
      %3212 = vmatpush.bf16.msra.mxu0 %v2860
      %3213 = vmatpush.bf16.msra.mxu0 %v2859
      %3214 = vmatpush.bf16.msra.mxu0 %v2858
      %3215 = vmatmul.bf16.gmra.mxu0 %v2391
      %v3216 = vpop.f32.mrf.mxu0
      %v3217 = vadd.f32 %v3168, %v3216
      %v3218 = vpop.f32.mrf.mxu0
      %v3219 = vadd.f32 %v3170, %v3218
      %3220 = vmatmul.bf16.gmra.mxu0 %v2400
      %v3221 = vpop.f32.mrf.mxu0
      %v3222 = vadd.f32 %v3173, %v3221
      %v3223 = vpop.f32.mrf.mxu0
      %v3224 = vadd.f32 %v3175, %v3223
      %3225 = vmatmul.bf16.gmra.mxu0 %v2409
      %v3226 = vpop.f32.mrf.mxu0
      %v3227 = vadd.f32 %v3178, %v3226
      %v3228 = vpop.f32.mrf.mxu0
      %v3229 = vadd.f32 %v3180, %v3228
      %3230 = vmatmul.bf16.gmra.mxu0 %v2418
      %v3231 = vpop.f32.mrf.mxu0
      %v3232 = vadd.f32 %v3183, %v3231
      %v3233 = vpop.f32.mrf.mxu0
      %v3234 = vadd.f32 %v3185, %v3233
      %3235 = vmatmul.bf16.gmra.mxu0 %v2427
      %v3236 = vpop.f32.mrf.mxu0
      %v3237 = vadd.f32 %v3188, %v3236
      %v3238 = vpop.f32.mrf.mxu0
      %v3239 = vadd.f32 %v3190, %v3238
      %3240 = vmatmul.bf16.gmra.mxu0 %v2436
      %v3241 = vpop.f32.mrf.mxu0
      %v3242 = vadd.f32 %v3193, %v3241
      %v3243 = vpop.f32.mrf.mxu0
      %v3244 = vadd.f32 %v3195, %v3243
      %3245 = vmatmul.bf16.gmra.mxu0 %v2445
      %v3246 = vpop.f32.mrf.mxu0
      %v3247 = vadd.f32 %v3198, %v3246
      %v3248 = vpop.f32.mrf.mxu0
      %v3249 = vadd.f32 %v3200, %v3248
      %3250 = vmatmul.bf16.gmra.mxu0 %v2454
      %v3251 = vpop.f32.mrf.mxu0
      %v3252 = vadd.f32 %v3203, %v3251
      %v3253 = vpop.f32.mrf.mxu0
      %v3254 = vadd.f32 %v3205, %v3253
      %3255 = vdwg.mxu0
      %3256 = vmatpush.bf16.msra.mxu0 %v2873
      %3257 = vmatpush.bf16.msra.mxu0 %v2872
      %3258 = vmatpush.bf16.msra.mxu0 %v2871
      %3259 = vmatpush.bf16.msra.mxu0 %v2870
      %3260 = vmatpush.bf16.msra.mxu0 %v2869
      %3261 = vmatpush.bf16.msra.mxu0 %v2868
      %3262 = vmatpush.bf16.msra.mxu0 %v2867
      %3263 = vmatpush.bf16.msra.mxu0 %v2866
      %3264 = vmatmul.bf16.gmra.mxu0 %v2392
      %v3265 = vpop.f32.mrf.mxu0
      %v3266 = vadd.f32 %v3217, %v3265
      %v3267 = vpop.f32.mrf.mxu0
      %v3268 = vadd.f32 %v3219, %v3267
      %3269 = vmatmul.bf16.gmra.mxu0 %v2401
      %v3270 = vpop.f32.mrf.mxu0
      %v3271 = vadd.f32 %v3222, %v3270
      %v3272 = vpop.f32.mrf.mxu0
      %v3273 = vadd.f32 %v3224, %v3272
      %3274 = vmatmul.bf16.gmra.mxu0 %v2410
      %v3275 = vpop.f32.mrf.mxu0
      %v3276 = vadd.f32 %v3227, %v3275
      %v3277 = vpop.f32.mrf.mxu0
      %v3278 = vadd.f32 %v3229, %v3277
      %3279 = vmatmul.bf16.gmra.mxu0 %v2419
      %v3280 = vpop.f32.mrf.mxu0
      %v3281 = vadd.f32 %v3232, %v3280
      %v3282 = vpop.f32.mrf.mxu0
      %v3283 = vadd.f32 %v3234, %v3282
      %3284 = vmatmul.bf16.gmra.mxu0 %v2428
      %v3285 = vpop.f32.mrf.mxu0
      %v3286 = vadd.f32 %v3237, %v3285
      %v3287 = vpop.f32.mrf.mxu0
      %v3288 = vadd.f32 %v3239, %v3287
      %3289 = vmatmul.bf16.gmra.mxu0 %v2437
      %v3290 = vpop.f32.mrf.mxu0
      %v3291 = vadd.f32 %v3242, %v3290
      %v3292 = vpop.f32.mrf.mxu0
      %v3293 = vadd.f32 %v3244, %v3292
      %3294 = vmatmul.bf16.gmra.mxu0 %v2446
      %v3295 = vpop.f32.mrf.mxu0
      %v3296 = vadd.f32 %v3247, %v3295
      %v3297 = vpop.f32.mrf.mxu0
      %v3298 = vadd.f32 %v3249, %v3297
      %3299 = vmatmul.bf16.gmra.mxu0 %v2455
      %v3300 = vpop.f32.mrf.mxu0
      %v3301 = vadd.f32 %v3252, %v3300
      %v3302 = vpop.f32.mrf.mxu0
      %v3303 = vadd.f32 %v3254, %v3302
      %3304 = vdwg.mxu0
      %3305 = vmatpush.bf16.msra.mxu0 %v2881
      %3306 = vmatpush.bf16.msra.mxu0 %v2880
      %3307 = vmatpush.bf16.msra.mxu0 %v2879
      %3308 = vmatpush.bf16.msra.mxu0 %v2878
      %3309 = vmatpush.bf16.msra.mxu0 %v2877
      %3310 = vmatpush.bf16.msra.mxu0 %v2876
      %3311 = vmatpush.bf16.msra.mxu0 %v2875
      %3312 = vmatpush.bf16.msra.mxu0 %v2874
      %3313 = vmatmul.bf16.gmra.mxu0 %v2393
      %v3314 = vpop.f32.mrf.mxu0
      %v3315 = vadd.f32 %v3266, %v3314
      %v3316 = vpop.f32.mrf.mxu0
      %v3317 = vadd.f32 %v3268, %v3316
      %3318 = vmatmul.bf16.gmra.mxu0 %v2402
      %v3319 = vpop.f32.mrf.mxu0
      %v3320 = vadd.f32 %v3271, %v3319
      %v3321 = vpop.f32.mrf.mxu0
      %v3322 = vadd.f32 %v3273, %v3321
      %3323 = vmatmul.bf16.gmra.mxu0 %v2411
      %v3324 = vpop.f32.mrf.mxu0
      %v3325 = vadd.f32 %v3276, %v3324
      %v3326 = vpop.f32.mrf.mxu0
      %v3327 = vadd.f32 %v3278, %v3326
      %3328 = vmatmul.bf16.gmra.mxu0 %v2420
      %v3329 = vpop.f32.mrf.mxu0
      %v3330 = vadd.f32 %v3281, %v3329
      %v3331 = vpop.f32.mrf.mxu0
      %v3332 = vadd.f32 %v3283, %v3331
      %3333 = vmatmul.bf16.gmra.mxu0 %v2429
      %v3334 = vpop.f32.mrf.mxu0
      %v3335 = vadd.f32 %v3286, %v3334
      %v3336 = vpop.f32.mrf.mxu0
      %v3337 = vadd.f32 %v3288, %v3336
      %3338 = vmatmul.bf16.gmra.mxu0 %v2438
      %v3339 = vpop.f32.mrf.mxu0
      %v3340 = vadd.f32 %v3291, %v3339
      %v3341 = vpop.f32.mrf.mxu0
      %v3342 = vadd.f32 %v3293, %v3341
      %3343 = vmatmul.bf16.gmra.mxu0 %v2447
      %v3344 = vpop.f32.mrf.mxu0
      %v3345 = vadd.f32 %v3296, %v3344
      %v3346 = vpop.f32.mrf.mxu0
      %v3347 = vadd.f32 %v3298, %v3346
      %3348 = vmatmul.bf16.gmra.mxu0 %v2456
      %v3349 = vpop.f32.mrf.mxu0
      %v3350 = vadd.f32 %v3301, %v3349
      %v3351 = vpop.f32.mrf.mxu0
      %v3352 = vadd.f32 %v3303, %v3351
      %3353 = vdwg.mxu0
      %3354 = vmatpush.bf16.msra.mxu0 %v2889
      %3355 = vmatpush.bf16.msra.mxu0 %v2888
      %3356 = vmatpush.bf16.msra.mxu0 %v2887
      %3357 = vmatpush.bf16.msra.mxu0 %v2886
      %3358 = vmatpush.bf16.msra.mxu0 %v2885
      %3359 = vmatpush.bf16.msra.mxu0 %v2884
      %3360 = vmatpush.bf16.msra.mxu0 %v2883
      %3361 = vmatpush.bf16.msra.mxu0 %v2882
      %3362 = vmatmul.bf16.gmra.mxu0 %v2394
      %v3363 = vpop.f32.mrf.mxu0
      %v3364 = vadd.f32 %v3315, %v3363
      %v3365 = vpop.f32.mrf.mxu0
      %v3366 = vadd.f32 %v3317, %v3365
      %3367 = vmatmul.bf16.gmra.mxu0 %v2403
      %v3368 = vpop.f32.mrf.mxu0
      %v3369 = vadd.f32 %v3320, %v3368
      %v3370 = vpop.f32.mrf.mxu0
      %v3371 = vadd.f32 %v3322, %v3370
      %3372 = vmatmul.bf16.gmra.mxu0 %v2412
      %v3373 = vpop.f32.mrf.mxu0
      %v3374 = vadd.f32 %v3325, %v3373
      %v3375 = vpop.f32.mrf.mxu0
      %v3376 = vadd.f32 %v3327, %v3375
      %3377 = vmatmul.bf16.gmra.mxu0 %v2421
      %v3378 = vpop.f32.mrf.mxu0
      %v3379 = vadd.f32 %v3330, %v3378
      %v3380 = vpop.f32.mrf.mxu0
      %v3381 = vadd.f32 %v3332, %v3380
      %3382 = vmatmul.bf16.gmra.mxu0 %v2430
      %v3383 = vpop.f32.mrf.mxu0
      %v3384 = vadd.f32 %v3335, %v3383
      %v3385 = vpop.f32.mrf.mxu0
      %v3386 = vadd.f32 %v3337, %v3385
      %3387 = vmatmul.bf16.gmra.mxu0 %v2439
      %v3388 = vpop.f32.mrf.mxu0
      %v3389 = vadd.f32 %v3340, %v3388
      %v3390 = vpop.f32.mrf.mxu0
      %v3391 = vadd.f32 %v3342, %v3390
      %3392 = vmatmul.bf16.gmra.mxu0 %v2448
      %v3393 = vpop.f32.mrf.mxu0
      %v3394 = vadd.f32 %v3345, %v3393
      %v3395 = vpop.f32.mrf.mxu0
      %v3396 = vadd.f32 %v3347, %v3395
      %3397 = vmatmul.bf16.gmra.mxu0 %v2457
      %v3398 = vpop.f32.mrf.mxu0
      %v3399 = vadd.f32 %v3350, %v3398
      %v3400 = vpop.f32.mrf.mxu0
      %v3401 = vadd.f32 %v3352, %v3400
      %3402 = vdwg.mxu0
      %v3403 = vpack.c.bf16 %v3364, %v3364
      %v3404 = vpack.c.bf16 %v3366, %v3366
      %v3405 = vpack.c.bf16 %v3369, %v3369
      %v3406 = vpack.c.bf16 %v3371, %v3371
      %v3407 = vpack.c.bf16 %v3374, %v3374
      %v3408 = vpack.c.bf16 %v3376, %v3376
      %v3409 = vpack.c.bf16 %v3379, %v3379
      %v3410 = vpack.c.bf16 %v3381, %v3381
      %v3411 = vpack.c.bf16 %v3384, %v3384
      %v3412 = vpack.c.bf16 %v3386, %v3386
      %v3413 = vpack.c.bf16 %v3389, %v3389
      %v3414 = vpack.c.bf16 %v3391, %v3391
      %v3415 = vpack.c.bf16 %v3394, %v3394
      %v3416 = vpack.c.bf16 %v3396, %v3396
      %v3417 = vpack.c.bf16 %v3399, %v3399
      %v3418 = vpack.c.bf16 %v3401, %v3401
      %3419 = vst [vmem:[%s255] sm:$0xf] %v3403
      %3420 = vst [vmem:[%s255 + $0x4] sm:$0xf] %v3404
      %3421 = vst [vmem:[%s255 + $0x8] sm:$0xf] %v3405
      %3422 = vst [vmem:[%s255 + $0xc] sm:$0xf] %v3406
      %3423 = vst [vmem:[%s255 + $0x10] sm:$0xf] %v3407
      %3424 = vst [vmem:[%s255 + $0x14] sm:$0xf] %v3408
      %3425 = vst [vmem:[%s255 + $0x18] sm:$0xf] %v3409
      %3426 = vst [vmem:[%s255 + $0x1c] sm:$0xf] %v3410
      %3427 = vst [vmem:[%s255 + $0x20] sm:$0xf] %v3411
      %3428 = vst [vmem:[%s255 + $0x24] sm:$0xf] %v3412
      %3429 = vst [vmem:[%s255 + $0x28] sm:$0xf] %v3413
      %3430 = vst [vmem:[%s255 + $0x2c] sm:$0xf] %v3414
      %3431 = vst [vmem:[%s255 + $0x30] sm:$0xf] %v3415
      %3432 = vst [vmem:[%s255 + $0x34] sm:$0xf] %v3416
      %3433 = vst [vmem:[%s255 + $0x38] sm:$0xf] %v3417
      %3434 = vst [vmem:[%s255 + $0x3c] sm:$0xf] %v3418
      // Predicated region
      $region53: #{basic_block.3} parent=35 // pred_check
        %p3435 = pneg %p583
      $region54: #{basic_block.3} parent=35 // pred_check_branch
        %3437 = sbr.rel (%p3435) target = $region56
      $region55: #{basic_block.3} parent=35 // pred_region
        %3438 = vst [vmem:[%s260] sm:$0x3] 0.0
      $region56: #{basic_block.3} parent=35 // pred_fallthru
        _
      %v3439 = vadd.f32 %v3364, %v3366
      %v3440 = vadd.f32 %v3439, %v3369
      %v3441 = vadd.f32 %v3440, %v3371
      %v3442 = vadd.f32 %v3441, %v3374
      %v3443 = vadd.f32 %v3442, %v3376
      %v3444 = vadd.f32 %v3443, %v3379
      %v3445 = vadd.f32 %v3444, %v3381
      %v3446 = vadd.f32 %v3445, %v3384
      %v3447 = vadd.f32 %v3446, %v3386
      %v3448 = vadd.f32 %v3447, %v3389
      %v3449 = vadd.f32 %v3448, %v3391
      %v3450 = vadd.f32 %v3449, %v3394
      %v3451 = vadd.f32 %v3450, %v3396
      %v3452 = vadd.f32 %v3451, %v3399
      %v3453 = vadd.f32 %v3452, %v3401
      %v3454 = vrot.slane %v3453, 4
      %v3455 = vadd.f32 %v3453, %v3454
      %v3456 = vrot.slane %v3455, 2
      %v3457 = vadd.f32 %v3455, %v3456
      %v3458 = vrot.slane %v3457, 1
      %v3459 = vadd.f32 %v3457, %v3458
      %v3460 = vmul.f32 %v3364, %v3364
      %v3461 = vmul.f32 %v3366, %v3366
      %v3462 = vmul.f32 %v3369, %v3369
      %v3463 = vmul.f32 %v3371, %v3371
      %v3464 = vmul.f32 %v3374, %v3374
      %v3465 = vmul.f32 %v3376, %v3376
      %v3466 = vmul.f32 %v3379, %v3379
      %v3467 = vmul.f32 %v3381, %v3381
      %v3468 = vmul.f32 %v3384, %v3384
      %v3469 = vmul.f32 %v3386, %v3386
      %v3470 = vmul.f32 %v3389, %v3389
      %v3471 = vmul.f32 %v3391, %v3391
      %v3472 = vmul.f32 %v3394, %v3394
      %v3473 = vmul.f32 %v3396, %v3396
      %v3474 = vmul.f32 %v3399, %v3399
      %v3475 = vmul.f32 %v3401, %v3401
      %v3476 = vadd.f32 %v3460, %v3461
      %v3477 = vadd.f32 %v3476, %v3462
      %v3478 = vadd.f32 %v3477, %v3463
      %v3479 = vadd.f32 %v3478, %v3464
      %v3480 = vadd.f32 %v3479, %v3465
      %v3481 = vadd.f32 %v3480, %v3466
      %v3482 = vadd.f32 %v3481, %v3467
      %v3483 = vadd.f32 %v3482, %v3468
      %v3484 = vadd.f32 %v3483, %v3469
      %v3485 = vadd.f32 %v3484, %v3470
      %v3486 = vadd.f32 %v3485, %v3471
      %v3487 = vadd.f32 %v3486, %v3472
      %v3488 = vadd.f32 %v3487, %v3473
      %v3489 = vadd.f32 %v3488, %v3474
      %v3490 = vadd.f32 %v3489, %v3475
      %v3491 = vrot.slane %v3490, 4
      %v3492 = vadd.f32 %v3490, %v3491
      %v3493 = vrot.slane %v3492, 2
      %v3494 = vadd.f32 %v3492, %v3493
      %v3495 = vrot.slane %v3494, 1
      %v3496 = vadd.f32 %v3494, %v3495
      %v3497 = vld [vmem:[%s260] sm:$0x3]
      %vm3498 = vcmask 1040384
      %v3499 = vsel %vm3498, %v3459, %v3496
      %v3500 = vadd.f32 %v3497, %v3499
      %3501 = vst [vmem:[%s260] sm:$0x3] %v3500
      %s3502 = smul.u32 8, %s22
      %p3503 = scmp.lt.s32.totalorder %s21, 1
      %s3504 = scalar_select %p3503, %s21, 1
      %p3505 = scmp.lt.s32.totalorder %s3502, 15
      %s3506 = scalar_select %p3505, %s3502, 15
      %s3507 = smul.addr %s3506, 2
      %s3508 = smul.addr %s3504, 32
      %s3509 = sadd.s32 %s3507, %s3508
      %s3510 = smul.addr %s3509, 4
      %s3511 = scalar_lea.vmem %s4, %s3510
      %p3512 = scmp.lt.s32.totalorder %s21, 1
      %s3513 = scalar_select %p3512, %s21, 1
      %s3514 = smul.addr %s3513, 2
      %s3515 = scalar_lea.vmem %s5, %s3514
      // Predicated region
      $region57: #{basic_block.3} parent=35 // pred_check
        %p3516 = pneg %p138
      $region58: #{basic_block.3} parent=35 // pred_check_branch
        %3518 = sbr.rel (%p3516) target = $region60
      $region59: #{basic_block.3} parent=35 // pred_region
        %s3519 = smul.u32 8, %s22
      $region60: #{basic_block.3} parent=35 // pred_fallthru
        _
      // Predicated region
      $region61: #{basic_block.3} parent=35 // pred_check
        %p3520 = pneg %p164
      $region62: #{basic_block.3} parent=35 // pred_check_branch
        %3522 = sbr.rel (%p3520) target = $region64
      $region63: #{basic_block.3} parent=35 // pred_region
        _
      $region64: #{basic_block.3} parent=35 // pred_fallthru
        _
    $region36: #{basic_block.3} parent=5 // pred_fallthru
      _
    %p3523 = scmp.le.s32.totalorder 2, %s12
    // Predicated region
    $region65: #{basic_block.3} parent=5 // pred_check
      %p3524 = pneg %p3523
    $region66: #{basic_block.3} parent=5 // pred_check_branch
      %3526 = sbr.rel (%p3524) target = $region68
    $region67: #{basic_block.3} parent=5 // pred_region
      %s3527 = ssub.s32 %s12, 2
      // Predicated region
      $region69: #{basic_block.3} parent=67 // pred_check
        %p3528 = pneg %p144
      $region70: #{basic_block.3} parent=67 // pred_check_branch
        %3530 = sbr.rel (%p3528) target = $region72
      $region71: #{basic_block.3} parent=67 // pred_region
        %s3531 = smul.u32 8, %s24
        %p3532 = scmp.lt.s32.totalorder %s23, 1
        %s3533 = scalar_select %p3532, %s23, 1
        %p3534 = scmp.lt.s32.totalorder %s3531, 15
        %s3535 = scalar_select %p3534, %s3531, 15
        %s3536 = smul.addr %s3535, 2
        %s3537 = smul.addr %s3533, 32
        %s3538 = sadd.s32 %s3536, %s3537
        %s3539 = smul.addr %s3538, 4
        %s3540 = scalar_lea.vmem %s4, %s3539
      $region72: #{basic_block.3} parent=67 // pred_fallthru
        _
      // Predicated region
      $region73: #{basic_block.3} parent=67 // pred_check
        %p3541 = pneg %p170
      $region74: #{basic_block.3} parent=67 // pred_check_branch
        %3543 = sbr.rel (%p3541) target = $region76
      $region75: #{basic_block.3} parent=67 // pred_region
        %p3544 = scmp.lt.s32.totalorder %s23, 1
        %s3545 = scalar_select %p3544, %s23, 1
        %s3546 = smul.addr %s3545, 2
        %s3547 = scalar_lea.vmem %s5, %s3546
      $region76: #{basic_block.3} parent=67 // pred_fallthru
        _
    $region68: #{basic_block.3} parent=5 // pred_fallthru
      _
  $region6: #{basic_block.3} parent=0 // loop_footer
    %s16 = sadd.s32 1, %s12
  $region7: #{basic_block.3} parent=0 // loop_footer_branch
    %11 = sbr.rel target = $region3
  $region8: #{basic_block.3} parent=0 // loop_exit
    _

</llo_original>
